<compile_context>
chip_gen: v6e
topology: v6e:2x2x1
jax: 0.10.0
libtpu: 0.0.40
codegen_flags: <defaults>
</compile_context>

<pallas_src>
import jax
import jax.numpy as jnp
import numpy as np
from jax.experimental import pallas as pl
from jax.experimental.pallas import tpu as pltpu

H = 50     # true hidden size (fixed by the module definition)
HP = 128   # per-gate lane padding: one full 128-lane vreg tile per gate


def _sigmoid(x):
    # logistic(x) == 0.5 * tanh(x / 2) + 0.5 exactly: one EUP tanh + VPU ops.
    return 0.5 * jnp.tanh(0.5 * x) + 0.5


def _res_lstm_kernel(x_ref,      # (T, B, 1)     f32
                     wih1_ref,   # (1, 4*HP)     f32  layer-1 input weights (row)
                     b1_ref,     # (1, 4*HP)     f32  layer-1 bias (b_ih + b_hh)
                     wrec_ref,   # (2*HP, 8*HP)  bf16 block-diag [whh1 | 0 ; 0 | whh2]
                     wih2_ref,   # (HP, 4*HP)    bf16 layer-2 input weights
                     b2_ref,     # (1, 4*HP)     f32  layer-2 bias (b_ih + b_hh)
                     wlin_ref,   # (1, 1, HP)    f32  final linear weights
                     blin_ref,   # (1, 1)        f32  final linear bias
                     o_ref,      # (T, B)        f32  output
                     res_ref):   # (T, B, HP)    f32  scratch: per-step residual
    T = x_ref.shape[0]
    B = x_ref.shape[1]

    # Small operands (a few vregs each): hoist once.  The big weights stay in
    # VMEM and are read inside the dots (refs are VMEM-resident; no copy).
    wih1 = wih1_ref[...]
    b1 = b1_ref[...]
    b2 = b2_ref[...]

    def step(t, carry):
        hh, cc = carry                              # (B, 2*HP) each; padded lanes == 0
        x_t = x_ref[t]                              # (B, 1)

        # One MXU op that depends only on the previous carries:
        #   lanes [0, 4*HP)     = h1_prev @ whh1   (layer-1 recurrent gates)
        #   lanes [4*HP, 8*HP)  = h2_prev @ whh2   (layer-2 recurrent gates)
        g_rec = jnp.dot(hh.astype(jnp.bfloat16), wrec_ref[...],
                        preferred_element_type=jnp.float32)      # (B, 8*HP)

        # ---- LSTM layer 1 (gate order i, f, o, g after weight-prep reorder) ----
        # input_size == 1: the input term is a pure VPU broadcast multiply.
        g1 = g_rec[:, :4 * HP] + x_t * wih1 + b1                 # (B, 4*HP)
        s1 = _sigmoid(g1[:, :3 * HP])                            # i, f, o at once
        i1 = s1[:, 0 * HP:1 * HP]
        f1 = s1[:, 1 * HP:2 * HP]
        o1 = s1[:, 2 * HP:3 * HP]
        gg1 = jnp.tanh(g1[:, 3 * HP:4 * HP])
        c1 = f1 * cc[:, :HP] + i1 * gg1
        h1 = o1 * jnp.tanh(c1)

        # ---- LSTM layer 2: only a K=HP dot remains on the h1-dependent path ----
        g2 = (g_rec[:, 4 * HP:]
              + jnp.dot(h1.astype(jnp.bfloat16), wih2_ref[...],
                        preferred_element_type=jnp.float32)
              + b2)                                              # (B, 4*HP)
        s2 = _sigmoid(g2[:, :3 * HP])
        i2 = s2[:, 0 * HP:1 * HP]
        f2 = s2[:, 1 * HP:2 * HP]
        o2 = s2[:, 2 * HP:3 * HP]
        gg2 = jnp.tanh(g2[:, 3 * HP:4 * HP])
        c2 = f2 * cc[:, HP:] + i2 * gg2
        h2 = o2 * jnp.tanh(c2)

        # Residual add; the tiny N=1 projection is batched after the loop,
        # keeping it off the serial recurrence path.
        res_ref[t] = h1 + h2

        # Lane-tile-aligned concatenation of 128-lane halves (no data movement).
        return (jnp.concatenate([h1, h2], axis=-1),
                jnp.concatenate([c1, c2], axis=-1))

    z = jnp.zeros((B, 2 * HP), jnp.float32)
    unroll = True if T <= 32 else 2
    jax.lax.fori_loop(0, T, step, (z, z), unroll=unroll)

    # ---- batched final linear: multiply + lane-reduce over the whole slab ----
    proj = jnp.sum(res_ref[...] * wlin_ref[...], axis=-1)        # (T, B)
    o_ref[...] = proj + blin_ref[...]                            # single store


_GATE_ORDER = (0, 1, 3, 2)   # PyTorch [i, f, g, o] -> kernel [i, f, o, g]


def _pad_gate_cols(w):
    """(K, 4*H) in PyTorch gate order [i,f,g,o] -> (K, 4*HP) in kernel order
    [i,f,o,g]; each gate's H columns placed at lane offset g*HP, padded columns
    zero (so padded hidden/cell lanes stay exactly 0)."""
    K = w.shape[0]
    wg = w.reshape(K, 4, H)[:, _GATE_ORDER, :]
    return jnp.zeros((K, 4, HP), w.dtype).at[:, :, :H].set(wg).reshape(K, 4 * HP)


def _pad_rows(w, k_pad):
    return jnp.zeros((k_pad, w.shape[1]), w.dtype).at[:w.shape[0], :].set(w)


@jax.jit
def res_lstms_forward(x_btd, params):
    """x_btd: (B, T, 1) float32. Returns (B, T, 1) float32."""
    B, T, D = x_btd.shape
    assert D == 1
    wih1, whh1, b1, wih2, whh2, b2, wlin, blin = params

    # Kernel-side layouts: per-gate 128-lane padding, [i,f,o,g] gate order.
    wih1_k = _pad_gate_cols(wih1)                                   # (1, 512) f32
    b1_k = _pad_gate_cols(b1)                                       # (1, 512) f32
    b2_k = _pad_gate_cols(b2)                                       # (1, 512) f32

    # Block-diagonal recurrent weight for both layers, stored bf16 for the MXU.
    wrec_k = jnp.zeros((2 * HP, 8 * HP), jnp.float32)
    wrec_k = wrec_k.at[:H, :4 * HP].set(_pad_gate_cols(whh1))
    wrec_k = wrec_k.at[HP:HP + H, 4 * HP:].set(_pad_gate_cols(whh2))
    wrec_k = wrec_k.astype(jnp.bfloat16)                            # (256, 1024)

    wih2_k = _pad_rows(_pad_gate_cols(wih2), HP).astype(jnp.bfloat16)  # (128, 512)

    wlin_k = jnp.zeros((1, 1, HP), jnp.float32).at[0, 0, :H].set(wlin[:, 0])
    blin_k = blin.astype(jnp.float32)                               # (1, 1)

    x_tbd = jnp.transpose(x_btd, (1, 0, 2)).astype(jnp.float32)     # (T, B, 1)

    vmem = pl.BlockSpec(memory_space=pltpu.MemorySpace.VMEM)
    out_tb = pl.pallas_call(
        _res_lstm_kernel,
        out_shape=jax.ShapeDtypeStruct((T, B), jnp.float32),
        in_specs=[vmem] * 8,
        out_specs=vmem,
        scratch_shapes=[pltpu.VMEM((T, B, HP), jnp.float32)],       # residual slab
        compiler_params=pltpu.CompilerParams(
            vmem_limit_bytes=64 * 1024 * 1024),
    )(x_tbd, wih1_k, b1_k, wrec_k, wih2_k, b2_k, wlin_k, blin_k)

    return jnp.transpose(out_tb)[:, :, None]                        # (B, T, 1)


def init_params(key):
    """Deterministic PyTorch-style uniform(-1/sqrt(H), 1/sqrt(H)) init.
    Weights stored pre-transposed for right-multiplication: (in_dim, 4*H),
    columns in PyTorch gate order [i, f, g, o]."""
    k = 1.0 / np.sqrt(H)
    keys = jax.random.split(key, 10)
    u = lambda kk, shape: jax.random.uniform(kk, shape, jnp.float32, -k, k)
    wih1 = u(keys[0], (1, 4 * H))
    whh1 = u(keys[1], (H, 4 * H))
    b1 = u(keys[2], (1, 4 * H)) + u(keys[3], (1, 4 * H))   # b_ih + b_hh
    wih2 = u(keys[4], (H, 4 * H))
    whh2 = u(keys[5], (H, 4 * H))
    b2 = u(keys[6], (1, 4 * H)) + u(keys[7], (1, 4 * H))
    wlin = u(keys[8], (H, 1))
    blin = u(keys[9], (1, 1))
    return (wih1, whh1, b1, wih2, whh2, b2, wlin, blin)


def _reference_forward(x_btd, params):
    """Pure-JAX f32 reference (lax.scan) matching the PyTorch module."""
    wih1, whh1, b1, wih2, whh2, b2, wlin, blin = params
    B, T, _ = x_btd.shape

    def lstm_cell(x_t, h, c, wih, whh, b):
        g = x_t @ wih + h @ whh + b
        i = jax.nn.sigmoid(g[:, 0 * H:1 * H])
        f = jax.nn.sigmoid(g[:, 1 * H:2 * H])
        gg = jnp.tanh(g[:, 2 * H:3 * H])
        o = jax.nn.sigmoid(g[:, 3 * H:4 * H])
        c = f * c + i * gg
        h = o * jnp.tanh(c)
        return h, c

    def step(carry, x_t):
        h1, c1, h2, c2 = carry
        h1, c1 = lstm_cell(x_t, h1, c1, wih1, whh1, b1)
        h2, c2 = lstm_cell(h1, h2, c2, wih2, whh2, b2)
        y = (h1 + h2) @ wlin + blin
        return (h1, c1, h2, c2), y

    z = jnp.zeros((B, H), jnp.float32)
    _, ys = jax.lax.scan(step, (z, z, z, z), jnp.transpose(x_btd, (1, 0, 2)))
    return jnp.transpose(ys, (1, 0, 2))


if __name__ == "__main__":
    key = jax.random.PRNGKey(0)
    kx, kp = jax.random.split(key)

    B, T = 2, 8
    x = jax.random.normal(kx, (B, T, 1), jnp.float32)   # (batch, seq, features=1)
    params = init_params(kp)

    out = jax.block_until_ready(res_lstms_forward(x, params))
    ref = jax.block_until_ready(_reference_forward(x, params))
    assert out.shape == (B, T, 1)
    # bf16 MXU operands (f32 accumulation) -> tolerance loosened from 1e-4.
    np.testing.assert_allclose(np.asarray(out), np.asarray(ref), rtol=2e-2, atol=2e-2)

    print("KERNEL_OK")
</pallas_src>

<mosaic_0001>
module attributes {stable_mosaic.version = 11 : i64} {
  func.func @_res_lstm_kernel(%arg0: memref<8x2x1xf32, #tpu.memory_space<vmem>>, %arg1: memref<1x512xf32, #tpu.memory_space<vmem>>, %arg2: memref<1x512xf32, #tpu.memory_space<vmem>>, %arg3: memref<256x1024xbf16, #tpu.memory_space<vmem>>, %arg4: memref<128x512xbf16, #tpu.memory_space<vmem>>, %arg5: memref<1x512xf32, #tpu.memory_space<vmem>>, %arg6: memref<1x1x128xf32, #tpu.memory_space<vmem>>, %arg7: memref<1x1xf32, #tpu.memory_space<vmem>>, %arg8: memref<8x2xf32, #tpu.memory_space<vmem>>, %arg9: memref<8x2x128xf32, #tpu.memory_space<vmem>>) attributes {dimension_semantics = [], scalar_prefetch = 0 : i64, scratch_operands = 1 : i64, tpu.core_type = #tpu.core_type<tc>} {
    %c0 = arith.constant 0 : index
    %c0_0 = arith.constant 0 : index
    %0 = vector.load %arg1[%c0, %c0_0] : memref<1x512xf32, #tpu.memory_space<vmem>>, vector<1x512xf32>
    %c0_1 = arith.constant 0 : index
    %c0_2 = arith.constant 0 : index
    %1 = vector.load %arg2[%c0_1, %c0_2] : memref<1x512xf32, #tpu.memory_space<vmem>>, vector<1x512xf32>
    %c0_3 = arith.constant 0 : index
    %c0_4 = arith.constant 0 : index
    %2 = vector.load %arg5[%c0_3, %c0_4] : memref<1x512xf32, #tpu.memory_space<vmem>>, vector<1x512xf32>
    %cst = arith.constant 0.000000e+00 : f32
    %3 = vector.broadcast %cst : f32 to vector<2x256xf32>
    %c0_i32 = arith.constant 0 : i32
    %4 = arith.index_cast %c0_i32 : i32 to index
    %c0_5 = arith.constant 0 : index
    %c0_6 = arith.constant 0 : index
    %5 = vector.load %arg0[%4, %c0_5, %c0_6] : memref<8x2x1xf32, #tpu.memory_space<vmem>>, vector<1x2x1xf32>
    %6 = vector.shape_cast %5 : vector<1x2x1xf32> to vector<2x1xf32>
    %7 = arith.truncf %3 : vector<2x256xf32> to vector<2x256xbf16>
    %c0_7 = arith.constant 0 : index
    %c0_8 = arith.constant 0 : index
    %8 = vector.load %arg3[%c0_7, %c0_8] : memref<256x1024xbf16, #tpu.memory_space<vmem>>, vector<256x1024xbf16>
    %cst_9 = arith.constant dense<0.000000e+00> : vector<2x1024xf32>
    %9 = tpu.matmul %7, %8, %cst_9 {dimension_numbers = #tpu.dot_dimension_numbers<[1], [0], [0], [1], [0, 0, 1, 1], [], []>} : vector<2x256xbf16>, vector<256x1024xbf16>, vector<2x1024xf32> -> vector<2x1024xf32>
    %10 = vector.extract_strided_slice %9 {offsets = [0, 0], sizes = [2, 512], strides = [1, 1]} : vector<2x1024xf32> to vector<2x512xf32>
    %11 = vector.broadcast %6 : vector<2x1xf32> to vector<2x512xf32>
    %12 = vector.broadcast %0 : vector<1x512xf32> to vector<2x512xf32>
    %13 = arith.mulf %11, %12 : vector<2x512xf32>
    %14 = arith.addf %10, %13 : vector<2x512xf32>
    %15 = vector.broadcast %1 : vector<1x512xf32> to vector<2x512xf32>
    %16 = arith.addf %14, %15 : vector<2x512xf32>
    %17 = vector.extract_strided_slice %16 {offsets = [0, 0], sizes = [2, 384], strides = [1, 1]} : vector<2x512xf32> to vector<2x384xf32>
    %cst_10 = arith.constant 5.000000e-01 : f32
    %18 = vector.broadcast %cst_10 : f32 to vector<2x384xf32>
    %19 = arith.mulf %18, %17 : vector<2x384xf32>
    %20 = math.tanh %19 : vector<2x384xf32>
    %cst_11 = arith.constant 5.000000e-01 : f32
    %21 = vector.broadcast %cst_11 : f32 to vector<2x384xf32>
    %22 = arith.mulf %21, %20 : vector<2x384xf32>
    %cst_12 = arith.constant 5.000000e-01 : f32
    %23 = vector.broadcast %cst_12 : f32 to vector<2x384xf32>
    %24 = arith.addf %22, %23 : vector<2x384xf32>
    %25 = vector.extract_strided_slice %24 {offsets = [0, 0], sizes = [2, 128], strides = [1, 1]} : vector<2x384xf32> to vector<2x128xf32>
    %26 = vector.extract_strided_slice %24 {offsets = [0, 128], sizes = [2, 128], strides = [1, 1]} : vector<2x384xf32> to vector<2x128xf32>
    %27 = vector.extract_strided_slice %24 {offsets = [0, 256], sizes = [2, 128], strides = [1, 1]} : vector<2x384xf32> to vector<2x128xf32>
    %28 = vector.extract_strided_slice %16 {offsets = [0, 384], sizes = [2, 128], strides = [1, 1]} : vector<2x512xf32> to vector<2x128xf32>
    %29 = math.tanh %28 : vector<2x128xf32>
    %30 = vector.extract_strided_slice %3 {offsets = [0, 0], sizes = [2, 128], strides = [1, 1]} : vector<2x256xf32> to vector<2x128xf32>
    %31 = arith.mulf %26, %30 : vector<2x128xf32>
    %32 = arith.mulf %25, %29 : vector<2x128xf32>
    %33 = arith.addf %31, %32 : vector<2x128xf32>
    %34 = math.tanh %33 : vector<2x128xf32>
    %35 = arith.mulf %27, %34 : vector<2x128xf32>
    %36 = vector.extract_strided_slice %9 {offsets = [0, 512], sizes = [2, 512], strides = [1, 1]} : vector<2x1024xf32> to vector<2x512xf32>
    %37 = arith.truncf %35 : vector<2x128xf32> to vector<2x128xbf16>
    %c0_13 = arith.constant 0 : index
    %c0_14 = arith.constant 0 : index
    %38 = vector.load %arg4[%c0_13, %c0_14] : memref<128x512xbf16, #tpu.memory_space<vmem>>, vector<128x512xbf16>
    %cst_15 = arith.constant dense<0.000000e+00> : vector<2x512xf32>
    %39 = tpu.matmul %37, %38, %cst_15 {dimension_numbers = #tpu.dot_dimension_numbers<[1], [0], [0], [1], [0, 0, 1, 1], [], []>} : vector<2x128xbf16>, vector<128x512xbf16>, vector<2x512xf32> -> vector<2x512xf32>
    %40 = arith.addf %36, %39 : vector<2x512xf32>
    %41 = vector.broadcast %2 : vector<1x512xf32> to vector<2x512xf32>
    %42 = arith.addf %40, %41 : vector<2x512xf32>
    %43 = vector.extract_strided_slice %42 {offsets = [0, 0], sizes = [2, 384], strides = [1, 1]} : vector<2x512xf32> to vector<2x384xf32>
    %cst_16 = arith.constant 5.000000e-01 : f32
    %44 = vector.broadcast %cst_16 : f32 to vector<2x384xf32>
    %45 = arith.mulf %44, %43 : vector<2x384xf32>
    %46 = math.tanh %45 : vector<2x384xf32>
    %cst_17 = arith.constant 5.000000e-01 : f32
    %47 = vector.broadcast %cst_17 : f32 to vector<2x384xf32>
    %48 = arith.mulf %47, %46 : vector<2x384xf32>
    %cst_18 = arith.constant 5.000000e-01 : f32
    %49 = vector.broadcast %cst_18 : f32 to vector<2x384xf32>
    %50 = arith.addf %48, %49 : vector<2x384xf32>
    %51 = vector.extract_strided_slice %50 {offsets = [0, 0], sizes = [2, 128], strides = [1, 1]} : vector<2x384xf32> to vector<2x128xf32>
    %52 = vector.extract_strided_slice %50 {offsets = [0, 128], sizes = [2, 128], strides = [1, 1]} : vector<2x384xf32> to vector<2x128xf32>
    %53 = vector.extract_strided_slice %50 {offsets = [0, 256], sizes = [2, 128], strides = [1, 1]} : vector<2x384xf32> to vector<2x128xf32>
    %54 = vector.extract_strided_slice %42 {offsets = [0, 384], sizes = [2, 128], strides = [1, 1]} : vector<2x512xf32> to vector<2x128xf32>
    %55 = math.tanh %54 : vector<2x128xf32>
    %56 = vector.extract_strided_slice %3 {offsets = [0, 128], sizes = [2, 128], strides = [1, 1]} : vector<2x256xf32> to vector<2x128xf32>
    %57 = arith.mulf %52, %56 : vector<2x128xf32>
    %58 = arith.mulf %51, %55 : vector<2x128xf32>
    %59 = arith.addf %57, %58 : vector<2x128xf32>
    %60 = math.tanh %59 : vector<2x128xf32>
    %61 = arith.mulf %53, %60 : vector<2x128xf32>
    %62 = arith.addf %35, %61 : vector<2x128xf32>
    %63 = arith.index_cast %c0_i32 : i32 to index
    %c0_19 = arith.constant 0 : index
    %c0_20 = arith.constant 0 : index
    %64 = vector.load %arg9[%63, %c0_19, %c0_20] : memref<8x2x128xf32, #tpu.memory_space<vmem>>, vector<1x2x128xf32>
    %65 = vector.shape_cast %64 : vector<1x2x128xf32> to vector<2x128xf32>
    %66 = vector.shape_cast %62 : vector<2x128xf32> to vector<1x2x128xf32>
    tpu.vector_store %arg9[%63, %c0_19, %c0_20], %66 {strides = array<i32>} : memref<8x2x128xf32, #tpu.memory_space<vmem>>, vector<1x2x128xf32>,
    %67 = tpu.concatenate %35, %61 in 1 : vector<2x128xf32>, vector<2x128xf32> -> vector<2x256xf32>
    %68 = tpu.concatenate %33, %59 in 1 : vector<2x128xf32>, vector<2x128xf32> -> vector<2x256xf32>
    %c1_i32 = arith.constant 1 : i32
    %69 = arith.index_cast %c1_i32 : i32 to index
    %c0_21 = arith.constant 0 : index
    %c0_22 = arith.constant 0 : index
    %70 = vector.load %arg0[%69, %c0_21, %c0_22] : memref<8x2x1xf32, #tpu.memory_space<vmem>>, vector<1x2x1xf32>
    %71 = vector.shape_cast %70 : vector<1x2x1xf32> to vector<2x1xf32>
    %72 = arith.truncf %67 : vector<2x256xf32> to vector<2x256xbf16>
    %c0_23 = arith.constant 0 : index
    %c0_24 = arith.constant 0 : index
    %73 = vector.load %arg3[%c0_23, %c0_24] : memref<256x1024xbf16, #tpu.memory_space<vmem>>, vector<256x1024xbf16>
    %cst_25 = arith.constant dense<0.000000e+00> : vector<2x1024xf32>
    %74 = tpu.matmul %72, %73, %cst_25 {dimension_numbers = #tpu.dot_dimension_numbers<[1], [0], [0], [1], [0, 0, 1, 1], [], []>} : vector<2x256xbf16>, vector<256x1024xbf16>, vector<2x1024xf32> -> vector<2x1024xf32>
    %75 = vector.extract_strided_slice %74 {offsets = [0, 0], sizes = [2, 512], strides = [1, 1]} : vector<2x1024xf32> to vector<2x512xf32>
    %76 = vector.broadcast %71 : vector<2x1xf32> to vector<2x512xf32>
    %77 = vector.broadcast %0 : vector<1x512xf32> to vector<2x512xf32>
    %78 = arith.mulf %76, %77 : vector<2x512xf32>
    %79 = arith.addf %75, %78 : vector<2x512xf32>
    %80 = vector.broadcast %1 : vector<1x512xf32> to vector<2x512xf32>
    %81 = arith.addf %79, %80 : vector<2x512xf32>
    %82 = vector.extract_strided_slice %81 {offsets = [0, 0], sizes = [2, 384], strides = [1, 1]} : vector<2x512xf32> to vector<2x384xf32>
    %cst_26 = arith.constant 5.000000e-01 : f32
    %83 = vector.broadcast %cst_26 : f32 to vector<2x384xf32>
    %84 = arith.mulf %83, %82 : vector<2x384xf32>
    %85 = math.tanh %84 : vector<2x384xf32>
    %cst_27 = arith.constant 5.000000e-01 : f32
    %86 = vector.broadcast %cst_27 : f32 to vector<2x384xf32>
    %87 = arith.mulf %86, %85 : vector<2x384xf32>
    %cst_28 = arith.constant 5.000000e-01 : f32
    %88 = vector.broadcast %cst_28 : f32 to vector<2x384xf32>
    %89 = arith.addf %87, %88 : vector<2x384xf32>
    %90 = vector.extract_strided_slice %89 {offsets = [0, 0], sizes = [2, 128], strides = [1, 1]} : vector<2x384xf32> to vector<2x128xf32>
    %91 = vector.extract_strided_slice %89 {offsets = [0, 128], sizes = [2, 128], strides = [1, 1]} : vector<2x384xf32> to vector<2x128xf32>
    %92 = vector.extract_strided_slice %89 {offsets = [0, 256], sizes = [2, 128], strides = [1, 1]} : vector<2x384xf32> to vector<2x128xf32>
    %93 = vector.extract_strided_slice %81 {offsets = [0, 384], sizes = [2, 128], strides = [1, 1]} : vector<2x512xf32> to vector<2x128xf32>
    %94 = math.tanh %93 : vector<2x128xf32>
    %95 = vector.extract_strided_slice %68 {offsets = [0, 0], sizes = [2, 128], strides = [1, 1]} : vector<2x256xf32> to vector<2x128xf32>
    %96 = arith.mulf %91, %95 : vector<2x128xf32>
    %97 = arith.mulf %90, %94 : vector<2x128xf32>
    %98 = arith.addf %96, %97 : vector<2x128xf32>
    %99 = math.tanh %98 : vector<2x128xf32>
    %100 = arith.mulf %92, %99 : vector<2x128xf32>
    %101 = vector.extract_strided_slice %74 {offsets = [0, 512], sizes = [2, 512], strides = [1, 1]} : vector<2x1024xf32> to vector<2x512xf32>
    %102 = arith.truncf %100 : vector<2x128xf32> to vector<2x128xbf16>
    %c0_29 = arith.constant 0 : index
    %c0_30 = arith.constant 0 : index
    %103 = vector.load %arg4[%c0_29, %c0_30] : memref<128x512xbf16, #tpu.memory_space<vmem>>, vector<128x512xbf16>
    %cst_31 = arith.constant dense<0.000000e+00> : vector<2x512xf32>
    %104 = tpu.matmul %102, %103, %cst_31 {dimension_numbers = #tpu.dot_dimension_numbers<[1], [0], [0], [1], [0, 0, 1, 1], [], []>} : vector<2x128xbf16>, vector<128x512xbf16>, vector<2x512xf32> -> vector<2x512xf32>
    %105 = arith.addf %101, %104 : vector<2x512xf32>
    %106 = vector.broadcast %2 : vector<1x512xf32> to vector<2x512xf32>
    %107 = arith.addf %105, %106 : vector<2x512xf32>
    %108 = vector.extract_strided_slice %107 {offsets = [0, 0], sizes = [2, 384], strides = [1, 1]} : vector<2x512xf32> to vector<2x384xf32>
    %cst_32 = arith.constant 5.000000e-01 : f32
    %109 = vector.broadcast %cst_32 : f32 to vector<2x384xf32>
    %110 = arith.mulf %109, %108 : vector<2x384xf32>
    %111 = math.tanh %110 : vector<2x384xf32>
    %cst_33 = arith.constant 5.000000e-01 : f32
    %112 = vector.broadcast %cst_33 : f32 to vector<2x384xf32>
    %113 = arith.mulf %112, %111 : vector<2x384xf32>
    %cst_34 = arith.constant 5.000000e-01 : f32
    %114 = vector.broadcast %cst_34 : f32 to vector<2x384xf32>
    %115 = arith.addf %113, %114 : vector<2x384xf32>
    %116 = vector.extract_strided_slice %115 {offsets = [0, 0], sizes = [2, 128], strides = [1, 1]} : vector<2x384xf32> to vector<2x128xf32>
    %117 = vector.extract_strided_slice %115 {offsets = [0, 128], sizes = [2, 128], strides = [1, 1]} : vector<2x384xf32> to vector<2x128xf32>
    %118 = vector.extract_strided_slice %115 {offsets = [0, 256], sizes = [2, 128], strides = [1, 1]} : vector<2x384xf32> to vector<2x128xf32>
    %119 = vector.extract_strided_slice %107 {offsets = [0, 384], sizes = [2, 128], strides = [1, 1]} : vector<2x512xf32> to vector<2x128xf32>
    %120 = math.tanh %119 : vector<2x128xf32>
    %121 = vector.extract_strided_slice %68 {offsets = [0, 128], sizes = [2, 128], strides = [1, 1]} : vector<2x256xf32> to vector<2x128xf32>
    %122 = arith.mulf %117, %121 : vector<2x128xf32>
    %123 = arith.mulf %116, %120 : vector<2x128xf32>
    %124 = arith.addf %122, %123 : vector<2x128xf32>
    %125 = math.tanh %124 : vector<2x128xf32>
    %126 = arith.mulf %118, %125 : vector<2x128xf32>
    %127 = arith.addf %100, %126 : vector<2x128xf32>
    %128 = arith.index_cast %c1_i32 : i32 to index
    %c0_35 = arith.constant 0 : index
    %c0_36 = arith.constant 0 : index
    %129 = vector.load %arg9[%128, %c0_35, %c0_36] : memref<8x2x128xf32, #tpu.memory_space<vmem>>, vector<1x2x128xf32>
    %130 = vector.shape_cast %129 : vector<1x2x128xf32> to vector<2x128xf32>
    %131 = vector.shape_cast %127 : vector<2x128xf32> to vector<1x2x128xf32>
    tpu.vector_store %arg9[%128, %c0_35, %c0_36], %131 {strides = array<i32>} : memref<8x2x128xf32, #tpu.memory_space<vmem>>, vector<1x2x128xf32>,
    %132 = tpu.concatenate %100, %126 in 1 : vector<2x128xf32>, vector<2x128xf32> -> vector<2x256xf32>
    %133 = tpu.concatenate %98, %124 in 1 : vector<2x128xf32>, vector<2x128xf32> -> vector<2x256xf32>
    %c2_i32 = arith.constant 2 : i32
    %134 = arith.index_cast %c2_i32 : i32 to index
    %c0_37 = arith.constant 0 : index
    %c0_38 = arith.constant 0 : index
    %135 = vector.load %arg0[%134, %c0_37, %c0_38] : memref<8x2x1xf32, #tpu.memory_space<vmem>>, vector<1x2x1xf32>
    %136 = vector.shape_cast %135 : vector<1x2x1xf32> to vector<2x1xf32>
    %137 = arith.truncf %132 : vector<2x256xf32> to vector<2x256xbf16>
    %c0_39 = arith.constant 0 : index
    %c0_40 = arith.constant 0 : index
    %138 = vector.load %arg3[%c0_39, %c0_40] : memref<256x1024xbf16, #tpu.memory_space<vmem>>, vector<256x1024xbf16>
    %cst_41 = arith.constant dense<0.000000e+00> : vector<2x1024xf32>
    %139 = tpu.matmul %137, %138, %cst_41 {dimension_numbers = #tpu.dot_dimension_numbers<[1], [0], [0], [1], [0, 0, 1, 1], [], []>} : vector<2x256xbf16>, vector<256x1024xbf16>, vector<2x1024xf32> -> vector<2x1024xf32>
    %140 = vector.extract_strided_slice %139 {offsets = [0, 0], sizes = [2, 512], strides = [1, 1]} : vector<2x1024xf32> to vector<2x512xf32>
    %141 = vector.broadcast %136 : vector<2x1xf32> to vector<2x512xf32>
    %142 = vector.broadcast %0 : vector<1x512xf32> to vector<2x512xf32>
    %143 = arith.mulf %141, %142 : vector<2x512xf32>
    %144 = arith.addf %140, %143 : vector<2x512xf32>
    %145 = vector.broadcast %1 : vector<1x512xf32> to vector<2x512xf32>
    %146 = arith.addf %144, %145 : vector<2x512xf32>
    %147 = vector.extract_strided_slice %146 {offsets = [0, 0], sizes = [2, 384], strides = [1, 1]} : vector<2x512xf32> to vector<2x384xf32>
    %cst_42 = arith.constant 5.000000e-01 : f32
    %148 = vector.broadcast %cst_42 : f32 to vector<2x384xf32>
    %149 = arith.mulf %148, %147 : vector<2x384xf32>
    %150 = math.tanh %149 : vector<2x384xf32>
    %cst_43 = arith.constant 5.000000e-01 : f32
    %151 = vector.broadcast %cst_43 : f32 to vector<2x384xf32>
    %152 = arith.mulf %151, %150 : vector<2x384xf32>
    %cst_44 = arith.constant 5.000000e-01 : f32
    %153 = vector.broadcast %cst_44 : f32 to vector<2x384xf32>
    %154 = arith.addf %152, %153 : vector<2x384xf32>
    %155 = vector.extract_strided_slice %154 {offsets = [0, 0], sizes = [2, 128], strides = [1, 1]} : vector<2x384xf32> to vector<2x128xf32>
    %156 = vector.extract_strided_slice %154 {offsets = [0, 128], sizes = [2, 128], strides = [1, 1]} : vector<2x384xf32> to vector<2x128xf32>
    %157 = vector.extract_strided_slice %154 {offsets = [0, 256], sizes = [2, 128], strides = [1, 1]} : vector<2x384xf32> to vector<2x128xf32>
    %158 = vector.extract_strided_slice %146 {offsets = [0, 384], sizes = [2, 128], strides = [1, 1]} : vector<2x512xf32> to vector<2x128xf32>
    %159 = math.tanh %158 : vector<2x128xf32>
    %160 = vector.extract_strided_slice %133 {offsets = [0, 0], sizes = [2, 128], strides = [1, 1]} : vector<2x256xf32> to vector<2x128xf32>
    %161 = arith.mulf %156, %160 : vector<2x128xf32>
    %162 = arith.mulf %155, %159 : vector<2x128xf32>
    %163 = arith.addf %161, %162 : vector<2x128xf32>
    %164 = math.tanh %163 : vector<2x128xf32>
    %165 = arith.mulf %157, %164 : vector<2x128xf32>
    %166 = vector.extract_strided_slice %139 {offsets = [0, 512], sizes = [2, 512], strides = [1, 1]} : vector<2x1024xf32> to vector<2x512xf32>
    %167 = arith.truncf %165 : vector<2x128xf32> to vector<2x128xbf16>
    %c0_45 = arith.constant 0 : index
    %c0_46 = arith.constant 0 : index
    %168 = vector.load %arg4[%c0_45, %c0_46] : memref<128x512xbf16, #tpu.memory_space<vmem>>, vector<128x512xbf16>
    %cst_47 = arith.constant dense<0.000000e+00> : vector<2x512xf32>
    %169 = tpu.matmul %167, %168, %cst_47 {dimension_numbers = #tpu.dot_dimension_numbers<[1], [0], [0], [1], [0, 0, 1, 1], [], []>} : vector<2x128xbf16>, vector<128x512xbf16>, vector<2x512xf32> -> vector<2x512xf32>
    %170 = arith.addf %166, %169 : vector<2x512xf32>
    %171 = vector.broadcast %2 : vector<1x512xf32> to vector<2x512xf32>
    %172 = arith.addf %170, %171 : vector<2x512xf32>
    %173 = vector.extract_strided_slice %172 {offsets = [0, 0], sizes = [2, 384], strides = [1, 1]} : vector<2x512xf32> to vector<2x384xf32>
    %cst_48 = arith.constant 5.000000e-01 : f32
    %174 = vector.broadcast %cst_48 : f32 to vector<2x384xf32>
    %175 = arith.mulf %174, %173 : vector<2x384xf32>
    %176 = math.tanh %175 : vector<2x384xf32>
    %cst_49 = arith.constant 5.000000e-01 : f32
    %177 = vector.broadcast %cst_49 : f32 to vector<2x384xf32>
    %178 = arith.mulf %177, %176 : vector<2x384xf32>
    %cst_50 = arith.constant 5.000000e-01 : f32
    %179 = vector.broadcast %cst_50 : f32 to vector<2x384xf32>
    %180 = arith.addf %178, %179 : vector<2x384xf32>
    %181 = vector.extract_strided_slice %180 {offsets = [0, 0], sizes = [2, 128], strides = [1, 1]} : vector<2x384xf32> to vector<2x128xf32>
    %182 = vector.extract_strided_slice %180 {offsets = [0, 128], sizes = [2, 128], strides = [1, 1]} : vector<2x384xf32> to vector<2x128xf32>
    %183 = vector.extract_strided_slice %180 {offsets = [0, 256], sizes = [2, 128], strides = [1, 1]} : vector<2x384xf32> to vector<2x128xf32>
    %184 = vector.extract_strided_slice %172 {offsets = [0, 384], sizes = [2, 128], strides = [1, 1]} : vector<2x512xf32> to vector<2x128xf32>
    %185 = math.tanh %184 : vector<2x128xf32>
    %186 = vector.extract_strided_slice %133 {offsets = [0, 128], sizes = [2, 128], strides = [1, 1]} : vector<2x256xf32> to vector<2x128xf32>
    %187 = arith.mulf %182, %186 : vector<2x128xf32>
    %188 = arith.mulf %181, %185 : vector<2x128xf32>
    %189 = arith.addf %187, %188 : vector<2x128xf32>
    %190 = math.tanh %189 : vector<2x128xf32>
    %191 = arith.mulf %183, %190 : vector<2x128xf32>
    %192 = arith.addf %165, %191 : vector<2x128xf32>
    %193 = arith.index_cast %c2_i32 : i32 to index
    %c0_51 = arith.constant 0 : index
    %c0_52 = arith.constant 0 : index
    %194 = vector.load %arg9[%193, %c0_51, %c0_52] : memref<8x2x128xf32, #tpu.memory_space<vmem>>, vector<1x2x128xf32>
    %195 = vector.shape_cast %194 : vector<1x2x128xf32> to vector<2x128xf32>
    %196 = vector.shape_cast %192 : vector<2x128xf32> to vector<1x2x128xf32>
    tpu.vector_store %arg9[%193, %c0_51, %c0_52], %196 {strides = array<i32>} : memref<8x2x128xf32, #tpu.memory_space<vmem>>, vector<1x2x128xf32>,
    %197 = tpu.concatenate %165, %191 in 1 : vector<2x128xf32>, vector<2x128xf32> -> vector<2x256xf32>
    %198 = tpu.concatenate %163, %189 in 1 : vector<2x128xf32>, vector<2x128xf32> -> vector<2x256xf32>
    %c3_i32 = arith.constant 3 : i32
    %199 = arith.index_cast %c3_i32 : i32 to index
    %c0_53 = arith.constant 0 : index
    %c0_54 = arith.constant 0 : index
    %200 = vector.load %arg0[%199, %c0_53, %c0_54] : memref<8x2x1xf32, #tpu.memory_space<vmem>>, vector<1x2x1xf32>
    %201 = vector.shape_cast %200 : vector<1x2x1xf32> to vector<2x1xf32>
    %202 = arith.truncf %197 : vector<2x256xf32> to vector<2x256xbf16>
    %c0_55 = arith.constant 0 : index
    %c0_56 = arith.constant 0 : index
    %203 = vector.load %arg3[%c0_55, %c0_56] : memref<256x1024xbf16, #tpu.memory_space<vmem>>, vector<256x1024xbf16>
    %cst_57 = arith.constant dense<0.000000e+00> : vector<2x1024xf32>
    %204 = tpu.matmul %202, %203, %cst_57 {dimension_numbers = #tpu.dot_dimension_numbers<[1], [0], [0], [1], [0, 0, 1, 1], [], []>} : vector<2x256xbf16>, vector<256x1024xbf16>, vector<2x1024xf32> -> vector<2x1024xf32>
    %205 = vector.extract_strided_slice %204 {offsets = [0, 0], sizes = [2, 512], strides = [1, 1]} : vector<2x1024xf32> to vector<2x512xf32>
    %206 = vector.broadcast %201 : vector<2x1xf32> to vector<2x512xf32>
    %207 = vector.broadcast %0 : vector<1x512xf32> to vector<2x512xf32>
    %208 = arith.mulf %206, %207 : vector<2x512xf32>
    %209 = arith.addf %205, %208 : vector<2x512xf32>
    %210 = vector.broadcast %1 : vector<1x512xf32> to vector<2x512xf32>
    %211 = arith.addf %209, %210 : vector<2x512xf32>
    %212 = vector.extract_strided_slice %211 {offsets = [0, 0], sizes = [2, 384], strides = [1, 1]} : vector<2x512xf32> to vector<2x384xf32>
    %cst_58 = arith.constant 5.000000e-01 : f32
    %213 = vector.broadcast %cst_58 : f32 to vector<2x384xf32>
    %214 = arith.mulf %213, %212 : vector<2x384xf32>
    %215 = math.tanh %214 : vector<2x384xf32>
    %cst_59 = arith.constant 5.000000e-01 : f32
    %216 = vector.broadcast %cst_59 : f32 to vector<2x384xf32>
    %217 = arith.mulf %216, %215 : vector<2x384xf32>
    %cst_60 = arith.constant 5.000000e-01 : f32
    %218 = vector.broadcast %cst_60 : f32 to vector<2x384xf32>
    %219 = arith.addf %217, %218 : vector<2x384xf32>
    %220 = vector.extract_strided_slice %219 {offsets = [0, 0], sizes = [2, 128], strides = [1, 1]} : vector<2x384xf32> to vector<2x128xf32>
    %221 = vector.extract_strided_slice %219 {offsets = [0, 128], sizes = [2, 128], strides = [1, 1]} : vector<2x384xf32> to vector<2x128xf32>
    %222 = vector.extract_strided_slice %219 {offsets = [0, 256], sizes = [2, 128], strides = [1, 1]} : vector<2x384xf32> to vector<2x128xf32>
    %223 = vector.extract_strided_slice %211 {offsets = [0, 384], sizes = [2, 128], strides = [1, 1]} : vector<2x512xf32> to vector<2x128xf32>
    %224 = math.tanh %223 : vector<2x128xf32>
    %225 = vector.extract_strided_slice %198 {offsets = [0, 0], sizes = [2, 128], strides = [1, 1]} : vector<2x256xf32> to vector<2x128xf32>
    %226 = arith.mulf %221, %225 : vector<2x128xf32>
    %227 = arith.mulf %220, %224 : vector<2x128xf32>
    %228 = arith.addf %226, %227 : vector<2x128xf32>
    %229 = math.tanh %228 : vector<2x128xf32>
    %230 = arith.mulf %222, %229 : vector<2x128xf32>
    %231 = vector.extract_strided_slice %204 {offsets = [0, 512], sizes = [2, 512], strides = [1, 1]} : vector<2x1024xf32> to vector<2x512xf32>
    %232 = arith.truncf %230 : vector<2x128xf32> to vector<2x128xbf16>
    %c0_61 = arith.constant 0 : index
    %c0_62 = arith.constant 0 : index
    %233 = vector.load %arg4[%c0_61, %c0_62] : memref<128x512xbf16, #tpu.memory_space<vmem>>, vector<128x512xbf16>
    %cst_63 = arith.constant dense<0.000000e+00> : vector<2x512xf32>
    %234 = tpu.matmul %232, %233, %cst_63 {dimension_numbers = #tpu.dot_dimension_numbers<[1], [0], [0], [1], [0, 0, 1, 1], [], []>} : vector<2x128xbf16>, vector<128x512xbf16>, vector<2x512xf32> -> vector<2x512xf32>
    %235 = arith.addf %231, %234 : vector<2x512xf32>
    %236 = vector.broadcast %2 : vector<1x512xf32> to vector<2x512xf32>
    %237 = arith.addf %235, %236 : vector<2x512xf32>
    %238 = vector.extract_strided_slice %237 {offsets = [0, 0], sizes = [2, 384], strides = [1, 1]} : vector<2x512xf32> to vector<2x384xf32>
    %cst_64 = arith.constant 5.000000e-01 : f32
    %239 = vector.broadcast %cst_64 : f32 to vector<2x384xf32>
    %240 = arith.mulf %239, %238 : vector<2x384xf32>
    %241 = math.tanh %240 : vector<2x384xf32>
    %cst_65 = arith.constant 5.000000e-01 : f32
    %242 = vector.broadcast %cst_65 : f32 to vector<2x384xf32>
    %243 = arith.mulf %242, %241 : vector<2x384xf32>
    %cst_66 = arith.constant 5.000000e-01 : f32
    %244 = vector.broadcast %cst_66 : f32 to vector<2x384xf32>
    %245 = arith.addf %243, %244 : vector<2x384xf32>
    %246 = vector.extract_strided_slice %245 {offsets = [0, 0], sizes = [2, 128], strides = [1, 1]} : vector<2x384xf32> to vector<2x128xf32>
    %247 = vector.extract_strided_slice %245 {offsets = [0, 128], sizes = [2, 128], strides = [1, 1]} : vector<2x384xf32> to vector<2x128xf32>
    %248 = vector.extract_strided_slice %245 {offsets = [0, 256], sizes = [2, 128], strides = [1, 1]} : vector<2x384xf32> to vector<2x128xf32>
    %249 = vector.extract_strided_slice %237 {offsets = [0, 384], sizes = [2, 128], strides = [1, 1]} : vector<2x512xf32> to vector<2x128xf32>
    %250 = math.tanh %249 : vector<2x128xf32>
    %251 = vector.extract_strided_slice %198 {offsets = [0, 128], sizes = [2, 128], strides = [1, 1]} : vector<2x256xf32> to vector<2x128xf32>
    %252 = arith.mulf %247, %251 : vector<2x128xf32>
    %253 = arith.mulf %246, %250 : vector<2x128xf32>
    %254 = arith.addf %252, %253 : vector<2x128xf32>
    %255 = math.tanh %254 : vector<2x128xf32>
    %256 = arith.mulf %248, %255 : vector<2x128xf32>
    %257 = arith.addf %230, %256 : vector<2x128xf32>
    %258 = arith.index_cast %c3_i32 : i32 to index
    %c0_67 = arith.constant 0 : index
    %c0_68 = arith.constant 0 : index
    %259 = vector.load %arg9[%258, %c0_67, %c0_68] : memref<8x2x128xf32, #tpu.memory_space<vmem>>, vector<1x2x128xf32>
    %260 = vector.shape_cast %259 : vector<1x2x128xf32> to vector<2x128xf32>
    %261 = vector.shape_cast %257 : vector<2x128xf32> to vector<1x2x128xf32>
    tpu.vector_store %arg9[%258, %c0_67, %c0_68], %261 {strides = array<i32>} : memref<8x2x128xf32, #tpu.memory_space<vmem>>, vector<1x2x128xf32>,
    %262 = tpu.concatenate %230, %256 in 1 : vector<2x128xf32>, vector<2x128xf32> -> vector<2x256xf32>
    %263 = tpu.concatenate %228, %254 in 1 : vector<2x128xf32>, vector<2x128xf32> -> vector<2x256xf32>
    %c4_i32 = arith.constant 4 : i32
    %264 = arith.index_cast %c4_i32 : i32 to index
    %c0_69 = arith.constant 0 : index
    %c0_70 = arith.constant 0 : index
    %265 = vector.load %arg0[%264, %c0_69, %c0_70] : memref<8x2x1xf32, #tpu.memory_space<vmem>>, vector<1x2x1xf32>
    %266 = vector.shape_cast %265 : vector<1x2x1xf32> to vector<2x1xf32>
    %267 = arith.truncf %262 : vector<2x256xf32> to vector<2x256xbf16>
    %c0_71 = arith.constant 0 : index
    %c0_72 = arith.constant 0 : index
    %268 = vector.load %arg3[%c0_71, %c0_72] : memref<256x1024xbf16, #tpu.memory_space<vmem>>, vector<256x1024xbf16>
    %cst_73 = arith.constant dense<0.000000e+00> : vector<2x1024xf32>
    %269 = tpu.matmul %267, %268, %cst_73 {dimension_numbers = #tpu.dot_dimension_numbers<[1], [0], [0], [1], [0, 0, 1, 1], [], []>} : vector<2x256xbf16>, vector<256x1024xbf16>, vector<2x1024xf32> -> vector<2x1024xf32>
    %270 = vector.extract_strided_slice %269 {offsets = [0, 0], sizes = [2, 512], strides = [1, 1]} : vector<2x1024xf32> to vector<2x512xf32>
    %271 = vector.broadcast %266 : vector<2x1xf32> to vector<2x512xf32>
    %272 = vector.broadcast %0 : vector<1x512xf32> to vector<2x512xf32>
    %273 = arith.mulf %271, %272 : vector<2x512xf32>
    %274 = arith.addf %270, %273 : vector<2x512xf32>
    %275 = vector.broadcast %1 : vector<1x512xf32> to vector<2x512xf32>
    %276 = arith.addf %274, %275 : vector<2x512xf32>
    %277 = vector.extract_strided_slice %276 {offsets = [0, 0], sizes = [2, 384], strides = [1, 1]} : vector<2x512xf32> to vector<2x384xf32>
    %cst_74 = arith.constant 5.000000e-01 : f32
    %278 = vector.broadcast %cst_74 : f32 to vector<2x384xf32>
    %279 = arith.mulf %278, %277 : vector<2x384xf32>
    %280 = math.tanh %279 : vector<2x384xf32>
    %cst_75 = arith.constant 5.000000e-01 : f32
    %281 = vector.broadcast %cst_75 : f32 to vector<2x384xf32>
    %282 = arith.mulf %281, %280 : vector<2x384xf32>
    %cst_76 = arith.constant 5.000000e-01 : f32
    %283 = vector.broadcast %cst_76 : f32 to vector<2x384xf32>
    %284 = arith.addf %282, %283 : vector<2x384xf32>
    %285 = vector.extract_strided_slice %284 {offsets = [0, 0], sizes = [2, 128], strides = [1, 1]} : vector<2x384xf32> to vector<2x128xf32>
    %286 = vector.extract_strided_slice %284 {offsets = [0, 128], sizes = [2, 128], strides = [1, 1]} : vector<2x384xf32> to vector<2x128xf32>
    %287 = vector.extract_strided_slice %284 {offsets = [0, 256], sizes = [2, 128], strides = [1, 1]} : vector<2x384xf32> to vector<2x128xf32>
    %288 = vector.extract_strided_slice %276 {offsets = [0, 384], sizes = [2, 128], strides = [1, 1]} : vector<2x512xf32> to vector<2x128xf32>
    %289 = math.tanh %288 : vector<2x128xf32>
    %290 = vector.extract_strided_slice %263 {offsets = [0, 0], sizes = [2, 128], strides = [1, 1]} : vector<2x256xf32> to vector<2x128xf32>
    %291 = arith.mulf %286, %290 : vector<2x128xf32>
    %292 = arith.mulf %285, %289 : vector<2x128xf32>
    %293 = arith.addf %291, %292 : vector<2x128xf32>
    %294 = math.tanh %293 : vector<2x128xf32>
    %295 = arith.mulf %287, %294 : vector<2x128xf32>
    %296 = vector.extract_strided_slice %269 {offsets = [0, 512], sizes = [2, 512], strides = [1, 1]} : vector<2x1024xf32> to vector<2x512xf32>
    %297 = arith.truncf %295 : vector<2x128xf32> to vector<2x128xbf16>
    %c0_77 = arith.constant 0 : index
    %c0_78 = arith.constant 0 : index
    %298 = vector.load %arg4[%c0_77, %c0_78] : memref<128x512xbf16, #tpu.memory_space<vmem>>, vector<128x512xbf16>
    %cst_79 = arith.constant dense<0.000000e+00> : vector<2x512xf32>
    %299 = tpu.matmul %297, %298, %cst_79 {dimension_numbers = #tpu.dot_dimension_numbers<[1], [0], [0], [1], [0, 0, 1, 1], [], []>} : vector<2x128xbf16>, vector<128x512xbf16>, vector<2x512xf32> -> vector<2x512xf32>
    %300 = arith.addf %296, %299 : vector<2x512xf32>
    %301 = vector.broadcast %2 : vector<1x512xf32> to vector<2x512xf32>
    %302 = arith.addf %300, %301 : vector<2x512xf32>
    %303 = vector.extract_strided_slice %302 {offsets = [0, 0], sizes = [2, 384], strides = [1, 1]} : vector<2x512xf32> to vector<2x384xf32>
    %cst_80 = arith.constant 5.000000e-01 : f32
    %304 = vector.broadcast %cst_80 : f32 to vector<2x384xf32>
    %305 = arith.mulf %304, %303 : vector<2x384xf32>
    %306 = math.tanh %305 : vector<2x384xf32>
    %cst_81 = arith.constant 5.000000e-01 : f32
    %307 = vector.broadcast %cst_81 : f32 to vector<2x384xf32>
    %308 = arith.mulf %307, %306 : vector<2x384xf32>
    %cst_82 = arith.constant 5.000000e-01 : f32
    %309 = vector.broadcast %cst_82 : f32 to vector<2x384xf32>
    %310 = arith.addf %308, %309 : vector<2x384xf32>
    %311 = vector.extract_strided_slice %310 {offsets = [0, 0], sizes = [2, 128], strides = [1, 1]} : vector<2x384xf32> to vector<2x128xf32>
    %312 = vector.extract_strided_slice %310 {offsets = [0, 128], sizes = [2, 128], strides = [1, 1]} : vector<2x384xf32> to vector<2x128xf32>
    %313 = vector.extract_strided_slice %310 {offsets = [0, 256], sizes = [2, 128], strides = [1, 1]} : vector<2x384xf32> to vector<2x128xf32>
    %314 = vector.extract_strided_slice %302 {offsets = [0, 384], sizes = [2, 128], strides = [1, 1]} : vector<2x512xf32> to vector<2x128xf32>
    %315 = math.tanh %314 : vector<2x128xf32>
    %316 = vector.extract_strided_slice %263 {offsets = [0, 128], sizes = [2, 128], strides = [1, 1]} : vector<2x256xf32> to vector<2x128xf32>
    %317 = arith.mulf %312, %316 : vector<2x128xf32>
    %318 = arith.mulf %311, %315 : vector<2x128xf32>
    %319 = arith.addf %317, %318 : vector<2x128xf32>
    %320 = math.tanh %319 : vector<2x128xf32>
    %321 = arith.mulf %313, %320 : vector<2x128xf32>
    %322 = arith.addf %295, %321 : vector<2x128xf32>
    %323 = arith.index_cast %c4_i32 : i32 to index
    %c0_83 = arith.constant 0 : index
    %c0_84 = arith.constant 0 : index
    %324 = vector.load %arg9[%323, %c0_83, %c0_84] : memref<8x2x128xf32, #tpu.memory_space<vmem>>, vector<1x2x128xf32>
    %325 = vector.shape_cast %324 : vector<1x2x128xf32> to vector<2x128xf32>
    %326 = vector.shape_cast %322 : vector<2x128xf32> to vector<1x2x128xf32>
    tpu.vector_store %arg9[%323, %c0_83, %c0_84], %326 {strides = array<i32>} : memref<8x2x128xf32, #tpu.memory_space<vmem>>, vector<1x2x128xf32>,
    %327 = tpu.concatenate %295, %321 in 1 : vector<2x128xf32>, vector<2x128xf32> -> vector<2x256xf32>
    %328 = tpu.concatenate %293, %319 in 1 : vector<2x128xf32>, vector<2x128xf32> -> vector<2x256xf32>
    %c5_i32 = arith.constant 5 : i32
    %329 = arith.index_cast %c5_i32 : i32 to index
    %c0_85 = arith.constant 0 : index
    %c0_86 = arith.constant 0 : index
    %330 = vector.load %arg0[%329, %c0_85, %c0_86] : memref<8x2x1xf32, #tpu.memory_space<vmem>>, vector<1x2x1xf32>
    %331 = vector.shape_cast %330 : vector<1x2x1xf32> to vector<2x1xf32>
    %332 = arith.truncf %327 : vector<2x256xf32> to vector<2x256xbf16>
    %c0_87 = arith.constant 0 : index
    %c0_88 = arith.constant 0 : index
    %333 = vector.load %arg3[%c0_87, %c0_88] : memref<256x1024xbf16, #tpu.memory_space<vmem>>, vector<256x1024xbf16>
    %cst_89 = arith.constant dense<0.000000e+00> : vector<2x1024xf32>
    %334 = tpu.matmul %332, %333, %cst_89 {dimension_numbers = #tpu.dot_dimension_numbers<[1], [0], [0], [1], [0, 0, 1, 1], [], []>} : vector<2x256xbf16>, vector<256x1024xbf16>, vector<2x1024xf32> -> vector<2x1024xf32>
    %335 = vector.extract_strided_slice %334 {offsets = [0, 0], sizes = [2, 512], strides = [1, 1]} : vector<2x1024xf32> to vector<2x512xf32>
    %336 = vector.broadcast %331 : vector<2x1xf32> to vector<2x512xf32>
    %337 = vector.broadcast %0 : vector<1x512xf32> to vector<2x512xf32>
    %338 = arith.mulf %336, %337 : vector<2x512xf32>
    %339 = arith.addf %335, %338 : vector<2x512xf32>
    %340 = vector.broadcast %1 : vector<1x512xf32> to vector<2x512xf32>
    %341 = arith.addf %339, %340 : vector<2x512xf32>
    %342 = vector.extract_strided_slice %341 {offsets = [0, 0], sizes = [2, 384], strides = [1, 1]} : vector<2x512xf32> to vector<2x384xf32>
    %cst_90 = arith.constant 5.000000e-01 : f32
    %343 = vector.broadcast %cst_90 : f32 to vector<2x384xf32>
    %344 = arith.mulf %343, %342 : vector<2x384xf32>
    %345 = math.tanh %344 : vector<2x384xf32>
    %cst_91 = arith.constant 5.000000e-01 : f32
    %346 = vector.broadcast %cst_91 : f32 to vector<2x384xf32>
    %347 = arith.mulf %346, %345 : vector<2x384xf32>
    %cst_92 = arith.constant 5.000000e-01 : f32
    %348 = vector.broadcast %cst_92 : f32 to vector<2x384xf32>
    %349 = arith.addf %347, %348 : vector<2x384xf32>
    %350 = vector.extract_strided_slice %349 {offsets = [0, 0], sizes = [2, 128], strides = [1, 1]} : vector<2x384xf32> to vector<2x128xf32>
    %351 = vector.extract_strided_slice %349 {offsets = [0, 128], sizes = [2, 128], strides = [1, 1]} : vector<2x384xf32> to vector<2x128xf32>
    %352 = vector.extract_strided_slice %349 {offsets = [0, 256], sizes = [2, 128], strides = [1, 1]} : vector<2x384xf32> to vector<2x128xf32>
    %353 = vector.extract_strided_slice %341 {offsets = [0, 384], sizes = [2, 128], strides = [1, 1]} : vector<2x512xf32> to vector<2x128xf32>
    %354 = math.tanh %353 : vector<2x128xf32>
    %355 = vector.extract_strided_slice %328 {offsets = [0, 0], sizes = [2, 128], strides = [1, 1]} : vector<2x256xf32> to vector<2x128xf32>
    %356 = arith.mulf %351, %355 : vector<2x128xf32>
    %357 = arith.mulf %350, %354 : vector<2x128xf32>
    %358 = arith.addf %356, %357 : vector<2x128xf32>
    %359 = math.tanh %358 : vector<2x128xf32>
    %360 = arith.mulf %352, %359 : vector<2x128xf32>
    %361 = vector.extract_strided_slice %334 {offsets = [0, 512], sizes = [2, 512], strides = [1, 1]} : vector<2x1024xf32> to vector<2x512xf32>
    %362 = arith.truncf %360 : vector<2x128xf32> to vector<2x128xbf16>
    %c0_93 = arith.constant 0 : index
    %c0_94 = arith.constant 0 : index
    %363 = vector.load %arg4[%c0_93, %c0_94] : memref<128x512xbf16, #tpu.memory_space<vmem>>, vector<128x512xbf16>
    %cst_95 = arith.constant dense<0.000000e+00> : vector<2x512xf32>
    %364 = tpu.matmul %362, %363, %cst_95 {dimension_numbers = #tpu.dot_dimension_numbers<[1], [0], [0], [1], [0, 0, 1, 1], [], []>} : vector<2x128xbf16>, vector<128x512xbf16>, vector<2x512xf32> -> vector<2x512xf32>
    %365 = arith.addf %361, %364 : vector<2x512xf32>
    %366 = vector.broadcast %2 : vector<1x512xf32> to vector<2x512xf32>
    %367 = arith.addf %365, %366 : vector<2x512xf32>
    %368 = vector.extract_strided_slice %367 {offsets = [0, 0], sizes = [2, 384], strides = [1, 1]} : vector<2x512xf32> to vector<2x384xf32>
    %cst_96 = arith.constant 5.000000e-01 : f32
    %369 = vector.broadcast %cst_96 : f32 to vector<2x384xf32>
    %370 = arith.mulf %369, %368 : vector<2x384xf32>
    %371 = math.tanh %370 : vector<2x384xf32>
    %cst_97 = arith.constant 5.000000e-01 : f32
    %372 = vector.broadcast %cst_97 : f32 to vector<2x384xf32>
    %373 = arith.mulf %372, %371 : vector<2x384xf32>
    %cst_98 = arith.constant 5.000000e-01 : f32
    %374 = vector.broadcast %cst_98 : f32 to vector<2x384xf32>
    %375 = arith.addf %373, %374 : vector<2x384xf32>
    %376 = vector.extract_strided_slice %375 {offsets = [0, 0], sizes = [2, 128], strides = [1, 1]} : vector<2x384xf32> to vector<2x128xf32>
    %377 = vector.extract_strided_slice %375 {offsets = [0, 128], sizes = [2, 128], strides = [1, 1]} : vector<2x384xf32> to vector<2x128xf32>
    %378 = vector.extract_strided_slice %375 {offsets = [0, 256], sizes = [2, 128], strides = [1, 1]} : vector<2x384xf32> to vector<2x128xf32>
    %379 = vector.extract_strided_slice %367 {offsets = [0, 384], sizes = [2, 128], strides = [1, 1]} : vector<2x512xf32> to vector<2x128xf32>
    %380 = math.tanh %379 : vector<2x128xf32>
    %381 = vector.extract_strided_slice %328 {offsets = [0, 128], sizes = [2, 128], strides = [1, 1]} : vector<2x256xf32> to vector<2x128xf32>
    %382 = arith.mulf %377, %381 : vector<2x128xf32>
    %383 = arith.mulf %376, %380 : vector<2x128xf32>
    %384 = arith.addf %382, %383 : vector<2x128xf32>
    %385 = math.tanh %384 : vector<2x128xf32>
    %386 = arith.mulf %378, %385 : vector<2x128xf32>
    %387 = arith.addf %360, %386 : vector<2x128xf32>
    %388 = arith.index_cast %c5_i32 : i32 to index
    %c0_99 = arith.constant 0 : index
    %c0_100 = arith.constant 0 : index
    %389 = vector.load %arg9[%388, %c0_99, %c0_100] : memref<8x2x128xf32, #tpu.memory_space<vmem>>, vector<1x2x128xf32>
    %390 = vector.shape_cast %389 : vector<1x2x128xf32> to vector<2x128xf32>
    %391 = vector.shape_cast %387 : vector<2x128xf32> to vector<1x2x128xf32>
    tpu.vector_store %arg9[%388, %c0_99, %c0_100], %391 {strides = array<i32>} : memref<8x2x128xf32, #tpu.memory_space<vmem>>, vector<1x2x128xf32>,
    %392 = tpu.concatenate %360, %386 in 1 : vector<2x128xf32>, vector<2x128xf32> -> vector<2x256xf32>
    %393 = tpu.concatenate %358, %384 in 1 : vector<2x128xf32>, vector<2x128xf32> -> vector<2x256xf32>
    %c6_i32 = arith.constant 6 : i32
    %394 = arith.index_cast %c6_i32 : i32 to index
    %c0_101 = arith.constant 0 : index
    %c0_102 = arith.constant 0 : index
    %395 = vector.load %arg0[%394, %c0_101, %c0_102] : memref<8x2x1xf32, #tpu.memory_space<vmem>>, vector<1x2x1xf32>
    %396 = vector.shape_cast %395 : vector<1x2x1xf32> to vector<2x1xf32>
    %397 = arith.truncf %392 : vector<2x256xf32> to vector<2x256xbf16>
    %c0_103 = arith.constant 0 : index
    %c0_104 = arith.constant 0 : index
    %398 = vector.load %arg3[%c0_103, %c0_104] : memref<256x1024xbf16, #tpu.memory_space<vmem>>, vector<256x1024xbf16>
    %cst_105 = arith.constant dense<0.000000e+00> : vector<2x1024xf32>
    %399 = tpu.matmul %397, %398, %cst_105 {dimension_numbers = #tpu.dot_dimension_numbers<[1], [0], [0], [1], [0, 0, 1, 1], [], []>} : vector<2x256xbf16>, vector<256x1024xbf16>, vector<2x1024xf32> -> vector<2x1024xf32>
    %400 = vector.extract_strided_slice %399 {offsets = [0, 0], sizes = [2, 512], strides = [1, 1]} : vector<2x1024xf32> to vector<2x512xf32>
    %401 = vector.broadcast %396 : vector<2x1xf32> to vector<2x512xf32>
    %402 = vector.broadcast %0 : vector<1x512xf32> to vector<2x512xf32>
    %403 = arith.mulf %401, %402 : vector<2x512xf32>
    %404 = arith.addf %400, %403 : vector<2x512xf32>
    %405 = vector.broadcast %1 : vector<1x512xf32> to vector<2x512xf32>
    %406 = arith.addf %404, %405 : vector<2x512xf32>
    %407 = vector.extract_strided_slice %406 {offsets = [0, 0], sizes = [2, 384], strides = [1, 1]} : vector<2x512xf32> to vector<2x384xf32>
    %cst_106 = arith.constant 5.000000e-01 : f32
    %408 = vector.broadcast %cst_106 : f32 to vector<2x384xf32>
    %409 = arith.mulf %408, %407 : vector<2x384xf32>
    %410 = math.tanh %409 : vector<2x384xf32>
    %cst_107 = arith.constant 5.000000e-01 : f32
    %411 = vector.broadcast %cst_107 : f32 to vector<2x384xf32>
    %412 = arith.mulf %411, %410 : vector<2x384xf32>
    %cst_108 = arith.constant 5.000000e-01 : f32
    %413 = vector.broadcast %cst_108 : f32 to vector<2x384xf32>
    %414 = arith.addf %412, %413 : vector<2x384xf32>
    %415 = vector.extract_strided_slice %414 {offsets = [0, 0], sizes = [2, 128], strides = [1, 1]} : vector<2x384xf32> to vector<2x128xf32>
    %416 = vector.extract_strided_slice %414 {offsets = [0, 128], sizes = [2, 128], strides = [1, 1]} : vector<2x384xf32> to vector<2x128xf32>
    %417 = vector.extract_strided_slice %414 {offsets = [0, 256], sizes = [2, 128], strides = [1, 1]} : vector<2x384xf32> to vector<2x128xf32>
    %418 = vector.extract_strided_slice %406 {offsets = [0, 384], sizes = [2, 128], strides = [1, 1]} : vector<2x512xf32> to vector<2x128xf32>
    %419 = math.tanh %418 : vector<2x128xf32>
    %420 = vector.extract_strided_slice %393 {offsets = [0, 0], sizes = [2, 128], strides = [1, 1]} : vector<2x256xf32> to vector<2x128xf32>
    %421 = arith.mulf %416, %420 : vector<2x128xf32>
    %422 = arith.mulf %415, %419 : vector<2x128xf32>
    %423 = arith.addf %421, %422 : vector<2x128xf32>
    %424 = math.tanh %423 : vector<2x128xf32>
    %425 = arith.mulf %417, %424 : vector<2x128xf32>
    %426 = vector.extract_strided_slice %399 {offsets = [0, 512], sizes = [2, 512], strides = [1, 1]} : vector<2x1024xf32> to vector<2x512xf32>
    %427 = arith.truncf %425 : vector<2x128xf32> to vector<2x128xbf16>
    %c0_109 = arith.constant 0 : index
    %c0_110 = arith.constant 0 : index
    %428 = vector.load %arg4[%c0_109, %c0_110] : memref<128x512xbf16, #tpu.memory_space<vmem>>, vector<128x512xbf16>
    %cst_111 = arith.constant dense<0.000000e+00> : vector<2x512xf32>
    %429 = tpu.matmul %427, %428, %cst_111 {dimension_numbers = #tpu.dot_dimension_numbers<[1], [0], [0], [1], [0, 0, 1, 1], [], []>} : vector<2x128xbf16>, vector<128x512xbf16>, vector<2x512xf32> -> vector<2x512xf32>
    %430 = arith.addf %426, %429 : vector<2x512xf32>
    %431 = vector.broadcast %2 : vector<1x512xf32> to vector<2x512xf32>
    %432 = arith.addf %430, %431 : vector<2x512xf32>
    %433 = vector.extract_strided_slice %432 {offsets = [0, 0], sizes = [2, 384], strides = [1, 1]} : vector<2x512xf32> to vector<2x384xf32>
    %cst_112 = arith.constant 5.000000e-01 : f32
    %434 = vector.broadcast %cst_112 : f32 to vector<2x384xf32>
    %435 = arith.mulf %434, %433 : vector<2x384xf32>
    %436 = math.tanh %435 : vector<2x384xf32>
    %cst_113 = arith.constant 5.000000e-01 : f32
    %437 = vector.broadcast %cst_113 : f32 to vector<2x384xf32>
    %438 = arith.mulf %437, %436 : vector<2x384xf32>
    %cst_114 = arith.constant 5.000000e-01 : f32
    %439 = vector.broadcast %cst_114 : f32 to vector<2x384xf32>
    %440 = arith.addf %438, %439 : vector<2x384xf32>
    %441 = vector.extract_strided_slice %440 {offsets = [0, 0], sizes = [2, 128], strides = [1, 1]} : vector<2x384xf32> to vector<2x128xf32>
    %442 = vector.extract_strided_slice %440 {offsets = [0, 128], sizes = [2, 128], strides = [1, 1]} : vector<2x384xf32> to vector<2x128xf32>
    %443 = vector.extract_strided_slice %440 {offsets = [0, 256], sizes = [2, 128], strides = [1, 1]} : vector<2x384xf32> to vector<2x128xf32>
    %444 = vector.extract_strided_slice %432 {offsets = [0, 384], sizes = [2, 128], strides = [1, 1]} : vector<2x512xf32> to vector<2x128xf32>
    %445 = math.tanh %444 : vector<2x128xf32>
    %446 = vector.extract_strided_slice %393 {offsets = [0, 128], sizes = [2, 128], strides = [1, 1]} : vector<2x256xf32> to vector<2x128xf32>
    %447 = arith.mulf %442, %446 : vector<2x128xf32>
    %448 = arith.mulf %441, %445 : vector<2x128xf32>
    %449 = arith.addf %447, %448 : vector<2x128xf32>
    %450 = math.tanh %449 : vector<2x128xf32>
    %451 = arith.mulf %443, %450 : vector<2x128xf32>
    %452 = arith.addf %425, %451 : vector<2x128xf32>
    %453 = arith.index_cast %c6_i32 : i32 to index
    %c0_115 = arith.constant 0 : index
    %c0_116 = arith.constant 0 : index
    %454 = vector.load %arg9[%453, %c0_115, %c0_116] : memref<8x2x128xf32, #tpu.memory_space<vmem>>, vector<1x2x128xf32>
    %455 = vector.shape_cast %454 : vector<1x2x128xf32> to vector<2x128xf32>
    %456 = vector.shape_cast %452 : vector<2x128xf32> to vector<1x2x128xf32>
    tpu.vector_store %arg9[%453, %c0_115, %c0_116], %456 {strides = array<i32>} : memref<8x2x128xf32, #tpu.memory_space<vmem>>, vector<1x2x128xf32>,
    %457 = tpu.concatenate %425, %451 in 1 : vector<2x128xf32>, vector<2x128xf32> -> vector<2x256xf32>
    %458 = tpu.concatenate %423, %449 in 1 : vector<2x128xf32>, vector<2x128xf32> -> vector<2x256xf32>
    %c7_i32 = arith.constant 7 : i32
    %459 = arith.index_cast %c7_i32 : i32 to index
    %c0_117 = arith.constant 0 : index
    %c0_118 = arith.constant 0 : index
    %460 = vector.load %arg0[%459, %c0_117, %c0_118] : memref<8x2x1xf32, #tpu.memory_space<vmem>>, vector<1x2x1xf32>
    %461 = vector.shape_cast %460 : vector<1x2x1xf32> to vector<2x1xf32>
    %462 = arith.truncf %457 : vector<2x256xf32> to vector<2x256xbf16>
    %c0_119 = arith.constant 0 : index
    %c0_120 = arith.constant 0 : index
    %463 = vector.load %arg3[%c0_119, %c0_120] : memref<256x1024xbf16, #tpu.memory_space<vmem>>, vector<256x1024xbf16>
    %cst_121 = arith.constant dense<0.000000e+00> : vector<2x1024xf32>
    %464 = tpu.matmul %462, %463, %cst_121 {dimension_numbers = #tpu.dot_dimension_numbers<[1], [0], [0], [1], [0, 0, 1, 1], [], []>} : vector<2x256xbf16>, vector<256x1024xbf16>, vector<2x1024xf32> -> vector<2x1024xf32>
    %465 = vector.extract_strided_slice %464 {offsets = [0, 0], sizes = [2, 512], strides = [1, 1]} : vector<2x1024xf32> to vector<2x512xf32>
    %466 = vector.broadcast %461 : vector<2x1xf32> to vector<2x512xf32>
    %467 = vector.broadcast %0 : vector<1x512xf32> to vector<2x512xf32>
    %468 = arith.mulf %466, %467 : vector<2x512xf32>
    %469 = arith.addf %465, %468 : vector<2x512xf32>
    %470 = vector.broadcast %1 : vector<1x512xf32> to vector<2x512xf32>
    %471 = arith.addf %469, %470 : vector<2x512xf32>
    %472 = vector.extract_strided_slice %471 {offsets = [0, 0], sizes = [2, 384], strides = [1, 1]} : vector<2x512xf32> to vector<2x384xf32>
    %cst_122 = arith.constant 5.000000e-01 : f32
    %473 = vector.broadcast %cst_122 : f32 to vector<2x384xf32>
    %474 = arith.mulf %473, %472 : vector<2x384xf32>
    %475 = math.tanh %474 : vector<2x384xf32>
    %cst_123 = arith.constant 5.000000e-01 : f32
    %476 = vector.broadcast %cst_123 : f32 to vector<2x384xf32>
    %477 = arith.mulf %476, %475 : vector<2x384xf32>
    %cst_124 = arith.constant 5.000000e-01 : f32
    %478 = vector.broadcast %cst_124 : f32 to vector<2x384xf32>
    %479 = arith.addf %477, %478 : vector<2x384xf32>
    %480 = vector.extract_strided_slice %479 {offsets = [0, 0], sizes = [2, 128], strides = [1, 1]} : vector<2x384xf32> to vector<2x128xf32>
    %481 = vector.extract_strided_slice %479 {offsets = [0, 128], sizes = [2, 128], strides = [1, 1]} : vector<2x384xf32> to vector<2x128xf32>
    %482 = vector.extract_strided_slice %479 {offsets = [0, 256], sizes = [2, 128], strides = [1, 1]} : vector<2x384xf32> to vector<2x128xf32>
    %483 = vector.extract_strided_slice %471 {offsets = [0, 384], sizes = [2, 128], strides = [1, 1]} : vector<2x512xf32> to vector<2x128xf32>
    %484 = math.tanh %483 : vector<2x128xf32>
    %485 = vector.extract_strided_slice %458 {offsets = [0, 0], sizes = [2, 128], strides = [1, 1]} : vector<2x256xf32> to vector<2x128xf32>
    %486 = arith.mulf %481, %485 : vector<2x128xf32>
    %487 = arith.mulf %480, %484 : vector<2x128xf32>
    %488 = arith.addf %486, %487 : vector<2x128xf32>
    %489 = math.tanh %488 : vector<2x128xf32>
    %490 = arith.mulf %482, %489 : vector<2x128xf32>
    %491 = vector.extract_strided_slice %464 {offsets = [0, 512], sizes = [2, 512], strides = [1, 1]} : vector<2x1024xf32> to vector<2x512xf32>
    %492 = arith.truncf %490 : vector<2x128xf32> to vector<2x128xbf16>
    %c0_125 = arith.constant 0 : index
    %c0_126 = arith.constant 0 : index
    %493 = vector.load %arg4[%c0_125, %c0_126] : memref<128x512xbf16, #tpu.memory_space<vmem>>, vector<128x512xbf16>
    %cst_127 = arith.constant dense<0.000000e+00> : vector<2x512xf32>
    %494 = tpu.matmul %492, %493, %cst_127 {dimension_numbers = #tpu.dot_dimension_numbers<[1], [0], [0], [1], [0, 0, 1, 1], [], []>} : vector<2x128xbf16>, vector<128x512xbf16>, vector<2x512xf32> -> vector<2x512xf32>
    %495 = arith.addf %491, %494 : vector<2x512xf32>
    %496 = vector.broadcast %2 : vector<1x512xf32> to vector<2x512xf32>
    %497 = arith.addf %495, %496 : vector<2x512xf32>
    %498 = vector.extract_strided_slice %497 {offsets = [0, 0], sizes = [2, 384], strides = [1, 1]} : vector<2x512xf32> to vector<2x384xf32>
    %cst_128 = arith.constant 5.000000e-01 : f32
    %499 = vector.broadcast %cst_128 : f32 to vector<2x384xf32>
    %500 = arith.mulf %499, %498 : vector<2x384xf32>
    %501 = math.tanh %500 : vector<2x384xf32>
    %cst_129 = arith.constant 5.000000e-01 : f32
    %502 = vector.broadcast %cst_129 : f32 to vector<2x384xf32>
    %503 = arith.mulf %502, %501 : vector<2x384xf32>
    %cst_130 = arith.constant 5.000000e-01 : f32
    %504 = vector.broadcast %cst_130 : f32 to vector<2x384xf32>
    %505 = arith.addf %503, %504 : vector<2x384xf32>
    %506 = vector.extract_strided_slice %505 {offsets = [0, 0], sizes = [2, 128], strides = [1, 1]} : vector<2x384xf32> to vector<2x128xf32>
    %507 = vector.extract_strided_slice %505 {offsets = [0, 128], sizes = [2, 128], strides = [1, 1]} : vector<2x384xf32> to vector<2x128xf32>
    %508 = vector.extract_strided_slice %505 {offsets = [0, 256], sizes = [2, 128], strides = [1, 1]} : vector<2x384xf32> to vector<2x128xf32>
    %509 = vector.extract_strided_slice %497 {offsets = [0, 384], sizes = [2, 128], strides = [1, 1]} : vector<2x512xf32> to vector<2x128xf32>
    %510 = math.tanh %509 : vector<2x128xf32>
    %511 = vector.extract_strided_slice %458 {offsets = [0, 128], sizes = [2, 128], strides = [1, 1]} : vector<2x256xf32> to vector<2x128xf32>
    %512 = arith.mulf %507, %511 : vector<2x128xf32>
    %513 = arith.mulf %506, %510 : vector<2x128xf32>
    %514 = arith.addf %512, %513 : vector<2x128xf32>
    %515 = math.tanh %514 : vector<2x128xf32>
    %516 = arith.mulf %508, %515 : vector<2x128xf32>
    %517 = arith.addf %490, %516 : vector<2x128xf32>
    %518 = arith.index_cast %c7_i32 : i32 to index
    %c0_131 = arith.constant 0 : index
    %c0_132 = arith.constant 0 : index
    %519 = vector.load %arg9[%518, %c0_131, %c0_132] : memref<8x2x128xf32, #tpu.memory_space<vmem>>, vector<1x2x128xf32>
    %520 = vector.shape_cast %519 : vector<1x2x128xf32> to vector<2x128xf32>
    %521 = vector.shape_cast %517 : vector<2x128xf32> to vector<1x2x128xf32>
    tpu.vector_store %arg9[%518, %c0_131, %c0_132], %521 {strides = array<i32>} : memref<8x2x128xf32, #tpu.memory_space<vmem>>, vector<1x2x128xf32>,
    %522 = tpu.concatenate %490, %516 in 1 : vector<2x128xf32>, vector<2x128xf32> -> vector<2x256xf32>
    %523 = tpu.concatenate %488, %514 in 1 : vector<2x128xf32>, vector<2x128xf32> -> vector<2x256xf32>
    %c8_i32 = arith.constant 8 : i32
    %c0_133 = arith.constant 0 : index
    %c0_134 = arith.constant 0 : index
    %c0_135 = arith.constant 0 : index
    %524 = vector.load %arg9[%c0_133, %c0_134, %c0_135] : memref<8x2x128xf32, #tpu.memory_space<vmem>>, vector<8x2x128xf32>
    %c0_136 = arith.constant 0 : index
    %c0_137 = arith.constant 0 : index
    %c0_138 = arith.constant 0 : index
    %525 = vector.load %arg6[%c0_136, %c0_137, %c0_138] : memref<1x1x128xf32, #tpu.memory_space<vmem>>, vector<1x1x128xf32>
    %526 = vector.broadcast %525 : vector<1x1x128xf32> to vector<8x2x128xf32>
    %527 = arith.mulf %524, %526 : vector<8x2x128xf32>
    %cst_139 = arith.constant dense<0.000000e+00> : vector<8x2xf32>
    %528 = vector.multi_reduction <add>, %527, %cst_139 [2] : vector<8x2x128xf32> to vector<8x2xf32>
    %c0_140 = arith.constant 0 : index
    %c0_141 = arith.constant 0 : index
    %529 = vector.load %arg7[%c0_140, %c0_141] : memref<1x1xf32, #tpu.memory_space<vmem>>, vector<1x1xf32>
    %530 = vector.broadcast %529 : vector<1x1xf32> to vector<8x2xf32>
    %531 = arith.addf %528, %530 : vector<8x2xf32>
    %c0_142 = arith.constant 0 : index
    %c0_143 = arith.constant 0 : index
    %532 = vector.load %arg8[%c0_142, %c0_143] : memref<8x2xf32, #tpu.memory_space<vmem>>, vector<8x2xf32>
    tpu.vector_store %arg8[%c0_142, %c0_143], %531 {strides = array<i32>} : memref<8x2xf32, #tpu.memory_space<vmem>>, vector<8x2xf32>,
    return
  }
}

</mosaic_0001>

<llo_original>
// kernel: res_lstms_forward.1
$region0: #{res_lstms_forward.1}
  #allocation0 [shape = 'u32[]', space=smem, size = 0x4, offset = 0x4, fixed_abs, tag = 'smem constant byte address 0x4 - core index']
  #allocation1 [shape = 'u32[144,128]{1,0:T(1,128)}', space=vmem, size = 0x12000, scoped, tag = 'internal scratch']
  #allocation2 [shape = 'f32[8,2,128]{2,1,0:T(2,128)}', space=vmem, size = 0x2000, scoped, tag = 'scratch operand']
  #allocation3 [shape = 'f32[1,1]{1,0:T(1,128)S(1)}', space=vmem, size = 0x200, scoped, tag = 'scoped memory for res_lstms_forward.1']
  %s0 = inlined_call_operand.vmem [shape: f32[8,2,1], index: 0, kind: input, shape index: {}]
  %s1 = inlined_call_operand.vmem [shape: f32[1,512], index: 1, kind: input, shape index: {}]
  %s2 = inlined_call_operand.vmem [shape: f32[1,512], index: 2, kind: input, shape index: {}]
  %s3 = inlined_call_operand.vmem [shape: bf16[256,1024], index: 3, kind: input, shape index: {}]
  %s4 = inlined_call_operand.vmem [shape: bf16[128,512], index: 4, kind: input, shape index: {}]
  %s5 = inlined_call_operand.vmem [shape: f32[1,512], index: 5, kind: input, shape index: {}]
  %s6 = inlined_call_operand.vmem [shape: f32[1,1,128], index: 6, kind: input, shape index: {}]
  %s7 = inlined_call_operand.<no memory space> [shape: f32[1,1], index: 7, kind: input, shape index: {}]
  %s8 = inlined_call_operand.vmem [shape: f32[8,2], index: 8, kind: output, shape index: {}]
  %s9 = sld [smem:[#allocation0]]
  $region42: #{res_lstms_forward.1} parent=0
    _
  %s11 = ssub.s32 1, %s9
  %s12 = scalar_select 0, %s11, %s9
  %v13 = vstv %s7
  %14 = vst [vmem:[#allocation3] sm:$0x1] %v13
  // Predicated region
  $region2: #{res_lstms_forward.1} parent=0 // pred_check
    _
  $region3: #{res_lstms_forward.1} parent=0 // pred_check_branch
    %16 = sbr.rel (0) target = $region5
  $region4: #{res_lstms_forward.1} parent=0 // pred_region
    _
  $region5: #{res_lstms_forward.1} parent=0 // pred_fallthru
    _
  // Predicated region
  $region6: #{res_lstms_forward.1} parent=0 // pred_check
    _
  $region7: #{res_lstms_forward.1} parent=0 // pred_check_branch
    %18 = sbr.rel (0) target = $region9
  $region8: #{res_lstms_forward.1} parent=0 // pred_region
    _
  $region9: #{res_lstms_forward.1} parent=0 // pred_fallthru
    _
  // Predicated region
  $region10: #{res_lstms_forward.1} parent=0 // pred_check
    _
  $region11: #{res_lstms_forward.1} parent=0 // pred_check_branch
    %20 = sbr.rel (0) target = $region13
  $region12: #{res_lstms_forward.1} parent=0 // pred_region
    _
  $region13: #{res_lstms_forward.1} parent=0 // pred_fallthru
    _
  // Predicated region
  $region14: #{res_lstms_forward.1} parent=0 // pred_check
    _
  $region15: #{res_lstms_forward.1} parent=0 // pred_check_branch
    %22 = sbr.rel (0) target = $region17
  $region16: #{res_lstms_forward.1} parent=0 // pred_region
    _
  $region17: #{res_lstms_forward.1} parent=0 // pred_fallthru
    _
  // Predicated region
  $region18: #{res_lstms_forward.1} parent=0 // pred_check
    _
  $region19: #{res_lstms_forward.1} parent=0 // pred_check_branch
    %24 = sbr.rel (0) target = $region21
  $region20: #{res_lstms_forward.1} parent=0 // pred_region
    _
  $region21: #{res_lstms_forward.1} parent=0 // pred_fallthru
    _
  // Predicated region
  $region22: #{res_lstms_forward.1} parent=0 // pred_check
    _
  $region23: #{res_lstms_forward.1} parent=0 // pred_check_branch
    %26 = sbr.rel (0) target = $region25
  $region24: #{res_lstms_forward.1} parent=0 // pred_region
    _
  $region25: #{res_lstms_forward.1} parent=0 // pred_fallthru
    _
  // Predicated region
  $region26: #{res_lstms_forward.1} parent=0 // pred_check
    _
  $region27: #{res_lstms_forward.1} parent=0 // pred_check_branch
    %28 = sbr.rel (0) target = $region29
  $region28: #{res_lstms_forward.1} parent=0 // pred_region
    _
  $region29: #{res_lstms_forward.1} parent=0 // pred_fallthru
    _
  // Predicated region
  $region30: #{res_lstms_forward.1} parent=0 // pred_check
    _
  $region31: #{res_lstms_forward.1} parent=0 // pred_check_branch
    %30 = sbr.rel (0) target = $region33
  $region32: #{res_lstms_forward.1} parent=0 // pred_region
    _
  $region33: #{res_lstms_forward.1} parent=0 // pred_fallthru
    _
  %v32 = vld [vmem:[%s1] sm:$0xf]
  %v33 = vld [vmem:[%s2] sm:$0xf]
  %v34 = vld [vmem:[%s5] sm:$0xf]
  %v35 = vld [vmem:[%s0] sm:$0x3]
  %v36 = vld [vmem:[%s3] sm:$0xff]
  %v37 = vld [vmem:[%s3 + $0x8] sm:$0xff]
  %v38 = vld [vmem:[%s3 + $0x10] sm:$0xff]
  %v39 = vld [vmem:[%s3 + $0x18] sm:$0xff]
  %v40 = vld [vmem:[%s3 + $0x20] sm:$0xff]
  %v41 = vld [vmem:[%s3 + $0x28] sm:$0xff]
  %v42 = vld [vmem:[%s3 + $0x30] sm:$0xff]
  %v43 = vld [vmem:[%s3 + $0x38] sm:$0xff]
  %v44 = vld [vmem:[%s3 + $0x40] sm:$0xff]
  %v45 = vld [vmem:[%s3 + $0x48] sm:$0xff]
  %v46 = vld [vmem:[%s3 + $0x50] sm:$0xff]
  %v47 = vld [vmem:[%s3 + $0x58] sm:$0xff]
  %v48 = vld [vmem:[%s3 + $0x60] sm:$0xff]
  %v49 = vld [vmem:[%s3 + $0x68] sm:$0xff]
  %v50 = vld [vmem:[%s3 + $0x70] sm:$0xff]
  %v51 = vld [vmem:[%s3 + $0x78] sm:$0xff]
  %v52 = vld [vmem:[%s3 + $0x80] sm:$0xff]
  %v53 = vld [vmem:[%s3 + $0x88] sm:$0xff]
  %v54 = vld [vmem:[%s3 + $0x90] sm:$0xff]
  %v55 = vld [vmem:[%s3 + $0x98] sm:$0xff]
  %v56 = vld [vmem:[%s3 + $0xa0] sm:$0xff]
  %v57 = vld [vmem:[%s3 + $0xa8] sm:$0xff]
  %v58 = vld [vmem:[%s3 + $0xb0] sm:$0xff]
  %v59 = vld [vmem:[%s3 + $0xb8] sm:$0xff]
  %v60 = vld [vmem:[%s3 + $0xc0] sm:$0xff]
  %v61 = vld [vmem:[%s3 + $0xc8] sm:$0xff]
  %v62 = vld [vmem:[%s3 + $0xd0] sm:$0xff]
  %v63 = vld [vmem:[%s3 + $0xd8] sm:$0xff]
  %v64 = vld [vmem:[%s3 + $0xe0] sm:$0xff]
  %v65 = vld [vmem:[%s3 + $0xe8] sm:$0xff]
  %v66 = vld [vmem:[%s3 + $0xf0] sm:$0xff]
  %v67 = vld [vmem:[%s3 + $0xf8] sm:$0xff]
  %v68 = vld [vmem:[%s3 + $0x100] sm:$0xff]
  %v69 = vld [vmem:[%s3 + $0x108] sm:$0xff]
  %v70 = vld [vmem:[%s3 + $0x110] sm:$0xff]
  %v71 = vld [vmem:[%s3 + $0x118] sm:$0xff]
  %v72 = vld [vmem:[%s3 + $0x120] sm:$0xff]
  %v73 = vld [vmem:[%s3 + $0x128] sm:$0xff]
  %v74 = vld [vmem:[%s3 + $0x130] sm:$0xff]
  %v75 = vld [vmem:[%s3 + $0x138] sm:$0xff]
  %v76 = vld [vmem:[%s3 + $0x140] sm:$0xff]
  %v77 = vld [vmem:[%s3 + $0x148] sm:$0xff]
  %v78 = vld [vmem:[%s3 + $0x150] sm:$0xff]
  %v79 = vld [vmem:[%s3 + $0x158] sm:$0xff]
  %v80 = vld [vmem:[%s3 + $0x160] sm:$0xff]
  %v81 = vld [vmem:[%s3 + $0x168] sm:$0xff]
  %v82 = vld [vmem:[%s3 + $0x170] sm:$0xff]
  %v83 = vld [vmem:[%s3 + $0x178] sm:$0xff]
  %v84 = vld [vmem:[%s3 + $0x180] sm:$0xff]
  %v85 = vld [vmem:[%s3 + $0x188] sm:$0xff]
  %v86 = vld [vmem:[%s3 + $0x190] sm:$0xff]
  %v87 = vld [vmem:[%s3 + $0x198] sm:$0xff]
  %v88 = vld [vmem:[%s3 + $0x1a0] sm:$0xff]
  %v89 = vld [vmem:[%s3 + $0x1a8] sm:$0xff]
  %v90 = vld [vmem:[%s3 + $0x1b0] sm:$0xff]
  %v91 = vld [vmem:[%s3 + $0x1b8] sm:$0xff]
  %v92 = vld [vmem:[%s3 + $0x1c0] sm:$0xff]
  %v93 = vld [vmem:[%s3 + $0x1c8] sm:$0xff]
  %v94 = vld [vmem:[%s3 + $0x1d0] sm:$0xff]
  %v95 = vld [vmem:[%s3 + $0x1d8] sm:$0xff]
  %v96 = vld [vmem:[%s3 + $0x1e0] sm:$0xff]
  %v97 = vld [vmem:[%s3 + $0x1e8] sm:$0xff]
  %v98 = vld [vmem:[%s3 + $0x1f0] sm:$0xff]
  %v99 = vld [vmem:[%s3 + $0x1f8] sm:$0xff]
  %v100 = vld [vmem:[%s3 + $0x200] sm:$0xff]
  %v101 = vld [vmem:[%s3 + $0x208] sm:$0xff]
  %v102 = vld [vmem:[%s3 + $0x210] sm:$0xff]
  %v103 = vld [vmem:[%s3 + $0x218] sm:$0xff]
  %v104 = vld [vmem:[%s3 + $0x220] sm:$0xff]
  %v105 = vld [vmem:[%s3 + $0x228] sm:$0xff]
  %v106 = vld [vmem:[%s3 + $0x230] sm:$0xff]
  %v107 = vld [vmem:[%s3 + $0x238] sm:$0xff]
  %v108 = vld [vmem:[%s3 + $0x240] sm:$0xff]
  %v109 = vld [vmem:[%s3 + $0x248] sm:$0xff]
  %v110 = vld [vmem:[%s3 + $0x250] sm:$0xff]
  %v111 = vld [vmem:[%s3 + $0x258] sm:$0xff]
  %v112 = vld [vmem:[%s3 + $0x260] sm:$0xff]
  %v113 = vld [vmem:[%s3 + $0x268] sm:$0xff]
  %v114 = vld [vmem:[%s3 + $0x270] sm:$0xff]
  %v115 = vld [vmem:[%s3 + $0x278] sm:$0xff]
  %v116 = vld [vmem:[%s3 + $0x280] sm:$0xff]
  %v117 = vld [vmem:[%s3 + $0x288] sm:$0xff]
  %v118 = vld [vmem:[%s3 + $0x290] sm:$0xff]
  %v119 = vld [vmem:[%s3 + $0x298] sm:$0xff]
  %v120 = vld [vmem:[%s3 + $0x2a0] sm:$0xff]
  %v121 = vld [vmem:[%s3 + $0x2a8] sm:$0xff]
  %v122 = vld [vmem:[%s3 + $0x2b0] sm:$0xff]
  %v123 = vld [vmem:[%s3 + $0x2b8] sm:$0xff]
  %v124 = vld [vmem:[%s3 + $0x2c0] sm:$0xff]
  %v125 = vld [vmem:[%s3 + $0x2c8] sm:$0xff]
  %v126 = vld [vmem:[%s3 + $0x2d0] sm:$0xff]
  %v127 = vld [vmem:[%s3 + $0x2d8] sm:$0xff]
  %v128 = vld [vmem:[%s3 + $0x2e0] sm:$0xff]
  %v129 = vld [vmem:[%s3 + $0x2e8] sm:$0xff]
  %v130 = vld [vmem:[%s3 + $0x2f0] sm:$0xff]
  %v131 = vld [vmem:[%s3 + $0x2f8] sm:$0xff]
  %v132 = vld [vmem:[%s3 + $0x300] sm:$0xff]
  %v133 = vld [vmem:[%s3 + $0x308] sm:$0xff]
  %v134 = vld [vmem:[%s3 + $0x310] sm:$0xff]
  %v135 = vld [vmem:[%s3 + $0x318] sm:$0xff]
  %v136 = vld [vmem:[%s3 + $0x320] sm:$0xff]
  %v137 = vld [vmem:[%s3 + $0x328] sm:$0xff]
  %v138 = vld [vmem:[%s3 + $0x330] sm:$0xff]
  %v139 = vld [vmem:[%s3 + $0x338] sm:$0xff]
  %v140 = vld [vmem:[%s3 + $0x340] sm:$0xff]
  %v141 = vld [vmem:[%s3 + $0x348] sm:$0xff]
  %v142 = vld [vmem:[%s3 + $0x350] sm:$0xff]
  %v143 = vld [vmem:[%s3 + $0x358] sm:$0xff]
  %v144 = vld [vmem:[%s3 + $0x360] sm:$0xff]
  %v145 = vld [vmem:[%s3 + $0x368] sm:$0xff]
  %v146 = vld [vmem:[%s3 + $0x370] sm:$0xff]
  %v147 = vld [vmem:[%s3 + $0x378] sm:$0xff]
  %v148 = vld [vmem:[%s3 + $0x380] sm:$0xff]
  %v149 = vld [vmem:[%s3 + $0x388] sm:$0xff]
  %v150 = vld [vmem:[%s3 + $0x390] sm:$0xff]
  %v151 = vld [vmem:[%s3 + $0x398] sm:$0xff]
  %v152 = vld [vmem:[%s3 + $0x3a0] sm:$0xff]
  %v153 = vld [vmem:[%s3 + $0x3a8] sm:$0xff]
  %v154 = vld [vmem:[%s3 + $0x3b0] sm:$0xff]
  %v155 = vld [vmem:[%s3 + $0x3b8] sm:$0xff]
  %v156 = vld [vmem:[%s3 + $0x3c0] sm:$0xff]
  %v157 = vld [vmem:[%s3 + $0x3c8] sm:$0xff]
  %v158 = vld [vmem:[%s3 + $0x3d0] sm:$0xff]
  %v159 = vld [vmem:[%s3 + $0x3d8] sm:$0xff]
  %v160 = vld [vmem:[%s3 + $0x3e0] sm:$0xff]
  %v161 = vld [vmem:[%s3 + $0x3e8] sm:$0xff]
  %v162 = vld [vmem:[%s3 + $0x3f0] sm:$0xff]
  %v163 = vld [vmem:[%s3 + $0x3f8] sm:$0xff]
  %v292 = vunpack.c.l.b16 %v36
  %v293 = vunpack.c.h.b16 %v36
  %v294 = vunpack.c.l.b16 %v37
  %v295 = vunpack.c.h.b16 %v37
  %v296 = vunpack.c.l.b16 %v38
  %v297 = vunpack.c.h.b16 %v38
  %v298 = vunpack.c.l.b16 %v39
  %v299 = vunpack.c.h.b16 %v39
  %v300 = vunpack.c.l.b16 %v40
  %v301 = vunpack.c.h.b16 %v40
  %v302 = vunpack.c.l.b16 %v41
  %v303 = vunpack.c.h.b16 %v41
  %v304 = vunpack.c.l.b16 %v42
  %v305 = vunpack.c.h.b16 %v42
  %v306 = vunpack.c.l.b16 %v43
  %v307 = vunpack.c.h.b16 %v43
  %v308 = vunpack.c.l.b16 %v44
  %v309 = vunpack.c.h.b16 %v44
  %v310 = vunpack.c.l.b16 %v45
  %v311 = vunpack.c.h.b16 %v45
  %v312 = vunpack.c.l.b16 %v46
  %v313 = vunpack.c.h.b16 %v46
  %v314 = vunpack.c.l.b16 %v47
  %v315 = vunpack.c.h.b16 %v47
  %v316 = vunpack.c.l.b16 %v48
  %v317 = vunpack.c.h.b16 %v48
  %v318 = vunpack.c.l.b16 %v49
  %v319 = vunpack.c.h.b16 %v49
  %v320 = vunpack.c.l.b16 %v50
  %v321 = vunpack.c.h.b16 %v50
  %v322 = vunpack.c.l.b16 %v51
  %v323 = vunpack.c.h.b16 %v51
  %v324 = vunpack.c.l.b16 %v52
  %v325 = vunpack.c.h.b16 %v52
  %v326 = vunpack.c.l.b16 %v53
  %v327 = vunpack.c.h.b16 %v53
  %v328 = vunpack.c.l.b16 %v54
  %v329 = vunpack.c.h.b16 %v54
  %v330 = vunpack.c.l.b16 %v55
  %v331 = vunpack.c.h.b16 %v55
  %v332 = vunpack.c.l.b16 %v56
  %v333 = vunpack.c.h.b16 %v56
  %v334 = vunpack.c.l.b16 %v57
  %v335 = vunpack.c.h.b16 %v57
  %v336 = vunpack.c.l.b16 %v58
  %v337 = vunpack.c.h.b16 %v58
  %v338 = vunpack.c.l.b16 %v59
  %v339 = vunpack.c.h.b16 %v59
  %v340 = vunpack.c.l.b16 %v60
  %v341 = vunpack.c.h.b16 %v60
  %v342 = vunpack.c.l.b16 %v61
  %v343 = vunpack.c.h.b16 %v61
  %v344 = vunpack.c.l.b16 %v62
  %v345 = vunpack.c.h.b16 %v62
  %v346 = vunpack.c.l.b16 %v63
  %v347 = vunpack.c.h.b16 %v63
  %v348 = vunpack.c.l.b16 %v64
  %v349 = vunpack.c.h.b16 %v64
  %v350 = vunpack.c.l.b16 %v65
  %v351 = vunpack.c.h.b16 %v65
  %v352 = vunpack.c.l.b16 %v66
  %v353 = vunpack.c.h.b16 %v66
  %v354 = vunpack.c.l.b16 %v67
  %v355 = vunpack.c.h.b16 %v67
  %v356 = vunpack.c.l.b16 %v68
  %v357 = vunpack.c.h.b16 %v68
  %v358 = vunpack.c.l.b16 %v69
  %v359 = vunpack.c.h.b16 %v69
  %v360 = vunpack.c.l.b16 %v70
  %v361 = vunpack.c.h.b16 %v70
  %v362 = vunpack.c.l.b16 %v71
  %v363 = vunpack.c.h.b16 %v71
  %v364 = vunpack.c.l.b16 %v72
  %v365 = vunpack.c.h.b16 %v72
  %v366 = vunpack.c.l.b16 %v73
  %v367 = vunpack.c.h.b16 %v73
  %v368 = vunpack.c.l.b16 %v74
  %v369 = vunpack.c.h.b16 %v74
  %v370 = vunpack.c.l.b16 %v75
  %v371 = vunpack.c.h.b16 %v75
  %v372 = vunpack.c.l.b16 %v76
  %v373 = vunpack.c.h.b16 %v76
  %v374 = vunpack.c.l.b16 %v77
  %v375 = vunpack.c.h.b16 %v77
  %v376 = vunpack.c.l.b16 %v78
  %v377 = vunpack.c.h.b16 %v78
  %v378 = vunpack.c.l.b16 %v79
  %v379 = vunpack.c.h.b16 %v79
  %v380 = vunpack.c.l.b16 %v80
  %v381 = vunpack.c.h.b16 %v80
  %v382 = vunpack.c.l.b16 %v81
  %v383 = vunpack.c.h.b16 %v81
  %v384 = vunpack.c.l.b16 %v82
  %v385 = vunpack.c.h.b16 %v82
  %v386 = vunpack.c.l.b16 %v83
  %v387 = vunpack.c.h.b16 %v83
  %v388 = vunpack.c.l.b16 %v84
  %v389 = vunpack.c.h.b16 %v84
  %v390 = vunpack.c.l.b16 %v85
  %v391 = vunpack.c.h.b16 %v85
  %v392 = vunpack.c.l.b16 %v86
  %v393 = vunpack.c.h.b16 %v86
  %v394 = vunpack.c.l.b16 %v87
  %v395 = vunpack.c.h.b16 %v87
  %v396 = vunpack.c.l.b16 %v88
  %v397 = vunpack.c.h.b16 %v88
  %v398 = vunpack.c.l.b16 %v89
  %v399 = vunpack.c.h.b16 %v89
  %v400 = vunpack.c.l.b16 %v90
  %v401 = vunpack.c.h.b16 %v90
  %v402 = vunpack.c.l.b16 %v91
  %v403 = vunpack.c.h.b16 %v91
  %v404 = vunpack.c.l.b16 %v92
  %v405 = vunpack.c.h.b16 %v92
  %v406 = vunpack.c.l.b16 %v93
  %v407 = vunpack.c.h.b16 %v93
  %v408 = vunpack.c.l.b16 %v94
  %v409 = vunpack.c.h.b16 %v94
  %v410 = vunpack.c.l.b16 %v95
  %v411 = vunpack.c.h.b16 %v95
  %v412 = vunpack.c.l.b16 %v96
  %v413 = vunpack.c.h.b16 %v96
  %v414 = vunpack.c.l.b16 %v97
  %v415 = vunpack.c.h.b16 %v97
  %v416 = vunpack.c.l.b16 %v98
  %v417 = vunpack.c.h.b16 %v98
  %v418 = vunpack.c.l.b16 %v99
  %v419 = vunpack.c.h.b16 %v99
  %v420 = vunpack.c.l.b16 %v100
  %v421 = vunpack.c.h.b16 %v100
  %v422 = vunpack.c.l.b16 %v101
  %v423 = vunpack.c.h.b16 %v101
  %v424 = vunpack.c.l.b16 %v102
  %v425 = vunpack.c.h.b16 %v102
  %v426 = vunpack.c.l.b16 %v103
  %v427 = vunpack.c.h.b16 %v103
  %v428 = vunpack.c.l.b16 %v104
  %v429 = vunpack.c.h.b16 %v104
  %v430 = vunpack.c.l.b16 %v105
  %v431 = vunpack.c.h.b16 %v105
  %v432 = vunpack.c.l.b16 %v106
  %v433 = vunpack.c.h.b16 %v106
  %v434 = vunpack.c.l.b16 %v107
  %v435 = vunpack.c.h.b16 %v107
  %v436 = vunpack.c.l.b16 %v108
  %v437 = vunpack.c.h.b16 %v108
  %v438 = vunpack.c.l.b16 %v109
  %v439 = vunpack.c.h.b16 %v109
  %v440 = vunpack.c.l.b16 %v110
  %v441 = vunpack.c.h.b16 %v110
  %v442 = vunpack.c.l.b16 %v111
  %v443 = vunpack.c.h.b16 %v111
  %v444 = vunpack.c.l.b16 %v112
  %v445 = vunpack.c.h.b16 %v112
  %v446 = vunpack.c.l.b16 %v113
  %v447 = vunpack.c.h.b16 %v113
  %v448 = vunpack.c.l.b16 %v114
  %v449 = vunpack.c.h.b16 %v114
  %v450 = vunpack.c.l.b16 %v115
  %v451 = vunpack.c.h.b16 %v115
  %v452 = vunpack.c.l.b16 %v116
  %v453 = vunpack.c.h.b16 %v116
  %v454 = vunpack.c.l.b16 %v117
  %v455 = vunpack.c.h.b16 %v117
  %v456 = vunpack.c.l.b16 %v118
  %v457 = vunpack.c.h.b16 %v118
  %v458 = vunpack.c.l.b16 %v119
  %v459 = vunpack.c.h.b16 %v119
  %v460 = vunpack.c.l.b16 %v120
  %v461 = vunpack.c.h.b16 %v120
  %v462 = vunpack.c.l.b16 %v121
  %v463 = vunpack.c.h.b16 %v121
  %v464 = vunpack.c.l.b16 %v122
  %v465 = vunpack.c.h.b16 %v122
  %v466 = vunpack.c.l.b16 %v123
  %v467 = vunpack.c.h.b16 %v123
  %v468 = vunpack.c.l.b16 %v124
  %v469 = vunpack.c.h.b16 %v124
  %v470 = vunpack.c.l.b16 %v125
  %v471 = vunpack.c.h.b16 %v125
  %v472 = vunpack.c.l.b16 %v126
  %v473 = vunpack.c.h.b16 %v126
  %v474 = vunpack.c.l.b16 %v127
  %v475 = vunpack.c.h.b16 %v127
  %v476 = vunpack.c.l.b16 %v128
  %v477 = vunpack.c.h.b16 %v128
  %v478 = vunpack.c.l.b16 %v129
  %v479 = vunpack.c.h.b16 %v129
  %v480 = vunpack.c.l.b16 %v130
  %v481 = vunpack.c.h.b16 %v130
  %v482 = vunpack.c.l.b16 %v131
  %v483 = vunpack.c.h.b16 %v131
  %v484 = vunpack.c.l.b16 %v132
  %v485 = vunpack.c.h.b16 %v132
  %v486 = vunpack.c.l.b16 %v133
  %v487 = vunpack.c.h.b16 %v133
  %v488 = vunpack.c.l.b16 %v134
  %v489 = vunpack.c.h.b16 %v134
  %v490 = vunpack.c.l.b16 %v135
  %v491 = vunpack.c.h.b16 %v135
  %v492 = vunpack.c.l.b16 %v136
  %v493 = vunpack.c.h.b16 %v136
  %v494 = vunpack.c.l.b16 %v137
  %v495 = vunpack.c.h.b16 %v137
  %v496 = vunpack.c.l.b16 %v138
  %v497 = vunpack.c.h.b16 %v138
  %v498 = vunpack.c.l.b16 %v139
  %v499 = vunpack.c.h.b16 %v139
  %v500 = vunpack.c.l.b16 %v140
  %v501 = vunpack.c.h.b16 %v140
  %v502 = vunpack.c.l.b16 %v141
  %v503 = vunpack.c.h.b16 %v141
  %v504 = vunpack.c.l.b16 %v142
  %v505 = vunpack.c.h.b16 %v142
  %v506 = vunpack.c.l.b16 %v143
  %v507 = vunpack.c.h.b16 %v143
  %v508 = vunpack.c.l.b16 %v144
  %v509 = vunpack.c.h.b16 %v144
  %v510 = vunpack.c.l.b16 %v145
  %v511 = vunpack.c.h.b16 %v145
  %v512 = vunpack.c.l.b16 %v146
  %v513 = vunpack.c.h.b16 %v146
  %v514 = vunpack.c.l.b16 %v147
  %v515 = vunpack.c.h.b16 %v147
  %v516 = vunpack.c.l.b16 %v148
  %v517 = vunpack.c.h.b16 %v148
  %v518 = vunpack.c.l.b16 %v149
  %v519 = vunpack.c.h.b16 %v149
  %v520 = vunpack.c.l.b16 %v150
  %v521 = vunpack.c.h.b16 %v150
  %v522 = vunpack.c.l.b16 %v151
  %v523 = vunpack.c.h.b16 %v151
  %v524 = vunpack.c.l.b16 %v152
  %v525 = vunpack.c.h.b16 %v152
  %v526 = vunpack.c.l.b16 %v153
  %v527 = vunpack.c.h.b16 %v153
  %v528 = vunpack.c.l.b16 %v154
  %v529 = vunpack.c.h.b16 %v154
  %v530 = vunpack.c.l.b16 %v155
  %v531 = vunpack.c.h.b16 %v155
  %v532 = vunpack.c.l.b16 %v156
  %v533 = vunpack.c.h.b16 %v156
  %v534 = vunpack.c.l.b16 %v157
  %v535 = vunpack.c.h.b16 %v157
  %v536 = vunpack.c.l.b16 %v158
  %v537 = vunpack.c.h.b16 %v158
  %v538 = vunpack.c.l.b16 %v159
  %v539 = vunpack.c.h.b16 %v159
  %v540 = vunpack.c.l.b16 %v160
  %v541 = vunpack.c.h.b16 %v160
  %v542 = vunpack.c.l.b16 %v161
  %v543 = vunpack.c.h.b16 %v161
  %v544 = vunpack.c.l.b16 %v162
  %v545 = vunpack.c.h.b16 %v162
  %v546 = vunpack.c.l.b16 %v163
  %v547 = vunpack.c.h.b16 %v163
  %v548 = vpack.c.b16 %v300, %v292
  %v549 = vpack.c.b16 %v301, %v293
  %v550 = vpack.c.b16 %v302, %v294
  %v551 = vpack.c.b16 %v303, %v295
  %v552 = vpack.c.b16 %v304, %v296
  %v553 = vpack.c.b16 %v305, %v297
  %v554 = vpack.c.b16 %v306, %v298
  %v555 = vpack.c.b16 %v307, %v299
  %v556 = vpack.c.b16 %v316, %v308
  %v557 = vpack.c.b16 %v317, %v309
  %v558 = vpack.c.b16 %v318, %v310
  %v559 = vpack.c.b16 %v319, %v311
  %v560 = vpack.c.b16 %v320, %v312
  %v561 = vpack.c.b16 %v321, %v313
  %v562 = vpack.c.b16 %v322, %v314
  %v563 = vpack.c.b16 %v323, %v315
  %v564 = vpack.c.b16 %v332, %v324
  %v565 = vpack.c.b16 %v333, %v325
  %v566 = vpack.c.b16 %v334, %v326
  %v567 = vpack.c.b16 %v335, %v327
  %v568 = vpack.c.b16 %v336, %v328
  %v569 = vpack.c.b16 %v337, %v329
  %v570 = vpack.c.b16 %v338, %v330
  %v571 = vpack.c.b16 %v339, %v331
  %v572 = vpack.c.b16 %v348, %v340
  %v573 = vpack.c.b16 %v349, %v341
  %v574 = vpack.c.b16 %v350, %v342
  %v575 = vpack.c.b16 %v351, %v343
  %v576 = vpack.c.b16 %v352, %v344
  %v577 = vpack.c.b16 %v353, %v345
  %v578 = vpack.c.b16 %v354, %v346
  %v579 = vpack.c.b16 %v355, %v347
  %v580 = vpack.c.b16 %v364, %v356
  %v581 = vpack.c.b16 %v365, %v357
  %v582 = vpack.c.b16 %v366, %v358
  %v583 = vpack.c.b16 %v367, %v359
  %v584 = vpack.c.b16 %v368, %v360
  %v585 = vpack.c.b16 %v369, %v361
  %v586 = vpack.c.b16 %v370, %v362
  %v587 = vpack.c.b16 %v371, %v363
  %v588 = vpack.c.b16 %v380, %v372
  %v589 = vpack.c.b16 %v381, %v373
  %v590 = vpack.c.b16 %v382, %v374
  %v591 = vpack.c.b16 %v383, %v375
  %v592 = vpack.c.b16 %v384, %v376
  %v593 = vpack.c.b16 %v385, %v377
  %v594 = vpack.c.b16 %v386, %v378
  %v595 = vpack.c.b16 %v387, %v379
  %v596 = vpack.c.b16 %v396, %v388
  %v597 = vpack.c.b16 %v397, %v389
  %v598 = vpack.c.b16 %v398, %v390
  %v599 = vpack.c.b16 %v399, %v391
  %v600 = vpack.c.b16 %v400, %v392
  %v601 = vpack.c.b16 %v401, %v393
  %v602 = vpack.c.b16 %v402, %v394
  %v603 = vpack.c.b16 %v403, %v395
  %v604 = vpack.c.b16 %v412, %v404
  %v605 = vpack.c.b16 %v413, %v405
  %v606 = vpack.c.b16 %v414, %v406
  %v607 = vpack.c.b16 %v415, %v407
  %v608 = vpack.c.b16 %v416, %v408
  %v609 = vpack.c.b16 %v417, %v409
  %v610 = vpack.c.b16 %v418, %v410
  %v611 = vpack.c.b16 %v419, %v411
  %v612 = vpack.c.b16 %v428, %v420
  %v613 = vpack.c.b16 %v429, %v421
  %v614 = vpack.c.b16 %v430, %v422
  %v615 = vpack.c.b16 %v431, %v423
  %v616 = vpack.c.b16 %v432, %v424
  %v617 = vpack.c.b16 %v433, %v425
  %v618 = vpack.c.b16 %v434, %v426
  %v619 = vpack.c.b16 %v435, %v427
  %v620 = vpack.c.b16 %v444, %v436
  %v621 = vpack.c.b16 %v445, %v437
  %v622 = vpack.c.b16 %v446, %v438
  %v623 = vpack.c.b16 %v447, %v439
  %v624 = vpack.c.b16 %v448, %v440
  %v625 = vpack.c.b16 %v449, %v441
  %v626 = vpack.c.b16 %v450, %v442
  %v627 = vpack.c.b16 %v451, %v443
  %v628 = vpack.c.b16 %v460, %v452
  %v629 = vpack.c.b16 %v461, %v453
  %v630 = vpack.c.b16 %v462, %v454
  %v631 = vpack.c.b16 %v463, %v455
  %v632 = vpack.c.b16 %v464, %v456
  %v633 = vpack.c.b16 %v465, %v457
  %v634 = vpack.c.b16 %v466, %v458
  %v635 = vpack.c.b16 %v467, %v459
  %v636 = vpack.c.b16 %v476, %v468
  %v637 = vpack.c.b16 %v477, %v469
  %v638 = vpack.c.b16 %v478, %v470
  %v639 = vpack.c.b16 %v479, %v471
  %v640 = vpack.c.b16 %v480, %v472
  %v641 = vpack.c.b16 %v481, %v473
  %v642 = vpack.c.b16 %v482, %v474
  %v643 = vpack.c.b16 %v483, %v475
  %v644 = vpack.c.b16 %v492, %v484
  %v645 = vpack.c.b16 %v493, %v485
  %v646 = vpack.c.b16 %v494, %v486
  %v647 = vpack.c.b16 %v495, %v487
  %v648 = vpack.c.b16 %v496, %v488
  %v649 = vpack.c.b16 %v497, %v489
  %v650 = vpack.c.b16 %v498, %v490
  %v651 = vpack.c.b16 %v499, %v491
  %v652 = vpack.c.b16 %v508, %v500
  %v653 = vpack.c.b16 %v509, %v501
  %v654 = vpack.c.b16 %v510, %v502
  %v655 = vpack.c.b16 %v511, %v503
  %v656 = vpack.c.b16 %v512, %v504
  %v657 = vpack.c.b16 %v513, %v505
  %v658 = vpack.c.b16 %v514, %v506
  %v659 = vpack.c.b16 %v515, %v507
  %v660 = vpack.c.b16 %v524, %v516
  %v661 = vpack.c.b16 %v525, %v517
  %v662 = vpack.c.b16 %v526, %v518
  %v663 = vpack.c.b16 %v527, %v519
  %v664 = vpack.c.b16 %v528, %v520
  %v665 = vpack.c.b16 %v529, %v521
  %v666 = vpack.c.b16 %v530, %v522
  %v667 = vpack.c.b16 %v531, %v523
  %v668 = vpack.c.b16 %v540, %v532
  %v669 = vpack.c.b16 %v541, %v533
  %v670 = vpack.c.b16 %v542, %v534
  %v671 = vpack.c.b16 %v543, %v535
  %v672 = vpack.c.b16 %v544, %v536
  %v673 = vpack.c.b16 %v545, %v537
  %v674 = vpack.c.b16 %v546, %v538
  %v675 = vpack.c.b16 %v547, %v539
  %804 = vmatprep.subr.bf16.mxu0 %v605
  %805 = vmatpush1.bf16.msra.mxu0 %v604
  %806 = vmatprep.subr.bf16.mxu0 %v597
  %807 = vmatpush1.bf16.msra.mxu0 %v596
  %808 = vmatprep.subr.bf16.mxu0 %v589
  %809 = vmatpush1.bf16.msra.mxu0 %v588
  %810 = vmatprep.subr.bf16.mxu0 %v581
  %811 = vmatpush1.bf16.msra.mxu0 %v580
  %812 = vmatprep.subr.bf16.mxu0 %v573
  %813 = vmatpush1.bf16.msra.mxu0 %v572
  %814 = vmatprep.subr.bf16.mxu0 %v565
  %815 = vmatpush1.bf16.msra.mxu0 %v564
  %816 = vmatprep.subr.bf16.mxu0 %v557
  %817 = vmatpush1.bf16.msra.mxu0 %v556
  %818 = vmatprep.subr.bf16.mxu0 %v549
  %819 = vmatpush1.bf16.msra.mxu0 %v548
  %820 = vmatprep.subr.bf16.mxu0 %v669
  %821 = vmatpush2.bf16.msra.mxu0 %v668
  %822 = vmatprep.subr.bf16.mxu0 %v661
  %823 = vmatpush2.bf16.msra.mxu0 %v660
  %824 = vmatprep.subr.bf16.mxu0 %v653
  %825 = vmatpush2.bf16.msra.mxu0 %v652
  %826 = vmatprep.subr.bf16.mxu0 %v645
  %827 = vmatpush2.bf16.msra.mxu0 %v644
  %828 = vmatprep.subr.bf16.mxu0 %v637
  %829 = vmatpush2.bf16.msra.mxu0 %v636
  %830 = vmatprep.subr.bf16.mxu0 %v629
  %831 = vmatpush2.bf16.msra.mxu0 %v628
  %832 = vmatprep.subr.bf16.mxu0 %v621
  %833 = vmatpush2.bf16.msra.mxu0 %v620
  %834 = vmatprep.subr.bf16.mxu0 %v613
  %835 = vmatpush2.bf16.msra.mxu0 %v612
  %836 = vmatprep.mubr.bf16.mxu0 0
  %837 = vmatmul.mubr.bf16.gmra.mxu0 0
  %v838 = vpop.f32.mrf.mxu0
  %v839 = vadd.f32 0.0, %v838
  %v840 = vpop.f32.mrf.mxu0
  %v841 = vadd.f32 0.0, %v840
  %v842 = vpop.f32.mrf.mxu0
  %v843 = vpop.f32.mrf.mxu0
  %844 = vdwg.mxu0
  %845 = vmatprep.subr.bf16.mxu0 %v607
  %846 = vmatpush1.bf16.msra.mxu0 %v606
  %847 = vmatprep.subr.bf16.mxu0 %v599
  %848 = vmatpush1.bf16.msra.mxu0 %v598
  %849 = vmatprep.subr.bf16.mxu0 %v591
  %850 = vmatpush1.bf16.msra.mxu0 %v590
  %851 = vmatprep.subr.bf16.mxu0 %v583
  %852 = vmatpush1.bf16.msra.mxu0 %v582
  %853 = vmatprep.subr.bf16.mxu0 %v575
  %854 = vmatpush1.bf16.msra.mxu0 %v574
  %855 = vmatprep.subr.bf16.mxu0 %v567
  %856 = vmatpush1.bf16.msra.mxu0 %v566
  %857 = vmatprep.subr.bf16.mxu0 %v559
  %858 = vmatpush1.bf16.msra.mxu0 %v558
  %859 = vmatprep.subr.bf16.mxu0 %v551
  %860 = vmatpush1.bf16.msra.mxu0 %v550
  %861 = vmatprep.subr.bf16.mxu0 %v671
  %862 = vmatpush2.bf16.msra.mxu0 %v670
  %863 = vmatprep.subr.bf16.mxu0 %v663
  %864 = vmatpush2.bf16.msra.mxu0 %v662
  %865 = vmatprep.subr.bf16.mxu0 %v655
  %866 = vmatpush2.bf16.msra.mxu0 %v654
  %867 = vmatprep.subr.bf16.mxu0 %v647
  %868 = vmatpush2.bf16.msra.mxu0 %v646
  %869 = vmatprep.subr.bf16.mxu0 %v639
  %870 = vmatpush2.bf16.msra.mxu0 %v638
  %871 = vmatprep.subr.bf16.mxu0 %v631
  %872 = vmatpush2.bf16.msra.mxu0 %v630
  %873 = vmatprep.subr.bf16.mxu0 %v623
  %874 = vmatpush2.bf16.msra.mxu0 %v622
  %875 = vmatprep.subr.bf16.mxu0 %v615
  %876 = vmatpush2.bf16.msra.mxu0 %v614
  %877 = vmatprep.mubr.bf16.mxu0 0
  %878 = vmatmul.mubr.bf16.gmra.mxu0 0
  %v879 = vpop.f32.mrf.mxu0
  %v880 = vadd.f32 0.0, %v879
  %v881 = vpop.f32.mrf.mxu0
  %v882 = vadd.f32 0.0, %v881
  %v883 = vpop.f32.mrf.mxu0
  %v884 = vpop.f32.mrf.mxu0
  %885 = vdwg.mxu0
  %886 = vmatprep.subr.bf16.mxu0 %v609
  %887 = vmatpush1.bf16.msra.mxu0 %v608
  %888 = vmatprep.subr.bf16.mxu0 %v601
  %889 = vmatpush1.bf16.msra.mxu0 %v600
  %890 = vmatprep.subr.bf16.mxu0 %v593
  %891 = vmatpush1.bf16.msra.mxu0 %v592
  %892 = vmatprep.subr.bf16.mxu0 %v585
  %893 = vmatpush1.bf16.msra.mxu0 %v584
  %894 = vmatprep.subr.bf16.mxu0 %v577
  %895 = vmatpush1.bf16.msra.mxu0 %v576
  %896 = vmatprep.subr.bf16.mxu0 %v569
  %897 = vmatpush1.bf16.msra.mxu0 %v568
  %898 = vmatprep.subr.bf16.mxu0 %v561
  %899 = vmatpush1.bf16.msra.mxu0 %v560
  %900 = vmatprep.subr.bf16.mxu0 %v553
  %901 = vmatpush1.bf16.msra.mxu0 %v552
  %902 = vmatprep.subr.bf16.mxu0 %v673
  %903 = vmatpush2.bf16.msra.mxu0 %v672
  %904 = vmatprep.subr.bf16.mxu0 %v665
  %905 = vmatpush2.bf16.msra.mxu0 %v664
  %906 = vmatprep.subr.bf16.mxu0 %v657
  %907 = vmatpush2.bf16.msra.mxu0 %v656
  %908 = vmatprep.subr.bf16.mxu0 %v649
  %909 = vmatpush2.bf16.msra.mxu0 %v648
  %910 = vmatprep.subr.bf16.mxu0 %v641
  %911 = vmatpush2.bf16.msra.mxu0 %v640
  %912 = vmatprep.subr.bf16.mxu0 %v633
  %913 = vmatpush2.bf16.msra.mxu0 %v632
  %914 = vmatprep.subr.bf16.mxu0 %v625
  %915 = vmatpush2.bf16.msra.mxu0 %v624
  %916 = vmatprep.subr.bf16.mxu0 %v617
  %917 = vmatpush2.bf16.msra.mxu0 %v616
  %918 = vmatprep.mubr.bf16.mxu0 0
  %919 = vmatmul.mubr.bf16.gmra.mxu0 0
  %v920 = vpop.f32.mrf.mxu0
  %v921 = vadd.f32 0.0, %v920
  %v922 = vpop.f32.mrf.mxu0
  %v923 = vadd.f32 0.0, %v922
  %v924 = vpop.f32.mrf.mxu0
  %v925 = vpop.f32.mrf.mxu0
  %926 = vdwg.mxu0
  %927 = vmatprep.subr.bf16.mxu0 %v611
  %928 = vmatpush1.bf16.msra.mxu0 %v610
  %929 = vmatprep.subr.bf16.mxu0 %v603
  %930 = vmatpush1.bf16.msra.mxu0 %v602
  %931 = vmatprep.subr.bf16.mxu0 %v595
  %932 = vmatpush1.bf16.msra.mxu0 %v594
  %933 = vmatprep.subr.bf16.mxu0 %v587
  %934 = vmatpush1.bf16.msra.mxu0 %v586
  %935 = vmatprep.subr.bf16.mxu0 %v579
  %936 = vmatpush1.bf16.msra.mxu0 %v578
  %937 = vmatprep.subr.bf16.mxu0 %v571
  %938 = vmatpush1.bf16.msra.mxu0 %v570
  %939 = vmatprep.subr.bf16.mxu0 %v563
  %940 = vmatpush1.bf16.msra.mxu0 %v562
  %941 = vmatprep.subr.bf16.mxu0 %v555
  %942 = vmatpush1.bf16.msra.mxu0 %v554
  %943 = vmatprep.subr.bf16.mxu0 %v675
  %944 = vmatpush2.bf16.msra.mxu0 %v674
  %945 = vmatprep.subr.bf16.mxu0 %v667
  %946 = vmatpush2.bf16.msra.mxu0 %v666
  %947 = vmatprep.subr.bf16.mxu0 %v659
  %948 = vmatpush2.bf16.msra.mxu0 %v658
  %949 = vmatprep.subr.bf16.mxu0 %v651
  %950 = vmatpush2.bf16.msra.mxu0 %v650
  %951 = vmatprep.subr.bf16.mxu0 %v643
  %952 = vmatpush2.bf16.msra.mxu0 %v642
  %953 = vmatprep.subr.bf16.mxu0 %v635
  %954 = vmatpush2.bf16.msra.mxu0 %v634
  %955 = vmatprep.subr.bf16.mxu0 %v627
  %956 = vmatpush2.bf16.msra.mxu0 %v626
  %957 = vmatprep.subr.bf16.mxu0 %v619
  %958 = vmatpush2.bf16.msra.mxu0 %v618
  %959 = vmatprep.mubr.bf16.mxu0 0
  %960 = vmatmul.mubr.bf16.gmra.mxu0 0
  %v961 = vpop.f32.mrf.mxu0
  %v962 = vadd.f32 0.0, %v961
  %v963 = vpop.f32.mrf.mxu0
  %v964 = vadd.f32 0.0, %v963
  %v965 = vpop.f32.mrf.mxu0
  %v966 = vpop.f32.mrf.mxu0
  %967 = vdwg.mxu0
  %969 = vset.pattern.permute.xlu0 0
  %970 = vperm.xlu0 %969, %v35
  %v971 = vpop.permute.xlu0 %970
  %v974 = vlaneseq
  %v975 = vshrl.u32 %v974, 7
  %v976 = vsub.s32 0, %v975
  %v977 = vrot.slane %v32, %v976
  %v978 = vlaneseq
  %v979 = vshrl.u32 %v978, 7
  %v980 = vsub.s32 1, %v979
  %v981 = vrot.slane %v32, %v980
  %v982 = vlaneseq
  %v983 = vshrl.u32 %v982, 7
  %v984 = vsub.s32 2, %v983
  %v985 = vrot.slane %v32, %v984
  %v986 = vlaneseq
  %v987 = vshrl.u32 %v986, 7
  %v988 = vsub.s32 3, %v987
  %v989 = vrot.slane %v32, %v988
  %v994 = vmul.f32 %v971, %v977
  %v995 = vmul.f32 %v971, %v981
  %v996 = vmul.f32 %v971, %v985
  %v997 = vmul.f32 %v971, %v989
  %v998 = vadd.f32 %v839, %v994
  %v999 = vadd.f32 %v841, %v995
  %v1000 = vadd.f32 %v880, %v996
  %v1001 = vadd.f32 %v882, %v997
  %v1003 = vlaneseq
  %v1004 = vshrl.u32 %v1003, 7
  %v1005 = vsub.s32 0, %v1004
  %v1006 = vrot.slane %v33, %v1005
  %v1007 = vlaneseq
  %v1008 = vshrl.u32 %v1007, 7
  %v1009 = vsub.s32 1, %v1008
  %v1010 = vrot.slane %v33, %v1009
  %v1011 = vlaneseq
  %v1012 = vshrl.u32 %v1011, 7
  %v1013 = vsub.s32 2, %v1012
  %v1014 = vrot.slane %v33, %v1013
  %v1015 = vlaneseq
  %v1016 = vshrl.u32 %v1015, 7
  %v1017 = vsub.s32 3, %v1016
  %v1018 = vrot.slane %v33, %v1017
  %v1023 = vadd.f32 %v998, %v1006
  %v1024 = vadd.f32 %v999, %v1010
  %v1025 = vadd.f32 %v1000, %v1014
  %v1026 = vadd.f32 %v1001, %v1018
  %v1027 = vmul.f32 %v1023, 0.5
  %v1028 = vmul.f32 %v1024, 0.5
  %v1029 = vmul.f32 %v1025, 0.5
  %v1030 = vtanh.pop %v1027
  %v1031 = vtanh.pop %v1028
  %v1032 = vtanh.pop %v1029
  %v1033 = vmul.f32 %v1030, 0.5
  %v1034 = vmul.f32 %v1031, 0.5
  %v1035 = vmul.f32 %v1032, 0.5
  %v1036 = vadd.f32 %v1033, 0.5
  %v1037 = vadd.f32 %v1034, 0.5
  %v1038 = vadd.f32 %v1035, 0.5
  %v1039 = vtanh.pop %v1026
  %v1040 = vmul.f32 %v1037, 0.0
  %v1041 = vmul.f32 %v1036, %v1039
  %v1042 = vadd.f32 %v1040, %v1041
  %v1043 = vtanh.pop %v1042
  %v1044 = vmul.f32 %v1038, %v1043
  %v1045 = vpack.c.bf16 %v1044, %v1044
  %v1046 = vld [vmem:[%s4] sm:$0xff]
  %v1047 = vld [vmem:[%s4 + $0x8] sm:$0xff]
  %v1048 = vld [vmem:[%s4 + $0x10] sm:$0xff]
  %v1049 = vld [vmem:[%s4 + $0x18] sm:$0xff]
  %v1050 = vld [vmem:[%s4 + $0x20] sm:$0xff]
  %v1051 = vld [vmem:[%s4 + $0x28] sm:$0xff]
  %v1052 = vld [vmem:[%s4 + $0x30] sm:$0xff]
  %v1053 = vld [vmem:[%s4 + $0x38] sm:$0xff]
  %v1054 = vld [vmem:[%s4 + $0x40] sm:$0xff]
  %v1055 = vld [vmem:[%s4 + $0x48] sm:$0xff]
  %v1056 = vld [vmem:[%s4 + $0x50] sm:$0xff]
  %v1057 = vld [vmem:[%s4 + $0x58] sm:$0xff]
  %v1058 = vld [vmem:[%s4 + $0x60] sm:$0xff]
  %v1059 = vld [vmem:[%s4 + $0x68] sm:$0xff]
  %v1060 = vld [vmem:[%s4 + $0x70] sm:$0xff]
  %v1061 = vld [vmem:[%s4 + $0x78] sm:$0xff]
  %v1062 = vld [vmem:[%s4 + $0x80] sm:$0xff]
  %v1063 = vld [vmem:[%s4 + $0x88] sm:$0xff]
  %v1064 = vld [vmem:[%s4 + $0x90] sm:$0xff]
  %v1065 = vld [vmem:[%s4 + $0x98] sm:$0xff]
  %v1066 = vld [vmem:[%s4 + $0xa0] sm:$0xff]
  %v1067 = vld [vmem:[%s4 + $0xa8] sm:$0xff]
  %v1068 = vld [vmem:[%s4 + $0xb0] sm:$0xff]
  %v1069 = vld [vmem:[%s4 + $0xb8] sm:$0xff]
  %v1070 = vld [vmem:[%s4 + $0xc0] sm:$0xff]
  %v1071 = vld [vmem:[%s4 + $0xc8] sm:$0xff]
  %v1072 = vld [vmem:[%s4 + $0xd0] sm:$0xff]
  %v1073 = vld [vmem:[%s4 + $0xd8] sm:$0xff]
  %v1074 = vld [vmem:[%s4 + $0xe0] sm:$0xff]
  %v1075 = vld [vmem:[%s4 + $0xe8] sm:$0xff]
  %v1076 = vld [vmem:[%s4 + $0xf0] sm:$0xff]
  %v1077 = vld [vmem:[%s4 + $0xf8] sm:$0xff]
  %v1110 = vunpack.c.l.b16 %v1046
  %v1111 = vunpack.c.h.b16 %v1046
  %v1112 = vunpack.c.l.b16 %v1047
  %v1113 = vunpack.c.h.b16 %v1047
  %v1114 = vunpack.c.l.b16 %v1048
  %v1115 = vunpack.c.h.b16 %v1048
  %v1116 = vunpack.c.l.b16 %v1049
  %v1117 = vunpack.c.h.b16 %v1049
  %v1118 = vunpack.c.l.b16 %v1050
  %v1119 = vunpack.c.h.b16 %v1050
  %v1120 = vunpack.c.l.b16 %v1051
  %v1121 = vunpack.c.h.b16 %v1051
  %v1122 = vunpack.c.l.b16 %v1052
  %v1123 = vunpack.c.h.b16 %v1052
  %v1124 = vunpack.c.l.b16 %v1053
  %v1125 = vunpack.c.h.b16 %v1053
  %v1126 = vunpack.c.l.b16 %v1054
  %v1127 = vunpack.c.h.b16 %v1054
  %v1128 = vunpack.c.l.b16 %v1055
  %v1129 = vunpack.c.h.b16 %v1055
  %v1130 = vunpack.c.l.b16 %v1056
  %v1131 = vunpack.c.h.b16 %v1056
  %v1132 = vunpack.c.l.b16 %v1057
  %v1133 = vunpack.c.h.b16 %v1057
  %v1134 = vunpack.c.l.b16 %v1058
  %v1135 = vunpack.c.h.b16 %v1058
  %v1136 = vunpack.c.l.b16 %v1059
  %v1137 = vunpack.c.h.b16 %v1059
  %v1138 = vunpack.c.l.b16 %v1060
  %v1139 = vunpack.c.h.b16 %v1060
  %v1140 = vunpack.c.l.b16 %v1061
  %v1141 = vunpack.c.h.b16 %v1061
  %v1142 = vunpack.c.l.b16 %v1062
  %v1143 = vunpack.c.h.b16 %v1062
  %v1144 = vunpack.c.l.b16 %v1063
  %v1145 = vunpack.c.h.b16 %v1063
  %v1146 = vunpack.c.l.b16 %v1064
  %v1147 = vunpack.c.h.b16 %v1064
  %v1148 = vunpack.c.l.b16 %v1065
  %v1149 = vunpack.c.h.b16 %v1065
  %v1150 = vunpack.c.l.b16 %v1066
  %v1151 = vunpack.c.h.b16 %v1066
  %v1152 = vunpack.c.l.b16 %v1067
  %v1153 = vunpack.c.h.b16 %v1067
  %v1154 = vunpack.c.l.b16 %v1068
  %v1155 = vunpack.c.h.b16 %v1068
  %v1156 = vunpack.c.l.b16 %v1069
  %v1157 = vunpack.c.h.b16 %v1069
  %v1158 = vunpack.c.l.b16 %v1070
  %v1159 = vunpack.c.h.b16 %v1070
  %v1160 = vunpack.c.l.b16 %v1071
  %v1161 = vunpack.c.h.b16 %v1071
  %v1162 = vunpack.c.l.b16 %v1072
  %v1163 = vunpack.c.h.b16 %v1072
  %v1164 = vunpack.c.l.b16 %v1073
  %v1165 = vunpack.c.h.b16 %v1073
  %v1166 = vunpack.c.l.b16 %v1074
  %v1167 = vunpack.c.h.b16 %v1074
  %v1168 = vunpack.c.l.b16 %v1075
  %v1169 = vunpack.c.h.b16 %v1075
  %v1170 = vunpack.c.l.b16 %v1076
  %v1171 = vunpack.c.h.b16 %v1076
  %v1172 = vunpack.c.l.b16 %v1077
  %v1173 = vunpack.c.h.b16 %v1077
  %v1174 = vpack.c.b16 %v1114, %v1110
  %v1175 = vpack.c.b16 %v1115, %v1111
  %v1176 = vpack.c.b16 %v1116, %v1112
  %v1177 = vpack.c.b16 %v1117, %v1113
  %v1178 = vpack.c.b16 %v1122, %v1118
  %v1179 = vpack.c.b16 %v1123, %v1119
  %v1180 = vpack.c.b16 %v1124, %v1120
  %v1181 = vpack.c.b16 %v1125, %v1121
  %v1182 = vpack.c.b16 %v1130, %v1126
  %v1183 = vpack.c.b16 %v1131, %v1127
  %v1184 = vpack.c.b16 %v1132, %v1128
  %v1185 = vpack.c.b16 %v1133, %v1129
  %v1186 = vpack.c.b16 %v1138, %v1134
  %v1187 = vpack.c.b16 %v1139, %v1135
  %v1188 = vpack.c.b16 %v1140, %v1136
  %v1189 = vpack.c.b16 %v1141, %v1137
  %v1190 = vpack.c.b16 %v1146, %v1142
  %v1191 = vpack.c.b16 %v1147, %v1143
  %v1192 = vpack.c.b16 %v1148, %v1144
  %v1193 = vpack.c.b16 %v1149, %v1145
  %v1194 = vpack.c.b16 %v1154, %v1150
  %v1195 = vpack.c.b16 %v1155, %v1151
  %v1196 = vpack.c.b16 %v1156, %v1152
  %v1197 = vpack.c.b16 %v1157, %v1153
  %v1198 = vpack.c.b16 %v1162, %v1158
  %v1199 = vpack.c.b16 %v1163, %v1159
  %v1200 = vpack.c.b16 %v1164, %v1160
  %v1201 = vpack.c.b16 %v1165, %v1161
  %v1202 = vpack.c.b16 %v1170, %v1166
  %v1203 = vpack.c.b16 %v1171, %v1167
  %v1204 = vpack.c.b16 %v1172, %v1168
  %v1205 = vpack.c.b16 %v1173, %v1169
  %1238 = vmatprep.subr.bf16.mxu0 %v1203
  %1239 = vmatpush1.bf16.msra.mxu0 %v1202
  %1240 = vmatprep.subr.bf16.mxu0 %v1199
  %1241 = vmatpush1.bf16.msra.mxu0 %v1198
  %1242 = vmatprep.subr.bf16.mxu0 %v1195
  %1243 = vmatpush1.bf16.msra.mxu0 %v1194
  %1244 = vmatprep.subr.bf16.mxu0 %v1191
  %1245 = vmatpush1.bf16.msra.mxu0 %v1190
  %1246 = vmatprep.subr.bf16.mxu0 %v1187
  %1247 = vmatpush1.bf16.msra.mxu0 %v1186
  %1248 = vmatprep.subr.bf16.mxu0 %v1183
  %1249 = vmatpush1.bf16.msra.mxu0 %v1182
  %1250 = vmatprep.subr.bf16.mxu0 %v1179
  %1251 = vmatpush1.bf16.msra.mxu0 %v1178
  %1252 = vmatprep.subr.bf16.mxu0 %v1175
  %1253 = vmatpush1.bf16.msra.mxu0 %v1174
  %1254 = vmatprep.subr.bf16.mxu0 0
  %1255 = vmatpush2.bf16.msra.mxu0 0
  %1256 = vmatprep.subr.bf16.mxu0 0
  %1257 = vmatpush2.bf16.msra.mxu0 0
  %1258 = vmatprep.subr.bf16.mxu0 0
  %1259 = vmatpush2.bf16.msra.mxu0 0
  %1260 = vmatprep.subr.bf16.mxu0 0
  %1261 = vmatpush2.bf16.msra.mxu0 0
  %1262 = vmatprep.subr.bf16.mxu0 0
  %1263 = vmatpush2.bf16.msra.mxu0 0
  %1264 = vmatprep.subr.bf16.mxu0 0
  %1265 = vmatpush2.bf16.msra.mxu0 0
  %1266 = vmatprep.subr.bf16.mxu0 0
  %1267 = vmatpush2.bf16.msra.mxu0 0
  %1268 = vmatprep.subr.bf16.mxu0 0
  %1269 = vmatpush2.bf16.msra.mxu0 0
  %1270 = vmatprep.mubr.bf16.mxu0 0
  %1271 = vmatmul.mubr.bf16.gmra.mxu0 %v1045
  %v1272 = vpop.f32.mrf.mxu0
  %v1273 = vadd.f32 0.0, %v1272
  %v1274 = vpop.f32.mrf.mxu0
  %v1275 = vadd.f32 0.0, %v1274
  %v1276 = vpop.f32.mrf.mxu0
  %v1277 = vpop.f32.mrf.mxu0
  %1278 = vdwg.mxu0
  %1279 = vmatprep.subr.bf16.mxu0 %v1205
  %1280 = vmatpush1.bf16.msra.mxu0 %v1204
  %1281 = vmatprep.subr.bf16.mxu0 %v1201
  %1282 = vmatpush1.bf16.msra.mxu0 %v1200
  %1283 = vmatprep.subr.bf16.mxu0 %v1197
  %1284 = vmatpush1.bf16.msra.mxu0 %v1196
  %1285 = vmatprep.subr.bf16.mxu0 %v1193
  %1286 = vmatpush1.bf16.msra.mxu0 %v1192
  %1287 = vmatprep.subr.bf16.mxu0 %v1189
  %1288 = vmatpush1.bf16.msra.mxu0 %v1188
  %1289 = vmatprep.subr.bf16.mxu0 %v1185
  %1290 = vmatpush1.bf16.msra.mxu0 %v1184
  %1291 = vmatprep.subr.bf16.mxu0 %v1181
  %1292 = vmatpush1.bf16.msra.mxu0 %v1180
  %1293 = vmatprep.subr.bf16.mxu0 %v1177
  %1294 = vmatpush1.bf16.msra.mxu0 %v1176
  %1295 = vmatprep.subr.bf16.mxu0 0
  %1296 = vmatpush2.bf16.msra.mxu0 0
  %1297 = vmatprep.subr.bf16.mxu0 0
  %1298 = vmatpush2.bf16.msra.mxu0 0
  %1299 = vmatprep.subr.bf16.mxu0 0
  %1300 = vmatpush2.bf16.msra.mxu0 0
  %1301 = vmatprep.subr.bf16.mxu0 0
  %1302 = vmatpush2.bf16.msra.mxu0 0
  %1303 = vmatprep.subr.bf16.mxu0 0
  %1304 = vmatpush2.bf16.msra.mxu0 0
  %1305 = vmatprep.subr.bf16.mxu0 0
  %1306 = vmatpush2.bf16.msra.mxu0 0
  %1307 = vmatprep.subr.bf16.mxu0 0
  %1308 = vmatpush2.bf16.msra.mxu0 0
  %1309 = vmatprep.subr.bf16.mxu0 0
  %1310 = vmatpush2.bf16.msra.mxu0 0
  %1311 = vmatprep.mubr.bf16.mxu0 0
  %1312 = vmatmul.mubr.bf16.gmra.mxu0 %v1045
  %v1313 = vpop.f32.mrf.mxu0
  %v1314 = vadd.f32 0.0, %v1313
  %v1315 = vpop.f32.mrf.mxu0
  %v1316 = vadd.f32 0.0, %v1315
  %v1317 = vpop.f32.mrf.mxu0
  %v1318 = vpop.f32.mrf.mxu0
  %1319 = vdwg.mxu0
  %v1320 = vadd.f32 %v921, %v1273
  %v1321 = vadd.f32 %v923, %v1275
  %v1322 = vadd.f32 %v962, %v1314
  %v1323 = vadd.f32 %v964, %v1316
  %v1325 = vlaneseq
  %v1326 = vshrl.u32 %v1325, 7
  %v1327 = vsub.s32 0, %v1326
  %v1328 = vrot.slane %v34, %v1327
  %v1329 = vlaneseq
  %v1330 = vshrl.u32 %v1329, 7
  %v1331 = vsub.s32 1, %v1330
  %v1332 = vrot.slane %v34, %v1331
  %v1333 = vlaneseq
  %v1334 = vshrl.u32 %v1333, 7
  %v1335 = vsub.s32 2, %v1334
  %v1336 = vrot.slane %v34, %v1335
  %v1337 = vlaneseq
  %v1338 = vshrl.u32 %v1337, 7
  %v1339 = vsub.s32 3, %v1338
  %v1340 = vrot.slane %v34, %v1339
  %v1345 = vadd.f32 %v1320, %v1328
  %v1346 = vadd.f32 %v1321, %v1332
  %v1347 = vadd.f32 %v1322, %v1336
  %v1348 = vadd.f32 %v1323, %v1340
  %v1349 = vmul.f32 %v1345, 0.5
  %v1350 = vmul.f32 %v1346, 0.5
  %v1351 = vmul.f32 %v1347, 0.5
  %v1352 = vtanh.pop %v1349
  %v1353 = vtanh.pop %v1350
  %v1354 = vtanh.pop %v1351
  %v1355 = vmul.f32 %v1352, 0.5
  %v1356 = vmul.f32 %v1353, 0.5
  %v1357 = vmul.f32 %v1354, 0.5
  %v1358 = vadd.f32 %v1355, 0.5
  %v1359 = vadd.f32 %v1356, 0.5
  %v1360 = vadd.f32 %v1357, 0.5
  %v1361 = vtanh.pop %v1348
  %v1362 = vmul.f32 %v1359, 0.0
  %v1363 = vmul.f32 %v1358, %v1361
  %v1364 = vadd.f32 %v1362, %v1363
  %v1365 = vtanh.pop %v1364
  %v1366 = vmul.f32 %v1360, %v1365
  %v1367 = vadd.f32 %v1044, %v1366
  %1368 = vst [vmem:[#allocation2] sm:$0x3] %v1367
  %s1369 = scalar_lea.vmem %s0, 2
  %v1370 = vld [vmem:[%s1369] sm:$0x3]
  %v1371 = vpack.c.bf16 %v1366, %v1366
  %v1372 = vld [vmem:[%s3] sm:$0xff]
  %v1373 = vld [vmem:[%s3 + $0x8] sm:$0xff]
  %v1374 = vld [vmem:[%s3 + $0x10] sm:$0xff]
  %v1375 = vld [vmem:[%s3 + $0x18] sm:$0xff]
  %v1376 = vld [vmem:[%s3 + $0x20] sm:$0xff]
  %v1377 = vld [vmem:[%s3 + $0x28] sm:$0xff]
  %v1378 = vld [vmem:[%s3 + $0x30] sm:$0xff]
  %v1379 = vld [vmem:[%s3 + $0x38] sm:$0xff]
  %v1380 = vld [vmem:[%s3 + $0x40] sm:$0xff]
  %v1381 = vld [vmem:[%s3 + $0x48] sm:$0xff]
  %v1382 = vld [vmem:[%s3 + $0x50] sm:$0xff]
  %v1383 = vld [vmem:[%s3 + $0x58] sm:$0xff]
  %v1384 = vld [vmem:[%s3 + $0x60] sm:$0xff]
  %v1385 = vld [vmem:[%s3 + $0x68] sm:$0xff]
  %v1386 = vld [vmem:[%s3 + $0x70] sm:$0xff]
  %v1387 = vld [vmem:[%s3 + $0x78] sm:$0xff]
  %v1388 = vld [vmem:[%s3 + $0x80] sm:$0xff]
  %v1389 = vld [vmem:[%s3 + $0x88] sm:$0xff]
  %v1390 = vld [vmem:[%s3 + $0x90] sm:$0xff]
  %v1391 = vld [vmem:[%s3 + $0x98] sm:$0xff]
  %v1392 = vld [vmem:[%s3 + $0xa0] sm:$0xff]
  %v1393 = vld [vmem:[%s3 + $0xa8] sm:$0xff]
  %v1394 = vld [vmem:[%s3 + $0xb0] sm:$0xff]
  %v1395 = vld [vmem:[%s3 + $0xb8] sm:$0xff]
  %v1396 = vld [vmem:[%s3 + $0xc0] sm:$0xff]
  %v1397 = vld [vmem:[%s3 + $0xc8] sm:$0xff]
  %v1398 = vld [vmem:[%s3 + $0xd0] sm:$0xff]
  %v1399 = vld [vmem:[%s3 + $0xd8] sm:$0xff]
  %v1400 = vld [vmem:[%s3 + $0xe0] sm:$0xff]
  %v1401 = vld [vmem:[%s3 + $0xe8] sm:$0xff]
  %v1402 = vld [vmem:[%s3 + $0xf0] sm:$0xff]
  %v1403 = vld [vmem:[%s3 + $0xf8] sm:$0xff]
  %v1404 = vld [vmem:[%s3 + $0x100] sm:$0xff]
  %v1405 = vld [vmem:[%s3 + $0x108] sm:$0xff]
  %v1406 = vld [vmem:[%s3 + $0x110] sm:$0xff]
  %v1407 = vld [vmem:[%s3 + $0x118] sm:$0xff]
  %v1408 = vld [vmem:[%s3 + $0x120] sm:$0xff]
  %v1409 = vld [vmem:[%s3 + $0x128] sm:$0xff]
  %v1410 = vld [vmem:[%s3 + $0x130] sm:$0xff]
  %v1411 = vld [vmem:[%s3 + $0x138] sm:$0xff]
  %v1412 = vld [vmem:[%s3 + $0x140] sm:$0xff]
  %v1413 = vld [vmem:[%s3 + $0x148] sm:$0xff]
  %v1414 = vld [vmem:[%s3 + $0x150] sm:$0xff]
  %v1415 = vld [vmem:[%s3 + $0x158] sm:$0xff]
  %v1416 = vld [vmem:[%s3 + $0x160] sm:$0xff]
  %v1417 = vld [vmem:[%s3 + $0x168] sm:$0xff]
  %v1418 = vld [vmem:[%s3 + $0x170] sm:$0xff]
  %v1419 = vld [vmem:[%s3 + $0x178] sm:$0xff]
  %v1420 = vld [vmem:[%s3 + $0x180] sm:$0xff]
  %v1421 = vld [vmem:[%s3 + $0x188] sm:$0xff]
  %v1422 = vld [vmem:[%s3 + $0x190] sm:$0xff]
  %v1423 = vld [vmem:[%s3 + $0x198] sm:$0xff]
  %v1424 = vld [vmem:[%s3 + $0x1a0] sm:$0xff]
  %v1425 = vld [vmem:[%s3 + $0x1a8] sm:$0xff]
  %v1426 = vld [vmem:[%s3 + $0x1b0] sm:$0xff]
  %v1427 = vld [vmem:[%s3 + $0x1b8] sm:$0xff]
  %v1428 = vld [vmem:[%s3 + $0x1c0] sm:$0xff]
  %v1429 = vld [vmem:[%s3 + $0x1c8] sm:$0xff]
  %v1430 = vld [vmem:[%s3 + $0x1d0] sm:$0xff]
  %v1431 = vld [vmem:[%s3 + $0x1d8] sm:$0xff]
  %v1432 = vld [vmem:[%s3 + $0x1e0] sm:$0xff]
  %v1433 = vld [vmem:[%s3 + $0x1e8] sm:$0xff]
  %v1434 = vld [vmem:[%s3 + $0x1f0] sm:$0xff]
  %v1435 = vld [vmem:[%s3 + $0x1f8] sm:$0xff]
  %v1436 = vld [vmem:[%s3 + $0x200] sm:$0xff]
  %v1437 = vld [vmem:[%s3 + $0x208] sm:$0xff]
  %v1438 = vld [vmem:[%s3 + $0x210] sm:$0xff]
  %v1439 = vld [vmem:[%s3 + $0x218] sm:$0xff]
  %v1440 = vld [vmem:[%s3 + $0x220] sm:$0xff]
  %v1441 = vld [vmem:[%s3 + $0x228] sm:$0xff]
  %v1442 = vld [vmem:[%s3 + $0x230] sm:$0xff]
  %v1443 = vld [vmem:[%s3 + $0x238] sm:$0xff]
  %v1444 = vld [vmem:[%s3 + $0x240] sm:$0xff]
  %v1445 = vld [vmem:[%s3 + $0x248] sm:$0xff]
  %v1446 = vld [vmem:[%s3 + $0x250] sm:$0xff]
  %v1447 = vld [vmem:[%s3 + $0x258] sm:$0xff]
  %v1448 = vld [vmem:[%s3 + $0x260] sm:$0xff]
  %v1449 = vld [vmem:[%s3 + $0x268] sm:$0xff]
  %v1450 = vld [vmem:[%s3 + $0x270] sm:$0xff]
  %v1451 = vld [vmem:[%s3 + $0x278] sm:$0xff]
  %v1452 = vld [vmem:[%s3 + $0x280] sm:$0xff]
  %v1453 = vld [vmem:[%s3 + $0x288] sm:$0xff]
  %v1454 = vld [vmem:[%s3 + $0x290] sm:$0xff]
  %v1455 = vld [vmem:[%s3 + $0x298] sm:$0xff]
  %v1456 = vld [vmem:[%s3 + $0x2a0] sm:$0xff]
  %v1457 = vld [vmem:[%s3 + $0x2a8] sm:$0xff]
  %v1458 = vld [vmem:[%s3 + $0x2b0] sm:$0xff]
  %v1459 = vld [vmem:[%s3 + $0x2b8] sm:$0xff]
  %v1460 = vld [vmem:[%s3 + $0x2c0] sm:$0xff]
  %v1461 = vld [vmem:[%s3 + $0x2c8] sm:$0xff]
  %v1462 = vld [vmem:[%s3 + $0x2d0] sm:$0xff]
  %v1463 = vld [vmem:[%s3 + $0x2d8] sm:$0xff]
  %v1464 = vld [vmem:[%s3 + $0x2e0] sm:$0xff]
  %v1465 = vld [vmem:[%s3 + $0x2e8] sm:$0xff]
  %v1466 = vld [vmem:[%s3 + $0x2f0] sm:$0xff]
  %v1467 = vld [vmem:[%s3 + $0x2f8] sm:$0xff]
  %v1468 = vld [vmem:[%s3 + $0x300] sm:$0xff]
  %v1469 = vld [vmem:[%s3 + $0x308] sm:$0xff]
  %v1470 = vld [vmem:[%s3 + $0x310] sm:$0xff]
  %v1471 = vld [vmem:[%s3 + $0x318] sm:$0xff]
  %v1472 = vld [vmem:[%s3 + $0x320] sm:$0xff]
  %v1473 = vld [vmem:[%s3 + $0x328] sm:$0xff]
  %v1474 = vld [vmem:[%s3 + $0x330] sm:$0xff]
  %v1475 = vld [vmem:[%s3 + $0x338] sm:$0xff]
  %v1476 = vld [vmem:[%s3 + $0x340] sm:$0xff]
  %v1477 = vld [vmem:[%s3 + $0x348] sm:$0xff]
  %v1478 = vld [vmem:[%s3 + $0x350] sm:$0xff]
  %v1479 = vld [vmem:[%s3 + $0x358] sm:$0xff]
  %v1480 = vld [vmem:[%s3 + $0x360] sm:$0xff]
  %v1481 = vld [vmem:[%s3 + $0x368] sm:$0xff]
  %v1482 = vld [vmem:[%s3 + $0x370] sm:$0xff]
  %v1483 = vld [vmem:[%s3 + $0x378] sm:$0xff]
  %v1484 = vld [vmem:[%s3 + $0x380] sm:$0xff]
  %v1485 = vld [vmem:[%s3 + $0x388] sm:$0xff]
  %v1486 = vld [vmem:[%s3 + $0x390] sm:$0xff]
  %v1487 = vld [vmem:[%s3 + $0x398] sm:$0xff]
  %v1488 = vld [vmem:[%s3 + $0x3a0] sm:$0xff]
  %v1489 = vld [vmem:[%s3 + $0x3a8] sm:$0xff]
  %v1490 = vld [vmem:[%s3 + $0x3b0] sm:$0xff]
  %v1491 = vld [vmem:[%s3 + $0x3b8] sm:$0xff]
  %v1492 = vld [vmem:[%s3 + $0x3c0] sm:$0xff]
  %v1493 = vld [vmem:[%s3 + $0x3c8] sm:$0xff]
  %v1494 = vld [vmem:[%s3 + $0x3d0] sm:$0xff]
  %v1495 = vld [vmem:[%s3 + $0x3d8] sm:$0xff]
  %v1496 = vld [vmem:[%s3 + $0x3e0] sm:$0xff]
  %v1497 = vld [vmem:[%s3 + $0x3e8] sm:$0xff]
  %v1498 = vld [vmem:[%s3 + $0x3f0] sm:$0xff]
  %v1499 = vld [vmem:[%s3 + $0x3f8] sm:$0xff]
  %v1628 = vunpack.c.l.b16 %v1372
  %v1629 = vunpack.c.h.b16 %v1372
  %v1630 = vunpack.c.l.b16 %v1373
  %v1631 = vunpack.c.h.b16 %v1373
  %v1632 = vunpack.c.l.b16 %v1374
  %v1633 = vunpack.c.h.b16 %v1374
  %v1634 = vunpack.c.l.b16 %v1375
  %v1635 = vunpack.c.h.b16 %v1375
  %v1636 = vunpack.c.l.b16 %v1376
  %v1637 = vunpack.c.h.b16 %v1376
  %v1638 = vunpack.c.l.b16 %v1377
  %v1639 = vunpack.c.h.b16 %v1377
  %v1640 = vunpack.c.l.b16 %v1378
  %v1641 = vunpack.c.h.b16 %v1378
  %v1642 = vunpack.c.l.b16 %v1379
  %v1643 = vunpack.c.h.b16 %v1379
  %v1644 = vunpack.c.l.b16 %v1380
  %v1645 = vunpack.c.h.b16 %v1380
  %v1646 = vunpack.c.l.b16 %v1381
  %v1647 = vunpack.c.h.b16 %v1381
  %v1648 = vunpack.c.l.b16 %v1382
  %v1649 = vunpack.c.h.b16 %v1382
  %v1650 = vunpack.c.l.b16 %v1383
  %v1651 = vunpack.c.h.b16 %v1383
  %v1652 = vunpack.c.l.b16 %v1384
  %v1653 = vunpack.c.h.b16 %v1384
  %v1654 = vunpack.c.l.b16 %v1385
  %v1655 = vunpack.c.h.b16 %v1385
  %v1656 = vunpack.c.l.b16 %v1386
  %v1657 = vunpack.c.h.b16 %v1386
  %v1658 = vunpack.c.l.b16 %v1387
  %v1659 = vunpack.c.h.b16 %v1387
  %v1660 = vunpack.c.l.b16 %v1388
  %v1661 = vunpack.c.h.b16 %v1388
  %v1662 = vunpack.c.l.b16 %v1389
  %v1663 = vunpack.c.h.b16 %v1389
  %v1664 = vunpack.c.l.b16 %v1390
  %v1665 = vunpack.c.h.b16 %v1390
  %v1666 = vunpack.c.l.b16 %v1391
  %v1667 = vunpack.c.h.b16 %v1391
  %v1668 = vunpack.c.l.b16 %v1392
  %v1669 = vunpack.c.h.b16 %v1392
  %v1670 = vunpack.c.l.b16 %v1393
  %v1671 = vunpack.c.h.b16 %v1393
  %v1672 = vunpack.c.l.b16 %v1394
  %v1673 = vunpack.c.h.b16 %v1394
  %v1674 = vunpack.c.l.b16 %v1395
  %v1675 = vunpack.c.h.b16 %v1395
  %v1676 = vunpack.c.l.b16 %v1396
  %v1677 = vunpack.c.h.b16 %v1396
  %v1678 = vunpack.c.l.b16 %v1397
  %v1679 = vunpack.c.h.b16 %v1397
  %v1680 = vunpack.c.l.b16 %v1398
  %v1681 = vunpack.c.h.b16 %v1398
  %v1682 = vunpack.c.l.b16 %v1399
  %v1683 = vunpack.c.h.b16 %v1399
  %v1684 = vunpack.c.l.b16 %v1400
  %v1685 = vunpack.c.h.b16 %v1400
  %v1686 = vunpack.c.l.b16 %v1401
  %v1687 = vunpack.c.h.b16 %v1401
  %v1688 = vunpack.c.l.b16 %v1402
  %v1689 = vunpack.c.h.b16 %v1402
  %v1690 = vunpack.c.l.b16 %v1403
  %v1691 = vunpack.c.h.b16 %v1403
  %v1692 = vunpack.c.l.b16 %v1404
  %v1693 = vunpack.c.h.b16 %v1404
  %v1694 = vunpack.c.l.b16 %v1405
  %v1695 = vunpack.c.h.b16 %v1405
  %v1696 = vunpack.c.l.b16 %v1406
  %v1697 = vunpack.c.h.b16 %v1406
  %v1698 = vunpack.c.l.b16 %v1407
  %v1699 = vunpack.c.h.b16 %v1407
  %v1700 = vunpack.c.l.b16 %v1408
  %v1701 = vunpack.c.h.b16 %v1408
  %v1702 = vunpack.c.l.b16 %v1409
  %v1703 = vunpack.c.h.b16 %v1409
  %v1704 = vunpack.c.l.b16 %v1410
  %v1705 = vunpack.c.h.b16 %v1410
  %v1706 = vunpack.c.l.b16 %v1411
  %v1707 = vunpack.c.h.b16 %v1411
  %v1708 = vunpack.c.l.b16 %v1412
  %v1709 = vunpack.c.h.b16 %v1412
  %v1710 = vunpack.c.l.b16 %v1413
  %v1711 = vunpack.c.h.b16 %v1413
  %v1712 = vunpack.c.l.b16 %v1414
  %v1713 = vunpack.c.h.b16 %v1414
  %v1714 = vunpack.c.l.b16 %v1415
  %v1715 = vunpack.c.h.b16 %v1415
  %v1716 = vunpack.c.l.b16 %v1416
  %v1717 = vunpack.c.h.b16 %v1416
  %v1718 = vunpack.c.l.b16 %v1417
  %v1719 = vunpack.c.h.b16 %v1417
  %v1720 = vunpack.c.l.b16 %v1418
  %v1721 = vunpack.c.h.b16 %v1418
  %v1722 = vunpack.c.l.b16 %v1419
  %v1723 = vunpack.c.h.b16 %v1419
  %v1724 = vunpack.c.l.b16 %v1420
  %v1725 = vunpack.c.h.b16 %v1420
  %v1726 = vunpack.c.l.b16 %v1421
  %v1727 = vunpack.c.h.b16 %v1421
  %v1728 = vunpack.c.l.b16 %v1422
  %v1729 = vunpack.c.h.b16 %v1422
  %v1730 = vunpack.c.l.b16 %v1423
  %v1731 = vunpack.c.h.b16 %v1423
  %v1732 = vunpack.c.l.b16 %v1424
  %v1733 = vunpack.c.h.b16 %v1424
  %v1734 = vunpack.c.l.b16 %v1425
  %v1735 = vunpack.c.h.b16 %v1425
  %v1736 = vunpack.c.l.b16 %v1426
  %v1737 = vunpack.c.h.b16 %v1426
  %v1738 = vunpack.c.l.b16 %v1427
  %v1739 = vunpack.c.h.b16 %v1427
  %v1740 = vunpack.c.l.b16 %v1428
  %v1741 = vunpack.c.h.b16 %v1428
  %v1742 = vunpack.c.l.b16 %v1429
  %v1743 = vunpack.c.h.b16 %v1429
  %v1744 = vunpack.c.l.b16 %v1430
  %v1745 = vunpack.c.h.b16 %v1430
  %v1746 = vunpack.c.l.b16 %v1431
  %v1747 = vunpack.c.h.b16 %v1431
  %v1748 = vunpack.c.l.b16 %v1432
  %v1749 = vunpack.c.h.b16 %v1432
  %v1750 = vunpack.c.l.b16 %v1433
  %v1751 = vunpack.c.h.b16 %v1433
  %v1752 = vunpack.c.l.b16 %v1434
  %v1753 = vunpack.c.h.b16 %v1434
  %v1754 = vunpack.c.l.b16 %v1435
  %v1755 = vunpack.c.h.b16 %v1435
  %v1756 = vunpack.c.l.b16 %v1436
  %v1757 = vunpack.c.h.b16 %v1436
  %v1758 = vunpack.c.l.b16 %v1437
  %v1759 = vunpack.c.h.b16 %v1437
  %v1760 = vunpack.c.l.b16 %v1438
  %v1761 = vunpack.c.h.b16 %v1438
  %v1762 = vunpack.c.l.b16 %v1439
  %v1763 = vunpack.c.h.b16 %v1439
  %v1764 = vunpack.c.l.b16 %v1440
  %v1765 = vunpack.c.h.b16 %v1440
  %v1766 = vunpack.c.l.b16 %v1441
  %v1767 = vunpack.c.h.b16 %v1441
  %v1768 = vunpack.c.l.b16 %v1442
  %v1769 = vunpack.c.h.b16 %v1442
  %v1770 = vunpack.c.l.b16 %v1443
  %v1771 = vunpack.c.h.b16 %v1443
  %v1772 = vunpack.c.l.b16 %v1444
  %v1773 = vunpack.c.h.b16 %v1444
  %v1774 = vunpack.c.l.b16 %v1445
  %v1775 = vunpack.c.h.b16 %v1445
  %v1776 = vunpack.c.l.b16 %v1446
  %v1777 = vunpack.c.h.b16 %v1446
  %v1778 = vunpack.c.l.b16 %v1447
  %v1779 = vunpack.c.h.b16 %v1447
  %v1780 = vunpack.c.l.b16 %v1448
  %v1781 = vunpack.c.h.b16 %v1448
  %v1782 = vunpack.c.l.b16 %v1449
  %v1783 = vunpack.c.h.b16 %v1449
  %v1784 = vunpack.c.l.b16 %v1450
  %v1785 = vunpack.c.h.b16 %v1450
  %v1786 = vunpack.c.l.b16 %v1451
  %v1787 = vunpack.c.h.b16 %v1451
  %v1788 = vunpack.c.l.b16 %v1452
  %v1789 = vunpack.c.h.b16 %v1452
  %v1790 = vunpack.c.l.b16 %v1453
  %v1791 = vunpack.c.h.b16 %v1453
  %v1792 = vunpack.c.l.b16 %v1454
  %v1793 = vunpack.c.h.b16 %v1454
  %v1794 = vunpack.c.l.b16 %v1455
  %v1795 = vunpack.c.h.b16 %v1455
  %v1796 = vunpack.c.l.b16 %v1456
  %v1797 = vunpack.c.h.b16 %v1456
  %v1798 = vunpack.c.l.b16 %v1457
  %v1799 = vunpack.c.h.b16 %v1457
  %v1800 = vunpack.c.l.b16 %v1458
  %v1801 = vunpack.c.h.b16 %v1458
  %v1802 = vunpack.c.l.b16 %v1459
  %v1803 = vunpack.c.h.b16 %v1459
  %v1804 = vunpack.c.l.b16 %v1460
  %v1805 = vunpack.c.h.b16 %v1460
  %v1806 = vunpack.c.l.b16 %v1461
  %v1807 = vunpack.c.h.b16 %v1461
  %v1808 = vunpack.c.l.b16 %v1462
  %v1809 = vunpack.c.h.b16 %v1462
  %v1810 = vunpack.c.l.b16 %v1463
  %v1811 = vunpack.c.h.b16 %v1463
  %v1812 = vunpack.c.l.b16 %v1464
  %v1813 = vunpack.c.h.b16 %v1464
  %v1814 = vunpack.c.l.b16 %v1465
  %v1815 = vunpack.c.h.b16 %v1465
  %v1816 = vunpack.c.l.b16 %v1466
  %v1817 = vunpack.c.h.b16 %v1466
  %v1818 = vunpack.c.l.b16 %v1467
  %v1819 = vunpack.c.h.b16 %v1467
  %v1820 = vunpack.c.l.b16 %v1468
  %v1821 = vunpack.c.h.b16 %v1468
  %v1822 = vunpack.c.l.b16 %v1469
  %v1823 = vunpack.c.h.b16 %v1469
  %v1824 = vunpack.c.l.b16 %v1470
  %v1825 = vunpack.c.h.b16 %v1470
  %v1826 = vunpack.c.l.b16 %v1471
  %v1827 = vunpack.c.h.b16 %v1471
  %v1828 = vunpack.c.l.b16 %v1472
  %v1829 = vunpack.c.h.b16 %v1472
  %v1830 = vunpack.c.l.b16 %v1473
  %v1831 = vunpack.c.h.b16 %v1473
  %v1832 = vunpack.c.l.b16 %v1474
  %v1833 = vunpack.c.h.b16 %v1474
  %v1834 = vunpack.c.l.b16 %v1475
  %v1835 = vunpack.c.h.b16 %v1475
  %v1836 = vunpack.c.l.b16 %v1476
  %v1837 = vunpack.c.h.b16 %v1476
  %v1838 = vunpack.c.l.b16 %v1477
  %v1839 = vunpack.c.h.b16 %v1477
  %v1840 = vunpack.c.l.b16 %v1478
  %v1841 = vunpack.c.h.b16 %v1478
  %v1842 = vunpack.c.l.b16 %v1479
  %v1843 = vunpack.c.h.b16 %v1479
  %v1844 = vunpack.c.l.b16 %v1480
  %v1845 = vunpack.c.h.b16 %v1480
  %v1846 = vunpack.c.l.b16 %v1481
  %v1847 = vunpack.c.h.b16 %v1481
  %v1848 = vunpack.c.l.b16 %v1482
  %v1849 = vunpack.c.h.b16 %v1482
  %v1850 = vunpack.c.l.b16 %v1483
  %v1851 = vunpack.c.h.b16 %v1483
  %v1852 = vunpack.c.l.b16 %v1484
  %v1853 = vunpack.c.h.b16 %v1484
  %v1854 = vunpack.c.l.b16 %v1485
  %v1855 = vunpack.c.h.b16 %v1485
  %v1856 = vunpack.c.l.b16 %v1486
  %v1857 = vunpack.c.h.b16 %v1486
  %v1858 = vunpack.c.l.b16 %v1487
  %v1859 = vunpack.c.h.b16 %v1487
  %v1860 = vunpack.c.l.b16 %v1488
  %v1861 = vunpack.c.h.b16 %v1488
  %v1862 = vunpack.c.l.b16 %v1489
  %v1863 = vunpack.c.h.b16 %v1489
  %v1864 = vunpack.c.l.b16 %v1490
  %v1865 = vunpack.c.h.b16 %v1490
  %v1866 = vunpack.c.l.b16 %v1491
  %v1867 = vunpack.c.h.b16 %v1491
  %v1868 = vunpack.c.l.b16 %v1492
  %v1869 = vunpack.c.h.b16 %v1492
  %v1870 = vunpack.c.l.b16 %v1493
  %v1871 = vunpack.c.h.b16 %v1493
  %v1872 = vunpack.c.l.b16 %v1494
  %v1873 = vunpack.c.h.b16 %v1494
  %v1874 = vunpack.c.l.b16 %v1495
  %v1875 = vunpack.c.h.b16 %v1495
  %v1876 = vunpack.c.l.b16 %v1496
  %v1877 = vunpack.c.h.b16 %v1496
  %v1878 = vunpack.c.l.b16 %v1497
  %v1879 = vunpack.c.h.b16 %v1497
  %v1880 = vunpack.c.l.b16 %v1498
  %v1881 = vunpack.c.h.b16 %v1498
  %v1882 = vunpack.c.l.b16 %v1499
  %v1883 = vunpack.c.h.b16 %v1499
  %v1884 = vpack.c.b16 %v1636, %v1628
  %v1885 = vpack.c.b16 %v1637, %v1629
  %v1886 = vpack.c.b16 %v1638, %v1630
  %v1887 = vpack.c.b16 %v1639, %v1631
  %v1888 = vpack.c.b16 %v1640, %v1632
  %v1889 = vpack.c.b16 %v1641, %v1633
  %v1890 = vpack.c.b16 %v1642, %v1634
  %v1891 = vpack.c.b16 %v1643, %v1635
  %v1892 = vpack.c.b16 %v1652, %v1644
  %v1893 = vpack.c.b16 %v1653, %v1645
  %v1894 = vpack.c.b16 %v1654, %v1646
  %v1895 = vpack.c.b16 %v1655, %v1647
  %v1896 = vpack.c.b16 %v1656, %v1648
  %v1897 = vpack.c.b16 %v1657, %v1649
  %v1898 = vpack.c.b16 %v1658, %v1650
  %v1899 = vpack.c.b16 %v1659, %v1651
  %v1900 = vpack.c.b16 %v1668, %v1660
  %v1901 = vpack.c.b16 %v1669, %v1661
  %v1902 = vpack.c.b16 %v1670, %v1662
  %v1903 = vpack.c.b16 %v1671, %v1663
  %v1904 = vpack.c.b16 %v1672, %v1664
  %v1905 = vpack.c.b16 %v1673, %v1665
  %v1906 = vpack.c.b16 %v1674, %v1666
  %v1907 = vpack.c.b16 %v1675, %v1667
  %v1908 = vpack.c.b16 %v1684, %v1676
  %v1909 = vpack.c.b16 %v1685, %v1677
  %v1910 = vpack.c.b16 %v1686, %v1678
  %v1911 = vpack.c.b16 %v1687, %v1679
  %v1912 = vpack.c.b16 %v1688, %v1680
  %v1913 = vpack.c.b16 %v1689, %v1681
  %v1914 = vpack.c.b16 %v1690, %v1682
  %v1915 = vpack.c.b16 %v1691, %v1683
  %v1916 = vpack.c.b16 %v1700, %v1692
  %v1917 = vpack.c.b16 %v1701, %v1693
  %v1918 = vpack.c.b16 %v1702, %v1694
  %v1919 = vpack.c.b16 %v1703, %v1695
  %v1920 = vpack.c.b16 %v1704, %v1696
  %v1921 = vpack.c.b16 %v1705, %v1697
  %v1922 = vpack.c.b16 %v1706, %v1698
  %v1923 = vpack.c.b16 %v1707, %v1699
  %v1924 = vpack.c.b16 %v1716, %v1708
  %v1925 = vpack.c.b16 %v1717, %v1709
  %v1926 = vpack.c.b16 %v1718, %v1710
  %v1927 = vpack.c.b16 %v1719, %v1711
  %v1928 = vpack.c.b16 %v1720, %v1712
  %v1929 = vpack.c.b16 %v1721, %v1713
  %v1930 = vpack.c.b16 %v1722, %v1714
  %v1931 = vpack.c.b16 %v1723, %v1715
  %v1932 = vpack.c.b16 %v1732, %v1724
  %v1933 = vpack.c.b16 %v1733, %v1725
  %v1934 = vpack.c.b16 %v1734, %v1726
  %v1935 = vpack.c.b16 %v1735, %v1727
  %v1936 = vpack.c.b16 %v1736, %v1728
  %v1937 = vpack.c.b16 %v1737, %v1729
  %v1938 = vpack.c.b16 %v1738, %v1730
  %v1939 = vpack.c.b16 %v1739, %v1731
  %v1940 = vpack.c.b16 %v1748, %v1740
  %v1941 = vpack.c.b16 %v1749, %v1741
  %v1942 = vpack.c.b16 %v1750, %v1742
  %v1943 = vpack.c.b16 %v1751, %v1743
  %v1944 = vpack.c.b16 %v1752, %v1744
  %v1945 = vpack.c.b16 %v1753, %v1745
  %v1946 = vpack.c.b16 %v1754, %v1746
  %v1947 = vpack.c.b16 %v1755, %v1747
  %v1948 = vpack.c.b16 %v1764, %v1756
  %v1949 = vpack.c.b16 %v1765, %v1757
  %v1950 = vpack.c.b16 %v1766, %v1758
  %v1951 = vpack.c.b16 %v1767, %v1759
  %v1952 = vpack.c.b16 %v1768, %v1760
  %v1953 = vpack.c.b16 %v1769, %v1761
  %v1954 = vpack.c.b16 %v1770, %v1762
  %v1955 = vpack.c.b16 %v1771, %v1763
  %v1956 = vpack.c.b16 %v1780, %v1772
  %v1957 = vpack.c.b16 %v1781, %v1773
  %v1958 = vpack.c.b16 %v1782, %v1774
  %v1959 = vpack.c.b16 %v1783, %v1775
  %v1960 = vpack.c.b16 %v1784, %v1776
  %v1961 = vpack.c.b16 %v1785, %v1777
  %v1962 = vpack.c.b16 %v1786, %v1778
  %v1963 = vpack.c.b16 %v1787, %v1779
  %v1964 = vpack.c.b16 %v1796, %v1788
  %v1965 = vpack.c.b16 %v1797, %v1789
  %v1966 = vpack.c.b16 %v1798, %v1790
  %v1967 = vpack.c.b16 %v1799, %v1791
  %v1968 = vpack.c.b16 %v1800, %v1792
  %v1969 = vpack.c.b16 %v1801, %v1793
  %v1970 = vpack.c.b16 %v1802, %v1794
  %v1971 = vpack.c.b16 %v1803, %v1795
  %v1972 = vpack.c.b16 %v1812, %v1804
  %v1973 = vpack.c.b16 %v1813, %v1805
  %v1974 = vpack.c.b16 %v1814, %v1806
  %v1975 = vpack.c.b16 %v1815, %v1807
  %v1976 = vpack.c.b16 %v1816, %v1808
  %v1977 = vpack.c.b16 %v1817, %v1809
  %v1978 = vpack.c.b16 %v1818, %v1810
  %v1979 = vpack.c.b16 %v1819, %v1811
  %v1980 = vpack.c.b16 %v1828, %v1820
  %v1981 = vpack.c.b16 %v1829, %v1821
  %v1982 = vpack.c.b16 %v1830, %v1822
  %v1983 = vpack.c.b16 %v1831, %v1823
  %v1984 = vpack.c.b16 %v1832, %v1824
  %v1985 = vpack.c.b16 %v1833, %v1825
  %v1986 = vpack.c.b16 %v1834, %v1826
  %v1987 = vpack.c.b16 %v1835, %v1827
  %v1988 = vpack.c.b16 %v1844, %v1836
  %v1989 = vpack.c.b16 %v1845, %v1837
  %v1990 = vpack.c.b16 %v1846, %v1838
  %v1991 = vpack.c.b16 %v1847, %v1839
  %v1992 = vpack.c.b16 %v1848, %v1840
  %v1993 = vpack.c.b16 %v1849, %v1841
  %v1994 = vpack.c.b16 %v1850, %v1842
  %v1995 = vpack.c.b16 %v1851, %v1843
  %v1996 = vpack.c.b16 %v1860, %v1852
  %v1997 = vpack.c.b16 %v1861, %v1853
  %v1998 = vpack.c.b16 %v1862, %v1854
  %v1999 = vpack.c.b16 %v1863, %v1855
  %v2000 = vpack.c.b16 %v1864, %v1856
  %v2001 = vpack.c.b16 %v1865, %v1857
  %v2002 = vpack.c.b16 %v1866, %v1858
  %v2003 = vpack.c.b16 %v1867, %v1859
  %v2004 = vpack.c.b16 %v1876, %v1868
  %v2005 = vpack.c.b16 %v1877, %v1869
  %v2006 = vpack.c.b16 %v1878, %v1870
  %v2007 = vpack.c.b16 %v1879, %v1871
  %v2008 = vpack.c.b16 %v1880, %v1872
  %v2009 = vpack.c.b16 %v1881, %v1873
  %v2010 = vpack.c.b16 %v1882, %v1874
  %v2011 = vpack.c.b16 %v1883, %v1875
  %2140 = vmatprep.subr.bf16.mxu0 %v1941
  %2141 = vmatpush1.bf16.msra.mxu0 %v1940
  %2142 = vmatprep.subr.bf16.mxu0 %v1933
  %2143 = vmatpush1.bf16.msra.mxu0 %v1932
  %2144 = vmatprep.subr.bf16.mxu0 %v1925
  %2145 = vmatpush1.bf16.msra.mxu0 %v1924
  %2146 = vmatprep.subr.bf16.mxu0 %v1917
  %2147 = vmatpush1.bf16.msra.mxu0 %v1916
  %2148 = vmatprep.subr.bf16.mxu0 %v1909
  %2149 = vmatpush1.bf16.msra.mxu0 %v1908
  %2150 = vmatprep.subr.bf16.mxu0 %v1901
  %2151 = vmatpush1.bf16.msra.mxu0 %v1900
  %2152 = vmatprep.subr.bf16.mxu0 %v1893
  %2153 = vmatpush1.bf16.msra.mxu0 %v1892
  %2154 = vmatprep.subr.bf16.mxu0 %v1885
  %2155 = vmatpush1.bf16.msra.mxu0 %v1884
  %2156 = vmatprep.subr.bf16.mxu0 %v2005
  %2157 = vmatpush2.bf16.msra.mxu0 %v2004
  %2158 = vmatprep.subr.bf16.mxu0 %v1997
  %2159 = vmatpush2.bf16.msra.mxu0 %v1996
  %2160 = vmatprep.subr.bf16.mxu0 %v1989
  %2161 = vmatpush2.bf16.msra.mxu0 %v1988
  %2162 = vmatprep.subr.bf16.mxu0 %v1981
  %2163 = vmatpush2.bf16.msra.mxu0 %v1980
  %2164 = vmatprep.subr.bf16.mxu0 %v1973
  %2165 = vmatpush2.bf16.msra.mxu0 %v1972
  %2166 = vmatprep.subr.bf16.mxu0 %v1965
  %2167 = vmatpush2.bf16.msra.mxu0 %v1964
  %2168 = vmatprep.subr.bf16.mxu0 %v1957
  %2169 = vmatpush2.bf16.msra.mxu0 %v1956
  %2170 = vmatprep.subr.bf16.mxu0 %v1949
  %2171 = vmatpush2.bf16.msra.mxu0 %v1948
  %2172 = vmatprep.mubr.bf16.mxu0 %v1371
  %2173 = vmatmul.mubr.bf16.gmra.mxu0 %v1045
  %v2174 = vpop.f32.mrf.mxu0
  %v2175 = vadd.f32 0.0, %v2174
  %v2176 = vpop.f32.mrf.mxu0
  %v2177 = vadd.f32 0.0, %v2176
  %v2178 = vpop.f32.mrf.mxu0
  %v2179 = vpop.f32.mrf.mxu0
  %2180 = vdwg.mxu0
  %2181 = vmatprep.subr.bf16.mxu0 %v1943
  %2182 = vmatpush1.bf16.msra.mxu0 %v1942
  %2183 = vmatprep.subr.bf16.mxu0 %v1935
  %2184 = vmatpush1.bf16.msra.mxu0 %v1934
  %2185 = vmatprep.subr.bf16.mxu0 %v1927
  %2186 = vmatpush1.bf16.msra.mxu0 %v1926
  %2187 = vmatprep.subr.bf16.mxu0 %v1919
  %2188 = vmatpush1.bf16.msra.mxu0 %v1918
  %2189 = vmatprep.subr.bf16.mxu0 %v1911
  %2190 = vmatpush1.bf16.msra.mxu0 %v1910
  %2191 = vmatprep.subr.bf16.mxu0 %v1903
  %2192 = vmatpush1.bf16.msra.mxu0 %v1902
  %2193 = vmatprep.subr.bf16.mxu0 %v1895
  %2194 = vmatpush1.bf16.msra.mxu0 %v1894
  %2195 = vmatprep.subr.bf16.mxu0 %v1887
  %2196 = vmatpush1.bf16.msra.mxu0 %v1886
  %2197 = vmatprep.subr.bf16.mxu0 %v2007
  %2198 = vmatpush2.bf16.msra.mxu0 %v2006
  %2199 = vmatprep.subr.bf16.mxu0 %v1999
  %2200 = vmatpush2.bf16.msra.mxu0 %v1998
  %2201 = vmatprep.subr.bf16.mxu0 %v1991
  %2202 = vmatpush2.bf16.msra.mxu0 %v1990
  %2203 = vmatprep.subr.bf16.mxu0 %v1983
  %2204 = vmatpush2.bf16.msra.mxu0 %v1982
  %2205 = vmatprep.subr.bf16.mxu0 %v1975
  %2206 = vmatpush2.bf16.msra.mxu0 %v1974
  %2207 = vmatprep.subr.bf16.mxu0 %v1967
  %2208 = vmatpush2.bf16.msra.mxu0 %v1966
  %2209 = vmatprep.subr.bf16.mxu0 %v1959
  %2210 = vmatpush2.bf16.msra.mxu0 %v1958
  %2211 = vmatprep.subr.bf16.mxu0 %v1951
  %2212 = vmatpush2.bf16.msra.mxu0 %v1950
  %2213 = vmatprep.mubr.bf16.mxu0 %v1371
  %2214 = vmatmul.mubr.bf16.gmra.mxu0 %v1045
  %v2215 = vpop.f32.mrf.mxu0
  %v2216 = vadd.f32 0.0, %v2215
  %v2217 = vpop.f32.mrf.mxu0
  %v2218 = vadd.f32 0.0, %v2217
  %v2219 = vpop.f32.mrf.mxu0
  %v2220 = vpop.f32.mrf.mxu0
  %2221 = vdwg.mxu0
  %2222 = vmatprep.subr.bf16.mxu0 %v1945
  %2223 = vmatpush1.bf16.msra.mxu0 %v1944
  %2224 = vmatprep.subr.bf16.mxu0 %v1937
  %2225 = vmatpush1.bf16.msra.mxu0 %v1936
  %2226 = vmatprep.subr.bf16.mxu0 %v1929
  %2227 = vmatpush1.bf16.msra.mxu0 %v1928
  %2228 = vmatprep.subr.bf16.mxu0 %v1921
  %2229 = vmatpush1.bf16.msra.mxu0 %v1920
  %2230 = vmatprep.subr.bf16.mxu0 %v1913
  %2231 = vmatpush1.bf16.msra.mxu0 %v1912
  %2232 = vmatprep.subr.bf16.mxu0 %v1905
  %2233 = vmatpush1.bf16.msra.mxu0 %v1904
  %2234 = vmatprep.subr.bf16.mxu0 %v1897
  %2235 = vmatpush1.bf16.msra.mxu0 %v1896
  %2236 = vmatprep.subr.bf16.mxu0 %v1889
  %2237 = vmatpush1.bf16.msra.mxu0 %v1888
  %2238 = vmatprep.subr.bf16.mxu0 %v2009
  %2239 = vmatpush2.bf16.msra.mxu0 %v2008
  %2240 = vmatprep.subr.bf16.mxu0 %v2001
  %2241 = vmatpush2.bf16.msra.mxu0 %v2000
  %2242 = vmatprep.subr.bf16.mxu0 %v1993
  %2243 = vmatpush2.bf16.msra.mxu0 %v1992
  %2244 = vmatprep.subr.bf16.mxu0 %v1985
  %2245 = vmatpush2.bf16.msra.mxu0 %v1984
  %2246 = vmatprep.subr.bf16.mxu0 %v1977
  %2247 = vmatpush2.bf16.msra.mxu0 %v1976
  %2248 = vmatprep.subr.bf16.mxu0 %v1969
  %2249 = vmatpush2.bf16.msra.mxu0 %v1968
  %2250 = vmatprep.subr.bf16.mxu0 %v1961
  %2251 = vmatpush2.bf16.msra.mxu0 %v1960
  %2252 = vmatprep.subr.bf16.mxu0 %v1953
  %2253 = vmatpush2.bf16.msra.mxu0 %v1952
  %2254 = vmatprep.mubr.bf16.mxu0 %v1371
  %2255 = vmatmul.mubr.bf16.gmra.mxu0 %v1045
  %v2256 = vpop.f32.mrf.mxu0
  %v2257 = vadd.f32 0.0, %v2256
  %v2258 = vpop.f32.mrf.mxu0
  %v2259 = vadd.f32 0.0, %v2258
  %v2260 = vpop.f32.mrf.mxu0
  %v2261 = vpop.f32.mrf.mxu0
  %2262 = vdwg.mxu0
  %2263 = vmatprep.subr.bf16.mxu0 %v1947
  %2264 = vmatpush1.bf16.msra.mxu0 %v1946
  %2265 = vmatprep.subr.bf16.mxu0 %v1939
  %2266 = vmatpush1.bf16.msra.mxu0 %v1938
  %2267 = vmatprep.subr.bf16.mxu0 %v1931
  %2268 = vmatpush1.bf16.msra.mxu0 %v1930
  %2269 = vmatprep.subr.bf16.mxu0 %v1923
  %2270 = vmatpush1.bf16.msra.mxu0 %v1922
  %2271 = vmatprep.subr.bf16.mxu0 %v1915
  %2272 = vmatpush1.bf16.msra.mxu0 %v1914
  %2273 = vmatprep.subr.bf16.mxu0 %v1907
  %2274 = vmatpush1.bf16.msra.mxu0 %v1906
  %2275 = vmatprep.subr.bf16.mxu0 %v1899
  %2276 = vmatpush1.bf16.msra.mxu0 %v1898
  %2277 = vmatprep.subr.bf16.mxu0 %v1891
  %2278 = vmatpush1.bf16.msra.mxu0 %v1890
  %2279 = vmatprep.subr.bf16.mxu0 %v2011
  %2280 = vmatpush2.bf16.msra.mxu0 %v2010
  %2281 = vmatprep.subr.bf16.mxu0 %v2003
  %2282 = vmatpush2.bf16.msra.mxu0 %v2002
  %2283 = vmatprep.subr.bf16.mxu0 %v1995
  %2284 = vmatpush2.bf16.msra.mxu0 %v1994
  %2285 = vmatprep.subr.bf16.mxu0 %v1987
  %2286 = vmatpush2.bf16.msra.mxu0 %v1986
  %2287 = vmatprep.subr.bf16.mxu0 %v1979
  %2288 = vmatpush2.bf16.msra.mxu0 %v1978
  %2289 = vmatprep.subr.bf16.mxu0 %v1971
  %2290 = vmatpush2.bf16.msra.mxu0 %v1970
  %2291 = vmatprep.subr.bf16.mxu0 %v1963
  %2292 = vmatpush2.bf16.msra.mxu0 %v1962
  %2293 = vmatprep.subr.bf16.mxu0 %v1955
  %2294 = vmatpush2.bf16.msra.mxu0 %v1954
  %2295 = vmatprep.mubr.bf16.mxu0 %v1371
  %2296 = vmatmul.mubr.bf16.gmra.mxu0 %v1045
  %v2297 = vpop.f32.mrf.mxu0
  %v2298 = vadd.f32 0.0, %v2297
  %v2299 = vpop.f32.mrf.mxu0
  %v2300 = vadd.f32 0.0, %v2299
  %v2301 = vpop.f32.mrf.mxu0
  %v2302 = vpop.f32.mrf.mxu0
  %2303 = vdwg.mxu0
  %2305 = vset.pattern.permute.xlu0 0
  %2306 = vperm.xlu0 %2305, %v1370
  %v2307 = vpop.permute.xlu0 %2306
  %v2309 = vmul.f32 %v2307, %v977
  %v2310 = vmul.f32 %v2307, %v981
  %v2311 = vmul.f32 %v2307, %v985
  %v2312 = vmul.f32 %v2307, %v989
  %v2313 = vadd.f32 %v2175, %v2309
  %v2314 = vadd.f32 %v2177, %v2310
  %v2315 = vadd.f32 %v2216, %v2311
  %v2316 = vadd.f32 %v2218, %v2312
  %v2317 = vadd.f32 %v2313, %v1006
  %v2318 = vadd.f32 %v2314, %v1010
  %v2319 = vadd.f32 %v2315, %v1014
  %v2320 = vadd.f32 %v2316, %v1018
  %v2321 = vmul.f32 %v2317, 0.5
  %v2322 = vmul.f32 %v2318, 0.5
  %v2323 = vmul.f32 %v2319, 0.5
  %v2324 = vtanh.pop %v2321
  %v2325 = vtanh.pop %v2322
  %v2326 = vtanh.pop %v2323
  %v2327 = vmul.f32 %v2324, 0.5
  %v2328 = vmul.f32 %v2325, 0.5
  %v2329 = vmul.f32 %v2326, 0.5
  %v2330 = vadd.f32 %v2327, 0.5
  %v2331 = vadd.f32 %v2328, 0.5
  %v2332 = vadd.f32 %v2329, 0.5
  %v2333 = vtanh.pop %v2320
  %v2334 = vmul.f32 %v2331, %v1042
  %v2335 = vmul.f32 %v2330, %v2333
  %v2336 = vadd.f32 %v2334, %v2335
  %v2337 = vtanh.pop %v2336
  %v2338 = vmul.f32 %v2332, %v2337
  %v2339 = vpack.c.bf16 %v2338, %v2338
  %v2340 = vld [vmem:[%s4] sm:$0xff]
  %v2341 = vld [vmem:[%s4 + $0x8] sm:$0xff]
  %v2342 = vld [vmem:[%s4 + $0x10] sm:$0xff]
  %v2343 = vld [vmem:[%s4 + $0x18] sm:$0xff]
  %v2344 = vld [vmem:[%s4 + $0x20] sm:$0xff]
  %v2345 = vld [vmem:[%s4 + $0x28] sm:$0xff]
  %v2346 = vld [vmem:[%s4 + $0x30] sm:$0xff]
  %v2347 = vld [vmem:[%s4 + $0x38] sm:$0xff]
  %v2348 = vld [vmem:[%s4 + $0x40] sm:$0xff]
  %v2349 = vld [vmem:[%s4 + $0x48] sm:$0xff]
  %v2350 = vld [vmem:[%s4 + $0x50] sm:$0xff]
  %v2351 = vld [vmem:[%s4 + $0x58] sm:$0xff]
  %v2352 = vld [vmem:[%s4 + $0x60] sm:$0xff]
  %v2353 = vld [vmem:[%s4 + $0x68] sm:$0xff]
  %v2354 = vld [vmem:[%s4 + $0x70] sm:$0xff]
  %v2355 = vld [vmem:[%s4 + $0x78] sm:$0xff]
  %v2356 = vld [vmem:[%s4 + $0x80] sm:$0xff]
  %v2357 = vld [vmem:[%s4 + $0x88] sm:$0xff]
  %v2358 = vld [vmem:[%s4 + $0x90] sm:$0xff]
  %v2359 = vld [vmem:[%s4 + $0x98] sm:$0xff]
  %v2360 = vld [vmem:[%s4 + $0xa0] sm:$0xff]
  %v2361 = vld [vmem:[%s4 + $0xa8] sm:$0xff]
  %v2362 = vld [vmem:[%s4 + $0xb0] sm:$0xff]
  %v2363 = vld [vmem:[%s4 + $0xb8] sm:$0xff]
  %v2364 = vld [vmem:[%s4 + $0xc0] sm:$0xff]
  %v2365 = vld [vmem:[%s4 + $0xc8] sm:$0xff]
  %v2366 = vld [vmem:[%s4 + $0xd0] sm:$0xff]
  %v2367 = vld [vmem:[%s4 + $0xd8] sm:$0xff]
  %v2368 = vld [vmem:[%s4 + $0xe0] sm:$0xff]
  %v2369 = vld [vmem:[%s4 + $0xe8] sm:$0xff]
  %v2370 = vld [vmem:[%s4 + $0xf0] sm:$0xff]
  %v2371 = vld [vmem:[%s4 + $0xf8] sm:$0xff]
  %v2404 = vunpack.c.l.b16 %v2340
  %v2405 = vunpack.c.h.b16 %v2340
  %v2406 = vunpack.c.l.b16 %v2341
  %v2407 = vunpack.c.h.b16 %v2341
  %v2408 = vunpack.c.l.b16 %v2342
  %v2409 = vunpack.c.h.b16 %v2342
  %v2410 = vunpack.c.l.b16 %v2343
  %v2411 = vunpack.c.h.b16 %v2343
  %v2412 = vunpack.c.l.b16 %v2344
  %v2413 = vunpack.c.h.b16 %v2344
  %v2414 = vunpack.c.l.b16 %v2345
  %v2415 = vunpack.c.h.b16 %v2345
  %v2416 = vunpack.c.l.b16 %v2346
  %v2417 = vunpack.c.h.b16 %v2346
  %v2418 = vunpack.c.l.b16 %v2347
  %v2419 = vunpack.c.h.b16 %v2347
  %v2420 = vunpack.c.l.b16 %v2348
  %v2421 = vunpack.c.h.b16 %v2348
  %v2422 = vunpack.c.l.b16 %v2349
  %v2423 = vunpack.c.h.b16 %v2349
  %v2424 = vunpack.c.l.b16 %v2350
  %v2425 = vunpack.c.h.b16 %v2350
  %v2426 = vunpack.c.l.b16 %v2351
  %v2427 = vunpack.c.h.b16 %v2351
  %v2428 = vunpack.c.l.b16 %v2352
  %v2429 = vunpack.c.h.b16 %v2352
  %v2430 = vunpack.c.l.b16 %v2353
  %v2431 = vunpack.c.h.b16 %v2353
  %v2432 = vunpack.c.l.b16 %v2354
  %v2433 = vunpack.c.h.b16 %v2354
  %v2434 = vunpack.c.l.b16 %v2355
  %v2435 = vunpack.c.h.b16 %v2355
  %v2436 = vunpack.c.l.b16 %v2356
  %v2437 = vunpack.c.h.b16 %v2356
  %v2438 = vunpack.c.l.b16 %v2357
  %v2439 = vunpack.c.h.b16 %v2357
  %v2440 = vunpack.c.l.b16 %v2358
  %v2441 = vunpack.c.h.b16 %v2358
  %v2442 = vunpack.c.l.b16 %v2359
  %v2443 = vunpack.c.h.b16 %v2359
  %v2444 = vunpack.c.l.b16 %v2360
  %v2445 = vunpack.c.h.b16 %v2360
  %v2446 = vunpack.c.l.b16 %v2361
  %v2447 = vunpack.c.h.b16 %v2361
  %v2448 = vunpack.c.l.b16 %v2362
  %v2449 = vunpack.c.h.b16 %v2362
  %v2450 = vunpack.c.l.b16 %v2363
  %v2451 = vunpack.c.h.b16 %v2363
  %v2452 = vunpack.c.l.b16 %v2364
  %v2453 = vunpack.c.h.b16 %v2364
  %v2454 = vunpack.c.l.b16 %v2365
  %v2455 = vunpack.c.h.b16 %v2365
  %v2456 = vunpack.c.l.b16 %v2366
  %v2457 = vunpack.c.h.b16 %v2366
  %v2458 = vunpack.c.l.b16 %v2367
  %v2459 = vunpack.c.h.b16 %v2367
  %v2460 = vunpack.c.l.b16 %v2368
  %v2461 = vunpack.c.h.b16 %v2368
  %v2462 = vunpack.c.l.b16 %v2369
  %v2463 = vunpack.c.h.b16 %v2369
  %v2464 = vunpack.c.l.b16 %v2370
  %v2465 = vunpack.c.h.b16 %v2370
  %v2466 = vunpack.c.l.b16 %v2371
  %v2467 = vunpack.c.h.b16 %v2371
  %v2468 = vpack.c.b16 %v2408, %v2404
  %v2469 = vpack.c.b16 %v2409, %v2405
  %v2470 = vpack.c.b16 %v2410, %v2406
  %v2471 = vpack.c.b16 %v2411, %v2407
  %v2472 = vpack.c.b16 %v2416, %v2412
  %v2473 = vpack.c.b16 %v2417, %v2413
  %v2474 = vpack.c.b16 %v2418, %v2414
  %v2475 = vpack.c.b16 %v2419, %v2415
  %v2476 = vpack.c.b16 %v2424, %v2420
  %v2477 = vpack.c.b16 %v2425, %v2421
  %v2478 = vpack.c.b16 %v2426, %v2422
  %v2479 = vpack.c.b16 %v2427, %v2423
  %v2480 = vpack.c.b16 %v2432, %v2428
  %v2481 = vpack.c.b16 %v2433, %v2429
  %v2482 = vpack.c.b16 %v2434, %v2430
  %v2483 = vpack.c.b16 %v2435, %v2431
  %v2484 = vpack.c.b16 %v2440, %v2436
  %v2485 = vpack.c.b16 %v2441, %v2437
  %v2486 = vpack.c.b16 %v2442, %v2438
  %v2487 = vpack.c.b16 %v2443, %v2439
  %v2488 = vpack.c.b16 %v2448, %v2444
  %v2489 = vpack.c.b16 %v2449, %v2445
  %v2490 = vpack.c.b16 %v2450, %v2446
  %v2491 = vpack.c.b16 %v2451, %v2447
  %v2492 = vpack.c.b16 %v2456, %v2452
  %v2493 = vpack.c.b16 %v2457, %v2453
  %v2494 = vpack.c.b16 %v2458, %v2454
  %v2495 = vpack.c.b16 %v2459, %v2455
  %v2496 = vpack.c.b16 %v2464, %v2460
  %v2497 = vpack.c.b16 %v2465, %v2461
  %v2498 = vpack.c.b16 %v2466, %v2462
  %v2499 = vpack.c.b16 %v2467, %v2463
  %2532 = vmatprep.subr.bf16.mxu0 %v2497
  %2533 = vmatpush1.bf16.msra.mxu0 %v2496
  %2534 = vmatprep.subr.bf16.mxu0 %v2493
  %2535 = vmatpush1.bf16.msra.mxu0 %v2492
  %2536 = vmatprep.subr.bf16.mxu0 %v2489
  %2537 = vmatpush1.bf16.msra.mxu0 %v2488
  %2538 = vmatprep.subr.bf16.mxu0 %v2485
  %2539 = vmatpush1.bf16.msra.mxu0 %v2484
  %2540 = vmatprep.subr.bf16.mxu0 %v2481
  %2541 = vmatpush1.bf16.msra.mxu0 %v2480
  %2542 = vmatprep.subr.bf16.mxu0 %v2477
  %2543 = vmatpush1.bf16.msra.mxu0 %v2476
  %2544 = vmatprep.subr.bf16.mxu0 %v2473
  %2545 = vmatpush1.bf16.msra.mxu0 %v2472
  %2546 = vmatprep.subr.bf16.mxu0 %v2469
  %2547 = vmatpush1.bf16.msra.mxu0 %v2468
  %2548 = vmatprep.subr.bf16.mxu0 0
  %2549 = vmatpush2.bf16.msra.mxu0 0
  %2550 = vmatprep.subr.bf16.mxu0 0
  %2551 = vmatpush2.bf16.msra.mxu0 0
  %2552 = vmatprep.subr.bf16.mxu0 0
  %2553 = vmatpush2.bf16.msra.mxu0 0
  %2554 = vmatprep.subr.bf16.mxu0 0
  %2555 = vmatpush2.bf16.msra.mxu0 0
  %2556 = vmatprep.subr.bf16.mxu0 0
  %2557 = vmatpush2.bf16.msra.mxu0 0
  %2558 = vmatprep.subr.bf16.mxu0 0
  %2559 = vmatpush2.bf16.msra.mxu0 0
  %2560 = vmatprep.subr.bf16.mxu0 0
  %2561 = vmatpush2.bf16.msra.mxu0 0
  %2562 = vmatprep.subr.bf16.mxu0 0
  %2563 = vmatpush2.bf16.msra.mxu0 0
  %2564 = vmatprep.mubr.bf16.mxu0 0
  %2565 = vmatmul.mubr.bf16.gmra.mxu0 %v2339
  %v2566 = vpop.f32.mrf.mxu0
  %v2567 = vadd.f32 0.0, %v2566
  %v2568 = vpop.f32.mrf.mxu0
  %v2569 = vadd.f32 0.0, %v2568
  %v2570 = vpop.f32.mrf.mxu0
  %v2571 = vpop.f32.mrf.mxu0
  %2572 = vdwg.mxu0
  %2573 = vmatprep.subr.bf16.mxu0 %v2499
  %2574 = vmatpush1.bf16.msra.mxu0 %v2498
  %2575 = vmatprep.subr.bf16.mxu0 %v2495
  %2576 = vmatpush1.bf16.msra.mxu0 %v2494
  %2577 = vmatprep.subr.bf16.mxu0 %v2491
  %2578 = vmatpush1.bf16.msra.mxu0 %v2490
  %2579 = vmatprep.subr.bf16.mxu0 %v2487
  %2580 = vmatpush1.bf16.msra.mxu0 %v2486
  %2581 = vmatprep.subr.bf16.mxu0 %v2483
  %2582 = vmatpush1.bf16.msra.mxu0 %v2482
  %2583 = vmatprep.subr.bf16.mxu0 %v2479
  %2584 = vmatpush1.bf16.msra.mxu0 %v2478
  %2585 = vmatprep.subr.bf16.mxu0 %v2475
  %2586 = vmatpush1.bf16.msra.mxu0 %v2474
  %2587 = vmatprep.subr.bf16.mxu0 %v2471
  %2588 = vmatpush1.bf16.msra.mxu0 %v2470
  %2589 = vmatprep.subr.bf16.mxu0 0
  %2590 = vmatpush2.bf16.msra.mxu0 0
  %2591 = vmatprep.subr.bf16.mxu0 0
  %2592 = vmatpush2.bf16.msra.mxu0 0
  %2593 = vmatprep.subr.bf16.mxu0 0
  %2594 = vmatpush2.bf16.msra.mxu0 0
  %2595 = vmatprep.subr.bf16.mxu0 0
  %2596 = vmatpush2.bf16.msra.mxu0 0
  %2597 = vmatprep.subr.bf16.mxu0 0
  %2598 = vmatpush2.bf16.msra.mxu0 0
  %2599 = vmatprep.subr.bf16.mxu0 0
  %2600 = vmatpush2.bf16.msra.mxu0 0
  %2601 = vmatprep.subr.bf16.mxu0 0
  %2602 = vmatpush2.bf16.msra.mxu0 0
  %2603 = vmatprep.subr.bf16.mxu0 0
  %2604 = vmatpush2.bf16.msra.mxu0 0
  %2605 = vmatprep.mubr.bf16.mxu0 0
  %2606 = vmatmul.mubr.bf16.gmra.mxu0 %v2339
  %v2607 = vpop.f32.mrf.mxu0
  %v2608 = vadd.f32 0.0, %v2607
  %v2609 = vpop.f32.mrf.mxu0
  %v2610 = vadd.f32 0.0, %v2609
  %v2611 = vpop.f32.mrf.mxu0
  %v2612 = vpop.f32.mrf.mxu0
  %2613 = vdwg.mxu0
  %v2614 = vadd.f32 %v2257, %v2567
  %v2615 = vadd.f32 %v2259, %v2569
  %v2616 = vadd.f32 %v2298, %v2608
  %v2617 = vadd.f32 %v2300, %v2610
  %v2618 = vadd.f32 %v2614, %v1328
  %v2619 = vadd.f32 %v2615, %v1332
  %v2620 = vadd.f32 %v2616, %v1336
  %v2621 = vadd.f32 %v2617, %v1340
  %v2622 = vmul.f32 %v2618, 0.5
  %v2623 = vmul.f32 %v2619, 0.5
  %v2624 = vmul.f32 %v2620, 0.5
  %v2625 = vtanh.pop %v2622
  %v2626 = vtanh.pop %v2623
  %v2627 = vtanh.pop %v2624
  %v2628 = vmul.f32 %v2625, 0.5
  %v2629 = vmul.f32 %v2626, 0.5
  %v2630 = vmul.f32 %v2627, 0.5
  %v2631 = vadd.f32 %v2628, 0.5
  %v2632 = vadd.f32 %v2629, 0.5
  %v2633 = vadd.f32 %v2630, 0.5
  %v2634 = vtanh.pop %v2621
  %v2635 = vmul.f32 %v2632, %v1364
  %v2636 = vmul.f32 %v2631, %v2634
  %v2637 = vadd.f32 %v2635, %v2636
  %v2638 = vtanh.pop %v2637
  %v2639 = vmul.f32 %v2633, %v2638
  %v2640 = vadd.f32 %v2338, %v2639
  %s2641 = scalar_lea.vmem [#allocation2], 2
  %2642 = vst [vmem:[%s2641] sm:$0x3] %v2640
  %s2643 = scalar_lea.vmem %s0, 4
  %v2644 = vld [vmem:[%s2643] sm:$0x3]
  %v2645 = vpack.c.bf16 %v2639, %v2639
  %v2646 = vld [vmem:[%s3] sm:$0xff]
  %v2647 = vld [vmem:[%s3 + $0x8] sm:$0xff]
  %v2648 = vld [vmem:[%s3 + $0x10] sm:$0xff]
  %v2649 = vld [vmem:[%s3 + $0x18] sm:$0xff]
  %v2650 = vld [vmem:[%s3 + $0x20] sm:$0xff]
  %v2651 = vld [vmem:[%s3 + $0x28] sm:$0xff]
  %v2652 = vld [vmem:[%s3 + $0x30] sm:$0xff]
  %v2653 = vld [vmem:[%s3 + $0x38] sm:$0xff]
  %v2654 = vld [vmem:[%s3 + $0x40] sm:$0xff]
  %v2655 = vld [vmem:[%s3 + $0x48] sm:$0xff]
  %v2656 = vld [vmem:[%s3 + $0x50] sm:$0xff]
  %v2657 = vld [vmem:[%s3 + $0x58] sm:$0xff]
  %v2658 = vld [vmem:[%s3 + $0x60] sm:$0xff]
  %v2659 = vld [vmem:[%s3 + $0x68] sm:$0xff]
  %v2660 = vld [vmem:[%s3 + $0x70] sm:$0xff]
  %v2661 = vld [vmem:[%s3 + $0x78] sm:$0xff]
  %v2662 = vld [vmem:[%s3 + $0x80] sm:$0xff]
  %v2663 = vld [vmem:[%s3 + $0x88] sm:$0xff]
  %v2664 = vld [vmem:[%s3 + $0x90] sm:$0xff]
  %v2665 = vld [vmem:[%s3 + $0x98] sm:$0xff]
  %v2666 = vld [vmem:[%s3 + $0xa0] sm:$0xff]
  %v2667 = vld [vmem:[%s3 + $0xa8] sm:$0xff]
  %v2668 = vld [vmem:[%s3 + $0xb0] sm:$0xff]
  %v2669 = vld [vmem:[%s3 + $0xb8] sm:$0xff]
  %v2670 = vld [vmem:[%s3 + $0xc0] sm:$0xff]
  %v2671 = vld [vmem:[%s3 + $0xc8] sm:$0xff]
  %v2672 = vld [vmem:[%s3 + $0xd0] sm:$0xff]
  %v2673 = vld [vmem:[%s3 + $0xd8] sm:$0xff]
  %v2674 = vld [vmem:[%s3 + $0xe0] sm:$0xff]
  %v2675 = vld [vmem:[%s3 + $0xe8] sm:$0xff]
  %v2676 = vld [vmem:[%s3 + $0xf0] sm:$0xff]
  %v2677 = vld [vmem:[%s3 + $0xf8] sm:$0xff]
  %v2678 = vld [vmem:[%s3 + $0x100] sm:$0xff]
  %v2679 = vld [vmem:[%s3 + $0x108] sm:$0xff]
  %v2680 = vld [vmem:[%s3 + $0x110] sm:$0xff]
  %v2681 = vld [vmem:[%s3 + $0x118] sm:$0xff]
  %v2682 = vld [vmem:[%s3 + $0x120] sm:$0xff]
  %v2683 = vld [vmem:[%s3 + $0x128] sm:$0xff]
  %v2684 = vld [vmem:[%s3 + $0x130] sm:$0xff]
  %v2685 = vld [vmem:[%s3 + $0x138] sm:$0xff]
  %v2686 = vld [vmem:[%s3 + $0x140] sm:$0xff]
  %v2687 = vld [vmem:[%s3 + $0x148] sm:$0xff]
  %v2688 = vld [vmem:[%s3 + $0x150] sm:$0xff]
  %v2689 = vld [vmem:[%s3 + $0x158] sm:$0xff]
  %v2690 = vld [vmem:[%s3 + $0x160] sm:$0xff]
  %v2691 = vld [vmem:[%s3 + $0x168] sm:$0xff]
  %v2692 = vld [vmem:[%s3 + $0x170] sm:$0xff]
  %v2693 = vld [vmem:[%s3 + $0x178] sm:$0xff]
  %v2694 = vld [vmem:[%s3 + $0x180] sm:$0xff]
  %v2695 = vld [vmem:[%s3 + $0x188] sm:$0xff]
  %v2696 = vld [vmem:[%s3 + $0x190] sm:$0xff]
  %v2697 = vld [vmem:[%s3 + $0x198] sm:$0xff]
  %v2698 = vld [vmem:[%s3 + $0x1a0] sm:$0xff]
  %v2699 = vld [vmem:[%s3 + $0x1a8] sm:$0xff]
  %v2700 = vld [vmem:[%s3 + $0x1b0] sm:$0xff]
  %v2701 = vld [vmem:[%s3 + $0x1b8] sm:$0xff]
  %v2702 = vld [vmem:[%s3 + $0x1c0] sm:$0xff]
  %v2703 = vld [vmem:[%s3 + $0x1c8] sm:$0xff]
  %v2704 = vld [vmem:[%s3 + $0x1d0] sm:$0xff]
  %v2705 = vld [vmem:[%s3 + $0x1d8] sm:$0xff]
  %v2706 = vld [vmem:[%s3 + $0x1e0] sm:$0xff]
  %v2707 = vld [vmem:[%s3 + $0x1e8] sm:$0xff]
  %v2708 = vld [vmem:[%s3 + $0x1f0] sm:$0xff]
  %v2709 = vld [vmem:[%s3 + $0x1f8] sm:$0xff]
  %v2710 = vld [vmem:[%s3 + $0x200] sm:$0xff]
  %v2711 = vld [vmem:[%s3 + $0x208] sm:$0xff]
  %v2712 = vld [vmem:[%s3 + $0x210] sm:$0xff]
  %v2713 = vld [vmem:[%s3 + $0x218] sm:$0xff]
  %v2714 = vld [vmem:[%s3 + $0x220] sm:$0xff]
  %v2715 = vld [vmem:[%s3 + $0x228] sm:$0xff]
  %v2716 = vld [vmem:[%s3 + $0x230] sm:$0xff]
  %v2717 = vld [vmem:[%s3 + $0x238] sm:$0xff]
  %v2718 = vld [vmem:[%s3 + $0x240] sm:$0xff]
  %v2719 = vld [vmem:[%s3 + $0x248] sm:$0xff]
  %v2720 = vld [vmem:[%s3 + $0x250] sm:$0xff]
  %v2721 = vld [vmem:[%s3 + $0x258] sm:$0xff]
  %v2722 = vld [vmem:[%s3 + $0x260] sm:$0xff]
  %v2723 = vld [vmem:[%s3 + $0x268] sm:$0xff]
  %v2724 = vld [vmem:[%s3 + $0x270] sm:$0xff]
  %v2725 = vld [vmem:[%s3 + $0x278] sm:$0xff]
  %v2726 = vld [vmem:[%s3 + $0x280] sm:$0xff]
  %v2727 = vld [vmem:[%s3 + $0x288] sm:$0xff]
  %v2728 = vld [vmem:[%s3 + $0x290] sm:$0xff]
  %v2729 = vld [vmem:[%s3 + $0x298] sm:$0xff]
  %v2730 = vld [vmem:[%s3 + $0x2a0] sm:$0xff]
  %v2731 = vld [vmem:[%s3 + $0x2a8] sm:$0xff]
  %v2732 = vld [vmem:[%s3 + $0x2b0] sm:$0xff]
  %v2733 = vld [vmem:[%s3 + $0x2b8] sm:$0xff]
  %v2734 = vld [vmem:[%s3 + $0x2c0] sm:$0xff]
  %v2735 = vld [vmem:[%s3 + $0x2c8] sm:$0xff]
  %v2736 = vld [vmem:[%s3 + $0x2d0] sm:$0xff]
  %v2737 = vld [vmem:[%s3 + $0x2d8] sm:$0xff]
  %v2738 = vld [vmem:[%s3 + $0x2e0] sm:$0xff]
  %v2739 = vld [vmem:[%s3 + $0x2e8] sm:$0xff]
  %v2740 = vld [vmem:[%s3 + $0x2f0] sm:$0xff]
  %v2741 = vld [vmem:[%s3 + $0x2f8] sm:$0xff]
  %v2742 = vld [vmem:[%s3 + $0x300] sm:$0xff]
  %v2743 = vld [vmem:[%s3 + $0x308] sm:$0xff]
  %v2744 = vld [vmem:[%s3 + $0x310] sm:$0xff]
  %v2745 = vld [vmem:[%s3 + $0x318] sm:$0xff]
  %v2746 = vld [vmem:[%s3 + $0x320] sm:$0xff]
  %v2747 = vld [vmem:[%s3 + $0x328] sm:$0xff]
  %v2748 = vld [vmem:[%s3 + $0x330] sm:$0xff]
  %v2749 = vld [vmem:[%s3 + $0x338] sm:$0xff]
  %v2750 = vld [vmem:[%s3 + $0x340] sm:$0xff]
  %v2751 = vld [vmem:[%s3 + $0x348] sm:$0xff]
  %v2752 = vld [vmem:[%s3 + $0x350] sm:$0xff]
  %v2753 = vld [vmem:[%s3 + $0x358] sm:$0xff]
  %v2754 = vld [vmem:[%s3 + $0x360] sm:$0xff]
  %v2755 = vld [vmem:[%s3 + $0x368] sm:$0xff]
  %v2756 = vld [vmem:[%s3 + $0x370] sm:$0xff]
  %v2757 = vld [vmem:[%s3 + $0x378] sm:$0xff]
  %v2758 = vld [vmem:[%s3 + $0x380] sm:$0xff]
  %v2759 = vld [vmem:[%s3 + $0x388] sm:$0xff]
  %v2760 = vld [vmem:[%s3 + $0x390] sm:$0xff]
  %v2761 = vld [vmem:[%s3 + $0x398] sm:$0xff]
  %v2762 = vld [vmem:[%s3 + $0x3a0] sm:$0xff]
  %v2763 = vld [vmem:[%s3 + $0x3a8] sm:$0xff]
  %v2764 = vld [vmem:[%s3 + $0x3b0] sm:$0xff]
  %v2765 = vld [vmem:[%s3 + $0x3b8] sm:$0xff]
  %v2766 = vld [vmem:[%s3 + $0x3c0] sm:$0xff]
  %v2767 = vld [vmem:[%s3 + $0x3c8] sm:$0xff]
  %v2768 = vld [vmem:[%s3 + $0x3d0] sm:$0xff]
  %v2769 = vld [vmem:[%s3 + $0x3d8] sm:$0xff]
  %v2770 = vld [vmem:[%s3 + $0x3e0] sm:$0xff]
  %v2771 = vld [vmem:[%s3 + $0x3e8] sm:$0xff]
  %v2772 = vld [vmem:[%s3 + $0x3f0] sm:$0xff]
  %v2773 = vld [vmem:[%s3 + $0x3f8] sm:$0xff]
  %v2902 = vunpack.c.l.b16 %v2646
  %v2903 = vunpack.c.h.b16 %v2646
  %v2904 = vunpack.c.l.b16 %v2647
  %v2905 = vunpack.c.h.b16 %v2647
  %v2906 = vunpack.c.l.b16 %v2648
  %v2907 = vunpack.c.h.b16 %v2648
  %v2908 = vunpack.c.l.b16 %v2649
  %v2909 = vunpack.c.h.b16 %v2649
  %v2910 = vunpack.c.l.b16 %v2650
  %v2911 = vunpack.c.h.b16 %v2650
  %v2912 = vunpack.c.l.b16 %v2651
  %v2913 = vunpack.c.h.b16 %v2651
  %v2914 = vunpack.c.l.b16 %v2652
  %v2915 = vunpack.c.h.b16 %v2652
  %v2916 = vunpack.c.l.b16 %v2653
  %v2917 = vunpack.c.h.b16 %v2653
  %v2918 = vunpack.c.l.b16 %v2654
  %v2919 = vunpack.c.h.b16 %v2654
  %v2920 = vunpack.c.l.b16 %v2655
  %v2921 = vunpack.c.h.b16 %v2655
  %v2922 = vunpack.c.l.b16 %v2656
  %v2923 = vunpack.c.h.b16 %v2656
  %v2924 = vunpack.c.l.b16 %v2657
  %v2925 = vunpack.c.h.b16 %v2657
  %v2926 = vunpack.c.l.b16 %v2658
  %v2927 = vunpack.c.h.b16 %v2658
  %v2928 = vunpack.c.l.b16 %v2659
  %v2929 = vunpack.c.h.b16 %v2659
  %v2930 = vunpack.c.l.b16 %v2660
  %v2931 = vunpack.c.h.b16 %v2660
  %v2932 = vunpack.c.l.b16 %v2661
  %v2933 = vunpack.c.h.b16 %v2661
  %v2934 = vunpack.c.l.b16 %v2662
  %v2935 = vunpack.c.h.b16 %v2662
  %v2936 = vunpack.c.l.b16 %v2663
  %v2937 = vunpack.c.h.b16 %v2663
  %v2938 = vunpack.c.l.b16 %v2664
  %v2939 = vunpack.c.h.b16 %v2664
  %v2940 = vunpack.c.l.b16 %v2665
  %v2941 = vunpack.c.h.b16 %v2665
  %v2942 = vunpack.c.l.b16 %v2666
  %v2943 = vunpack.c.h.b16 %v2666
  %v2944 = vunpack.c.l.b16 %v2667
  %v2945 = vunpack.c.h.b16 %v2667
  %v2946 = vunpack.c.l.b16 %v2668
  %v2947 = vunpack.c.h.b16 %v2668
  %v2948 = vunpack.c.l.b16 %v2669
  %v2949 = vunpack.c.h.b16 %v2669
  %v2950 = vunpack.c.l.b16 %v2670
  %v2951 = vunpack.c.h.b16 %v2670
  %v2952 = vunpack.c.l.b16 %v2671
  %v2953 = vunpack.c.h.b16 %v2671
  %v2954 = vunpack.c.l.b16 %v2672
  %v2955 = vunpack.c.h.b16 %v2672
  %v2956 = vunpack.c.l.b16 %v2673
  %v2957 = vunpack.c.h.b16 %v2673
  %v2958 = vunpack.c.l.b16 %v2674
  %v2959 = vunpack.c.h.b16 %v2674
  %v2960 = vunpack.c.l.b16 %v2675
  %v2961 = vunpack.c.h.b16 %v2675
  %v2962 = vunpack.c.l.b16 %v2676
  %v2963 = vunpack.c.h.b16 %v2676
  %v2964 = vunpack.c.l.b16 %v2677
  %v2965 = vunpack.c.h.b16 %v2677
  %v2966 = vunpack.c.l.b16 %v2678
  %v2967 = vunpack.c.h.b16 %v2678
  %v2968 = vunpack.c.l.b16 %v2679
  %v2969 = vunpack.c.h.b16 %v2679
  %v2970 = vunpack.c.l.b16 %v2680
  %v2971 = vunpack.c.h.b16 %v2680
  %v2972 = vunpack.c.l.b16 %v2681
  %v2973 = vunpack.c.h.b16 %v2681
  %v2974 = vunpack.c.l.b16 %v2682
  %v2975 = vunpack.c.h.b16 %v2682
  %v2976 = vunpack.c.l.b16 %v2683
  %v2977 = vunpack.c.h.b16 %v2683
  %v2978 = vunpack.c.l.b16 %v2684
  %v2979 = vunpack.c.h.b16 %v2684
  %v2980 = vunpack.c.l.b16 %v2685
  %v2981 = vunpack.c.h.b16 %v2685
  %v2982 = vunpack.c.l.b16 %v2686
  %v2983 = vunpack.c.h.b16 %v2686
  %v2984 = vunpack.c.l.b16 %v2687
  %v2985 = vunpack.c.h.b16 %v2687
  %v2986 = vunpack.c.l.b16 %v2688
  %v2987 = vunpack.c.h.b16 %v2688
  %v2988 = vunpack.c.l.b16 %v2689
  %v2989 = vunpack.c.h.b16 %v2689
  %v2990 = vunpack.c.l.b16 %v2690
  %v2991 = vunpack.c.h.b16 %v2690
  %v2992 = vunpack.c.l.b16 %v2691
  %v2993 = vunpack.c.h.b16 %v2691
  %v2994 = vunpack.c.l.b16 %v2692
  %v2995 = vunpack.c.h.b16 %v2692
  %v2996 = vunpack.c.l.b16 %v2693
  %v2997 = vunpack.c.h.b16 %v2693
  %v2998 = vunpack.c.l.b16 %v2694
  %v2999 = vunpack.c.h.b16 %v2694
  %v3000 = vunpack.c.l.b16 %v2695
  %v3001 = vunpack.c.h.b16 %v2695
  %v3002 = vunpack.c.l.b16 %v2696
  %v3003 = vunpack.c.h.b16 %v2696
  %v3004 = vunpack.c.l.b16 %v2697
  %v3005 = vunpack.c.h.b16 %v2697
  %v3006 = vunpack.c.l.b16 %v2698
  %v3007 = vunpack.c.h.b16 %v2698
  %v3008 = vunpack.c.l.b16 %v2699
  %v3009 = vunpack.c.h.b16 %v2699
  %v3010 = vunpack.c.l.b16 %v2700
  %v3011 = vunpack.c.h.b16 %v2700
  %v3012 = vunpack.c.l.b16 %v2701
  %v3013 = vunpack.c.h.b16 %v2701
  %v3014 = vunpack.c.l.b16 %v2702
  %v3015 = vunpack.c.h.b16 %v2702
  %v3016 = vunpack.c.l.b16 %v2703
  %v3017 = vunpack.c.h.b16 %v2703
  %v3018 = vunpack.c.l.b16 %v2704
  %v3019 = vunpack.c.h.b16 %v2704
  %v3020 = vunpack.c.l.b16 %v2705
  %v3021 = vunpack.c.h.b16 %v2705
  %v3022 = vunpack.c.l.b16 %v2706
  %v3023 = vunpack.c.h.b16 %v2706
  %v3024 = vunpack.c.l.b16 %v2707
  %v3025 = vunpack.c.h.b16 %v2707
  %v3026 = vunpack.c.l.b16 %v2708
  %v3027 = vunpack.c.h.b16 %v2708
  %v3028 = vunpack.c.l.b16 %v2709
  %v3029 = vunpack.c.h.b16 %v2709
  %v3030 = vunpack.c.l.b16 %v2710
  %v3031 = vunpack.c.h.b16 %v2710
  %v3032 = vunpack.c.l.b16 %v2711
  %v3033 = vunpack.c.h.b16 %v2711
  %v3034 = vunpack.c.l.b16 %v2712
  %v3035 = vunpack.c.h.b16 %v2712
  %v3036 = vunpack.c.l.b16 %v2713
  %v3037 = vunpack.c.h.b16 %v2713
  %v3038 = vunpack.c.l.b16 %v2714
  %v3039 = vunpack.c.h.b16 %v2714
  %v3040 = vunpack.c.l.b16 %v2715
  %v3041 = vunpack.c.h.b16 %v2715
  %v3042 = vunpack.c.l.b16 %v2716
  %v3043 = vunpack.c.h.b16 %v2716
  %v3044 = vunpack.c.l.b16 %v2717
  %v3045 = vunpack.c.h.b16 %v2717
  %v3046 = vunpack.c.l.b16 %v2718
  %v3047 = vunpack.c.h.b16 %v2718
  %v3048 = vunpack.c.l.b16 %v2719
  %v3049 = vunpack.c.h.b16 %v2719
  %v3050 = vunpack.c.l.b16 %v2720
  %v3051 = vunpack.c.h.b16 %v2720
  %v3052 = vunpack.c.l.b16 %v2721
  %v3053 = vunpack.c.h.b16 %v2721
  %v3054 = vunpack.c.l.b16 %v2722
  %v3055 = vunpack.c.h.b16 %v2722
  %v3056 = vunpack.c.l.b16 %v2723
  %v3057 = vunpack.c.h.b16 %v2723
  %v3058 = vunpack.c.l.b16 %v2724
  %v3059 = vunpack.c.h.b16 %v2724
  %v3060 = vunpack.c.l.b16 %v2725
  %v3061 = vunpack.c.h.b16 %v2725
  %v3062 = vunpack.c.l.b16 %v2726
  %v3063 = vunpack.c.h.b16 %v2726
  %v3064 = vunpack.c.l.b16 %v2727
  %v3065 = vunpack.c.h.b16 %v2727
  %v3066 = vunpack.c.l.b16 %v2728
  %v3067 = vunpack.c.h.b16 %v2728
  %v3068 = vunpack.c.l.b16 %v2729
  %v3069 = vunpack.c.h.b16 %v2729
  %v3070 = vunpack.c.l.b16 %v2730
  %v3071 = vunpack.c.h.b16 %v2730
  %v3072 = vunpack.c.l.b16 %v2731
  %v3073 = vunpack.c.h.b16 %v2731
  %v3074 = vunpack.c.l.b16 %v2732
  %v3075 = vunpack.c.h.b16 %v2732
  %v3076 = vunpack.c.l.b16 %v2733
  %v3077 = vunpack.c.h.b16 %v2733
  %v3078 = vunpack.c.l.b16 %v2734
  %v3079 = vunpack.c.h.b16 %v2734
  %v3080 = vunpack.c.l.b16 %v2735
  %v3081 = vunpack.c.h.b16 %v2735
  %v3082 = vunpack.c.l.b16 %v2736
  %v3083 = vunpack.c.h.b16 %v2736
  %v3084 = vunpack.c.l.b16 %v2737
  %v3085 = vunpack.c.h.b16 %v2737
  %v3086 = vunpack.c.l.b16 %v2738
  %v3087 = vunpack.c.h.b16 %v2738
  %v3088 = vunpack.c.l.b16 %v2739
  %v3089 = vunpack.c.h.b16 %v2739
  %v3090 = vunpack.c.l.b16 %v2740
  %v3091 = vunpack.c.h.b16 %v2740
  %v3092 = vunpack.c.l.b16 %v2741
  %v3093 = vunpack.c.h.b16 %v2741
  %v3094 = vunpack.c.l.b16 %v2742
  %v3095 = vunpack.c.h.b16 %v2742
  %v3096 = vunpack.c.l.b16 %v2743
  %v3097 = vunpack.c.h.b16 %v2743
  %v3098 = vunpack.c.l.b16 %v2744
  %v3099 = vunpack.c.h.b16 %v2744
  %v3100 = vunpack.c.l.b16 %v2745
  %v3101 = vunpack.c.h.b16 %v2745
  %v3102 = vunpack.c.l.b16 %v2746
  %v3103 = vunpack.c.h.b16 %v2746
  %v3104 = vunpack.c.l.b16 %v2747
  %v3105 = vunpack.c.h.b16 %v2747
  %v3106 = vunpack.c.l.b16 %v2748
  %v3107 = vunpack.c.h.b16 %v2748
  %v3108 = vunpack.c.l.b16 %v2749
  %v3109 = vunpack.c.h.b16 %v2749
  %v3110 = vunpack.c.l.b16 %v2750
  %v3111 = vunpack.c.h.b16 %v2750
  %v3112 = vunpack.c.l.b16 %v2751
  %v3113 = vunpack.c.h.b16 %v2751
  %v3114 = vunpack.c.l.b16 %v2752
  %v3115 = vunpack.c.h.b16 %v2752
  %v3116 = vunpack.c.l.b16 %v2753
  %v3117 = vunpack.c.h.b16 %v2753
  %v3118 = vunpack.c.l.b16 %v2754
  %v3119 = vunpack.c.h.b16 %v2754
  %v3120 = vunpack.c.l.b16 %v2755
  %v3121 = vunpack.c.h.b16 %v2755
  %v3122 = vunpack.c.l.b16 %v2756
  %v3123 = vunpack.c.h.b16 %v2756
  %v3124 = vunpack.c.l.b16 %v2757
  %v3125 = vunpack.c.h.b16 %v2757
  %v3126 = vunpack.c.l.b16 %v2758
  %v3127 = vunpack.c.h.b16 %v2758
  %v3128 = vunpack.c.l.b16 %v2759
  %v3129 = vunpack.c.h.b16 %v2759
  %v3130 = vunpack.c.l.b16 %v2760
  %v3131 = vunpack.c.h.b16 %v2760
  %v3132 = vunpack.c.l.b16 %v2761
  %v3133 = vunpack.c.h.b16 %v2761
  %v3134 = vunpack.c.l.b16 %v2762
  %v3135 = vunpack.c.h.b16 %v2762
  %v3136 = vunpack.c.l.b16 %v2763
  %v3137 = vunpack.c.h.b16 %v2763
  %v3138 = vunpack.c.l.b16 %v2764
  %v3139 = vunpack.c.h.b16 %v2764
  %v3140 = vunpack.c.l.b16 %v2765
  %v3141 = vunpack.c.h.b16 %v2765
  %v3142 = vunpack.c.l.b16 %v2766
  %v3143 = vunpack.c.h.b16 %v2766
  %v3144 = vunpack.c.l.b16 %v2767
  %v3145 = vunpack.c.h.b16 %v2767
  %v3146 = vunpack.c.l.b16 %v2768
  %v3147 = vunpack.c.h.b16 %v2768
  %v3148 = vunpack.c.l.b16 %v2769
  %v3149 = vunpack.c.h.b16 %v2769
  %v3150 = vunpack.c.l.b16 %v2770
  %v3151 = vunpack.c.h.b16 %v2770
  %v3152 = vunpack.c.l.b16 %v2771
  %v3153 = vunpack.c.h.b16 %v2771
  %v3154 = vunpack.c.l.b16 %v2772
  %v3155 = vunpack.c.h.b16 %v2772
  %v3156 = vunpack.c.l.b16 %v2773
  %v3157 = vunpack.c.h.b16 %v2773
  %v3158 = vpack.c.b16 %v2910, %v2902
  %v3159 = vpack.c.b16 %v2911, %v2903
  %v3160 = vpack.c.b16 %v2912, %v2904
  %v3161 = vpack.c.b16 %v2913, %v2905
  %v3162 = vpack.c.b16 %v2914, %v2906
  %v3163 = vpack.c.b16 %v2915, %v2907
  %v3164 = vpack.c.b16 %v2916, %v2908
  %v3165 = vpack.c.b16 %v2917, %v2909
  %v3166 = vpack.c.b16 %v2926, %v2918
  %v3167 = vpack.c.b16 %v2927, %v2919
  %v3168 = vpack.c.b16 %v2928, %v2920
  %v3169 = vpack.c.b16 %v2929, %v2921
  %v3170 = vpack.c.b16 %v2930, %v2922
  %v3171 = vpack.c.b16 %v2931, %v2923
  %v3172 = vpack.c.b16 %v2932, %v2924
  %v3173 = vpack.c.b16 %v2933, %v2925
  %v3174 = vpack.c.b16 %v2942, %v2934
  %v3175 = vpack.c.b16 %v2943, %v2935
  %v3176 = vpack.c.b16 %v2944, %v2936
  %v3177 = vpack.c.b16 %v2945, %v2937
  %v3178 = vpack.c.b16 %v2946, %v2938
  %v3179 = vpack.c.b16 %v2947, %v2939
  %v3180 = vpack.c.b16 %v2948, %v2940
  %v3181 = vpack.c.b16 %v2949, %v2941
  %v3182 = vpack.c.b16 %v2958, %v2950
  %v3183 = vpack.c.b16 %v2959, %v2951
  %v3184 = vpack.c.b16 %v2960, %v2952
  %v3185 = vpack.c.b16 %v2961, %v2953
  %v3186 = vpack.c.b16 %v2962, %v2954
  %v3187 = vpack.c.b16 %v2963, %v2955
  %v3188 = vpack.c.b16 %v2964, %v2956
  %v3189 = vpack.c.b16 %v2965, %v2957
  %v3190 = vpack.c.b16 %v2974, %v2966
  %v3191 = vpack.c.b16 %v2975, %v2967
  %v3192 = vpack.c.b16 %v2976, %v2968
  %v3193 = vpack.c.b16 %v2977, %v2969
  %v3194 = vpack.c.b16 %v2978, %v2970
  %v3195 = vpack.c.b16 %v2979, %v2971
  %v3196 = vpack.c.b16 %v2980, %v2972
  %v3197 = vpack.c.b16 %v2981, %v2973
  %v3198 = vpack.c.b16 %v2990, %v2982
  %v3199 = vpack.c.b16 %v2991, %v2983
  %v3200 = vpack.c.b16 %v2992, %v2984
  %v3201 = vpack.c.b16 %v2993, %v2985
  %v3202 = vpack.c.b16 %v2994, %v2986
  %v3203 = vpack.c.b16 %v2995, %v2987
  %v3204 = vpack.c.b16 %v2996, %v2988
  %v3205 = vpack.c.b16 %v2997, %v2989
  %v3206 = vpack.c.b16 %v3006, %v2998
  %v3207 = vpack.c.b16 %v3007, %v2999
  %v3208 = vpack.c.b16 %v3008, %v3000
  %v3209 = vpack.c.b16 %v3009, %v3001
  %v3210 = vpack.c.b16 %v3010, %v3002
  %v3211 = vpack.c.b16 %v3011, %v3003
  %v3212 = vpack.c.b16 %v3012, %v3004
  %v3213 = vpack.c.b16 %v3013, %v3005
  %v3214 = vpack.c.b16 %v3022, %v3014
  %v3215 = vpack.c.b16 %v3023, %v3015
  %v3216 = vpack.c.b16 %v3024, %v3016
  %v3217 = vpack.c.b16 %v3025, %v3017
  %v3218 = vpack.c.b16 %v3026, %v3018
  %v3219 = vpack.c.b16 %v3027, %v3019
  %v3220 = vpack.c.b16 %v3028, %v3020
  %v3221 = vpack.c.b16 %v3029, %v3021
  %v3222 = vpack.c.b16 %v3038, %v3030
  %v3223 = vpack.c.b16 %v3039, %v3031
  %v3224 = vpack.c.b16 %v3040, %v3032
  %v3225 = vpack.c.b16 %v3041, %v3033
  %v3226 = vpack.c.b16 %v3042, %v3034
  %v3227 = vpack.c.b16 %v3043, %v3035
  %v3228 = vpack.c.b16 %v3044, %v3036
  %v3229 = vpack.c.b16 %v3045, %v3037
  %v3230 = vpack.c.b16 %v3054, %v3046
  %v3231 = vpack.c.b16 %v3055, %v3047
  %v3232 = vpack.c.b16 %v3056, %v3048
  %v3233 = vpack.c.b16 %v3057, %v3049
  %v3234 = vpack.c.b16 %v3058, %v3050
  %v3235 = vpack.c.b16 %v3059, %v3051
  %v3236 = vpack.c.b16 %v3060, %v3052
  %v3237 = vpack.c.b16 %v3061, %v3053
  %v3238 = vpack.c.b16 %v3070, %v3062
  %v3239 = vpack.c.b16 %v3071, %v3063
  %v3240 = vpack.c.b16 %v3072, %v3064
  %v3241 = vpack.c.b16 %v3073, %v3065
  %v3242 = vpack.c.b16 %v3074, %v3066
  %v3243 = vpack.c.b16 %v3075, %v3067
  %v3244 = vpack.c.b16 %v3076, %v3068
  %v3245 = vpack.c.b16 %v3077, %v3069
  %v3246 = vpack.c.b16 %v3086, %v3078
  %v3247 = vpack.c.b16 %v3087, %v3079
  %v3248 = vpack.c.b16 %v3088, %v3080
  %v3249 = vpack.c.b16 %v3089, %v3081
  %v3250 = vpack.c.b16 %v3090, %v3082
  %v3251 = vpack.c.b16 %v3091, %v3083
  %v3252 = vpack.c.b16 %v3092, %v3084
  %v3253 = vpack.c.b16 %v3093, %v3085
  %v3254 = vpack.c.b16 %v3102, %v3094
  %v3255 = vpack.c.b16 %v3103, %v3095
  %v3256 = vpack.c.b16 %v3104, %v3096
  %v3257 = vpack.c.b16 %v3105, %v3097
  %v3258 = vpack.c.b16 %v3106, %v3098
  %v3259 = vpack.c.b16 %v3107, %v3099
  %v3260 = vpack.c.b16 %v3108, %v3100
  %v3261 = vpack.c.b16 %v3109, %v3101
  %v3262 = vpack.c.b16 %v3118, %v3110
  %v3263 = vpack.c.b16 %v3119, %v3111
  %v3264 = vpack.c.b16 %v3120, %v3112
  %v3265 = vpack.c.b16 %v3121, %v3113
  %v3266 = vpack.c.b16 %v3122, %v3114
  %v3267 = vpack.c.b16 %v3123, %v3115
  %v3268 = vpack.c.b16 %v3124, %v3116
  %v3269 = vpack.c.b16 %v3125, %v3117
  %v3270 = vpack.c.b16 %v3134, %v3126
  %v3271 = vpack.c.b16 %v3135, %v3127
  %v3272 = vpack.c.b16 %v3136, %v3128
  %v3273 = vpack.c.b16 %v3137, %v3129
  %v3274 = vpack.c.b16 %v3138, %v3130
  %v3275 = vpack.c.b16 %v3139, %v3131
  %v3276 = vpack.c.b16 %v3140, %v3132
  %v3277 = vpack.c.b16 %v3141, %v3133
  %v3278 = vpack.c.b16 %v3150, %v3142
  %v3279 = vpack.c.b16 %v3151, %v3143
  %v3280 = vpack.c.b16 %v3152, %v3144
  %v3281 = vpack.c.b16 %v3153, %v3145
  %v3282 = vpack.c.b16 %v3154, %v3146
  %v3283 = vpack.c.b16 %v3155, %v3147
  %v3284 = vpack.c.b16 %v3156, %v3148
  %v3285 = vpack.c.b16 %v3157, %v3149
  %3414 = vmatprep.subr.bf16.mxu0 %v3215
  %3415 = vmatpush1.bf16.msra.mxu0 %v3214
  %3416 = vmatprep.subr.bf16.mxu0 %v3207
  %3417 = vmatpush1.bf16.msra.mxu0 %v3206
  %3418 = vmatprep.subr.bf16.mxu0 %v3199
  %3419 = vmatpush1.bf16.msra.mxu0 %v3198
  %3420 = vmatprep.subr.bf16.mxu0 %v3191
  %3421 = vmatpush1.bf16.msra.mxu0 %v3190
  %3422 = vmatprep.subr.bf16.mxu0 %v3183
  %3423 = vmatpush1.bf16.msra.mxu0 %v3182
  %3424 = vmatprep.subr.bf16.mxu0 %v3175
  %3425 = vmatpush1.bf16.msra.mxu0 %v3174
  %3426 = vmatprep.subr.bf16.mxu0 %v3167
  %3427 = vmatpush1.bf16.msra.mxu0 %v3166
  %3428 = vmatprep.subr.bf16.mxu0 %v3159
  %3429 = vmatpush1.bf16.msra.mxu0 %v3158
  %3430 = vmatprep.subr.bf16.mxu0 %v3279
  %3431 = vmatpush2.bf16.msra.mxu0 %v3278
  %3432 = vmatprep.subr.bf16.mxu0 %v3271
  %3433 = vmatpush2.bf16.msra.mxu0 %v3270
  %3434 = vmatprep.subr.bf16.mxu0 %v3263
  %3435 = vmatpush2.bf16.msra.mxu0 %v3262
  %3436 = vmatprep.subr.bf16.mxu0 %v3255
  %3437 = vmatpush2.bf16.msra.mxu0 %v3254
  %3438 = vmatprep.subr.bf16.mxu0 %v3247
  %3439 = vmatpush2.bf16.msra.mxu0 %v3246
  %3440 = vmatprep.subr.bf16.mxu0 %v3239
  %3441 = vmatpush2.bf16.msra.mxu0 %v3238
  %3442 = vmatprep.subr.bf16.mxu0 %v3231
  %3443 = vmatpush2.bf16.msra.mxu0 %v3230
  %3444 = vmatprep.subr.bf16.mxu0 %v3223
  %3445 = vmatpush2.bf16.msra.mxu0 %v3222
  %3446 = vmatprep.mubr.bf16.mxu0 %v2645
  %3447 = vmatmul.mubr.bf16.gmra.mxu0 %v2339
  %v3448 = vpop.f32.mrf.mxu0
  %v3449 = vadd.f32 0.0, %v3448
  %v3450 = vpop.f32.mrf.mxu0
  %v3451 = vadd.f32 0.0, %v3450
  %v3452 = vpop.f32.mrf.mxu0
  %v3453 = vpop.f32.mrf.mxu0
  %3454 = vdwg.mxu0
  %3455 = vmatprep.subr.bf16.mxu0 %v3217
  %3456 = vmatpush1.bf16.msra.mxu0 %v3216
  %3457 = vmatprep.subr.bf16.mxu0 %v3209
  %3458 = vmatpush1.bf16.msra.mxu0 %v3208
  %3459 = vmatprep.subr.bf16.mxu0 %v3201
  %3460 = vmatpush1.bf16.msra.mxu0 %v3200
  %3461 = vmatprep.subr.bf16.mxu0 %v3193
  %3462 = vmatpush1.bf16.msra.mxu0 %v3192
  %3463 = vmatprep.subr.bf16.mxu0 %v3185
  %3464 = vmatpush1.bf16.msra.mxu0 %v3184
  %3465 = vmatprep.subr.bf16.mxu0 %v3177
  %3466 = vmatpush1.bf16.msra.mxu0 %v3176
  %3467 = vmatprep.subr.bf16.mxu0 %v3169
  %3468 = vmatpush1.bf16.msra.mxu0 %v3168
  %3469 = vmatprep.subr.bf16.mxu0 %v3161
  %3470 = vmatpush1.bf16.msra.mxu0 %v3160
  %3471 = vmatprep.subr.bf16.mxu0 %v3281
  %3472 = vmatpush2.bf16.msra.mxu0 %v3280
  %3473 = vmatprep.subr.bf16.mxu0 %v3273
  %3474 = vmatpush2.bf16.msra.mxu0 %v3272
  %3475 = vmatprep.subr.bf16.mxu0 %v3265
  %3476 = vmatpush2.bf16.msra.mxu0 %v3264
  %3477 = vmatprep.subr.bf16.mxu0 %v3257
  %3478 = vmatpush2.bf16.msra.mxu0 %v3256
  %3479 = vmatprep.subr.bf16.mxu0 %v3249
  %3480 = vmatpush2.bf16.msra.mxu0 %v3248
  %3481 = vmatprep.subr.bf16.mxu0 %v3241
  %3482 = vmatpush2.bf16.msra.mxu0 %v3240
  %3483 = vmatprep.subr.bf16.mxu0 %v3233
  %3484 = vmatpush2.bf16.msra.mxu0 %v3232
  %3485 = vmatprep.subr.bf16.mxu0 %v3225
  %3486 = vmatpush2.bf16.msra.mxu0 %v3224
  %3487 = vmatprep.mubr.bf16.mxu0 %v2645
  %3488 = vmatmul.mubr.bf16.gmra.mxu0 %v2339
  %v3489 = vpop.f32.mrf.mxu0
  %v3490 = vadd.f32 0.0, %v3489
  %v3491 = vpop.f32.mrf.mxu0
  %v3492 = vadd.f32 0.0, %v3491
  %v3493 = vpop.f32.mrf.mxu0
  %v3494 = vpop.f32.mrf.mxu0
  %3495 = vdwg.mxu0
  %3496 = vmatprep.subr.bf16.mxu0 %v3219
  %3497 = vmatpush1.bf16.msra.mxu0 %v3218
  %3498 = vmatprep.subr.bf16.mxu0 %v3211
  %3499 = vmatpush1.bf16.msra.mxu0 %v3210
  %3500 = vmatprep.subr.bf16.mxu0 %v3203
  %3501 = vmatpush1.bf16.msra.mxu0 %v3202
  %3502 = vmatprep.subr.bf16.mxu0 %v3195
  %3503 = vmatpush1.bf16.msra.mxu0 %v3194
  %3504 = vmatprep.subr.bf16.mxu0 %v3187
  %3505 = vmatpush1.bf16.msra.mxu0 %v3186
  %3506 = vmatprep.subr.bf16.mxu0 %v3179
  %3507 = vmatpush1.bf16.msra.mxu0 %v3178
  %3508 = vmatprep.subr.bf16.mxu0 %v3171
  %3509 = vmatpush1.bf16.msra.mxu0 %v3170
  %3510 = vmatprep.subr.bf16.mxu0 %v3163
  %3511 = vmatpush1.bf16.msra.mxu0 %v3162
  %3512 = vmatprep.subr.bf16.mxu0 %v3283
  %3513 = vmatpush2.bf16.msra.mxu0 %v3282
  %3514 = vmatprep.subr.bf16.mxu0 %v3275
  %3515 = vmatpush2.bf16.msra.mxu0 %v3274
  %3516 = vmatprep.subr.bf16.mxu0 %v3267
  %3517 = vmatpush2.bf16.msra.mxu0 %v3266
  %3518 = vmatprep.subr.bf16.mxu0 %v3259
  %3519 = vmatpush2.bf16.msra.mxu0 %v3258
  %3520 = vmatprep.subr.bf16.mxu0 %v3251
  %3521 = vmatpush2.bf16.msra.mxu0 %v3250
  %3522 = vmatprep.subr.bf16.mxu0 %v3243
  %3523 = vmatpush2.bf16.msra.mxu0 %v3242
  %3524 = vmatprep.subr.bf16.mxu0 %v3235
  %3525 = vmatpush2.bf16.msra.mxu0 %v3234
  %3526 = vmatprep.subr.bf16.mxu0 %v3227
  %3527 = vmatpush2.bf16.msra.mxu0 %v3226
  %3528 = vmatprep.mubr.bf16.mxu0 %v2645
  %3529 = vmatmul.mubr.bf16.gmra.mxu0 %v2339
  %v3530 = vpop.f32.mrf.mxu0
  %v3531 = vadd.f32 0.0, %v3530
  %v3532 = vpop.f32.mrf.mxu0
  %v3533 = vadd.f32 0.0, %v3532
  %v3534 = vpop.f32.mrf.mxu0
  %v3535 = vpop.f32.mrf.mxu0
  %3536 = vdwg.mxu0
  %3537 = vmatprep.subr.bf16.mxu0 %v3221
  %3538 = vmatpush1.bf16.msra.mxu0 %v3220
  %3539 = vmatprep.subr.bf16.mxu0 %v3213
  %3540 = vmatpush1.bf16.msra.mxu0 %v3212
  %3541 = vmatprep.subr.bf16.mxu0 %v3205
  %3542 = vmatpush1.bf16.msra.mxu0 %v3204
  %3543 = vmatprep.subr.bf16.mxu0 %v3197
  %3544 = vmatpush1.bf16.msra.mxu0 %v3196
  %3545 = vmatprep.subr.bf16.mxu0 %v3189
  %3546 = vmatpush1.bf16.msra.mxu0 %v3188
  %3547 = vmatprep.subr.bf16.mxu0 %v3181
  %3548 = vmatpush1.bf16.msra.mxu0 %v3180
  %3549 = vmatprep.subr.bf16.mxu0 %v3173
  %3550 = vmatpush1.bf16.msra.mxu0 %v3172
  %3551 = vmatprep.subr.bf16.mxu0 %v3165
  %3552 = vmatpush1.bf16.msra.mxu0 %v3164
  %3553 = vmatprep.subr.bf16.mxu0 %v3285
  %3554 = vmatpush2.bf16.msra.mxu0 %v3284
  %3555 = vmatprep.subr.bf16.mxu0 %v3277
  %3556 = vmatpush2.bf16.msra.mxu0 %v3276
  %3557 = vmatprep.subr.bf16.mxu0 %v3269
  %3558 = vmatpush2.bf16.msra.mxu0 %v3268
  %3559 = vmatprep.subr.bf16.mxu0 %v3261
  %3560 = vmatpush2.bf16.msra.mxu0 %v3260
  %3561 = vmatprep.subr.bf16.mxu0 %v3253
  %3562 = vmatpush2.bf16.msra.mxu0 %v3252
  %3563 = vmatprep.subr.bf16.mxu0 %v3245
  %3564 = vmatpush2.bf16.msra.mxu0 %v3244
  %3565 = vmatprep.subr.bf16.mxu0 %v3237
  %3566 = vmatpush2.bf16.msra.mxu0 %v3236
  %3567 = vmatprep.subr.bf16.mxu0 %v3229
  %3568 = vmatpush2.bf16.msra.mxu0 %v3228
  %3569 = vmatprep.mubr.bf16.mxu0 %v2645
  %3570 = vmatmul.mubr.bf16.gmra.mxu0 %v2339
  %v3571 = vpop.f32.mrf.mxu0
  %v3572 = vadd.f32 0.0, %v3571
  %v3573 = vpop.f32.mrf.mxu0
  %v3574 = vadd.f32 0.0, %v3573
  %v3575 = vpop.f32.mrf.mxu0
  %v3576 = vpop.f32.mrf.mxu0
  %3577 = vdwg.mxu0
  %3579 = vset.pattern.permute.xlu0 0
  %3580 = vperm.xlu0 %3579, %v2644
  %v3581 = vpop.permute.xlu0 %3580
  %v3583 = vmul.f32 %v3581, %v977
  %v3584 = vmul.f32 %v3581, %v981
  %v3585 = vmul.f32 %v3581, %v985
  %v3586 = vmul.f32 %v3581, %v989
  %v3587 = vadd.f32 %v3449, %v3583
  %v3588 = vadd.f32 %v3451, %v3584
  %v3589 = vadd.f32 %v3490, %v3585
  %v3590 = vadd.f32 %v3492, %v3586
  %v3591 = vadd.f32 %v3587, %v1006
  %v3592 = vadd.f32 %v3588, %v1010
  %v3593 = vadd.f32 %v3589, %v1014
  %v3594 = vadd.f32 %v3590, %v1018
  %v3595 = vmul.f32 %v3591, 0.5
  %v3596 = vmul.f32 %v3592, 0.5
  %v3597 = vmul.f32 %v3593, 0.5
  %v3598 = vtanh.pop %v3595
  %v3599 = vtanh.pop %v3596
  %v3600 = vtanh.pop %v3597
  %v3601 = vmul.f32 %v3598, 0.5
  %v3602 = vmul.f32 %v3599, 0.5
  %v3603 = vmul.f32 %v3600, 0.5
  %v3604 = vadd.f32 %v3601, 0.5
  %v3605 = vadd.f32 %v3602, 0.5
  %v3606 = vadd.f32 %v3603, 0.5
  %v3607 = vtanh.pop %v3594
  %v3608 = vmul.f32 %v3605, %v2336
  %v3609 = vmul.f32 %v3604, %v3607
  %v3610 = vadd.f32 %v3608, %v3609
  %v3611 = vtanh.pop %v3610
  %v3612 = vmul.f32 %v3606, %v3611
  %v3613 = vpack.c.bf16 %v3612, %v3612
  %v3614 = vld [vmem:[%s4] sm:$0xff]
  %v3615 = vld [vmem:[%s4 + $0x8] sm:$0xff]
  %v3616 = vld [vmem:[%s4 + $0x10] sm:$0xff]
  %v3617 = vld [vmem:[%s4 + $0x18] sm:$0xff]
  %v3618 = vld [vmem:[%s4 + $0x20] sm:$0xff]
  %v3619 = vld [vmem:[%s4 + $0x28] sm:$0xff]
  %v3620 = vld [vmem:[%s4 + $0x30] sm:$0xff]
  %v3621 = vld [vmem:[%s4 + $0x38] sm:$0xff]
  %v3622 = vld [vmem:[%s4 + $0x40] sm:$0xff]
  %v3623 = vld [vmem:[%s4 + $0x48] sm:$0xff]
  %v3624 = vld [vmem:[%s4 + $0x50] sm:$0xff]
  %v3625 = vld [vmem:[%s4 + $0x58] sm:$0xff]
  %v3626 = vld [vmem:[%s4 + $0x60] sm:$0xff]
  %v3627 = vld [vmem:[%s4 + $0x68] sm:$0xff]
  %v3628 = vld [vmem:[%s4 + $0x70] sm:$0xff]
  %v3629 = vld [vmem:[%s4 + $0x78] sm:$0xff]
  %v3630 = vld [vmem:[%s4 + $0x80] sm:$0xff]
  %v3631 = vld [vmem:[%s4 + $0x88] sm:$0xff]
  %v3632 = vld [vmem:[%s4 + $0x90] sm:$0xff]
  %v3633 = vld [vmem:[%s4 + $0x98] sm:$0xff]
  %v3634 = vld [vmem:[%s4 + $0xa0] sm:$0xff]
  %v3635 = vld [vmem:[%s4 + $0xa8] sm:$0xff]
  %v3636 = vld [vmem:[%s4 + $0xb0] sm:$0xff]
  %v3637 = vld [vmem:[%s4 + $0xb8] sm:$0xff]
  %v3638 = vld [vmem:[%s4 + $0xc0] sm:$0xff]
  %v3639 = vld [vmem:[%s4 + $0xc8] sm:$0xff]
  %v3640 = vld [vmem:[%s4 + $0xd0] sm:$0xff]
  %v3641 = vld [vmem:[%s4 + $0xd8] sm:$0xff]
  %v3642 = vld [vmem:[%s4 + $0xe0] sm:$0xff]
  %v3643 = vld [vmem:[%s4 + $0xe8] sm:$0xff]
  %v3644 = vld [vmem:[%s4 + $0xf0] sm:$0xff]
  %v3645 = vld [vmem:[%s4 + $0xf8] sm:$0xff]
  %v3678 = vunpack.c.l.b16 %v3614
  %v3679 = vunpack.c.h.b16 %v3614
  %v3680 = vunpack.c.l.b16 %v3615
  %v3681 = vunpack.c.h.b16 %v3615
  %v3682 = vunpack.c.l.b16 %v3616
  %v3683 = vunpack.c.h.b16 %v3616
  %v3684 = vunpack.c.l.b16 %v3617
  %v3685 = vunpack.c.h.b16 %v3617
  %v3686 = vunpack.c.l.b16 %v3618
  %v3687 = vunpack.c.h.b16 %v3618
  %v3688 = vunpack.c.l.b16 %v3619
  %v3689 = vunpack.c.h.b16 %v3619
  %v3690 = vunpack.c.l.b16 %v3620
  %v3691 = vunpack.c.h.b16 %v3620
  %v3692 = vunpack.c.l.b16 %v3621
  %v3693 = vunpack.c.h.b16 %v3621
  %v3694 = vunpack.c.l.b16 %v3622
  %v3695 = vunpack.c.h.b16 %v3622
  %v3696 = vunpack.c.l.b16 %v3623
  %v3697 = vunpack.c.h.b16 %v3623
  %v3698 = vunpack.c.l.b16 %v3624
  %v3699 = vunpack.c.h.b16 %v3624
  %v3700 = vunpack.c.l.b16 %v3625
  %v3701 = vunpack.c.h.b16 %v3625
  %v3702 = vunpack.c.l.b16 %v3626
  %v3703 = vunpack.c.h.b16 %v3626
  %v3704 = vunpack.c.l.b16 %v3627
  %v3705 = vunpack.c.h.b16 %v3627
  %v3706 = vunpack.c.l.b16 %v3628
  %v3707 = vunpack.c.h.b16 %v3628
  %v3708 = vunpack.c.l.b16 %v3629
  %v3709 = vunpack.c.h.b16 %v3629
  %v3710 = vunpack.c.l.b16 %v3630
  %v3711 = vunpack.c.h.b16 %v3630
  %v3712 = vunpack.c.l.b16 %v3631
  %v3713 = vunpack.c.h.b16 %v3631
  %v3714 = vunpack.c.l.b16 %v3632
  %v3715 = vunpack.c.h.b16 %v3632
  %v3716 = vunpack.c.l.b16 %v3633
  %v3717 = vunpack.c.h.b16 %v3633
  %v3718 = vunpack.c.l.b16 %v3634
  %v3719 = vunpack.c.h.b16 %v3634
  %v3720 = vunpack.c.l.b16 %v3635
  %v3721 = vunpack.c.h.b16 %v3635
  %v3722 = vunpack.c.l.b16 %v3636
  %v3723 = vunpack.c.h.b16 %v3636
  %v3724 = vunpack.c.l.b16 %v3637
  %v3725 = vunpack.c.h.b16 %v3637
  %v3726 = vunpack.c.l.b16 %v3638
  %v3727 = vunpack.c.h.b16 %v3638
  %v3728 = vunpack.c.l.b16 %v3639
  %v3729 = vunpack.c.h.b16 %v3639
  %v3730 = vunpack.c.l.b16 %v3640
  %v3731 = vunpack.c.h.b16 %v3640
  %v3732 = vunpack.c.l.b16 %v3641
  %v3733 = vunpack.c.h.b16 %v3641
  %v3734 = vunpack.c.l.b16 %v3642
  %v3735 = vunpack.c.h.b16 %v3642
  %v3736 = vunpack.c.l.b16 %v3643
  %v3737 = vunpack.c.h.b16 %v3643
  %v3738 = vunpack.c.l.b16 %v3644
  %v3739 = vunpack.c.h.b16 %v3644
  %v3740 = vunpack.c.l.b16 %v3645
  %v3741 = vunpack.c.h.b16 %v3645
  %v3742 = vpack.c.b16 %v3682, %v3678
  %v3743 = vpack.c.b16 %v3683, %v3679
  %v3744 = vpack.c.b16 %v3684, %v3680
  %v3745 = vpack.c.b16 %v3685, %v3681
  %v3746 = vpack.c.b16 %v3690, %v3686
  %v3747 = vpack.c.b16 %v3691, %v3687
  %v3748 = vpack.c.b16 %v3692, %v3688
  %v3749 = vpack.c.b16 %v3693, %v3689
  %v3750 = vpack.c.b16 %v3698, %v3694
  %v3751 = vpack.c.b16 %v3699, %v3695
  %v3752 = vpack.c.b16 %v3700, %v3696
  %v3753 = vpack.c.b16 %v3701, %v3697
  %v3754 = vpack.c.b16 %v3706, %v3702
  %v3755 = vpack.c.b16 %v3707, %v3703
  %v3756 = vpack.c.b16 %v3708, %v3704
  %v3757 = vpack.c.b16 %v3709, %v3705
  %v3758 = vpack.c.b16 %v3714, %v3710
  %v3759 = vpack.c.b16 %v3715, %v3711
  %v3760 = vpack.c.b16 %v3716, %v3712
  %v3761 = vpack.c.b16 %v3717, %v3713
  %v3762 = vpack.c.b16 %v3722, %v3718
  %v3763 = vpack.c.b16 %v3723, %v3719
  %v3764 = vpack.c.b16 %v3724, %v3720
  %v3765 = vpack.c.b16 %v3725, %v3721
  %v3766 = vpack.c.b16 %v3730, %v3726
  %v3767 = vpack.c.b16 %v3731, %v3727
  %v3768 = vpack.c.b16 %v3732, %v3728
  %v3769 = vpack.c.b16 %v3733, %v3729
  %v3770 = vpack.c.b16 %v3738, %v3734
  %v3771 = vpack.c.b16 %v3739, %v3735
  %v3772 = vpack.c.b16 %v3740, %v3736
  %v3773 = vpack.c.b16 %v3741, %v3737
  %3806 = vmatprep.subr.bf16.mxu0 %v3771
  %3807 = vmatpush1.bf16.msra.mxu0 %v3770
  %3808 = vmatprep.subr.bf16.mxu0 %v3767
  %3809 = vmatpush1.bf16.msra.mxu0 %v3766
  %3810 = vmatprep.subr.bf16.mxu0 %v3763
  %3811 = vmatpush1.bf16.msra.mxu0 %v3762
  %3812 = vmatprep.subr.bf16.mxu0 %v3759
  %3813 = vmatpush1.bf16.msra.mxu0 %v3758
  %3814 = vmatprep.subr.bf16.mxu0 %v3755
  %3815 = vmatpush1.bf16.msra.mxu0 %v3754
  %3816 = vmatprep.subr.bf16.mxu0 %v3751
  %3817 = vmatpush1.bf16.msra.mxu0 %v3750
  %3818 = vmatprep.subr.bf16.mxu0 %v3747
  %3819 = vmatpush1.bf16.msra.mxu0 %v3746
  %3820 = vmatprep.subr.bf16.mxu0 %v3743
  %3821 = vmatpush1.bf16.msra.mxu0 %v3742
  %3822 = vmatprep.subr.bf16.mxu0 0
  %3823 = vmatpush2.bf16.msra.mxu0 0
  %3824 = vmatprep.subr.bf16.mxu0 0
  %3825 = vmatpush2.bf16.msra.mxu0 0
  %3826 = vmatprep.subr.bf16.mxu0 0
  %3827 = vmatpush2.bf16.msra.mxu0 0
  %3828 = vmatprep.subr.bf16.mxu0 0
  %3829 = vmatpush2.bf16.msra.mxu0 0
  %3830 = vmatprep.subr.bf16.mxu0 0
  %3831 = vmatpush2.bf16.msra.mxu0 0
  %3832 = vmatprep.subr.bf16.mxu0 0
  %3833 = vmatpush2.bf16.msra.mxu0 0
  %3834 = vmatprep.subr.bf16.mxu0 0
  %3835 = vmatpush2.bf16.msra.mxu0 0
  %3836 = vmatprep.subr.bf16.mxu0 0
  %3837 = vmatpush2.bf16.msra.mxu0 0
  %3838 = vmatprep.mubr.bf16.mxu0 0
  %3839 = vmatmul.mubr.bf16.gmra.mxu0 %v3613
  %v3840 = vpop.f32.mrf.mxu0
  %v3841 = vadd.f32 0.0, %v3840
  %v3842 = vpop.f32.mrf.mxu0
  %v3843 = vadd.f32 0.0, %v3842
  %v3844 = vpop.f32.mrf.mxu0
  %v3845 = vpop.f32.mrf.mxu0
  %3846 = vdwg.mxu0
  %3847 = vmatprep.subr.bf16.mxu0 %v3773
  %3848 = vmatpush1.bf16.msra.mxu0 %v3772
  %3849 = vmatprep.subr.bf16.mxu0 %v3769
  %3850 = vmatpush1.bf16.msra.mxu0 %v3768
  %3851 = vmatprep.subr.bf16.mxu0 %v3765
  %3852 = vmatpush1.bf16.msra.mxu0 %v3764
  %3853 = vmatprep.subr.bf16.mxu0 %v3761
  %3854 = vmatpush1.bf16.msra.mxu0 %v3760
  %3855 = vmatprep.subr.bf16.mxu0 %v3757
  %3856 = vmatpush1.bf16.msra.mxu0 %v3756
  %3857 = vmatprep.subr.bf16.mxu0 %v3753
  %3858 = vmatpush1.bf16.msra.mxu0 %v3752
  %3859 = vmatprep.subr.bf16.mxu0 %v3749
  %3860 = vmatpush1.bf16.msra.mxu0 %v3748
  %3861 = vmatprep.subr.bf16.mxu0 %v3745
  %3862 = vmatpush1.bf16.msra.mxu0 %v3744
  %3863 = vmatprep.subr.bf16.mxu0 0
  %3864 = vmatpush2.bf16.msra.mxu0 0
  %3865 = vmatprep.subr.bf16.mxu0 0
  %3866 = vmatpush2.bf16.msra.mxu0 0
  %3867 = vmatprep.subr.bf16.mxu0 0
  %3868 = vmatpush2.bf16.msra.mxu0 0
  %3869 = vmatprep.subr.bf16.mxu0 0
  %3870 = vmatpush2.bf16.msra.mxu0 0
  %3871 = vmatprep.subr.bf16.mxu0 0
  %3872 = vmatpush2.bf16.msra.mxu0 0
  %3873 = vmatprep.subr.bf16.mxu0 0
  %3874 = vmatpush2.bf16.msra.mxu0 0
  %3875 = vmatprep.subr.bf16.mxu0 0
  %3876 = vmatpush2.bf16.msra.mxu0 0
  %3877 = vmatprep.subr.bf16.mxu0 0
  %3878 = vmatpush2.bf16.msra.mxu0 0
  %3879 = vmatprep.mubr.bf16.mxu0 0
  %3880 = vmatmul.mubr.bf16.gmra.mxu0 %v3613
  %v3881 = vpop.f32.mrf.mxu0
  %v3882 = vadd.f32 0.0, %v3881
  %v3883 = vpop.f32.mrf.mxu0
  %v3884 = vadd.f32 0.0, %v3883
  %v3885 = vpop.f32.mrf.mxu0
  %v3886 = vpop.f32.mrf.mxu0
  %3887 = vdwg.mxu0
  %v3888 = vadd.f32 %v3531, %v3841
  %v3889 = vadd.f32 %v3533, %v3843
  %v3890 = vadd.f32 %v3572, %v3882
  %v3891 = vadd.f32 %v3574, %v3884
  %v3892 = vadd.f32 %v3888, %v1328
  %v3893 = vadd.f32 %v3889, %v1332
  %v3894 = vadd.f32 %v3890, %v1336
  %v3895 = vadd.f32 %v3891, %v1340
  %v3896 = vmul.f32 %v3892, 0.5
  %v3897 = vmul.f32 %v3893, 0.5
  %v3898 = vmul.f32 %v3894, 0.5
  %v3899 = vtanh.pop %v3896
  %v3900 = vtanh.pop %v3897
  %v3901 = vtanh.pop %v3898
  %v3902 = vmul.f32 %v3899, 0.5
  %v3903 = vmul.f32 %v3900, 0.5
  %v3904 = vmul.f32 %v3901, 0.5
  %v3905 = vadd.f32 %v3902, 0.5
  %v3906 = vadd.f32 %v3903, 0.5
  %v3907 = vadd.f32 %v3904, 0.5
  %v3908 = vtanh.pop %v3895
  %v3909 = vmul.f32 %v3906, %v2637
  %v3910 = vmul.f32 %v3905, %v3908
  %v3911 = vadd.f32 %v3909, %v3910
  %v3912 = vtanh.pop %v3911
  %v3913 = vmul.f32 %v3907, %v3912
  %v3914 = vadd.f32 %v3612, %v3913
  %s3915 = scalar_lea.vmem [#allocation2], 4
  %3916 = vst [vmem:[%s3915] sm:$0x3] %v3914
  %s3917 = scalar_lea.vmem %s0, 6
  %v3918 = vld [vmem:[%s3917] sm:$0x3]
  %v3919 = vpack.c.bf16 %v3913, %v3913
  %v3920 = vld [vmem:[%s3] sm:$0xff]
  %v3921 = vld [vmem:[%s3 + $0x8] sm:$0xff]
  %v3922 = vld [vmem:[%s3 + $0x10] sm:$0xff]
  %v3923 = vld [vmem:[%s3 + $0x18] sm:$0xff]
  %v3924 = vld [vmem:[%s3 + $0x20] sm:$0xff]
  %v3925 = vld [vmem:[%s3 + $0x28] sm:$0xff]
  %v3926 = vld [vmem:[%s3 + $0x30] sm:$0xff]
  %v3927 = vld [vmem:[%s3 + $0x38] sm:$0xff]
  %v3928 = vld [vmem:[%s3 + $0x40] sm:$0xff]
  %v3929 = vld [vmem:[%s3 + $0x48] sm:$0xff]
  %v3930 = vld [vmem:[%s3 + $0x50] sm:$0xff]
  %v3931 = vld [vmem:[%s3 + $0x58] sm:$0xff]
  %v3932 = vld [vmem:[%s3 + $0x60] sm:$0xff]
  %v3933 = vld [vmem:[%s3 + $0x68] sm:$0xff]
  %v3934 = vld [vmem:[%s3 + $0x70] sm:$0xff]
  %v3935 = vld [vmem:[%s3 + $0x78] sm:$0xff]
  %v3936 = vld [vmem:[%s3 + $0x80] sm:$0xff]
  %v3937 = vld [vmem:[%s3 + $0x88] sm:$0xff]
  %v3938 = vld [vmem:[%s3 + $0x90] sm:$0xff]
  %v3939 = vld [vmem:[%s3 + $0x98] sm:$0xff]
  %v3940 = vld [vmem:[%s3 + $0xa0] sm:$0xff]
  %v3941 = vld [vmem:[%s3 + $0xa8] sm:$0xff]
  %v3942 = vld [vmem:[%s3 + $0xb0] sm:$0xff]
  %v3943 = vld [vmem:[%s3 + $0xb8] sm:$0xff]
  %v3944 = vld [vmem:[%s3 + $0xc0] sm:$0xff]
  %v3945 = vld [vmem:[%s3 + $0xc8] sm:$0xff]
  %v3946 = vld [vmem:[%s3 + $0xd0] sm:$0xff]
  %v3947 = vld [vmem:[%s3 + $0xd8] sm:$0xff]
  %v3948 = vld [vmem:[%s3 + $0xe0] sm:$0xff]
  %v3949 = vld [vmem:[%s3 + $0xe8] sm:$0xff]
  %v3950 = vld [vmem:[%s3 + $0xf0] sm:$0xff]
  %v3951 = vld [vmem:[%s3 + $0xf8] sm:$0xff]
  %v3952 = vld [vmem:[%s3 + $0x100] sm:$0xff]
  %v3953 = vld [vmem:[%s3 + $0x108] sm:$0xff]
  %v3954 = vld [vmem:[%s3 + $0x110] sm:$0xff]
  %v3955 = vld [vmem:[%s3 + $0x118] sm:$0xff]
  %v3956 = vld [vmem:[%s3 + $0x120] sm:$0xff]
  %v3957 = vld [vmem:[%s3 + $0x128] sm:$0xff]
  %v3958 = vld [vmem:[%s3 + $0x130] sm:$0xff]
  %v3959 = vld [vmem:[%s3 + $0x138] sm:$0xff]
  %v3960 = vld [vmem:[%s3 + $0x140] sm:$0xff]
  %v3961 = vld [vmem:[%s3 + $0x148] sm:$0xff]
  %v3962 = vld [vmem:[%s3 + $0x150] sm:$0xff]
  %v3963 = vld [vmem:[%s3 + $0x158] sm:$0xff]
  %v3964 = vld [vmem:[%s3 + $0x160] sm:$0xff]
  %v3965 = vld [vmem:[%s3 + $0x168] sm:$0xff]
  %v3966 = vld [vmem:[%s3 + $0x170] sm:$0xff]
  %v3967 = vld [vmem:[%s3 + $0x178] sm:$0xff]
  %v3968 = vld [vmem:[%s3 + $0x180] sm:$0xff]
  %v3969 = vld [vmem:[%s3 + $0x188] sm:$0xff]
  %v3970 = vld [vmem:[%s3 + $0x190] sm:$0xff]
  %v3971 = vld [vmem:[%s3 + $0x198] sm:$0xff]
  %v3972 = vld [vmem:[%s3 + $0x1a0] sm:$0xff]
  %v3973 = vld [vmem:[%s3 + $0x1a8] sm:$0xff]
  %v3974 = vld [vmem:[%s3 + $0x1b0] sm:$0xff]
  %v3975 = vld [vmem:[%s3 + $0x1b8] sm:$0xff]
  %v3976 = vld [vmem:[%s3 + $0x1c0] sm:$0xff]
  %v3977 = vld [vmem:[%s3 + $0x1c8] sm:$0xff]
  %v3978 = vld [vmem:[%s3 + $0x1d0] sm:$0xff]
  %v3979 = vld [vmem:[%s3 + $0x1d8] sm:$0xff]
  %v3980 = vld [vmem:[%s3 + $0x1e0] sm:$0xff]
  %v3981 = vld [vmem:[%s3 + $0x1e8] sm:$0xff]
  %v3982 = vld [vmem:[%s3 + $0x1f0] sm:$0xff]
  %v3983 = vld [vmem:[%s3 + $0x1f8] sm:$0xff]
  %v3984 = vld [vmem:[%s3 + $0x200] sm:$0xff]
  %v3985 = vld [vmem:[%s3 + $0x208] sm:$0xff]
  %v3986 = vld [vmem:[%s3 + $0x210] sm:$0xff]
  %v3987 = vld [vmem:[%s3 + $0x218] sm:$0xff]
  %v3988 = vld [vmem:[%s3 + $0x220] sm:$0xff]
  %v3989 = vld [vmem:[%s3 + $0x228] sm:$0xff]
  %v3990 = vld [vmem:[%s3 + $0x230] sm:$0xff]
  %v3991 = vld [vmem:[%s3 + $0x238] sm:$0xff]
  %v3992 = vld [vmem:[%s3 + $0x240] sm:$0xff]
  %v3993 = vld [vmem:[%s3 + $0x248] sm:$0xff]
  %v3994 = vld [vmem:[%s3 + $0x250] sm:$0xff]
  %v3995 = vld [vmem:[%s3 + $0x258] sm:$0xff]
  %v3996 = vld [vmem:[%s3 + $0x260] sm:$0xff]
  %v3997 = vld [vmem:[%s3 + $0x268] sm:$0xff]
  %v3998 = vld [vmem:[%s3 + $0x270] sm:$0xff]
  %v3999 = vld [vmem:[%s3 + $0x278] sm:$0xff]
  %v4000 = vld [vmem:[%s3 + $0x280] sm:$0xff]
  %v4001 = vld [vmem:[%s3 + $0x288] sm:$0xff]
  %v4002 = vld [vmem:[%s3 + $0x290] sm:$0xff]
  %v4003 = vld [vmem:[%s3 + $0x298] sm:$0xff]
  %v4004 = vld [vmem:[%s3 + $0x2a0] sm:$0xff]
  %v4005 = vld [vmem:[%s3 + $0x2a8] sm:$0xff]
  %v4006 = vld [vmem:[%s3 + $0x2b0] sm:$0xff]
  %v4007 = vld [vmem:[%s3 + $0x2b8] sm:$0xff]
  %v4008 = vld [vmem:[%s3 + $0x2c0] sm:$0xff]
  %v4009 = vld [vmem:[%s3 + $0x2c8] sm:$0xff]
  %v4010 = vld [vmem:[%s3 + $0x2d0] sm:$0xff]
  %v4011 = vld [vmem:[%s3 + $0x2d8] sm:$0xff]
  %v4012 = vld [vmem:[%s3 + $0x2e0] sm:$0xff]
  %v4013 = vld [vmem:[%s3 + $0x2e8] sm:$0xff]
  %v4014 = vld [vmem:[%s3 + $0x2f0] sm:$0xff]
  %v4015 = vld [vmem:[%s3 + $0x2f8] sm:$0xff]
  %v4016 = vld [vmem:[%s3 + $0x300] sm:$0xff]
  %v4017 = vld [vmem:[%s3 + $0x308] sm:$0xff]
  %v4018 = vld [vmem:[%s3 + $0x310] sm:$0xff]
  %v4019 = vld [vmem:[%s3 + $0x318] sm:$0xff]
  %v4020 = vld [vmem:[%s3 + $0x320] sm:$0xff]
  %v4021 = vld [vmem:[%s3 + $0x328] sm:$0xff]
  %v4022 = vld [vmem:[%s3 + $0x330] sm:$0xff]
  %v4023 = vld [vmem:[%s3 + $0x338] sm:$0xff]
  %v4024 = vld [vmem:[%s3 + $0x340] sm:$0xff]
  %v4025 = vld [vmem:[%s3 + $0x348] sm:$0xff]
  %v4026 = vld [vmem:[%s3 + $0x350] sm:$0xff]
  %v4027 = vld [vmem:[%s3 + $0x358] sm:$0xff]
  %v4028 = vld [vmem:[%s3 + $0x360] sm:$0xff]
  %v4029 = vld [vmem:[%s3 + $0x368] sm:$0xff]
  %v4030 = vld [vmem:[%s3 + $0x370] sm:$0xff]
  %v4031 = vld [vmem:[%s3 + $0x378] sm:$0xff]
  %v4032 = vld [vmem:[%s3 + $0x380] sm:$0xff]
  %v4033 = vld [vmem:[%s3 + $0x388] sm:$0xff]
  %v4034 = vld [vmem:[%s3 + $0x390] sm:$0xff]
  %v4035 = vld [vmem:[%s3 + $0x398] sm:$0xff]
  %v4036 = vld [vmem:[%s3 + $0x3a0] sm:$0xff]
  %v4037 = vld [vmem:[%s3 + $0x3a8] sm:$0xff]
  %v4038 = vld [vmem:[%s3 + $0x3b0] sm:$0xff]
  %v4039 = vld [vmem:[%s3 + $0x3b8] sm:$0xff]
  %v4040 = vld [vmem:[%s3 + $0x3c0] sm:$0xff]
  %v4041 = vld [vmem:[%s3 + $0x3c8] sm:$0xff]
  %v4042 = vld [vmem:[%s3 + $0x3d0] sm:$0xff]
  %v4043 = vld [vmem:[%s3 + $0x3d8] sm:$0xff]
  %v4044 = vld [vmem:[%s3 + $0x3e0] sm:$0xff]
  %v4045 = vld [vmem:[%s3 + $0x3e8] sm:$0xff]
  %v4046 = vld [vmem:[%s3 + $0x3f0] sm:$0xff]
  %v4047 = vld [vmem:[%s3 + $0x3f8] sm:$0xff]
  %v4176 = vunpack.c.l.b16 %v3920
  %v4177 = vunpack.c.h.b16 %v3920
  %v4178 = vunpack.c.l.b16 %v3921
  %v4179 = vunpack.c.h.b16 %v3921
  %v4180 = vunpack.c.l.b16 %v3922
  %v4181 = vunpack.c.h.b16 %v3922
  %v4182 = vunpack.c.l.b16 %v3923
  %v4183 = vunpack.c.h.b16 %v3923
  %v4184 = vunpack.c.l.b16 %v3924
  %v4185 = vunpack.c.h.b16 %v3924
  %v4186 = vunpack.c.l.b16 %v3925
  %v4187 = vunpack.c.h.b16 %v3925
  %v4188 = vunpack.c.l.b16 %v3926
  %v4189 = vunpack.c.h.b16 %v3926
  %v4190 = vunpack.c.l.b16 %v3927
  %v4191 = vunpack.c.h.b16 %v3927
  %v4192 = vunpack.c.l.b16 %v3928
  %v4193 = vunpack.c.h.b16 %v3928
  %v4194 = vunpack.c.l.b16 %v3929
  %v4195 = vunpack.c.h.b16 %v3929
  %v4196 = vunpack.c.l.b16 %v3930
  %v4197 = vunpack.c.h.b16 %v3930
  %v4198 = vunpack.c.l.b16 %v3931
  %v4199 = vunpack.c.h.b16 %v3931
  %v4200 = vunpack.c.l.b16 %v3932
  %v4201 = vunpack.c.h.b16 %v3932
  %v4202 = vunpack.c.l.b16 %v3933
  %v4203 = vunpack.c.h.b16 %v3933
  %v4204 = vunpack.c.l.b16 %v3934
  %v4205 = vunpack.c.h.b16 %v3934
  %v4206 = vunpack.c.l.b16 %v3935
  %v4207 = vunpack.c.h.b16 %v3935
  %v4208 = vunpack.c.l.b16 %v3936
  %v4209 = vunpack.c.h.b16 %v3936
  %v4210 = vunpack.c.l.b16 %v3937
  %v4211 = vunpack.c.h.b16 %v3937
  %v4212 = vunpack.c.l.b16 %v3938
  %v4213 = vunpack.c.h.b16 %v3938
  %v4214 = vunpack.c.l.b16 %v3939
  %v4215 = vunpack.c.h.b16 %v3939
  %v4216 = vunpack.c.l.b16 %v3940
  %v4217 = vunpack.c.h.b16 %v3940
  %v4218 = vunpack.c.l.b16 %v3941
  %v4219 = vunpack.c.h.b16 %v3941
  %v4220 = vunpack.c.l.b16 %v3942
  %v4221 = vunpack.c.h.b16 %v3942
  %v4222 = vunpack.c.l.b16 %v3943
  %v4223 = vunpack.c.h.b16 %v3943
  %v4224 = vunpack.c.l.b16 %v3944
  %v4225 = vunpack.c.h.b16 %v3944
  %v4226 = vunpack.c.l.b16 %v3945
  %v4227 = vunpack.c.h.b16 %v3945
  %v4228 = vunpack.c.l.b16 %v3946
  %v4229 = vunpack.c.h.b16 %v3946
  %v4230 = vunpack.c.l.b16 %v3947
  %v4231 = vunpack.c.h.b16 %v3947
  %v4232 = vunpack.c.l.b16 %v3948
  %v4233 = vunpack.c.h.b16 %v3948
  %v4234 = vunpack.c.l.b16 %v3949
  %v4235 = vunpack.c.h.b16 %v3949
  %v4236 = vunpack.c.l.b16 %v3950
  %v4237 = vunpack.c.h.b16 %v3950
  %v4238 = vunpack.c.l.b16 %v3951
  %v4239 = vunpack.c.h.b16 %v3951
  %v4240 = vunpack.c.l.b16 %v3952
  %v4241 = vunpack.c.h.b16 %v3952
  %v4242 = vunpack.c.l.b16 %v3953
  %v4243 = vunpack.c.h.b16 %v3953
  %v4244 = vunpack.c.l.b16 %v3954
  %v4245 = vunpack.c.h.b16 %v3954
  %v4246 = vunpack.c.l.b16 %v3955
  %v4247 = vunpack.c.h.b16 %v3955
  %v4248 = vunpack.c.l.b16 %v3956
  %v4249 = vunpack.c.h.b16 %v3956
  %v4250 = vunpack.c.l.b16 %v3957
  %v4251 = vunpack.c.h.b16 %v3957
  %v4252 = vunpack.c.l.b16 %v3958
  %v4253 = vunpack.c.h.b16 %v3958
  %v4254 = vunpack.c.l.b16 %v3959
  %v4255 = vunpack.c.h.b16 %v3959
  %v4256 = vunpack.c.l.b16 %v3960
  %v4257 = vunpack.c.h.b16 %v3960
  %v4258 = vunpack.c.l.b16 %v3961
  %v4259 = vunpack.c.h.b16 %v3961
  %v4260 = vunpack.c.l.b16 %v3962
  %v4261 = vunpack.c.h.b16 %v3962
  %v4262 = vunpack.c.l.b16 %v3963
  %v4263 = vunpack.c.h.b16 %v3963
  %v4264 = vunpack.c.l.b16 %v3964
  %v4265 = vunpack.c.h.b16 %v3964
  %v4266 = vunpack.c.l.b16 %v3965
  %v4267 = vunpack.c.h.b16 %v3965
  %v4268 = vunpack.c.l.b16 %v3966
  %v4269 = vunpack.c.h.b16 %v3966
  %v4270 = vunpack.c.l.b16 %v3967
  %v4271 = vunpack.c.h.b16 %v3967
  %v4272 = vunpack.c.l.b16 %v3968
  %v4273 = vunpack.c.h.b16 %v3968
  %v4274 = vunpack.c.l.b16 %v3969
  %v4275 = vunpack.c.h.b16 %v3969
  %v4276 = vunpack.c.l.b16 %v3970
  %v4277 = vunpack.c.h.b16 %v3970
  %v4278 = vunpack.c.l.b16 %v3971
  %v4279 = vunpack.c.h.b16 %v3971
  %v4280 = vunpack.c.l.b16 %v3972
  %v4281 = vunpack.c.h.b16 %v3972
  %v4282 = vunpack.c.l.b16 %v3973
  %v4283 = vunpack.c.h.b16 %v3973
  %v4284 = vunpack.c.l.b16 %v3974
  %v4285 = vunpack.c.h.b16 %v3974
  %v4286 = vunpack.c.l.b16 %v3975
  %v4287 = vunpack.c.h.b16 %v3975
  %v4288 = vunpack.c.l.b16 %v3976
  %v4289 = vunpack.c.h.b16 %v3976
  %v4290 = vunpack.c.l.b16 %v3977
  %v4291 = vunpack.c.h.b16 %v3977
  %v4292 = vunpack.c.l.b16 %v3978
  %v4293 = vunpack.c.h.b16 %v3978
  %v4294 = vunpack.c.l.b16 %v3979
  %v4295 = vunpack.c.h.b16 %v3979
  %v4296 = vunpack.c.l.b16 %v3980
  %v4297 = vunpack.c.h.b16 %v3980
  %v4298 = vunpack.c.l.b16 %v3981
  %v4299 = vunpack.c.h.b16 %v3981
  %v4300 = vunpack.c.l.b16 %v3982
  %v4301 = vunpack.c.h.b16 %v3982
  %v4302 = vunpack.c.l.b16 %v3983
  %v4303 = vunpack.c.h.b16 %v3983
  %v4304 = vunpack.c.l.b16 %v3984
  %v4305 = vunpack.c.h.b16 %v3984
  %v4306 = vunpack.c.l.b16 %v3985
  %v4307 = vunpack.c.h.b16 %v3985
  %v4308 = vunpack.c.l.b16 %v3986
  %v4309 = vunpack.c.h.b16 %v3986
  %v4310 = vunpack.c.l.b16 %v3987
  %v4311 = vunpack.c.h.b16 %v3987
  %v4312 = vunpack.c.l.b16 %v3988
  %v4313 = vunpack.c.h.b16 %v3988
  %v4314 = vunpack.c.l.b16 %v3989
  %v4315 = vunpack.c.h.b16 %v3989
  %v4316 = vunpack.c.l.b16 %v3990
  %v4317 = vunpack.c.h.b16 %v3990
  %v4318 = vunpack.c.l.b16 %v3991
  %v4319 = vunpack.c.h.b16 %v3991
  %v4320 = vunpack.c.l.b16 %v3992
  %v4321 = vunpack.c.h.b16 %v3992
  %v4322 = vunpack.c.l.b16 %v3993
  %v4323 = vunpack.c.h.b16 %v3993
  %v4324 = vunpack.c.l.b16 %v3994
  %v4325 = vunpack.c.h.b16 %v3994
  %v4326 = vunpack.c.l.b16 %v3995
  %v4327 = vunpack.c.h.b16 %v3995
  %v4328 = vunpack.c.l.b16 %v3996
  %v4329 = vunpack.c.h.b16 %v3996
  %v4330 = vunpack.c.l.b16 %v3997
  %v4331 = vunpack.c.h.b16 %v3997
  %v4332 = vunpack.c.l.b16 %v3998
  %v4333 = vunpack.c.h.b16 %v3998
  %v4334 = vunpack.c.l.b16 %v3999
  %v4335 = vunpack.c.h.b16 %v3999
  %v4336 = vunpack.c.l.b16 %v4000
  %v4337 = vunpack.c.h.b16 %v4000
  %v4338 = vunpack.c.l.b16 %v4001
  %v4339 = vunpack.c.h.b16 %v4001
  %v4340 = vunpack.c.l.b16 %v4002
  %v4341 = vunpack.c.h.b16 %v4002
  %v4342 = vunpack.c.l.b16 %v4003
  %v4343 = vunpack.c.h.b16 %v4003
  %v4344 = vunpack.c.l.b16 %v4004
  %v4345 = vunpack.c.h.b16 %v4004
  %v4346 = vunpack.c.l.b16 %v4005
  %v4347 = vunpack.c.h.b16 %v4005
  %v4348 = vunpack.c.l.b16 %v4006
  %v4349 = vunpack.c.h.b16 %v4006
  %v4350 = vunpack.c.l.b16 %v4007
  %v4351 = vunpack.c.h.b16 %v4007
  %v4352 = vunpack.c.l.b16 %v4008
  %v4353 = vunpack.c.h.b16 %v4008
  %v4354 = vunpack.c.l.b16 %v4009
  %v4355 = vunpack.c.h.b16 %v4009
  %v4356 = vunpack.c.l.b16 %v4010
  %v4357 = vunpack.c.h.b16 %v4010
  %v4358 = vunpack.c.l.b16 %v4011
  %v4359 = vunpack.c.h.b16 %v4011
  %v4360 = vunpack.c.l.b16 %v4012
  %v4361 = vunpack.c.h.b16 %v4012
  %v4362 = vunpack.c.l.b16 %v4013
  %v4363 = vunpack.c.h.b16 %v4013
  %v4364 = vunpack.c.l.b16 %v4014
  %v4365 = vunpack.c.h.b16 %v4014
  %v4366 = vunpack.c.l.b16 %v4015
  %v4367 = vunpack.c.h.b16 %v4015
  %v4368 = vunpack.c.l.b16 %v4016
  %v4369 = vunpack.c.h.b16 %v4016
  %v4370 = vunpack.c.l.b16 %v4017
  %v4371 = vunpack.c.h.b16 %v4017
  %v4372 = vunpack.c.l.b16 %v4018
  %v4373 = vunpack.c.h.b16 %v4018
  %v4374 = vunpack.c.l.b16 %v4019
  %v4375 = vunpack.c.h.b16 %v4019
  %v4376 = vunpack.c.l.b16 %v4020
  %v4377 = vunpack.c.h.b16 %v4020
  %v4378 = vunpack.c.l.b16 %v4021
  %v4379 = vunpack.c.h.b16 %v4021
  %v4380 = vunpack.c.l.b16 %v4022
  %v4381 = vunpack.c.h.b16 %v4022
  %v4382 = vunpack.c.l.b16 %v4023
  %v4383 = vunpack.c.h.b16 %v4023
  %v4384 = vunpack.c.l.b16 %v4024
  %v4385 = vunpack.c.h.b16 %v4024
  %v4386 = vunpack.c.l.b16 %v4025
  %v4387 = vunpack.c.h.b16 %v4025
  %v4388 = vunpack.c.l.b16 %v4026
  %v4389 = vunpack.c.h.b16 %v4026
  %v4390 = vunpack.c.l.b16 %v4027
  %v4391 = vunpack.c.h.b16 %v4027
  %v4392 = vunpack.c.l.b16 %v4028
  %v4393 = vunpack.c.h.b16 %v4028
  %v4394 = vunpack.c.l.b16 %v4029
  %v4395 = vunpack.c.h.b16 %v4029
  %v4396 = vunpack.c.l.b16 %v4030
  %v4397 = vunpack.c.h.b16 %v4030
  %v4398 = vunpack.c.l.b16 %v4031
  %v4399 = vunpack.c.h.b16 %v4031
  %v4400 = vunpack.c.l.b16 %v4032
  %v4401 = vunpack.c.h.b16 %v4032
  %v4402 = vunpack.c.l.b16 %v4033
  %v4403 = vunpack.c.h.b16 %v4033
  %v4404 = vunpack.c.l.b16 %v4034
  %v4405 = vunpack.c.h.b16 %v4034
  %v4406 = vunpack.c.l.b16 %v4035
  %v4407 = vunpack.c.h.b16 %v4035
  %v4408 = vunpack.c.l.b16 %v4036
  %v4409 = vunpack.c.h.b16 %v4036
  %v4410 = vunpack.c.l.b16 %v4037
  %v4411 = vunpack.c.h.b16 %v4037
  %v4412 = vunpack.c.l.b16 %v4038
  %v4413 = vunpack.c.h.b16 %v4038
  %v4414 = vunpack.c.l.b16 %v4039
  %v4415 = vunpack.c.h.b16 %v4039
  %v4416 = vunpack.c.l.b16 %v4040
  %v4417 = vunpack.c.h.b16 %v4040
  %v4418 = vunpack.c.l.b16 %v4041
  %v4419 = vunpack.c.h.b16 %v4041
  %v4420 = vunpack.c.l.b16 %v4042
  %v4421 = vunpack.c.h.b16 %v4042
  %v4422 = vunpack.c.l.b16 %v4043
  %v4423 = vunpack.c.h.b16 %v4043
  %v4424 = vunpack.c.l.b16 %v4044
  %v4425 = vunpack.c.h.b16 %v4044
  %v4426 = vunpack.c.l.b16 %v4045
  %v4427 = vunpack.c.h.b16 %v4045
  %v4428 = vunpack.c.l.b16 %v4046
  %v4429 = vunpack.c.h.b16 %v4046
  %v4430 = vunpack.c.l.b16 %v4047
  %v4431 = vunpack.c.h.b16 %v4047
  %v4432 = vpack.c.b16 %v4184, %v4176
  %v4433 = vpack.c.b16 %v4185, %v4177
  %v4434 = vpack.c.b16 %v4186, %v4178
  %v4435 = vpack.c.b16 %v4187, %v4179
  %v4436 = vpack.c.b16 %v4188, %v4180
  %v4437 = vpack.c.b16 %v4189, %v4181
  %v4438 = vpack.c.b16 %v4190, %v4182
  %v4439 = vpack.c.b16 %v4191, %v4183
  %v4440 = vpack.c.b16 %v4200, %v4192
  %v4441 = vpack.c.b16 %v4201, %v4193
  %v4442 = vpack.c.b16 %v4202, %v4194
  %v4443 = vpack.c.b16 %v4203, %v4195
  %v4444 = vpack.c.b16 %v4204, %v4196
  %v4445 = vpack.c.b16 %v4205, %v4197
  %v4446 = vpack.c.b16 %v4206, %v4198
  %v4447 = vpack.c.b16 %v4207, %v4199
  %v4448 = vpack.c.b16 %v4216, %v4208
  %v4449 = vpack.c.b16 %v4217, %v4209
  %v4450 = vpack.c.b16 %v4218, %v4210
  %v4451 = vpack.c.b16 %v4219, %v4211
  %v4452 = vpack.c.b16 %v4220, %v4212
  %v4453 = vpack.c.b16 %v4221, %v4213
  %v4454 = vpack.c.b16 %v4222, %v4214
  %v4455 = vpack.c.b16 %v4223, %v4215
  %v4456 = vpack.c.b16 %v4232, %v4224
  %v4457 = vpack.c.b16 %v4233, %v4225
  %v4458 = vpack.c.b16 %v4234, %v4226
  %v4459 = vpack.c.b16 %v4235, %v4227
  %v4460 = vpack.c.b16 %v4236, %v4228
  %v4461 = vpack.c.b16 %v4237, %v4229
  %v4462 = vpack.c.b16 %v4238, %v4230
  %v4463 = vpack.c.b16 %v4239, %v4231
  %v4464 = vpack.c.b16 %v4248, %v4240
  %v4465 = vpack.c.b16 %v4249, %v4241
  %v4466 = vpack.c.b16 %v4250, %v4242
  %v4467 = vpack.c.b16 %v4251, %v4243
  %v4468 = vpack.c.b16 %v4252, %v4244
  %v4469 = vpack.c.b16 %v4253, %v4245
  %v4470 = vpack.c.b16 %v4254, %v4246
  %v4471 = vpack.c.b16 %v4255, %v4247
  %v4472 = vpack.c.b16 %v4264, %v4256
  %v4473 = vpack.c.b16 %v4265, %v4257
  %v4474 = vpack.c.b16 %v4266, %v4258
  %v4475 = vpack.c.b16 %v4267, %v4259
  %v4476 = vpack.c.b16 %v4268, %v4260
  %v4477 = vpack.c.b16 %v4269, %v4261
  %v4478 = vpack.c.b16 %v4270, %v4262
  %v4479 = vpack.c.b16 %v4271, %v4263
  %v4480 = vpack.c.b16 %v4280, %v4272
  %v4481 = vpack.c.b16 %v4281, %v4273
  %v4482 = vpack.c.b16 %v4282, %v4274
  %v4483 = vpack.c.b16 %v4283, %v4275
  %v4484 = vpack.c.b16 %v4284, %v4276
  %v4485 = vpack.c.b16 %v4285, %v4277
  %v4486 = vpack.c.b16 %v4286, %v4278
  %v4487 = vpack.c.b16 %v4287, %v4279
  %v4488 = vpack.c.b16 %v4296, %v4288
  %v4489 = vpack.c.b16 %v4297, %v4289
  %v4490 = vpack.c.b16 %v4298, %v4290
  %v4491 = vpack.c.b16 %v4299, %v4291
  %v4492 = vpack.c.b16 %v4300, %v4292
  %v4493 = vpack.c.b16 %v4301, %v4293
  %v4494 = vpack.c.b16 %v4302, %v4294
  %v4495 = vpack.c.b16 %v4303, %v4295
  %v4496 = vpack.c.b16 %v4312, %v4304
  %v4497 = vpack.c.b16 %v4313, %v4305
  %v4498 = vpack.c.b16 %v4314, %v4306
  %v4499 = vpack.c.b16 %v4315, %v4307
  %v4500 = vpack.c.b16 %v4316, %v4308
  %v4501 = vpack.c.b16 %v4317, %v4309
  %v4502 = vpack.c.b16 %v4318, %v4310
  %v4503 = vpack.c.b16 %v4319, %v4311
  %v4504 = vpack.c.b16 %v4328, %v4320
  %v4505 = vpack.c.b16 %v4329, %v4321
  %v4506 = vpack.c.b16 %v4330, %v4322
  %v4507 = vpack.c.b16 %v4331, %v4323
  %v4508 = vpack.c.b16 %v4332, %v4324
  %v4509 = vpack.c.b16 %v4333, %v4325
  %v4510 = vpack.c.b16 %v4334, %v4326
  %v4511 = vpack.c.b16 %v4335, %v4327
  %v4512 = vpack.c.b16 %v4344, %v4336
  %v4513 = vpack.c.b16 %v4345, %v4337
  %v4514 = vpack.c.b16 %v4346, %v4338
  %v4515 = vpack.c.b16 %v4347, %v4339
  %v4516 = vpack.c.b16 %v4348, %v4340
  %v4517 = vpack.c.b16 %v4349, %v4341
  %v4518 = vpack.c.b16 %v4350, %v4342
  %v4519 = vpack.c.b16 %v4351, %v4343
  %v4520 = vpack.c.b16 %v4360, %v4352
  %v4521 = vpack.c.b16 %v4361, %v4353
  %v4522 = vpack.c.b16 %v4362, %v4354
  %v4523 = vpack.c.b16 %v4363, %v4355
  %v4524 = vpack.c.b16 %v4364, %v4356
  %v4525 = vpack.c.b16 %v4365, %v4357
  %v4526 = vpack.c.b16 %v4366, %v4358
  %v4527 = vpack.c.b16 %v4367, %v4359
  %v4528 = vpack.c.b16 %v4376, %v4368
  %v4529 = vpack.c.b16 %v4377, %v4369
  %v4530 = vpack.c.b16 %v4378, %v4370
  %v4531 = vpack.c.b16 %v4379, %v4371
  %v4532 = vpack.c.b16 %v4380, %v4372
  %v4533 = vpack.c.b16 %v4381, %v4373
  %v4534 = vpack.c.b16 %v4382, %v4374
  %v4535 = vpack.c.b16 %v4383, %v4375
  %v4536 = vpack.c.b16 %v4392, %v4384
  %v4537 = vpack.c.b16 %v4393, %v4385
  %v4538 = vpack.c.b16 %v4394, %v4386
  %v4539 = vpack.c.b16 %v4395, %v4387
  %v4540 = vpack.c.b16 %v4396, %v4388
  %v4541 = vpack.c.b16 %v4397, %v4389
  %v4542 = vpack.c.b16 %v4398, %v4390
  %v4543 = vpack.c.b16 %v4399, %v4391
  %v4544 = vpack.c.b16 %v4408, %v4400
  %v4545 = vpack.c.b16 %v4409, %v4401
  %v4546 = vpack.c.b16 %v4410, %v4402
  %v4547 = vpack.c.b16 %v4411, %v4403
  %v4548 = vpack.c.b16 %v4412, %v4404
  %v4549 = vpack.c.b16 %v4413, %v4405
  %v4550 = vpack.c.b16 %v4414, %v4406
  %v4551 = vpack.c.b16 %v4415, %v4407
  %v4552 = vpack.c.b16 %v4424, %v4416
  %v4553 = vpack.c.b16 %v4425, %v4417
  %v4554 = vpack.c.b16 %v4426, %v4418
  %v4555 = vpack.c.b16 %v4427, %v4419
  %v4556 = vpack.c.b16 %v4428, %v4420
  %v4557 = vpack.c.b16 %v4429, %v4421
  %v4558 = vpack.c.b16 %v4430, %v4422
  %v4559 = vpack.c.b16 %v4431, %v4423
  %4688 = vmatprep.subr.bf16.mxu0 %v4489
  %4689 = vmatpush1.bf16.msra.mxu0 %v4488
  %4690 = vmatprep.subr.bf16.mxu0 %v4481
  %4691 = vmatpush1.bf16.msra.mxu0 %v4480
  %4692 = vmatprep.subr.bf16.mxu0 %v4473
  %4693 = vmatpush1.bf16.msra.mxu0 %v4472
  %4694 = vmatprep.subr.bf16.mxu0 %v4465
  %4695 = vmatpush1.bf16.msra.mxu0 %v4464
  %4696 = vmatprep.subr.bf16.mxu0 %v4457
  %4697 = vmatpush1.bf16.msra.mxu0 %v4456
  %4698 = vmatprep.subr.bf16.mxu0 %v4449
  %4699 = vmatpush1.bf16.msra.mxu0 %v4448
  %4700 = vmatprep.subr.bf16.mxu0 %v4441
  %4701 = vmatpush1.bf16.msra.mxu0 %v4440
  %4702 = vmatprep.subr.bf16.mxu0 %v4433
  %4703 = vmatpush1.bf16.msra.mxu0 %v4432
  %4704 = vmatprep.subr.bf16.mxu0 %v4553
  %4705 = vmatpush2.bf16.msra.mxu0 %v4552
  %4706 = vmatprep.subr.bf16.mxu0 %v4545
  %4707 = vmatpush2.bf16.msra.mxu0 %v4544
  %4708 = vmatprep.subr.bf16.mxu0 %v4537
  %4709 = vmatpush2.bf16.msra.mxu0 %v4536
  %4710 = vmatprep.subr.bf16.mxu0 %v4529
  %4711 = vmatpush2.bf16.msra.mxu0 %v4528
  %4712 = vmatprep.subr.bf16.mxu0 %v4521
  %4713 = vmatpush2.bf16.msra.mxu0 %v4520
  %4714 = vmatprep.subr.bf16.mxu0 %v4513
  %4715 = vmatpush2.bf16.msra.mxu0 %v4512
  %4716 = vmatprep.subr.bf16.mxu0 %v4505
  %4717 = vmatpush2.bf16.msra.mxu0 %v4504
  %4718 = vmatprep.subr.bf16.mxu0 %v4497
  %4719 = vmatpush2.bf16.msra.mxu0 %v4496
  %4720 = vmatprep.mubr.bf16.mxu0 %v3919
  %4721 = vmatmul.mubr.bf16.gmra.mxu0 %v3613
  %v4722 = vpop.f32.mrf.mxu0
  %v4723 = vadd.f32 0.0, %v4722
  %v4724 = vpop.f32.mrf.mxu0
  %v4725 = vadd.f32 0.0, %v4724
  %v4726 = vpop.f32.mrf.mxu0
  %v4727 = vpop.f32.mrf.mxu0
  %4728 = vdwg.mxu0
  %4729 = vmatprep.subr.bf16.mxu0 %v4491
  %4730 = vmatpush1.bf16.msra.mxu0 %v4490
  %4731 = vmatprep.subr.bf16.mxu0 %v4483
  %4732 = vmatpush1.bf16.msra.mxu0 %v4482
  %4733 = vmatprep.subr.bf16.mxu0 %v4475
  %4734 = vmatpush1.bf16.msra.mxu0 %v4474
  %4735 = vmatprep.subr.bf16.mxu0 %v4467
  %4736 = vmatpush1.bf16.msra.mxu0 %v4466
  %4737 = vmatprep.subr.bf16.mxu0 %v4459
  %4738 = vmatpush1.bf16.msra.mxu0 %v4458
  %4739 = vmatprep.subr.bf16.mxu0 %v4451
  %4740 = vmatpush1.bf16.msra.mxu0 %v4450
  %4741 = vmatprep.subr.bf16.mxu0 %v4443
  %4742 = vmatpush1.bf16.msra.mxu0 %v4442
  %4743 = vmatprep.subr.bf16.mxu0 %v4435
  %4744 = vmatpush1.bf16.msra.mxu0 %v4434
  %4745 = vmatprep.subr.bf16.mxu0 %v4555
  %4746 = vmatpush2.bf16.msra.mxu0 %v4554
  %4747 = vmatprep.subr.bf16.mxu0 %v4547
  %4748 = vmatpush2.bf16.msra.mxu0 %v4546
  %4749 = vmatprep.subr.bf16.mxu0 %v4539
  %4750 = vmatpush2.bf16.msra.mxu0 %v4538
  %4751 = vmatprep.subr.bf16.mxu0 %v4531
  %4752 = vmatpush2.bf16.msra.mxu0 %v4530
  %4753 = vmatprep.subr.bf16.mxu0 %v4523
  %4754 = vmatpush2.bf16.msra.mxu0 %v4522
  %4755 = vmatprep.subr.bf16.mxu0 %v4515
  %4756 = vmatpush2.bf16.msra.mxu0 %v4514
  %4757 = vmatprep.subr.bf16.mxu0 %v4507
  %4758 = vmatpush2.bf16.msra.mxu0 %v4506
  %4759 = vmatprep.subr.bf16.mxu0 %v4499
  %4760 = vmatpush2.bf16.msra.mxu0 %v4498
  %4761 = vmatprep.mubr.bf16.mxu0 %v3919
  %4762 = vmatmul.mubr.bf16.gmra.mxu0 %v3613
  %v4763 = vpop.f32.mrf.mxu0
  %v4764 = vadd.f32 0.0, %v4763
  %v4765 = vpop.f32.mrf.mxu0
  %v4766 = vadd.f32 0.0, %v4765
  %v4767 = vpop.f32.mrf.mxu0
  %v4768 = vpop.f32.mrf.mxu0
  %4769 = vdwg.mxu0
  %4770 = vmatprep.subr.bf16.mxu0 %v4493
  %4771 = vmatpush1.bf16.msra.mxu0 %v4492
  %4772 = vmatprep.subr.bf16.mxu0 %v4485
  %4773 = vmatpush1.bf16.msra.mxu0 %v4484
  %4774 = vmatprep.subr.bf16.mxu0 %v4477
  %4775 = vmatpush1.bf16.msra.mxu0 %v4476
  %4776 = vmatprep.subr.bf16.mxu0 %v4469
  %4777 = vmatpush1.bf16.msra.mxu0 %v4468
  %4778 = vmatprep.subr.bf16.mxu0 %v4461
  %4779 = vmatpush1.bf16.msra.mxu0 %v4460
  %4780 = vmatprep.subr.bf16.mxu0 %v4453
  %4781 = vmatpush1.bf16.msra.mxu0 %v4452
  %4782 = vmatprep.subr.bf16.mxu0 %v4445
  %4783 = vmatpush1.bf16.msra.mxu0 %v4444
  %4784 = vmatprep.subr.bf16.mxu0 %v4437
  %4785 = vmatpush1.bf16.msra.mxu0 %v4436
  %4786 = vmatprep.subr.bf16.mxu0 %v4557
  %4787 = vmatpush2.bf16.msra.mxu0 %v4556
  %4788 = vmatprep.subr.bf16.mxu0 %v4549
  %4789 = vmatpush2.bf16.msra.mxu0 %v4548
  %4790 = vmatprep.subr.bf16.mxu0 %v4541
  %4791 = vmatpush2.bf16.msra.mxu0 %v4540
  %4792 = vmatprep.subr.bf16.mxu0 %v4533
  %4793 = vmatpush2.bf16.msra.mxu0 %v4532
  %4794 = vmatprep.subr.bf16.mxu0 %v4525
  %4795 = vmatpush2.bf16.msra.mxu0 %v4524
  %4796 = vmatprep.subr.bf16.mxu0 %v4517
  %4797 = vmatpush2.bf16.msra.mxu0 %v4516
  %4798 = vmatprep.subr.bf16.mxu0 %v4509
  %4799 = vmatpush2.bf16.msra.mxu0 %v4508
  %4800 = vmatprep.subr.bf16.mxu0 %v4501
  %4801 = vmatpush2.bf16.msra.mxu0 %v4500
  %4802 = vmatprep.mubr.bf16.mxu0 %v3919
  %4803 = vmatmul.mubr.bf16.gmra.mxu0 %v3613
  %v4804 = vpop.f32.mrf.mxu0
  %v4805 = vadd.f32 0.0, %v4804
  %v4806 = vpop.f32.mrf.mxu0
  %v4807 = vadd.f32 0.0, %v4806
  %v4808 = vpop.f32.mrf.mxu0
  %v4809 = vpop.f32.mrf.mxu0
  %4810 = vdwg.mxu0
  %4811 = vmatprep.subr.bf16.mxu0 %v4495
  %4812 = vmatpush1.bf16.msra.mxu0 %v4494
  %4813 = vmatprep.subr.bf16.mxu0 %v4487
  %4814 = vmatpush1.bf16.msra.mxu0 %v4486
  %4815 = vmatprep.subr.bf16.mxu0 %v4479
  %4816 = vmatpush1.bf16.msra.mxu0 %v4478
  %4817 = vmatprep.subr.bf16.mxu0 %v4471
  %4818 = vmatpush1.bf16.msra.mxu0 %v4470
  %4819 = vmatprep.subr.bf16.mxu0 %v4463
  %4820 = vmatpush1.bf16.msra.mxu0 %v4462
  %4821 = vmatprep.subr.bf16.mxu0 %v4455
  %4822 = vmatpush1.bf16.msra.mxu0 %v4454
  %4823 = vmatprep.subr.bf16.mxu0 %v4447
  %4824 = vmatpush1.bf16.msra.mxu0 %v4446
  %4825 = vmatprep.subr.bf16.mxu0 %v4439
  %4826 = vmatpush1.bf16.msra.mxu0 %v4438
  %4827 = vmatprep.subr.bf16.mxu0 %v4559
  %4828 = vmatpush2.bf16.msra.mxu0 %v4558
  %4829 = vmatprep.subr.bf16.mxu0 %v4551
  %4830 = vmatpush2.bf16.msra.mxu0 %v4550
  %4831 = vmatprep.subr.bf16.mxu0 %v4543
  %4832 = vmatpush2.bf16.msra.mxu0 %v4542
  %4833 = vmatprep.subr.bf16.mxu0 %v4535
  %4834 = vmatpush2.bf16.msra.mxu0 %v4534
  %4835 = vmatprep.subr.bf16.mxu0 %v4527
  %4836 = vmatpush2.bf16.msra.mxu0 %v4526
  %4837 = vmatprep.subr.bf16.mxu0 %v4519
  %4838 = vmatpush2.bf16.msra.mxu0 %v4518
  %4839 = vmatprep.subr.bf16.mxu0 %v4511
  %4840 = vmatpush2.bf16.msra.mxu0 %v4510
  %4841 = vmatprep.subr.bf16.mxu0 %v4503
  %4842 = vmatpush2.bf16.msra.mxu0 %v4502
  %4843 = vmatprep.mubr.bf16.mxu0 %v3919
  %4844 = vmatmul.mubr.bf16.gmra.mxu0 %v3613
  %v4845 = vpop.f32.mrf.mxu0
  %v4846 = vadd.f32 0.0, %v4845
  %v4847 = vpop.f32.mrf.mxu0
  %v4848 = vadd.f32 0.0, %v4847
  %v4849 = vpop.f32.mrf.mxu0
  %v4850 = vpop.f32.mrf.mxu0
  %4851 = vdwg.mxu0
  %4853 = vset.pattern.permute.xlu0 0
  %4854 = vperm.xlu0 %4853, %v3918
  %v4855 = vpop.permute.xlu0 %4854
  %v4857 = vmul.f32 %v4855, %v977
  %v4858 = vmul.f32 %v4855, %v981
  %v4859 = vmul.f32 %v4855, %v985
  %v4860 = vmul.f32 %v4855, %v989
  %v4861 = vadd.f32 %v4723, %v4857
  %v4862 = vadd.f32 %v4725, %v4858
  %v4863 = vadd.f32 %v4764, %v4859
  %v4864 = vadd.f32 %v4766, %v4860
  %v4865 = vadd.f32 %v4861, %v1006
  %v4866 = vadd.f32 %v4862, %v1010
  %v4867 = vadd.f32 %v4863, %v1014
  %v4868 = vadd.f32 %v4864, %v1018
  %v4869 = vmul.f32 %v4865, 0.5
  %v4870 = vmul.f32 %v4866, 0.5
  %v4871 = vmul.f32 %v4867, 0.5
  %v4872 = vtanh.pop %v4869
  %v4873 = vtanh.pop %v4870
  %v4874 = vtanh.pop %v4871
  %v4875 = vmul.f32 %v4872, 0.5
  %v4876 = vmul.f32 %v4873, 0.5
  %v4877 = vmul.f32 %v4874, 0.5
  %v4878 = vadd.f32 %v4875, 0.5
  %v4879 = vadd.f32 %v4876, 0.5
  %v4880 = vadd.f32 %v4877, 0.5
  %v4881 = vtanh.pop %v4868
  %v4882 = vmul.f32 %v4879, %v3610
  %v4883 = vmul.f32 %v4878, %v4881
  %v4884 = vadd.f32 %v4882, %v4883
  %v4885 = vtanh.pop %v4884
  %v4886 = vmul.f32 %v4880, %v4885
  %v4887 = vpack.c.bf16 %v4886, %v4886
  %v4888 = vld [vmem:[%s4] sm:$0xff]
  %v4889 = vld [vmem:[%s4 + $0x8] sm:$0xff]
  %v4890 = vld [vmem:[%s4 + $0x10] sm:$0xff]
  %v4891 = vld [vmem:[%s4 + $0x18] sm:$0xff]
  %v4892 = vld [vmem:[%s4 + $0x20] sm:$0xff]
  %v4893 = vld [vmem:[%s4 + $0x28] sm:$0xff]
  %v4894 = vld [vmem:[%s4 + $0x30] sm:$0xff]
  %v4895 = vld [vmem:[%s4 + $0x38] sm:$0xff]
  %v4896 = vld [vmem:[%s4 + $0x40] sm:$0xff]
  %v4897 = vld [vmem:[%s4 + $0x48] sm:$0xff]
  %v4898 = vld [vmem:[%s4 + $0x50] sm:$0xff]
  %v4899 = vld [vmem:[%s4 + $0x58] sm:$0xff]
  %v4900 = vld [vmem:[%s4 + $0x60] sm:$0xff]
  %v4901 = vld [vmem:[%s4 + $0x68] sm:$0xff]
  %v4902 = vld [vmem:[%s4 + $0x70] sm:$0xff]
  %v4903 = vld [vmem:[%s4 + $0x78] sm:$0xff]
  %v4904 = vld [vmem:[%s4 + $0x80] sm:$0xff]
  %v4905 = vld [vmem:[%s4 + $0x88] sm:$0xff]
  %v4906 = vld [vmem:[%s4 + $0x90] sm:$0xff]
  %v4907 = vld [vmem:[%s4 + $0x98] sm:$0xff]
  %v4908 = vld [vmem:[%s4 + $0xa0] sm:$0xff]
  %v4909 = vld [vmem:[%s4 + $0xa8] sm:$0xff]
  %v4910 = vld [vmem:[%s4 + $0xb0] sm:$0xff]
  %v4911 = vld [vmem:[%s4 + $0xb8] sm:$0xff]
  %v4912 = vld [vmem:[%s4 + $0xc0] sm:$0xff]
  %v4913 = vld [vmem:[%s4 + $0xc8] sm:$0xff]
  %v4914 = vld [vmem:[%s4 + $0xd0] sm:$0xff]
  %v4915 = vld [vmem:[%s4 + $0xd8] sm:$0xff]
  %v4916 = vld [vmem:[%s4 + $0xe0] sm:$0xff]
  %v4917 = vld [vmem:[%s4 + $0xe8] sm:$0xff]
  %v4918 = vld [vmem:[%s4 + $0xf0] sm:$0xff]
  %v4919 = vld [vmem:[%s4 + $0xf8] sm:$0xff]
  %v4952 = vunpack.c.l.b16 %v4888
  %v4953 = vunpack.c.h.b16 %v4888
  %v4954 = vunpack.c.l.b16 %v4889
  %v4955 = vunpack.c.h.b16 %v4889
  %v4956 = vunpack.c.l.b16 %v4890
  %v4957 = vunpack.c.h.b16 %v4890
  %v4958 = vunpack.c.l.b16 %v4891
  %v4959 = vunpack.c.h.b16 %v4891
  %v4960 = vunpack.c.l.b16 %v4892
  %v4961 = vunpack.c.h.b16 %v4892
  %v4962 = vunpack.c.l.b16 %v4893
  %v4963 = vunpack.c.h.b16 %v4893
  %v4964 = vunpack.c.l.b16 %v4894
  %v4965 = vunpack.c.h.b16 %v4894
  %v4966 = vunpack.c.l.b16 %v4895
  %v4967 = vunpack.c.h.b16 %v4895
  %v4968 = vunpack.c.l.b16 %v4896
  %v4969 = vunpack.c.h.b16 %v4896
  %v4970 = vunpack.c.l.b16 %v4897
  %v4971 = vunpack.c.h.b16 %v4897
  %v4972 = vunpack.c.l.b16 %v4898
  %v4973 = vunpack.c.h.b16 %v4898
  %v4974 = vunpack.c.l.b16 %v4899
  %v4975 = vunpack.c.h.b16 %v4899
  %v4976 = vunpack.c.l.b16 %v4900
  %v4977 = vunpack.c.h.b16 %v4900
  %v4978 = vunpack.c.l.b16 %v4901
  %v4979 = vunpack.c.h.b16 %v4901
  %v4980 = vunpack.c.l.b16 %v4902
  %v4981 = vunpack.c.h.b16 %v4902
  %v4982 = vunpack.c.l.b16 %v4903
  %v4983 = vunpack.c.h.b16 %v4903
  %v4984 = vunpack.c.l.b16 %v4904
  %v4985 = vunpack.c.h.b16 %v4904
  %v4986 = vunpack.c.l.b16 %v4905
  %v4987 = vunpack.c.h.b16 %v4905
  %v4988 = vunpack.c.l.b16 %v4906
  %v4989 = vunpack.c.h.b16 %v4906
  %v4990 = vunpack.c.l.b16 %v4907
  %v4991 = vunpack.c.h.b16 %v4907
  %v4992 = vunpack.c.l.b16 %v4908
  %v4993 = vunpack.c.h.b16 %v4908
  %v4994 = vunpack.c.l.b16 %v4909
  %v4995 = vunpack.c.h.b16 %v4909
  %v4996 = vunpack.c.l.b16 %v4910
  %v4997 = vunpack.c.h.b16 %v4910
  %v4998 = vunpack.c.l.b16 %v4911
  %v4999 = vunpack.c.h.b16 %v4911
  %v5000 = vunpack.c.l.b16 %v4912
  %v5001 = vunpack.c.h.b16 %v4912
  %v5002 = vunpack.c.l.b16 %v4913
  %v5003 = vunpack.c.h.b16 %v4913
  %v5004 = vunpack.c.l.b16 %v4914
  %v5005 = vunpack.c.h.b16 %v4914
  %v5006 = vunpack.c.l.b16 %v4915
  %v5007 = vunpack.c.h.b16 %v4915
  %v5008 = vunpack.c.l.b16 %v4916
  %v5009 = vunpack.c.h.b16 %v4916
  %v5010 = vunpack.c.l.b16 %v4917
  %v5011 = vunpack.c.h.b16 %v4917
  %v5012 = vunpack.c.l.b16 %v4918
  %v5013 = vunpack.c.h.b16 %v4918
  %v5014 = vunpack.c.l.b16 %v4919
  %v5015 = vunpack.c.h.b16 %v4919
  %v5016 = vpack.c.b16 %v4956, %v4952
  %v5017 = vpack.c.b16 %v4957, %v4953
  %v5018 = vpack.c.b16 %v4958, %v4954
  %v5019 = vpack.c.b16 %v4959, %v4955
  %v5020 = vpack.c.b16 %v4964, %v4960
  %v5021 = vpack.c.b16 %v4965, %v4961
  %v5022 = vpack.c.b16 %v4966, %v4962
  %v5023 = vpack.c.b16 %v4967, %v4963
  %v5024 = vpack.c.b16 %v4972, %v4968
  %v5025 = vpack.c.b16 %v4973, %v4969
  %v5026 = vpack.c.b16 %v4974, %v4970
  %v5027 = vpack.c.b16 %v4975, %v4971
  %v5028 = vpack.c.b16 %v4980, %v4976
  %v5029 = vpack.c.b16 %v4981, %v4977
  %v5030 = vpack.c.b16 %v4982, %v4978
  %v5031 = vpack.c.b16 %v4983, %v4979
  %v5032 = vpack.c.b16 %v4988, %v4984
  %v5033 = vpack.c.b16 %v4989, %v4985
  %v5034 = vpack.c.b16 %v4990, %v4986
  %v5035 = vpack.c.b16 %v4991, %v4987
  %v5036 = vpack.c.b16 %v4996, %v4992
  %v5037 = vpack.c.b16 %v4997, %v4993
  %v5038 = vpack.c.b16 %v4998, %v4994
  %v5039 = vpack.c.b16 %v4999, %v4995
  %v5040 = vpack.c.b16 %v5004, %v5000
  %v5041 = vpack.c.b16 %v5005, %v5001
  %v5042 = vpack.c.b16 %v5006, %v5002
  %v5043 = vpack.c.b16 %v5007, %v5003
  %v5044 = vpack.c.b16 %v5012, %v5008
  %v5045 = vpack.c.b16 %v5013, %v5009
  %v5046 = vpack.c.b16 %v5014, %v5010
  %v5047 = vpack.c.b16 %v5015, %v5011
  %5080 = vmatprep.subr.bf16.mxu0 %v5045
  %5081 = vmatpush1.bf16.msra.mxu0 %v5044
  %5082 = vmatprep.subr.bf16.mxu0 %v5041
  %5083 = vmatpush1.bf16.msra.mxu0 %v5040
  %5084 = vmatprep.subr.bf16.mxu0 %v5037
  %5085 = vmatpush1.bf16.msra.mxu0 %v5036
  %5086 = vmatprep.subr.bf16.mxu0 %v5033
  %5087 = vmatpush1.bf16.msra.mxu0 %v5032
  %5088 = vmatprep.subr.bf16.mxu0 %v5029
  %5089 = vmatpush1.bf16.msra.mxu0 %v5028
  %5090 = vmatprep.subr.bf16.mxu0 %v5025
  %5091 = vmatpush1.bf16.msra.mxu0 %v5024
  %5092 = vmatprep.subr.bf16.mxu0 %v5021
  %5093 = vmatpush1.bf16.msra.mxu0 %v5020
  %5094 = vmatprep.subr.bf16.mxu0 %v5017
  %5095 = vmatpush1.bf16.msra.mxu0 %v5016
  %5096 = vmatprep.subr.bf16.mxu0 0
  %5097 = vmatpush2.bf16.msra.mxu0 0
  %5098 = vmatprep.subr.bf16.mxu0 0
  %5099 = vmatpush2.bf16.msra.mxu0 0
  %5100 = vmatprep.subr.bf16.mxu0 0
  %5101 = vmatpush2.bf16.msra.mxu0 0
  %5102 = vmatprep.subr.bf16.mxu0 0
  %5103 = vmatpush2.bf16.msra.mxu0 0
  %5104 = vmatprep.subr.bf16.mxu0 0
  %5105 = vmatpush2.bf16.msra.mxu0 0
  %5106 = vmatprep.subr.bf16.mxu0 0
  %5107 = vmatpush2.bf16.msra.mxu0 0
  %5108 = vmatprep.subr.bf16.mxu0 0
  %5109 = vmatpush2.bf16.msra.mxu0 0
  %5110 = vmatprep.subr.bf16.mxu0 0
  %5111 = vmatpush2.bf16.msra.mxu0 0
  %5112 = vmatprep.mubr.bf16.mxu0 0
  %5113 = vmatmul.mubr.bf16.gmra.mxu0 %v4887
  %v5114 = vpop.f32.mrf.mxu0
  %v5115 = vadd.f32 0.0, %v5114
  %v5116 = vpop.f32.mrf.mxu0
  %v5117 = vadd.f32 0.0, %v5116
  %v5118 = vpop.f32.mrf.mxu0
  %v5119 = vpop.f32.mrf.mxu0
  %5120 = vdwg.mxu0
  %5121 = vmatprep.subr.bf16.mxu0 %v5047
  %5122 = vmatpush1.bf16.msra.mxu0 %v5046
  %5123 = vmatprep.subr.bf16.mxu0 %v5043
  %5124 = vmatpush1.bf16.msra.mxu0 %v5042
  %5125 = vmatprep.subr.bf16.mxu0 %v5039
  %5126 = vmatpush1.bf16.msra.mxu0 %v5038
  %5127 = vmatprep.subr.bf16.mxu0 %v5035
  %5128 = vmatpush1.bf16.msra.mxu0 %v5034
  %5129 = vmatprep.subr.bf16.mxu0 %v5031
  %5130 = vmatpush1.bf16.msra.mxu0 %v5030
  %5131 = vmatprep.subr.bf16.mxu0 %v5027
  %5132 = vmatpush1.bf16.msra.mxu0 %v5026
  %5133 = vmatprep.subr.bf16.mxu0 %v5023
  %5134 = vmatpush1.bf16.msra.mxu0 %v5022
  %5135 = vmatprep.subr.bf16.mxu0 %v5019
  %5136 = vmatpush1.bf16.msra.mxu0 %v5018
  %5137 = vmatprep.subr.bf16.mxu0 0
  %5138 = vmatpush2.bf16.msra.mxu0 0
  %5139 = vmatprep.subr.bf16.mxu0 0
  %5140 = vmatpush2.bf16.msra.mxu0 0
  %5141 = vmatprep.subr.bf16.mxu0 0
  %5142 = vmatpush2.bf16.msra.mxu0 0
  %5143 = vmatprep.subr.bf16.mxu0 0
  %5144 = vmatpush2.bf16.msra.mxu0 0
  %5145 = vmatprep.subr.bf16.mxu0 0
  %5146 = vmatpush2.bf16.msra.mxu0 0
  %5147 = vmatprep.subr.bf16.mxu0 0
  %5148 = vmatpush2.bf16.msra.mxu0 0
  %5149 = vmatprep.subr.bf16.mxu0 0
  %5150 = vmatpush2.bf16.msra.mxu0 0
  %5151 = vmatprep.subr.bf16.mxu0 0
  %5152 = vmatpush2.bf16.msra.mxu0 0
  %5153 = vmatprep.mubr.bf16.mxu0 0
  %5154 = vmatmul.mubr.bf16.gmra.mxu0 %v4887
  %v5155 = vpop.f32.mrf.mxu0
  %v5156 = vadd.f32 0.0, %v5155
  %v5157 = vpop.f32.mrf.mxu0
  %v5158 = vadd.f32 0.0, %v5157
  %v5159 = vpop.f32.mrf.mxu0
  %v5160 = vpop.f32.mrf.mxu0
  %5161 = vdwg.mxu0
  %v5162 = vadd.f32 %v4805, %v5115
  %v5163 = vadd.f32 %v4807, %v5117
  %v5164 = vadd.f32 %v4846, %v5156
  %v5165 = vadd.f32 %v4848, %v5158
  %v5166 = vadd.f32 %v5162, %v1328
  %v5167 = vadd.f32 %v5163, %v1332
  %v5168 = vadd.f32 %v5164, %v1336
  %v5169 = vadd.f32 %v5165, %v1340
  %v5170 = vmul.f32 %v5166, 0.5
  %v5171 = vmul.f32 %v5167, 0.5
  %v5172 = vmul.f32 %v5168, 0.5
  %v5173 = vtanh.pop %v5170
  %v5174 = vtanh.pop %v5171
  %v5175 = vtanh.pop %v5172
  %v5176 = vmul.f32 %v5173, 0.5
  %v5177 = vmul.f32 %v5174, 0.5
  %v5178 = vmul.f32 %v5175, 0.5
  %v5179 = vadd.f32 %v5176, 0.5
  %v5180 = vadd.f32 %v5177, 0.5
  %v5181 = vadd.f32 %v5178, 0.5
  %v5182 = vtanh.pop %v5169
  %v5183 = vmul.f32 %v5180, %v3911
  %v5184 = vmul.f32 %v5179, %v5182
  %v5185 = vadd.f32 %v5183, %v5184
  %v5186 = vtanh.pop %v5185
  %v5187 = vmul.f32 %v5181, %v5186
  %v5188 = vadd.f32 %v4886, %v5187
  %s5189 = scalar_lea.vmem [#allocation2], 6
  %5190 = vst [vmem:[%s5189] sm:$0x3] %v5188
  %s5191 = scalar_lea.vmem %s0, 8
  %v5192 = vld [vmem:[%s5191] sm:$0x3]
  %v5193 = vpack.c.bf16 %v5187, %v5187
  %v5194 = vld [vmem:[%s3] sm:$0xff]
  %v5195 = vld [vmem:[%s3 + $0x8] sm:$0xff]
  %v5196 = vld [vmem:[%s3 + $0x10] sm:$0xff]
  %v5197 = vld [vmem:[%s3 + $0x18] sm:$0xff]
  %v5198 = vld [vmem:[%s3 + $0x20] sm:$0xff]
  %v5199 = vld [vmem:[%s3 + $0x28] sm:$0xff]
  %v5200 = vld [vmem:[%s3 + $0x30] sm:$0xff]
  %v5201 = vld [vmem:[%s3 + $0x38] sm:$0xff]
  %v5202 = vld [vmem:[%s3 + $0x40] sm:$0xff]
  %v5203 = vld [vmem:[%s3 + $0x48] sm:$0xff]
  %v5204 = vld [vmem:[%s3 + $0x50] sm:$0xff]
  %v5205 = vld [vmem:[%s3 + $0x58] sm:$0xff]
  %v5206 = vld [vmem:[%s3 + $0x60] sm:$0xff]
  %v5207 = vld [vmem:[%s3 + $0x68] sm:$0xff]
  %v5208 = vld [vmem:[%s3 + $0x70] sm:$0xff]
  %v5209 = vld [vmem:[%s3 + $0x78] sm:$0xff]
  %v5210 = vld [vmem:[%s3 + $0x80] sm:$0xff]
  %v5211 = vld [vmem:[%s3 + $0x88] sm:$0xff]
  %v5212 = vld [vmem:[%s3 + $0x90] sm:$0xff]
  %v5213 = vld [vmem:[%s3 + $0x98] sm:$0xff]
  %v5214 = vld [vmem:[%s3 + $0xa0] sm:$0xff]
  %v5215 = vld [vmem:[%s3 + $0xa8] sm:$0xff]
  %v5216 = vld [vmem:[%s3 + $0xb0] sm:$0xff]
  %v5217 = vld [vmem:[%s3 + $0xb8] sm:$0xff]
  %v5218 = vld [vmem:[%s3 + $0xc0] sm:$0xff]
  %v5219 = vld [vmem:[%s3 + $0xc8] sm:$0xff]
  %v5220 = vld [vmem:[%s3 + $0xd0] sm:$0xff]
  %v5221 = vld [vmem:[%s3 + $0xd8] sm:$0xff]
  %v5222 = vld [vmem:[%s3 + $0xe0] sm:$0xff]
  %v5223 = vld [vmem:[%s3 + $0xe8] sm:$0xff]
  %v5224 = vld [vmem:[%s3 + $0xf0] sm:$0xff]
  %v5225 = vld [vmem:[%s3 + $0xf8] sm:$0xff]
  %v5226 = vld [vmem:[%s3 + $0x100] sm:$0xff]
  %v5227 = vld [vmem:[%s3 + $0x108] sm:$0xff]
  %v5228 = vld [vmem:[%s3 + $0x110] sm:$0xff]
  %v5229 = vld [vmem:[%s3 + $0x118] sm:$0xff]
  %v5230 = vld [vmem:[%s3 + $0x120] sm:$0xff]
  %v5231 = vld [vmem:[%s3 + $0x128] sm:$0xff]
  %v5232 = vld [vmem:[%s3 + $0x130] sm:$0xff]
  %v5233 = vld [vmem:[%s3 + $0x138] sm:$0xff]
  %v5234 = vld [vmem:[%s3 + $0x140] sm:$0xff]
  %v5235 = vld [vmem:[%s3 + $0x148] sm:$0xff]
  %v5236 = vld [vmem:[%s3 + $0x150] sm:$0xff]
  %v5237 = vld [vmem:[%s3 + $0x158] sm:$0xff]
  %v5238 = vld [vmem:[%s3 + $0x160] sm:$0xff]
  %v5239 = vld [vmem:[%s3 + $0x168] sm:$0xff]
  %v5240 = vld [vmem:[%s3 + $0x170] sm:$0xff]
  %v5241 = vld [vmem:[%s3 + $0x178] sm:$0xff]
  %v5242 = vld [vmem:[%s3 + $0x180] sm:$0xff]
  %v5243 = vld [vmem:[%s3 + $0x188] sm:$0xff]
  %v5244 = vld [vmem:[%s3 + $0x190] sm:$0xff]
  %v5245 = vld [vmem:[%s3 + $0x198] sm:$0xff]
  %v5246 = vld [vmem:[%s3 + $0x1a0] sm:$0xff]
  %v5247 = vld [vmem:[%s3 + $0x1a8] sm:$0xff]
  %v5248 = vld [vmem:[%s3 + $0x1b0] sm:$0xff]
  %v5249 = vld [vmem:[%s3 + $0x1b8] sm:$0xff]
  %v5250 = vld [vmem:[%s3 + $0x1c0] sm:$0xff]
  %v5251 = vld [vmem:[%s3 + $0x1c8] sm:$0xff]
  %v5252 = vld [vmem:[%s3 + $0x1d0] sm:$0xff]
  %v5253 = vld [vmem:[%s3 + $0x1d8] sm:$0xff]
  %v5254 = vld [vmem:[%s3 + $0x1e0] sm:$0xff]
  %v5255 = vld [vmem:[%s3 + $0x1e8] sm:$0xff]
  %v5256 = vld [vmem:[%s3 + $0x1f0] sm:$0xff]
  %v5257 = vld [vmem:[%s3 + $0x1f8] sm:$0xff]
  %v5258 = vld [vmem:[%s3 + $0x200] sm:$0xff]
  %v5259 = vld [vmem:[%s3 + $0x208] sm:$0xff]
  %v5260 = vld [vmem:[%s3 + $0x210] sm:$0xff]
  %v5261 = vld [vmem:[%s3 + $0x218] sm:$0xff]
  %v5262 = vld [vmem:[%s3 + $0x220] sm:$0xff]
  %v5263 = vld [vmem:[%s3 + $0x228] sm:$0xff]
  %v5264 = vld [vmem:[%s3 + $0x230] sm:$0xff]
  %v5265 = vld [vmem:[%s3 + $0x238] sm:$0xff]
  %v5266 = vld [vmem:[%s3 + $0x240] sm:$0xff]
  %v5267 = vld [vmem:[%s3 + $0x248] sm:$0xff]
  %v5268 = vld [vmem:[%s3 + $0x250] sm:$0xff]
  %v5269 = vld [vmem:[%s3 + $0x258] sm:$0xff]
  %v5270 = vld [vmem:[%s3 + $0x260] sm:$0xff]
  %v5271 = vld [vmem:[%s3 + $0x268] sm:$0xff]
  %v5272 = vld [vmem:[%s3 + $0x270] sm:$0xff]
  %v5273 = vld [vmem:[%s3 + $0x278] sm:$0xff]
  %v5274 = vld [vmem:[%s3 + $0x280] sm:$0xff]
  %v5275 = vld [vmem:[%s3 + $0x288] sm:$0xff]
  %v5276 = vld [vmem:[%s3 + $0x290] sm:$0xff]
  %v5277 = vld [vmem:[%s3 + $0x298] sm:$0xff]
  %v5278 = vld [vmem:[%s3 + $0x2a0] sm:$0xff]
  %v5279 = vld [vmem:[%s3 + $0x2a8] sm:$0xff]
  %v5280 = vld [vmem:[%s3 + $0x2b0] sm:$0xff]
  %v5281 = vld [vmem:[%s3 + $0x2b8] sm:$0xff]
  %v5282 = vld [vmem:[%s3 + $0x2c0] sm:$0xff]
  %v5283 = vld [vmem:[%s3 + $0x2c8] sm:$0xff]
  %v5284 = vld [vmem:[%s3 + $0x2d0] sm:$0xff]
  %v5285 = vld [vmem:[%s3 + $0x2d8] sm:$0xff]
  %v5286 = vld [vmem:[%s3 + $0x2e0] sm:$0xff]
  %v5287 = vld [vmem:[%s3 + $0x2e8] sm:$0xff]
  %v5288 = vld [vmem:[%s3 + $0x2f0] sm:$0xff]
  %v5289 = vld [vmem:[%s3 + $0x2f8] sm:$0xff]
  %v5290 = vld [vmem:[%s3 + $0x300] sm:$0xff]
  %v5291 = vld [vmem:[%s3 + $0x308] sm:$0xff]
  %v5292 = vld [vmem:[%s3 + $0x310] sm:$0xff]
  %v5293 = vld [vmem:[%s3 + $0x318] sm:$0xff]
  %v5294 = vld [vmem:[%s3 + $0x320] sm:$0xff]
  %v5295 = vld [vmem:[%s3 + $0x328] sm:$0xff]
  %v5296 = vld [vmem:[%s3 + $0x330] sm:$0xff]
  %v5297 = vld [vmem:[%s3 + $0x338] sm:$0xff]
  %v5298 = vld [vmem:[%s3 + $0x340] sm:$0xff]
  %v5299 = vld [vmem:[%s3 + $0x348] sm:$0xff]
  %v5300 = vld [vmem:[%s3 + $0x350] sm:$0xff]
  %v5301 = vld [vmem:[%s3 + $0x358] sm:$0xff]
  %v5302 = vld [vmem:[%s3 + $0x360] sm:$0xff]
  %v5303 = vld [vmem:[%s3 + $0x368] sm:$0xff]
  %v5304 = vld [vmem:[%s3 + $0x370] sm:$0xff]
  %v5305 = vld [vmem:[%s3 + $0x378] sm:$0xff]
  %v5306 = vld [vmem:[%s3 + $0x380] sm:$0xff]
  %v5307 = vld [vmem:[%s3 + $0x388] sm:$0xff]
  %v5308 = vld [vmem:[%s3 + $0x390] sm:$0xff]
  %v5309 = vld [vmem:[%s3 + $0x398] sm:$0xff]
  %v5310 = vld [vmem:[%s3 + $0x3a0] sm:$0xff]
  %v5311 = vld [vmem:[%s3 + $0x3a8] sm:$0xff]
  %v5312 = vld [vmem:[%s3 + $0x3b0] sm:$0xff]
  %v5313 = vld [vmem:[%s3 + $0x3b8] sm:$0xff]
  %v5314 = vld [vmem:[%s3 + $0x3c0] sm:$0xff]
  %v5315 = vld [vmem:[%s3 + $0x3c8] sm:$0xff]
  %v5316 = vld [vmem:[%s3 + $0x3d0] sm:$0xff]
  %v5317 = vld [vmem:[%s3 + $0x3d8] sm:$0xff]
  %v5318 = vld [vmem:[%s3 + $0x3e0] sm:$0xff]
  %v5319 = vld [vmem:[%s3 + $0x3e8] sm:$0xff]
  %v5320 = vld [vmem:[%s3 + $0x3f0] sm:$0xff]
  %v5321 = vld [vmem:[%s3 + $0x3f8] sm:$0xff]
  %v5450 = vunpack.c.l.b16 %v5194
  %v5451 = vunpack.c.h.b16 %v5194
  %v5452 = vunpack.c.l.b16 %v5195
  %v5453 = vunpack.c.h.b16 %v5195
  %v5454 = vunpack.c.l.b16 %v5196
  %v5455 = vunpack.c.h.b16 %v5196
  %v5456 = vunpack.c.l.b16 %v5197
  %v5457 = vunpack.c.h.b16 %v5197
  %v5458 = vunpack.c.l.b16 %v5198
  %v5459 = vunpack.c.h.b16 %v5198
  %v5460 = vunpack.c.l.b16 %v5199
  %v5461 = vunpack.c.h.b16 %v5199
  %v5462 = vunpack.c.l.b16 %v5200
  %v5463 = vunpack.c.h.b16 %v5200
  %v5464 = vunpack.c.l.b16 %v5201
  %v5465 = vunpack.c.h.b16 %v5201
  %v5466 = vunpack.c.l.b16 %v5202
  %v5467 = vunpack.c.h.b16 %v5202
  %v5468 = vunpack.c.l.b16 %v5203
  %v5469 = vunpack.c.h.b16 %v5203
  %v5470 = vunpack.c.l.b16 %v5204
  %v5471 = vunpack.c.h.b16 %v5204
  %v5472 = vunpack.c.l.b16 %v5205
  %v5473 = vunpack.c.h.b16 %v5205
  %v5474 = vunpack.c.l.b16 %v5206
  %v5475 = vunpack.c.h.b16 %v5206
  %v5476 = vunpack.c.l.b16 %v5207
  %v5477 = vunpack.c.h.b16 %v5207
  %v5478 = vunpack.c.l.b16 %v5208
  %v5479 = vunpack.c.h.b16 %v5208
  %v5480 = vunpack.c.l.b16 %v5209
  %v5481 = vunpack.c.h.b16 %v5209
  %v5482 = vunpack.c.l.b16 %v5210
  %v5483 = vunpack.c.h.b16 %v5210
  %v5484 = vunpack.c.l.b16 %v5211
  %v5485 = vunpack.c.h.b16 %v5211
  %v5486 = vunpack.c.l.b16 %v5212
  %v5487 = vunpack.c.h.b16 %v5212
  %v5488 = vunpack.c.l.b16 %v5213
  %v5489 = vunpack.c.h.b16 %v5213
  %v5490 = vunpack.c.l.b16 %v5214
  %v5491 = vunpack.c.h.b16 %v5214
  %v5492 = vunpack.c.l.b16 %v5215
  %v5493 = vunpack.c.h.b16 %v5215
  %v5494 = vunpack.c.l.b16 %v5216
  %v5495 = vunpack.c.h.b16 %v5216
  %v5496 = vunpack.c.l.b16 %v5217
  %v5497 = vunpack.c.h.b16 %v5217
  %v5498 = vunpack.c.l.b16 %v5218
  %v5499 = vunpack.c.h.b16 %v5218
  %v5500 = vunpack.c.l.b16 %v5219
  %v5501 = vunpack.c.h.b16 %v5219
  %v5502 = vunpack.c.l.b16 %v5220
  %v5503 = vunpack.c.h.b16 %v5220
  %v5504 = vunpack.c.l.b16 %v5221
  %v5505 = vunpack.c.h.b16 %v5221
  %v5506 = vunpack.c.l.b16 %v5222
  %v5507 = vunpack.c.h.b16 %v5222
  %v5508 = vunpack.c.l.b16 %v5223
  %v5509 = vunpack.c.h.b16 %v5223
  %v5510 = vunpack.c.l.b16 %v5224
  %v5511 = vunpack.c.h.b16 %v5224
  %v5512 = vunpack.c.l.b16 %v5225
  %v5513 = vunpack.c.h.b16 %v5225
  %v5514 = vunpack.c.l.b16 %v5226
  %v5515 = vunpack.c.h.b16 %v5226
  %v5516 = vunpack.c.l.b16 %v5227
  %v5517 = vunpack.c.h.b16 %v5227
  %v5518 = vunpack.c.l.b16 %v5228
  %v5519 = vunpack.c.h.b16 %v5228
  %v5520 = vunpack.c.l.b16 %v5229
  %v5521 = vunpack.c.h.b16 %v5229
  %v5522 = vunpack.c.l.b16 %v5230
  %v5523 = vunpack.c.h.b16 %v5230
  %v5524 = vunpack.c.l.b16 %v5231
  %v5525 = vunpack.c.h.b16 %v5231
  %v5526 = vunpack.c.l.b16 %v5232
  %v5527 = vunpack.c.h.b16 %v5232
  %v5528 = vunpack.c.l.b16 %v5233
  %v5529 = vunpack.c.h.b16 %v5233
  %v5530 = vunpack.c.l.b16 %v5234
  %v5531 = vunpack.c.h.b16 %v5234
  %v5532 = vunpack.c.l.b16 %v5235
  %v5533 = vunpack.c.h.b16 %v5235
  %v5534 = vunpack.c.l.b16 %v5236
  %v5535 = vunpack.c.h.b16 %v5236
  %v5536 = vunpack.c.l.b16 %v5237
  %v5537 = vunpack.c.h.b16 %v5237
  %v5538 = vunpack.c.l.b16 %v5238
  %v5539 = vunpack.c.h.b16 %v5238
  %v5540 = vunpack.c.l.b16 %v5239
  %v5541 = vunpack.c.h.b16 %v5239
  %v5542 = vunpack.c.l.b16 %v5240
  %v5543 = vunpack.c.h.b16 %v5240
  %v5544 = vunpack.c.l.b16 %v5241
  %v5545 = vunpack.c.h.b16 %v5241
  %v5546 = vunpack.c.l.b16 %v5242
  %v5547 = vunpack.c.h.b16 %v5242
  %v5548 = vunpack.c.l.b16 %v5243
  %v5549 = vunpack.c.h.b16 %v5243
  %v5550 = vunpack.c.l.b16 %v5244
  %v5551 = vunpack.c.h.b16 %v5244
  %v5552 = vunpack.c.l.b16 %v5245
  %v5553 = vunpack.c.h.b16 %v5245
  %v5554 = vunpack.c.l.b16 %v5246
  %v5555 = vunpack.c.h.b16 %v5246
  %v5556 = vunpack.c.l.b16 %v5247
  %v5557 = vunpack.c.h.b16 %v5247
  %v5558 = vunpack.c.l.b16 %v5248
  %v5559 = vunpack.c.h.b16 %v5248
  %v5560 = vunpack.c.l.b16 %v5249
  %v5561 = vunpack.c.h.b16 %v5249
  %v5562 = vunpack.c.l.b16 %v5250
  %v5563 = vunpack.c.h.b16 %v5250
  %v5564 = vunpack.c.l.b16 %v5251
  %v5565 = vunpack.c.h.b16 %v5251
  %v5566 = vunpack.c.l.b16 %v5252
  %v5567 = vunpack.c.h.b16 %v5252
  %v5568 = vunpack.c.l.b16 %v5253
  %v5569 = vunpack.c.h.b16 %v5253
  %v5570 = vunpack.c.l.b16 %v5254
  %v5571 = vunpack.c.h.b16 %v5254
  %v5572 = vunpack.c.l.b16 %v5255
  %v5573 = vunpack.c.h.b16 %v5255
  %v5574 = vunpack.c.l.b16 %v5256
  %v5575 = vunpack.c.h.b16 %v5256
  %v5576 = vunpack.c.l.b16 %v5257
  %v5577 = vunpack.c.h.b16 %v5257
  %v5578 = vunpack.c.l.b16 %v5258
  %v5579 = vunpack.c.h.b16 %v5258
  %v5580 = vunpack.c.l.b16 %v5259
  %v5581 = vunpack.c.h.b16 %v5259
  %v5582 = vunpack.c.l.b16 %v5260
  %v5583 = vunpack.c.h.b16 %v5260
  %v5584 = vunpack.c.l.b16 %v5261
  %v5585 = vunpack.c.h.b16 %v5261
  %v5586 = vunpack.c.l.b16 %v5262
  %v5587 = vunpack.c.h.b16 %v5262
  %v5588 = vunpack.c.l.b16 %v5263
  %v5589 = vunpack.c.h.b16 %v5263
  %v5590 = vunpack.c.l.b16 %v5264
  %v5591 = vunpack.c.h.b16 %v5264
  %v5592 = vunpack.c.l.b16 %v5265
  %v5593 = vunpack.c.h.b16 %v5265
  %v5594 = vunpack.c.l.b16 %v5266
  %v5595 = vunpack.c.h.b16 %v5266
  %v5596 = vunpack.c.l.b16 %v5267
  %v5597 = vunpack.c.h.b16 %v5267
  %v5598 = vunpack.c.l.b16 %v5268
  %v5599 = vunpack.c.h.b16 %v5268
  %v5600 = vunpack.c.l.b16 %v5269
  %v5601 = vunpack.c.h.b16 %v5269
  %v5602 = vunpack.c.l.b16 %v5270
  %v5603 = vunpack.c.h.b16 %v5270
  %v5604 = vunpack.c.l.b16 %v5271
  %v5605 = vunpack.c.h.b16 %v5271
  %v5606 = vunpack.c.l.b16 %v5272
  %v5607 = vunpack.c.h.b16 %v5272
  %v5608 = vunpack.c.l.b16 %v5273
  %v5609 = vunpack.c.h.b16 %v5273
  %v5610 = vunpack.c.l.b16 %v5274
  %v5611 = vunpack.c.h.b16 %v5274
  %v5612 = vunpack.c.l.b16 %v5275
  %v5613 = vunpack.c.h.b16 %v5275
  %v5614 = vunpack.c.l.b16 %v5276
  %v5615 = vunpack.c.h.b16 %v5276
  %v5616 = vunpack.c.l.b16 %v5277
  %v5617 = vunpack.c.h.b16 %v5277
  %v5618 = vunpack.c.l.b16 %v5278
  %v5619 = vunpack.c.h.b16 %v5278
  %v5620 = vunpack.c.l.b16 %v5279
  %v5621 = vunpack.c.h.b16 %v5279
  %v5622 = vunpack.c.l.b16 %v5280
  %v5623 = vunpack.c.h.b16 %v5280
  %v5624 = vunpack.c.l.b16 %v5281
  %v5625 = vunpack.c.h.b16 %v5281
  %v5626 = vunpack.c.l.b16 %v5282
  %v5627 = vunpack.c.h.b16 %v5282
  %v5628 = vunpack.c.l.b16 %v5283
  %v5629 = vunpack.c.h.b16 %v5283
  %v5630 = vunpack.c.l.b16 %v5284
  %v5631 = vunpack.c.h.b16 %v5284
  %v5632 = vunpack.c.l.b16 %v5285
  %v5633 = vunpack.c.h.b16 %v5285
  %v5634 = vunpack.c.l.b16 %v5286
  %v5635 = vunpack.c.h.b16 %v5286
  %v5636 = vunpack.c.l.b16 %v5287
  %v5637 = vunpack.c.h.b16 %v5287
  %v5638 = vunpack.c.l.b16 %v5288
  %v5639 = vunpack.c.h.b16 %v5288
  %v5640 = vunpack.c.l.b16 %v5289
  %v5641 = vunpack.c.h.b16 %v5289
  %v5642 = vunpack.c.l.b16 %v5290
  %v5643 = vunpack.c.h.b16 %v5290
  %v5644 = vunpack.c.l.b16 %v5291
  %v5645 = vunpack.c.h.b16 %v5291
  %v5646 = vunpack.c.l.b16 %v5292
  %v5647 = vunpack.c.h.b16 %v5292
  %v5648 = vunpack.c.l.b16 %v5293
  %v5649 = vunpack.c.h.b16 %v5293
  %v5650 = vunpack.c.l.b16 %v5294
  %v5651 = vunpack.c.h.b16 %v5294
  %v5652 = vunpack.c.l.b16 %v5295
  %v5653 = vunpack.c.h.b16 %v5295
  %v5654 = vunpack.c.l.b16 %v5296
  %v5655 = vunpack.c.h.b16 %v5296
  %v5656 = vunpack.c.l.b16 %v5297
  %v5657 = vunpack.c.h.b16 %v5297
  %v5658 = vunpack.c.l.b16 %v5298
  %v5659 = vunpack.c.h.b16 %v5298
  %v5660 = vunpack.c.l.b16 %v5299
  %v5661 = vunpack.c.h.b16 %v5299
  %v5662 = vunpack.c.l.b16 %v5300
  %v5663 = vunpack.c.h.b16 %v5300
  %v5664 = vunpack.c.l.b16 %v5301
  %v5665 = vunpack.c.h.b16 %v5301
  %v5666 = vunpack.c.l.b16 %v5302
  %v5667 = vunpack.c.h.b16 %v5302
  %v5668 = vunpack.c.l.b16 %v5303
  %v5669 = vunpack.c.h.b16 %v5303
  %v5670 = vunpack.c.l.b16 %v5304
  %v5671 = vunpack.c.h.b16 %v5304
  %v5672 = vunpack.c.l.b16 %v5305
  %v5673 = vunpack.c.h.b16 %v5305
  %v5674 = vunpack.c.l.b16 %v5306
  %v5675 = vunpack.c.h.b16 %v5306
  %v5676 = vunpack.c.l.b16 %v5307
  %v5677 = vunpack.c.h.b16 %v5307
  %v5678 = vunpack.c.l.b16 %v5308
  %v5679 = vunpack.c.h.b16 %v5308
  %v5680 = vunpack.c.l.b16 %v5309
  %v5681 = vunpack.c.h.b16 %v5309
  %v5682 = vunpack.c.l.b16 %v5310
  %v5683 = vunpack.c.h.b16 %v5310
  %v5684 = vunpack.c.l.b16 %v5311
  %v5685 = vunpack.c.h.b16 %v5311
  %v5686 = vunpack.c.l.b16 %v5312
  %v5687 = vunpack.c.h.b16 %v5312
  %v5688 = vunpack.c.l.b16 %v5313
  %v5689 = vunpack.c.h.b16 %v5313
  %v5690 = vunpack.c.l.b16 %v5314
  %v5691 = vunpack.c.h.b16 %v5314
  %v5692 = vunpack.c.l.b16 %v5315
  %v5693 = vunpack.c.h.b16 %v5315
  %v5694 = vunpack.c.l.b16 %v5316
  %v5695 = vunpack.c.h.b16 %v5316
  %v5696 = vunpack.c.l.b16 %v5317
  %v5697 = vunpack.c.h.b16 %v5317
  %v5698 = vunpack.c.l.b16 %v5318
  %v5699 = vunpack.c.h.b16 %v5318
  %v5700 = vunpack.c.l.b16 %v5319
  %v5701 = vunpack.c.h.b16 %v5319
  %v5702 = vunpack.c.l.b16 %v5320
  %v5703 = vunpack.c.h.b16 %v5320
  %v5704 = vunpack.c.l.b16 %v5321
  %v5705 = vunpack.c.h.b16 %v5321
  %v5706 = vpack.c.b16 %v5458, %v5450
  %v5707 = vpack.c.b16 %v5459, %v5451
  %v5708 = vpack.c.b16 %v5460, %v5452
  %v5709 = vpack.c.b16 %v5461, %v5453
  %v5710 = vpack.c.b16 %v5462, %v5454
  %v5711 = vpack.c.b16 %v5463, %v5455
  %v5712 = vpack.c.b16 %v5464, %v5456
  %v5713 = vpack.c.b16 %v5465, %v5457
  %v5714 = vpack.c.b16 %v5474, %v5466
  %v5715 = vpack.c.b16 %v5475, %v5467
  %v5716 = vpack.c.b16 %v5476, %v5468
  %v5717 = vpack.c.b16 %v5477, %v5469
  %v5718 = vpack.c.b16 %v5478, %v5470
  %v5719 = vpack.c.b16 %v5479, %v5471
  %v5720 = vpack.c.b16 %v5480, %v5472
  %v5721 = vpack.c.b16 %v5481, %v5473
  %v5722 = vpack.c.b16 %v5490, %v5482
  %v5723 = vpack.c.b16 %v5491, %v5483
  %v5724 = vpack.c.b16 %v5492, %v5484
  %v5725 = vpack.c.b16 %v5493, %v5485
  %v5726 = vpack.c.b16 %v5494, %v5486
  %v5727 = vpack.c.b16 %v5495, %v5487
  %v5728 = vpack.c.b16 %v5496, %v5488
  %v5729 = vpack.c.b16 %v5497, %v5489
  %v5730 = vpack.c.b16 %v5506, %v5498
  %v5731 = vpack.c.b16 %v5507, %v5499
  %v5732 = vpack.c.b16 %v5508, %v5500
  %v5733 = vpack.c.b16 %v5509, %v5501
  %v5734 = vpack.c.b16 %v5510, %v5502
  %v5735 = vpack.c.b16 %v5511, %v5503
  %v5736 = vpack.c.b16 %v5512, %v5504
  %v5737 = vpack.c.b16 %v5513, %v5505
  %v5738 = vpack.c.b16 %v5522, %v5514
  %v5739 = vpack.c.b16 %v5523, %v5515
  %v5740 = vpack.c.b16 %v5524, %v5516
  %v5741 = vpack.c.b16 %v5525, %v5517
  %v5742 = vpack.c.b16 %v5526, %v5518
  %v5743 = vpack.c.b16 %v5527, %v5519
  %v5744 = vpack.c.b16 %v5528, %v5520
  %v5745 = vpack.c.b16 %v5529, %v5521
  %v5746 = vpack.c.b16 %v5538, %v5530
  %v5747 = vpack.c.b16 %v5539, %v5531
  %v5748 = vpack.c.b16 %v5540, %v5532
  %v5749 = vpack.c.b16 %v5541, %v5533
  %v5750 = vpack.c.b16 %v5542, %v5534
  %v5751 = vpack.c.b16 %v5543, %v5535
  %v5752 = vpack.c.b16 %v5544, %v5536
  %v5753 = vpack.c.b16 %v5545, %v5537
  %v5754 = vpack.c.b16 %v5554, %v5546
  %v5755 = vpack.c.b16 %v5555, %v5547
  %v5756 = vpack.c.b16 %v5556, %v5548
  %v5757 = vpack.c.b16 %v5557, %v5549
  %v5758 = vpack.c.b16 %v5558, %v5550
  %v5759 = vpack.c.b16 %v5559, %v5551
  %v5760 = vpack.c.b16 %v5560, %v5552
  %v5761 = vpack.c.b16 %v5561, %v5553
  %v5762 = vpack.c.b16 %v5570, %v5562
  %v5763 = vpack.c.b16 %v5571, %v5563
  %v5764 = vpack.c.b16 %v5572, %v5564
  %v5765 = vpack.c.b16 %v5573, %v5565
  %v5766 = vpack.c.b16 %v5574, %v5566
  %v5767 = vpack.c.b16 %v5575, %v5567
  %v5768 = vpack.c.b16 %v5576, %v5568
  %v5769 = vpack.c.b16 %v5577, %v5569
  %v5770 = vpack.c.b16 %v5586, %v5578
  %v5771 = vpack.c.b16 %v5587, %v5579
  %v5772 = vpack.c.b16 %v5588, %v5580
  %v5773 = vpack.c.b16 %v5589, %v5581
  %v5774 = vpack.c.b16 %v5590, %v5582
  %v5775 = vpack.c.b16 %v5591, %v5583
  %v5776 = vpack.c.b16 %v5592, %v5584
  %v5777 = vpack.c.b16 %v5593, %v5585
  %v5778 = vpack.c.b16 %v5602, %v5594
  %v5779 = vpack.c.b16 %v5603, %v5595
  %v5780 = vpack.c.b16 %v5604, %v5596
  %v5781 = vpack.c.b16 %v5605, %v5597
  %v5782 = vpack.c.b16 %v5606, %v5598
  %v5783 = vpack.c.b16 %v5607, %v5599
  %v5784 = vpack.c.b16 %v5608, %v5600
  %v5785 = vpack.c.b16 %v5609, %v5601
  %v5786 = vpack.c.b16 %v5618, %v5610
  %v5787 = vpack.c.b16 %v5619, %v5611
  %v5788 = vpack.c.b16 %v5620, %v5612
  %v5789 = vpack.c.b16 %v5621, %v5613
  %v5790 = vpack.c.b16 %v5622, %v5614
  %v5791 = vpack.c.b16 %v5623, %v5615
  %v5792 = vpack.c.b16 %v5624, %v5616
  %v5793 = vpack.c.b16 %v5625, %v5617
  %v5794 = vpack.c.b16 %v5634, %v5626
  %v5795 = vpack.c.b16 %v5635, %v5627
  %v5796 = vpack.c.b16 %v5636, %v5628
  %v5797 = vpack.c.b16 %v5637, %v5629
  %v5798 = vpack.c.b16 %v5638, %v5630
  %v5799 = vpack.c.b16 %v5639, %v5631
  %v5800 = vpack.c.b16 %v5640, %v5632
  %v5801 = vpack.c.b16 %v5641, %v5633
  %v5802 = vpack.c.b16 %v5650, %v5642
  %v5803 = vpack.c.b16 %v5651, %v5643
  %v5804 = vpack.c.b16 %v5652, %v5644
  %v5805 = vpack.c.b16 %v5653, %v5645
  %v5806 = vpack.c.b16 %v5654, %v5646
  %v5807 = vpack.c.b16 %v5655, %v5647
  %v5808 = vpack.c.b16 %v5656, %v5648
  %v5809 = vpack.c.b16 %v5657, %v5649
  %v5810 = vpack.c.b16 %v5666, %v5658
  %v5811 = vpack.c.b16 %v5667, %v5659
  %v5812 = vpack.c.b16 %v5668, %v5660
  %v5813 = vpack.c.b16 %v5669, %v5661
  %v5814 = vpack.c.b16 %v5670, %v5662
  %v5815 = vpack.c.b16 %v5671, %v5663
  %v5816 = vpack.c.b16 %v5672, %v5664
  %v5817 = vpack.c.b16 %v5673, %v5665
  %v5818 = vpack.c.b16 %v5682, %v5674
  %v5819 = vpack.c.b16 %v5683, %v5675
  %v5820 = vpack.c.b16 %v5684, %v5676
  %v5821 = vpack.c.b16 %v5685, %v5677
  %v5822 = vpack.c.b16 %v5686, %v5678
  %v5823 = vpack.c.b16 %v5687, %v5679
  %v5824 = vpack.c.b16 %v5688, %v5680
  %v5825 = vpack.c.b16 %v5689, %v5681
  %v5826 = vpack.c.b16 %v5698, %v5690
  %v5827 = vpack.c.b16 %v5699, %v5691
  %v5828 = vpack.c.b16 %v5700, %v5692
  %v5829 = vpack.c.b16 %v5701, %v5693
  %v5830 = vpack.c.b16 %v5702, %v5694
  %v5831 = vpack.c.b16 %v5703, %v5695
  %v5832 = vpack.c.b16 %v5704, %v5696
  %v5833 = vpack.c.b16 %v5705, %v5697
  %5962 = vmatprep.subr.bf16.mxu0 %v5763
  %5963 = vmatpush1.bf16.msra.mxu0 %v5762
  %5964 = vmatprep.subr.bf16.mxu0 %v5755
  %5965 = vmatpush1.bf16.msra.mxu0 %v5754
  %5966 = vmatprep.subr.bf16.mxu0 %v5747
  %5967 = vmatpush1.bf16.msra.mxu0 %v5746
  %5968 = vmatprep.subr.bf16.mxu0 %v5739
  %5969 = vmatpush1.bf16.msra.mxu0 %v5738
  %5970 = vmatprep.subr.bf16.mxu0 %v5731
  %5971 = vmatpush1.bf16.msra.mxu0 %v5730
  %5972 = vmatprep.subr.bf16.mxu0 %v5723
  %5973 = vmatpush1.bf16.msra.mxu0 %v5722
  %5974 = vmatprep.subr.bf16.mxu0 %v5715
  %5975 = vmatpush1.bf16.msra.mxu0 %v5714
  %5976 = vmatprep.subr.bf16.mxu0 %v5707
  %5977 = vmatpush1.bf16.msra.mxu0 %v5706
  %5978 = vmatprep.subr.bf16.mxu0 %v5827
  %5979 = vmatpush2.bf16.msra.mxu0 %v5826
  %5980 = vmatprep.subr.bf16.mxu0 %v5819
  %5981 = vmatpush2.bf16.msra.mxu0 %v5818
  %5982 = vmatprep.subr.bf16.mxu0 %v5811
  %5983 = vmatpush2.bf16.msra.mxu0 %v5810
  %5984 = vmatprep.subr.bf16.mxu0 %v5803
  %5985 = vmatpush2.bf16.msra.mxu0 %v5802
  %5986 = vmatprep.subr.bf16.mxu0 %v5795
  %5987 = vmatpush2.bf16.msra.mxu0 %v5794
  %5988 = vmatprep.subr.bf16.mxu0 %v5787
  %5989 = vmatpush2.bf16.msra.mxu0 %v5786
  %5990 = vmatprep.subr.bf16.mxu0 %v5779
  %5991 = vmatpush2.bf16.msra.mxu0 %v5778
  %5992 = vmatprep.subr.bf16.mxu0 %v5771
  %5993 = vmatpush2.bf16.msra.mxu0 %v5770
  %5994 = vmatprep.mubr.bf16.mxu0 %v5193
  %5995 = vmatmul.mubr.bf16.gmra.mxu0 %v4887
  %v5996 = vpop.f32.mrf.mxu0
  %v5997 = vadd.f32 0.0, %v5996
  %v5998 = vpop.f32.mrf.mxu0
  %v5999 = vadd.f32 0.0, %v5998
  %v6000 = vpop.f32.mrf.mxu0
  %v6001 = vpop.f32.mrf.mxu0
  %6002 = vdwg.mxu0
  %6003 = vmatprep.subr.bf16.mxu0 %v5765
  %6004 = vmatpush1.bf16.msra.mxu0 %v5764
  %6005 = vmatprep.subr.bf16.mxu0 %v5757
  %6006 = vmatpush1.bf16.msra.mxu0 %v5756
  %6007 = vmatprep.subr.bf16.mxu0 %v5749
  %6008 = vmatpush1.bf16.msra.mxu0 %v5748
  %6009 = vmatprep.subr.bf16.mxu0 %v5741
  %6010 = vmatpush1.bf16.msra.mxu0 %v5740
  %6011 = vmatprep.subr.bf16.mxu0 %v5733
  %6012 = vmatpush1.bf16.msra.mxu0 %v5732
  %6013 = vmatprep.subr.bf16.mxu0 %v5725
  %6014 = vmatpush1.bf16.msra.mxu0 %v5724
  %6015 = vmatprep.subr.bf16.mxu0 %v5717
  %6016 = vmatpush1.bf16.msra.mxu0 %v5716
  %6017 = vmatprep.subr.bf16.mxu0 %v5709
  %6018 = vmatpush1.bf16.msra.mxu0 %v5708
  %6019 = vmatprep.subr.bf16.mxu0 %v5829
  %6020 = vmatpush2.bf16.msra.mxu0 %v5828
  %6021 = vmatprep.subr.bf16.mxu0 %v5821
  %6022 = vmatpush2.bf16.msra.mxu0 %v5820
  %6023 = vmatprep.subr.bf16.mxu0 %v5813
  %6024 = vmatpush2.bf16.msra.mxu0 %v5812
  %6025 = vmatprep.subr.bf16.mxu0 %v5805
  %6026 = vmatpush2.bf16.msra.mxu0 %v5804
  %6027 = vmatprep.subr.bf16.mxu0 %v5797
  %6028 = vmatpush2.bf16.msra.mxu0 %v5796
  %6029 = vmatprep.subr.bf16.mxu0 %v5789
  %6030 = vmatpush2.bf16.msra.mxu0 %v5788
  %6031 = vmatprep.subr.bf16.mxu0 %v5781
  %6032 = vmatpush2.bf16.msra.mxu0 %v5780
  %6033 = vmatprep.subr.bf16.mxu0 %v5773
  %6034 = vmatpush2.bf16.msra.mxu0 %v5772
  %6035 = vmatprep.mubr.bf16.mxu0 %v5193
  %6036 = vmatmul.mubr.bf16.gmra.mxu0 %v4887
  %v6037 = vpop.f32.mrf.mxu0
  %v6038 = vadd.f32 0.0, %v6037
  %v6039 = vpop.f32.mrf.mxu0
  %v6040 = vadd.f32 0.0, %v6039
  %v6041 = vpop.f32.mrf.mxu0
  %v6042 = vpop.f32.mrf.mxu0
  %6043 = vdwg.mxu0
  %6044 = vmatprep.subr.bf16.mxu0 %v5767
  %6045 = vmatpush1.bf16.msra.mxu0 %v5766
  %6046 = vmatprep.subr.bf16.mxu0 %v5759
  %6047 = vmatpush1.bf16.msra.mxu0 %v5758
  %6048 = vmatprep.subr.bf16.mxu0 %v5751
  %6049 = vmatpush1.bf16.msra.mxu0 %v5750
  %6050 = vmatprep.subr.bf16.mxu0 %v5743
  %6051 = vmatpush1.bf16.msra.mxu0 %v5742
  %6052 = vmatprep.subr.bf16.mxu0 %v5735
  %6053 = vmatpush1.bf16.msra.mxu0 %v5734
  %6054 = vmatprep.subr.bf16.mxu0 %v5727
  %6055 = vmatpush1.bf16.msra.mxu0 %v5726
  %6056 = vmatprep.subr.bf16.mxu0 %v5719
  %6057 = vmatpush1.bf16.msra.mxu0 %v5718
  %6058 = vmatprep.subr.bf16.mxu0 %v5711
  %6059 = vmatpush1.bf16.msra.mxu0 %v5710
  %6060 = vmatprep.subr.bf16.mxu0 %v5831
  %6061 = vmatpush2.bf16.msra.mxu0 %v5830
  %6062 = vmatprep.subr.bf16.mxu0 %v5823
  %6063 = vmatpush2.bf16.msra.mxu0 %v5822
  %6064 = vmatprep.subr.bf16.mxu0 %v5815
  %6065 = vmatpush2.bf16.msra.mxu0 %v5814
  %6066 = vmatprep.subr.bf16.mxu0 %v5807
  %6067 = vmatpush2.bf16.msra.mxu0 %v5806
  %6068 = vmatprep.subr.bf16.mxu0 %v5799
  %6069 = vmatpush2.bf16.msra.mxu0 %v5798
  %6070 = vmatprep.subr.bf16.mxu0 %v5791
  %6071 = vmatpush2.bf16.msra.mxu0 %v5790
  %6072 = vmatprep.subr.bf16.mxu0 %v5783
  %6073 = vmatpush2.bf16.msra.mxu0 %v5782
  %6074 = vmatprep.subr.bf16.mxu0 %v5775
  %6075 = vmatpush2.bf16.msra.mxu0 %v5774
  %6076 = vmatprep.mubr.bf16.mxu0 %v5193
  %6077 = vmatmul.mubr.bf16.gmra.mxu0 %v4887
  %v6078 = vpop.f32.mrf.mxu0
  %v6079 = vadd.f32 0.0, %v6078
  %v6080 = vpop.f32.mrf.mxu0
  %v6081 = vadd.f32 0.0, %v6080
  %v6082 = vpop.f32.mrf.mxu0
  %v6083 = vpop.f32.mrf.mxu0
  %6084 = vdwg.mxu0
  %6085 = vmatprep.subr.bf16.mxu0 %v5769
  %6086 = vmatpush1.bf16.msra.mxu0 %v5768
  %6087 = vmatprep.subr.bf16.mxu0 %v5761
  %6088 = vmatpush1.bf16.msra.mxu0 %v5760
  %6089 = vmatprep.subr.bf16.mxu0 %v5753
  %6090 = vmatpush1.bf16.msra.mxu0 %v5752
  %6091 = vmatprep.subr.bf16.mxu0 %v5745
  %6092 = vmatpush1.bf16.msra.mxu0 %v5744
  %6093 = vmatprep.subr.bf16.mxu0 %v5737
  %6094 = vmatpush1.bf16.msra.mxu0 %v5736
  %6095 = vmatprep.subr.bf16.mxu0 %v5729
  %6096 = vmatpush1.bf16.msra.mxu0 %v5728
  %6097 = vmatprep.subr.bf16.mxu0 %v5721
  %6098 = vmatpush1.bf16.msra.mxu0 %v5720
  %6099 = vmatprep.subr.bf16.mxu0 %v5713
  %6100 = vmatpush1.bf16.msra.mxu0 %v5712
  %6101 = vmatprep.subr.bf16.mxu0 %v5833
  %6102 = vmatpush2.bf16.msra.mxu0 %v5832
  %6103 = vmatprep.subr.bf16.mxu0 %v5825
  %6104 = vmatpush2.bf16.msra.mxu0 %v5824
  %6105 = vmatprep.subr.bf16.mxu0 %v5817
  %6106 = vmatpush2.bf16.msra.mxu0 %v5816
  %6107 = vmatprep.subr.bf16.mxu0 %v5809
  %6108 = vmatpush2.bf16.msra.mxu0 %v5808
  %6109 = vmatprep.subr.bf16.mxu0 %v5801
  %6110 = vmatpush2.bf16.msra.mxu0 %v5800
  %6111 = vmatprep.subr.bf16.mxu0 %v5793
  %6112 = vmatpush2.bf16.msra.mxu0 %v5792
  %6113 = vmatprep.subr.bf16.mxu0 %v5785
  %6114 = vmatpush2.bf16.msra.mxu0 %v5784
  %6115 = vmatprep.subr.bf16.mxu0 %v5777
  %6116 = vmatpush2.bf16.msra.mxu0 %v5776
  %6117 = vmatprep.mubr.bf16.mxu0 %v5193
  %6118 = vmatmul.mubr.bf16.gmra.mxu0 %v4887
  %v6119 = vpop.f32.mrf.mxu0
  %v6120 = vadd.f32 0.0, %v6119
  %v6121 = vpop.f32.mrf.mxu0
  %v6122 = vadd.f32 0.0, %v6121
  %v6123 = vpop.f32.mrf.mxu0
  %v6124 = vpop.f32.mrf.mxu0
  %6125 = vdwg.mxu0
  %6127 = vset.pattern.permute.xlu0 0
  %6128 = vperm.xlu0 %6127, %v5192
  %v6129 = vpop.permute.xlu0 %6128
  %v6131 = vmul.f32 %v6129, %v977
  %v6132 = vmul.f32 %v6129, %v981
  %v6133 = vmul.f32 %v6129, %v985
  %v6134 = vmul.f32 %v6129, %v989
  %v6135 = vadd.f32 %v5997, %v6131
  %v6136 = vadd.f32 %v5999, %v6132
  %v6137 = vadd.f32 %v6038, %v6133
  %v6138 = vadd.f32 %v6040, %v6134
  %v6139 = vadd.f32 %v6135, %v1006
  %v6140 = vadd.f32 %v6136, %v1010
  %v6141 = vadd.f32 %v6137, %v1014
  %v6142 = vadd.f32 %v6138, %v1018
  %v6143 = vmul.f32 %v6139, 0.5
  %v6144 = vmul.f32 %v6140, 0.5
  %v6145 = vmul.f32 %v6141, 0.5
  %v6146 = vtanh.pop %v6143
  %v6147 = vtanh.pop %v6144
  %v6148 = vtanh.pop %v6145
  %v6149 = vmul.f32 %v6146, 0.5
  %v6150 = vmul.f32 %v6147, 0.5
  %v6151 = vmul.f32 %v6148, 0.5
  %v6152 = vadd.f32 %v6149, 0.5
  %v6153 = vadd.f32 %v6150, 0.5
  %v6154 = vadd.f32 %v6151, 0.5
  %v6155 = vtanh.pop %v6142
  %v6156 = vmul.f32 %v6153, %v4884
  %v6157 = vmul.f32 %v6152, %v6155
  %v6158 = vadd.f32 %v6156, %v6157
  %v6159 = vtanh.pop %v6158
  %v6160 = vmul.f32 %v6154, %v6159
  %v6161 = vpack.c.bf16 %v6160, %v6160
  %v6162 = vld [vmem:[%s4] sm:$0xff]
  %v6163 = vld [vmem:[%s4 + $0x8] sm:$0xff]
  %v6164 = vld [vmem:[%s4 + $0x10] sm:$0xff]
  %v6165 = vld [vmem:[%s4 + $0x18] sm:$0xff]
  %v6166 = vld [vmem:[%s4 + $0x20] sm:$0xff]
  %v6167 = vld [vmem:[%s4 + $0x28] sm:$0xff]
  %v6168 = vld [vmem:[%s4 + $0x30] sm:$0xff]
  %v6169 = vld [vmem:[%s4 + $0x38] sm:$0xff]
  %v6170 = vld [vmem:[%s4 + $0x40] sm:$0xff]
  %v6171 = vld [vmem:[%s4 + $0x48] sm:$0xff]
  %v6172 = vld [vmem:[%s4 + $0x50] sm:$0xff]
  %v6173 = vld [vmem:[%s4 + $0x58] sm:$0xff]
  %v6174 = vld [vmem:[%s4 + $0x60] sm:$0xff]
  %v6175 = vld [vmem:[%s4 + $0x68] sm:$0xff]
  %v6176 = vld [vmem:[%s4 + $0x70] sm:$0xff]
  %v6177 = vld [vmem:[%s4 + $0x78] sm:$0xff]
  %v6178 = vld [vmem:[%s4 + $0x80] sm:$0xff]
  %v6179 = vld [vmem:[%s4 + $0x88] sm:$0xff]
  %v6180 = vld [vmem:[%s4 + $0x90] sm:$0xff]
  %v6181 = vld [vmem:[%s4 + $0x98] sm:$0xff]
  %v6182 = vld [vmem:[%s4 + $0xa0] sm:$0xff]
  %v6183 = vld [vmem:[%s4 + $0xa8] sm:$0xff]
  %v6184 = vld [vmem:[%s4 + $0xb0] sm:$0xff]
  %v6185 = vld [vmem:[%s4 + $0xb8] sm:$0xff]
  %v6186 = vld [vmem:[%s4 + $0xc0] sm:$0xff]
  %v6187 = vld [vmem:[%s4 + $0xc8] sm:$0xff]
  %v6188 = vld [vmem:[%s4 + $0xd0] sm:$0xff]
  %v6189 = vld [vmem:[%s4 + $0xd8] sm:$0xff]
  %v6190 = vld [vmem:[%s4 + $0xe0] sm:$0xff]
  %v6191 = vld [vmem:[%s4 + $0xe8] sm:$0xff]
  %v6192 = vld [vmem:[%s4 + $0xf0] sm:$0xff]
  %v6193 = vld [vmem:[%s4 + $0xf8] sm:$0xff]
  %v6226 = vunpack.c.l.b16 %v6162
  %v6227 = vunpack.c.h.b16 %v6162
  %v6228 = vunpack.c.l.b16 %v6163
  %v6229 = vunpack.c.h.b16 %v6163
  %v6230 = vunpack.c.l.b16 %v6164
  %v6231 = vunpack.c.h.b16 %v6164
  %v6232 = vunpack.c.l.b16 %v6165
  %v6233 = vunpack.c.h.b16 %v6165
  %v6234 = vunpack.c.l.b16 %v6166
  %v6235 = vunpack.c.h.b16 %v6166
  %v6236 = vunpack.c.l.b16 %v6167
  %v6237 = vunpack.c.h.b16 %v6167
  %v6238 = vunpack.c.l.b16 %v6168
  %v6239 = vunpack.c.h.b16 %v6168
  %v6240 = vunpack.c.l.b16 %v6169
  %v6241 = vunpack.c.h.b16 %v6169
  %v6242 = vunpack.c.l.b16 %v6170
  %v6243 = vunpack.c.h.b16 %v6170
  %v6244 = vunpack.c.l.b16 %v6171
  %v6245 = vunpack.c.h.b16 %v6171
  %v6246 = vunpack.c.l.b16 %v6172
  %v6247 = vunpack.c.h.b16 %v6172
  %v6248 = vunpack.c.l.b16 %v6173
  %v6249 = vunpack.c.h.b16 %v6173
  %v6250 = vunpack.c.l.b16 %v6174
  %v6251 = vunpack.c.h.b16 %v6174
  %v6252 = vunpack.c.l.b16 %v6175
  %v6253 = vunpack.c.h.b16 %v6175
  %v6254 = vunpack.c.l.b16 %v6176
  %v6255 = vunpack.c.h.b16 %v6176
  %v6256 = vunpack.c.l.b16 %v6177
  %v6257 = vunpack.c.h.b16 %v6177
  %v6258 = vunpack.c.l.b16 %v6178
  %v6259 = vunpack.c.h.b16 %v6178
  %v6260 = vunpack.c.l.b16 %v6179
  %v6261 = vunpack.c.h.b16 %v6179
  %v6262 = vunpack.c.l.b16 %v6180
  %v6263 = vunpack.c.h.b16 %v6180
  %v6264 = vunpack.c.l.b16 %v6181
  %v6265 = vunpack.c.h.b16 %v6181
  %v6266 = vunpack.c.l.b16 %v6182
  %v6267 = vunpack.c.h.b16 %v6182
  %v6268 = vunpack.c.l.b16 %v6183
  %v6269 = vunpack.c.h.b16 %v6183
  %v6270 = vunpack.c.l.b16 %v6184
  %v6271 = vunpack.c.h.b16 %v6184
  %v6272 = vunpack.c.l.b16 %v6185
  %v6273 = vunpack.c.h.b16 %v6185
  %v6274 = vunpack.c.l.b16 %v6186
  %v6275 = vunpack.c.h.b16 %v6186
  %v6276 = vunpack.c.l.b16 %v6187
  %v6277 = vunpack.c.h.b16 %v6187
  %v6278 = vunpack.c.l.b16 %v6188
  %v6279 = vunpack.c.h.b16 %v6188
  %v6280 = vunpack.c.l.b16 %v6189
  %v6281 = vunpack.c.h.b16 %v6189
  %v6282 = vunpack.c.l.b16 %v6190
  %v6283 = vunpack.c.h.b16 %v6190
  %v6284 = vunpack.c.l.b16 %v6191
  %v6285 = vunpack.c.h.b16 %v6191
  %v6286 = vunpack.c.l.b16 %v6192
  %v6287 = vunpack.c.h.b16 %v6192
  %v6288 = vunpack.c.l.b16 %v6193
  %v6289 = vunpack.c.h.b16 %v6193
  %v6290 = vpack.c.b16 %v6230, %v6226
  %v6291 = vpack.c.b16 %v6231, %v6227
  %v6292 = vpack.c.b16 %v6232, %v6228
  %v6293 = vpack.c.b16 %v6233, %v6229
  %v6294 = vpack.c.b16 %v6238, %v6234
  %v6295 = vpack.c.b16 %v6239, %v6235
  %v6296 = vpack.c.b16 %v6240, %v6236
  %v6297 = vpack.c.b16 %v6241, %v6237
  %v6298 = vpack.c.b16 %v6246, %v6242
  %v6299 = vpack.c.b16 %v6247, %v6243
  %v6300 = vpack.c.b16 %v6248, %v6244
  %v6301 = vpack.c.b16 %v6249, %v6245
  %v6302 = vpack.c.b16 %v6254, %v6250
  %v6303 = vpack.c.b16 %v6255, %v6251
  %v6304 = vpack.c.b16 %v6256, %v6252
  %v6305 = vpack.c.b16 %v6257, %v6253
  %v6306 = vpack.c.b16 %v6262, %v6258
  %v6307 = vpack.c.b16 %v6263, %v6259
  %v6308 = vpack.c.b16 %v6264, %v6260
  %v6309 = vpack.c.b16 %v6265, %v6261
  %v6310 = vpack.c.b16 %v6270, %v6266
  %v6311 = vpack.c.b16 %v6271, %v6267
  %v6312 = vpack.c.b16 %v6272, %v6268
  %v6313 = vpack.c.b16 %v6273, %v6269
  %v6314 = vpack.c.b16 %v6278, %v6274
  %v6315 = vpack.c.b16 %v6279, %v6275
  %v6316 = vpack.c.b16 %v6280, %v6276
  %v6317 = vpack.c.b16 %v6281, %v6277
  %v6318 = vpack.c.b16 %v6286, %v6282
  %v6319 = vpack.c.b16 %v6287, %v6283
  %v6320 = vpack.c.b16 %v6288, %v6284
  %v6321 = vpack.c.b16 %v6289, %v6285
  %6354 = vmatprep.subr.bf16.mxu0 %v6319
  %6355 = vmatpush1.bf16.msra.mxu0 %v6318
  %6356 = vmatprep.subr.bf16.mxu0 %v6315
  %6357 = vmatpush1.bf16.msra.mxu0 %v6314
  %6358 = vmatprep.subr.bf16.mxu0 %v6311
  %6359 = vmatpush1.bf16.msra.mxu0 %v6310
  %6360 = vmatprep.subr.bf16.mxu0 %v6307
  %6361 = vmatpush1.bf16.msra.mxu0 %v6306
  %6362 = vmatprep.subr.bf16.mxu0 %v6303
  %6363 = vmatpush1.bf16.msra.mxu0 %v6302
  %6364 = vmatprep.subr.bf16.mxu0 %v6299
  %6365 = vmatpush1.bf16.msra.mxu0 %v6298
  %6366 = vmatprep.subr.bf16.mxu0 %v6295
  %6367 = vmatpush1.bf16.msra.mxu0 %v6294
  %6368 = vmatprep.subr.bf16.mxu0 %v6291
  %6369 = vmatpush1.bf16.msra.mxu0 %v6290
  %6370 = vmatprep.subr.bf16.mxu0 0
  %6371 = vmatpush2.bf16.msra.mxu0 0
  %6372 = vmatprep.subr.bf16.mxu0 0
  %6373 = vmatpush2.bf16.msra.mxu0 0
  %6374 = vmatprep.subr.bf16.mxu0 0
  %6375 = vmatpush2.bf16.msra.mxu0 0
  %6376 = vmatprep.subr.bf16.mxu0 0
  %6377 = vmatpush2.bf16.msra.mxu0 0
  %6378 = vmatprep.subr.bf16.mxu0 0
  %6379 = vmatpush2.bf16.msra.mxu0 0
  %6380 = vmatprep.subr.bf16.mxu0 0
  %6381 = vmatpush2.bf16.msra.mxu0 0
  %6382 = vmatprep.subr.bf16.mxu0 0
  %6383 = vmatpush2.bf16.msra.mxu0 0
  %6384 = vmatprep.subr.bf16.mxu0 0
  %6385 = vmatpush2.bf16.msra.mxu0 0
  %6386 = vmatprep.mubr.bf16.mxu0 0
  %6387 = vmatmul.mubr.bf16.gmra.mxu0 %v6161
  %v6388 = vpop.f32.mrf.mxu0
  %v6389 = vadd.f32 0.0, %v6388
  %v6390 = vpop.f32.mrf.mxu0
  %v6391 = vadd.f32 0.0, %v6390
  %v6392 = vpop.f32.mrf.mxu0
  %v6393 = vpop.f32.mrf.mxu0
  %6394 = vdwg.mxu0
  %6395 = vmatprep.subr.bf16.mxu0 %v6321
  %6396 = vmatpush1.bf16.msra.mxu0 %v6320
  %6397 = vmatprep.subr.bf16.mxu0 %v6317
  %6398 = vmatpush1.bf16.msra.mxu0 %v6316
  %6399 = vmatprep.subr.bf16.mxu0 %v6313
  %6400 = vmatpush1.bf16.msra.mxu0 %v6312
  %6401 = vmatprep.subr.bf16.mxu0 %v6309
  %6402 = vmatpush1.bf16.msra.mxu0 %v6308
  %6403 = vmatprep.subr.bf16.mxu0 %v6305
  %6404 = vmatpush1.bf16.msra.mxu0 %v6304
  %6405 = vmatprep.subr.bf16.mxu0 %v6301
  %6406 = vmatpush1.bf16.msra.mxu0 %v6300
  %6407 = vmatprep.subr.bf16.mxu0 %v6297
  %6408 = vmatpush1.bf16.msra.mxu0 %v6296
  %6409 = vmatprep.subr.bf16.mxu0 %v6293
  %6410 = vmatpush1.bf16.msra.mxu0 %v6292
  %6411 = vmatprep.subr.bf16.mxu0 0
  %6412 = vmatpush2.bf16.msra.mxu0 0
  %6413 = vmatprep.subr.bf16.mxu0 0
  %6414 = vmatpush2.bf16.msra.mxu0 0
  %6415 = vmatprep.subr.bf16.mxu0 0
  %6416 = vmatpush2.bf16.msra.mxu0 0
  %6417 = vmatprep.subr.bf16.mxu0 0
  %6418 = vmatpush2.bf16.msra.mxu0 0
  %6419 = vmatprep.subr.bf16.mxu0 0
  %6420 = vmatpush2.bf16.msra.mxu0 0
  %6421 = vmatprep.subr.bf16.mxu0 0
  %6422 = vmatpush2.bf16.msra.mxu0 0
  %6423 = vmatprep.subr.bf16.mxu0 0
  %6424 = vmatpush2.bf16.msra.mxu0 0
  %6425 = vmatprep.subr.bf16.mxu0 0
  %6426 = vmatpush2.bf16.msra.mxu0 0
  %6427 = vmatprep.mubr.bf16.mxu0 0
  %6428 = vmatmul.mubr.bf16.gmra.mxu0 %v6161
  %v6429 = vpop.f32.mrf.mxu0
  %v6430 = vadd.f32 0.0, %v6429
  %v6431 = vpop.f32.mrf.mxu0
  %v6432 = vadd.f32 0.0, %v6431
  %v6433 = vpop.f32.mrf.mxu0
  %v6434 = vpop.f32.mrf.mxu0
  %6435 = vdwg.mxu0
  %v6436 = vadd.f32 %v6079, %v6389
  %v6437 = vadd.f32 %v6081, %v6391
  %v6438 = vadd.f32 %v6120, %v6430
  %v6439 = vadd.f32 %v6122, %v6432
  %v6440 = vadd.f32 %v6436, %v1328
  %v6441 = vadd.f32 %v6437, %v1332
  %v6442 = vadd.f32 %v6438, %v1336
  %v6443 = vadd.f32 %v6439, %v1340
  %v6444 = vmul.f32 %v6440, 0.5
  %v6445 = vmul.f32 %v6441, 0.5
  %v6446 = vmul.f32 %v6442, 0.5
  %v6447 = vtanh.pop %v6444
  %v6448 = vtanh.pop %v6445
  %v6449 = vtanh.pop %v6446
  %v6450 = vmul.f32 %v6447, 0.5
  %v6451 = vmul.f32 %v6448, 0.5
  %v6452 = vmul.f32 %v6449, 0.5
  %v6453 = vadd.f32 %v6450, 0.5
  %v6454 = vadd.f32 %v6451, 0.5
  %v6455 = vadd.f32 %v6452, 0.5
  %v6456 = vtanh.pop %v6443
  %v6457 = vmul.f32 %v6454, %v5185
  %v6458 = vmul.f32 %v6453, %v6456
  %v6459 = vadd.f32 %v6457, %v6458
  %v6460 = vtanh.pop %v6459
  %v6461 = vmul.f32 %v6455, %v6460
  %v6462 = vadd.f32 %v6160, %v6461
  %s6463 = scalar_lea.vmem [#allocation2], 8
  %6464 = vst [vmem:[%s6463] sm:$0x3] %v6462
  %s6465 = scalar_lea.vmem %s0, 10
  %v6466 = vld [vmem:[%s6465] sm:$0x3]
  %v6467 = vpack.c.bf16 %v6461, %v6461
  %v6468 = vld [vmem:[%s3] sm:$0xff]
  %v6469 = vld [vmem:[%s3 + $0x8] sm:$0xff]
  %v6470 = vld [vmem:[%s3 + $0x10] sm:$0xff]
  %v6471 = vld [vmem:[%s3 + $0x18] sm:$0xff]
  %v6472 = vld [vmem:[%s3 + $0x20] sm:$0xff]
  %v6473 = vld [vmem:[%s3 + $0x28] sm:$0xff]
  %v6474 = vld [vmem:[%s3 + $0x30] sm:$0xff]
  %v6475 = vld [vmem:[%s3 + $0x38] sm:$0xff]
  %v6476 = vld [vmem:[%s3 + $0x40] sm:$0xff]
  %v6477 = vld [vmem:[%s3 + $0x48] sm:$0xff]
  %v6478 = vld [vmem:[%s3 + $0x50] sm:$0xff]
  %v6479 = vld [vmem:[%s3 + $0x58] sm:$0xff]
  %v6480 = vld [vmem:[%s3 + $0x60] sm:$0xff]
  %v6481 = vld [vmem:[%s3 + $0x68] sm:$0xff]
  %v6482 = vld [vmem:[%s3 + $0x70] sm:$0xff]
  %v6483 = vld [vmem:[%s3 + $0x78] sm:$0xff]
  %v6484 = vld [vmem:[%s3 + $0x80] sm:$0xff]
  %v6485 = vld [vmem:[%s3 + $0x88] sm:$0xff]
  %v6486 = vld [vmem:[%s3 + $0x90] sm:$0xff]
  %v6487 = vld [vmem:[%s3 + $0x98] sm:$0xff]
  %v6488 = vld [vmem:[%s3 + $0xa0] sm:$0xff]
  %v6489 = vld [vmem:[%s3 + $0xa8] sm:$0xff]
  %v6490 = vld [vmem:[%s3 + $0xb0] sm:$0xff]
  %v6491 = vld [vmem:[%s3 + $0xb8] sm:$0xff]
  %v6492 = vld [vmem:[%s3 + $0xc0] sm:$0xff]
  %v6493 = vld [vmem:[%s3 + $0xc8] sm:$0xff]
  %v6494 = vld [vmem:[%s3 + $0xd0] sm:$0xff]
  %v6495 = vld [vmem:[%s3 + $0xd8] sm:$0xff]
  %v6496 = vld [vmem:[%s3 + $0xe0] sm:$0xff]
  %v6497 = vld [vmem:[%s3 + $0xe8] sm:$0xff]
  %v6498 = vld [vmem:[%s3 + $0xf0] sm:$0xff]
  %v6499 = vld [vmem:[%s3 + $0xf8] sm:$0xff]
  %v6500 = vld [vmem:[%s3 + $0x100] sm:$0xff]
  %v6501 = vld [vmem:[%s3 + $0x108] sm:$0xff]
  %v6502 = vld [vmem:[%s3 + $0x110] sm:$0xff]
  %v6503 = vld [vmem:[%s3 + $0x118] sm:$0xff]
  %v6504 = vld [vmem:[%s3 + $0x120] sm:$0xff]
  %v6505 = vld [vmem:[%s3 + $0x128] sm:$0xff]
  %v6506 = vld [vmem:[%s3 + $0x130] sm:$0xff]
  %v6507 = vld [vmem:[%s3 + $0x138] sm:$0xff]
  %v6508 = vld [vmem:[%s3 + $0x140] sm:$0xff]
  %v6509 = vld [vmem:[%s3 + $0x148] sm:$0xff]
  %v6510 = vld [vmem:[%s3 + $0x150] sm:$0xff]
  %v6511 = vld [vmem:[%s3 + $0x158] sm:$0xff]
  %v6512 = vld [vmem:[%s3 + $0x160] sm:$0xff]
  %v6513 = vld [vmem:[%s3 + $0x168] sm:$0xff]
  %v6514 = vld [vmem:[%s3 + $0x170] sm:$0xff]
  %v6515 = vld [vmem:[%s3 + $0x178] sm:$0xff]
  %v6516 = vld [vmem:[%s3 + $0x180] sm:$0xff]
  %v6517 = vld [vmem:[%s3 + $0x188] sm:$0xff]
  %v6518 = vld [vmem:[%s3 + $0x190] sm:$0xff]
  %v6519 = vld [vmem:[%s3 + $0x198] sm:$0xff]
  %v6520 = vld [vmem:[%s3 + $0x1a0] sm:$0xff]
  %v6521 = vld [vmem:[%s3 + $0x1a8] sm:$0xff]
  %v6522 = vld [vmem:[%s3 + $0x1b0] sm:$0xff]
  %v6523 = vld [vmem:[%s3 + $0x1b8] sm:$0xff]
  %v6524 = vld [vmem:[%s3 + $0x1c0] sm:$0xff]
  %v6525 = vld [vmem:[%s3 + $0x1c8] sm:$0xff]
  %v6526 = vld [vmem:[%s3 + $0x1d0] sm:$0xff]
  %v6527 = vld [vmem:[%s3 + $0x1d8] sm:$0xff]
  %v6528 = vld [vmem:[%s3 + $0x1e0] sm:$0xff]
  %v6529 = vld [vmem:[%s3 + $0x1e8] sm:$0xff]
  %v6530 = vld [vmem:[%s3 + $0x1f0] sm:$0xff]
  %v6531 = vld [vmem:[%s3 + $0x1f8] sm:$0xff]
  %v6532 = vld [vmem:[%s3 + $0x200] sm:$0xff]
  %v6533 = vld [vmem:[%s3 + $0x208] sm:$0xff]
  %v6534 = vld [vmem:[%s3 + $0x210] sm:$0xff]
  %v6535 = vld [vmem:[%s3 + $0x218] sm:$0xff]
  %v6536 = vld [vmem:[%s3 + $0x220] sm:$0xff]
  %v6537 = vld [vmem:[%s3 + $0x228] sm:$0xff]
  %v6538 = vld [vmem:[%s3 + $0x230] sm:$0xff]
  %v6539 = vld [vmem:[%s3 + $0x238] sm:$0xff]
  %v6540 = vld [vmem:[%s3 + $0x240] sm:$0xff]
  %v6541 = vld [vmem:[%s3 + $0x248] sm:$0xff]
  %v6542 = vld [vmem:[%s3 + $0x250] sm:$0xff]
  %v6543 = vld [vmem:[%s3 + $0x258] sm:$0xff]
  %v6544 = vld [vmem:[%s3 + $0x260] sm:$0xff]
  %v6545 = vld [vmem:[%s3 + $0x268] sm:$0xff]
  %v6546 = vld [vmem:[%s3 + $0x270] sm:$0xff]
  %v6547 = vld [vmem:[%s3 + $0x278] sm:$0xff]
  %v6548 = vld [vmem:[%s3 + $0x280] sm:$0xff]
  %v6549 = vld [vmem:[%s3 + $0x288] sm:$0xff]
  %v6550 = vld [vmem:[%s3 + $0x290] sm:$0xff]
  %v6551 = vld [vmem:[%s3 + $0x298] sm:$0xff]
  %v6552 = vld [vmem:[%s3 + $0x2a0] sm:$0xff]
  %v6553 = vld [vmem:[%s3 + $0x2a8] sm:$0xff]
  %v6554 = vld [vmem:[%s3 + $0x2b0] sm:$0xff]
  %v6555 = vld [vmem:[%s3 + $0x2b8] sm:$0xff]
  %v6556 = vld [vmem:[%s3 + $0x2c0] sm:$0xff]
  %v6557 = vld [vmem:[%s3 + $0x2c8] sm:$0xff]
  %v6558 = vld [vmem:[%s3 + $0x2d0] sm:$0xff]
  %v6559 = vld [vmem:[%s3 + $0x2d8] sm:$0xff]
  %v6560 = vld [vmem:[%s3 + $0x2e0] sm:$0xff]
  %v6561 = vld [vmem:[%s3 + $0x2e8] sm:$0xff]
  %v6562 = vld [vmem:[%s3 + $0x2f0] sm:$0xff]
  %v6563 = vld [vmem:[%s3 + $0x2f8] sm:$0xff]
  %v6564 = vld [vmem:[%s3 + $0x300] sm:$0xff]
  %v6565 = vld [vmem:[%s3 + $0x308] sm:$0xff]
  %v6566 = vld [vmem:[%s3 + $0x310] sm:$0xff]
  %v6567 = vld [vmem:[%s3 + $0x318] sm:$0xff]
  %v6568 = vld [vmem:[%s3 + $0x320] sm:$0xff]
  %v6569 = vld [vmem:[%s3 + $0x328] sm:$0xff]
  %v6570 = vld [vmem:[%s3 + $0x330] sm:$0xff]
  %v6571 = vld [vmem:[%s3 + $0x338] sm:$0xff]
  %v6572 = vld [vmem:[%s3 + $0x340] sm:$0xff]
  %v6573 = vld [vmem:[%s3 + $0x348] sm:$0xff]
  %v6574 = vld [vmem:[%s3 + $0x350] sm:$0xff]
  %v6575 = vld [vmem:[%s3 + $0x358] sm:$0xff]
  %v6576 = vld [vmem:[%s3 + $0x360] sm:$0xff]
  %v6577 = vld [vmem:[%s3 + $0x368] sm:$0xff]
  %v6578 = vld [vmem:[%s3 + $0x370] sm:$0xff]
  %v6579 = vld [vmem:[%s3 + $0x378] sm:$0xff]
  %v6580 = vld [vmem:[%s3 + $0x380] sm:$0xff]
  %v6581 = vld [vmem:[%s3 + $0x388] sm:$0xff]
  %v6582 = vld [vmem:[%s3 + $0x390] sm:$0xff]
  %v6583 = vld [vmem:[%s3 + $0x398] sm:$0xff]
  %v6584 = vld [vmem:[%s3 + $0x3a0] sm:$0xff]
  %v6585 = vld [vmem:[%s3 + $0x3a8] sm:$0xff]
  %v6586 = vld [vmem:[%s3 + $0x3b0] sm:$0xff]
  %v6587 = vld [vmem:[%s3 + $0x3b8] sm:$0xff]
  %v6588 = vld [vmem:[%s3 + $0x3c0] sm:$0xff]
  %v6589 = vld [vmem:[%s3 + $0x3c8] sm:$0xff]
  %v6590 = vld [vmem:[%s3 + $0x3d0] sm:$0xff]
  %v6591 = vld [vmem:[%s3 + $0x3d8] sm:$0xff]
  %v6592 = vld [vmem:[%s3 + $0x3e0] sm:$0xff]
  %v6593 = vld [vmem:[%s3 + $0x3e8] sm:$0xff]
  %v6594 = vld [vmem:[%s3 + $0x3f0] sm:$0xff]
  %v6595 = vld [vmem:[%s3 + $0x3f8] sm:$0xff]
  %v6724 = vunpack.c.l.b16 %v6468
  %v6725 = vunpack.c.h.b16 %v6468
  %v6726 = vunpack.c.l.b16 %v6469
  %v6727 = vunpack.c.h.b16 %v6469
  %v6728 = vunpack.c.l.b16 %v6470
  %v6729 = vunpack.c.h.b16 %v6470
  %v6730 = vunpack.c.l.b16 %v6471
  %v6731 = vunpack.c.h.b16 %v6471
  %v6732 = vunpack.c.l.b16 %v6472
  %v6733 = vunpack.c.h.b16 %v6472
  %v6734 = vunpack.c.l.b16 %v6473
  %v6735 = vunpack.c.h.b16 %v6473
  %v6736 = vunpack.c.l.b16 %v6474
  %v6737 = vunpack.c.h.b16 %v6474
  %v6738 = vunpack.c.l.b16 %v6475
  %v6739 = vunpack.c.h.b16 %v6475
  %v6740 = vunpack.c.l.b16 %v6476
  %v6741 = vunpack.c.h.b16 %v6476
  %v6742 = vunpack.c.l.b16 %v6477
  %v6743 = vunpack.c.h.b16 %v6477
  %v6744 = vunpack.c.l.b16 %v6478
  %v6745 = vunpack.c.h.b16 %v6478
  %v6746 = vunpack.c.l.b16 %v6479
  %v6747 = vunpack.c.h.b16 %v6479
  %v6748 = vunpack.c.l.b16 %v6480
  %v6749 = vunpack.c.h.b16 %v6480
  %v6750 = vunpack.c.l.b16 %v6481
  %v6751 = vunpack.c.h.b16 %v6481
  %v6752 = vunpack.c.l.b16 %v6482
  %v6753 = vunpack.c.h.b16 %v6482
  %v6754 = vunpack.c.l.b16 %v6483
  %v6755 = vunpack.c.h.b16 %v6483
  %v6756 = vunpack.c.l.b16 %v6484
  %v6757 = vunpack.c.h.b16 %v6484
  %v6758 = vunpack.c.l.b16 %v6485
  %v6759 = vunpack.c.h.b16 %v6485
  %v6760 = vunpack.c.l.b16 %v6486
  %v6761 = vunpack.c.h.b16 %v6486
  %v6762 = vunpack.c.l.b16 %v6487
  %v6763 = vunpack.c.h.b16 %v6487
  %v6764 = vunpack.c.l.b16 %v6488
  %v6765 = vunpack.c.h.b16 %v6488
  %v6766 = vunpack.c.l.b16 %v6489
  %v6767 = vunpack.c.h.b16 %v6489
  %v6768 = vunpack.c.l.b16 %v6490
  %v6769 = vunpack.c.h.b16 %v6490
  %v6770 = vunpack.c.l.b16 %v6491
  %v6771 = vunpack.c.h.b16 %v6491
  %v6772 = vunpack.c.l.b16 %v6492
  %v6773 = vunpack.c.h.b16 %v6492
  %v6774 = vunpack.c.l.b16 %v6493
  %v6775 = vunpack.c.h.b16 %v6493
  %v6776 = vunpack.c.l.b16 %v6494
  %v6777 = vunpack.c.h.b16 %v6494
  %v6778 = vunpack.c.l.b16 %v6495
  %v6779 = vunpack.c.h.b16 %v6495
  %v6780 = vunpack.c.l.b16 %v6496
  %v6781 = vunpack.c.h.b16 %v6496
  %v6782 = vunpack.c.l.b16 %v6497
  %v6783 = vunpack.c.h.b16 %v6497
  %v6784 = vunpack.c.l.b16 %v6498
  %v6785 = vunpack.c.h.b16 %v6498
  %v6786 = vunpack.c.l.b16 %v6499
  %v6787 = vunpack.c.h.b16 %v6499
  %v6788 = vunpack.c.l.b16 %v6500
  %v6789 = vunpack.c.h.b16 %v6500
  %v6790 = vunpack.c.l.b16 %v6501
  %v6791 = vunpack.c.h.b16 %v6501
  %v6792 = vunpack.c.l.b16 %v6502
  %v6793 = vunpack.c.h.b16 %v6502
  %v6794 = vunpack.c.l.b16 %v6503
  %v6795 = vunpack.c.h.b16 %v6503
  %v6796 = vunpack.c.l.b16 %v6504
  %v6797 = vunpack.c.h.b16 %v6504
  %v6798 = vunpack.c.l.b16 %v6505
  %v6799 = vunpack.c.h.b16 %v6505
  %v6800 = vunpack.c.l.b16 %v6506
  %v6801 = vunpack.c.h.b16 %v6506
  %v6802 = vunpack.c.l.b16 %v6507
  %v6803 = vunpack.c.h.b16 %v6507
  %v6804 = vunpack.c.l.b16 %v6508
  %v6805 = vunpack.c.h.b16 %v6508
  %v6806 = vunpack.c.l.b16 %v6509
  %v6807 = vunpack.c.h.b16 %v6509
  %v6808 = vunpack.c.l.b16 %v6510
  %v6809 = vunpack.c.h.b16 %v6510
  %v6810 = vunpack.c.l.b16 %v6511
  %v6811 = vunpack.c.h.b16 %v6511
  %v6812 = vunpack.c.l.b16 %v6512
  %v6813 = vunpack.c.h.b16 %v6512
  %v6814 = vunpack.c.l.b16 %v6513
  %v6815 = vunpack.c.h.b16 %v6513
  %v6816 = vunpack.c.l.b16 %v6514
  %v6817 = vunpack.c.h.b16 %v6514
  %v6818 = vunpack.c.l.b16 %v6515
  %v6819 = vunpack.c.h.b16 %v6515
  %v6820 = vunpack.c.l.b16 %v6516
  %v6821 = vunpack.c.h.b16 %v6516
  %v6822 = vunpack.c.l.b16 %v6517
  %v6823 = vunpack.c.h.b16 %v6517
  %v6824 = vunpack.c.l.b16 %v6518
  %v6825 = vunpack.c.h.b16 %v6518
  %v6826 = vunpack.c.l.b16 %v6519
  %v6827 = vunpack.c.h.b16 %v6519
  %v6828 = vunpack.c.l.b16 %v6520
  %v6829 = vunpack.c.h.b16 %v6520
  %v6830 = vunpack.c.l.b16 %v6521
  %v6831 = vunpack.c.h.b16 %v6521
  %v6832 = vunpack.c.l.b16 %v6522
  %v6833 = vunpack.c.h.b16 %v6522
  %v6834 = vunpack.c.l.b16 %v6523
  %v6835 = vunpack.c.h.b16 %v6523
  %v6836 = vunpack.c.l.b16 %v6524
  %v6837 = vunpack.c.h.b16 %v6524
  %v6838 = vunpack.c.l.b16 %v6525
  %v6839 = vunpack.c.h.b16 %v6525
  %v6840 = vunpack.c.l.b16 %v6526
  %v6841 = vunpack.c.h.b16 %v6526
  %v6842 = vunpack.c.l.b16 %v6527
  %v6843 = vunpack.c.h.b16 %v6527
  %v6844 = vunpack.c.l.b16 %v6528
  %v6845 = vunpack.c.h.b16 %v6528
  %v6846 = vunpack.c.l.b16 %v6529
  %v6847 = vunpack.c.h.b16 %v6529
  %v6848 = vunpack.c.l.b16 %v6530
  %v6849 = vunpack.c.h.b16 %v6530
  %v6850 = vunpack.c.l.b16 %v6531
  %v6851 = vunpack.c.h.b16 %v6531
  %v6852 = vunpack.c.l.b16 %v6532
  %v6853 = vunpack.c.h.b16 %v6532
  %v6854 = vunpack.c.l.b16 %v6533
  %v6855 = vunpack.c.h.b16 %v6533
  %v6856 = vunpack.c.l.b16 %v6534
  %v6857 = vunpack.c.h.b16 %v6534
  %v6858 = vunpack.c.l.b16 %v6535
  %v6859 = vunpack.c.h.b16 %v6535
  %v6860 = vunpack.c.l.b16 %v6536
  %v6861 = vunpack.c.h.b16 %v6536
  %v6862 = vunpack.c.l.b16 %v6537
  %v6863 = vunpack.c.h.b16 %v6537
  %v6864 = vunpack.c.l.b16 %v6538
  %v6865 = vunpack.c.h.b16 %v6538
  %v6866 = vunpack.c.l.b16 %v6539
  %v6867 = vunpack.c.h.b16 %v6539
  %v6868 = vunpack.c.l.b16 %v6540
  %v6869 = vunpack.c.h.b16 %v6540
  %v6870 = vunpack.c.l.b16 %v6541
  %v6871 = vunpack.c.h.b16 %v6541
  %v6872 = vunpack.c.l.b16 %v6542
  %v6873 = vunpack.c.h.b16 %v6542
  %v6874 = vunpack.c.l.b16 %v6543
  %v6875 = vunpack.c.h.b16 %v6543
  %v6876 = vunpack.c.l.b16 %v6544
  %v6877 = vunpack.c.h.b16 %v6544
  %v6878 = vunpack.c.l.b16 %v6545
  %v6879 = vunpack.c.h.b16 %v6545
  %v6880 = vunpack.c.l.b16 %v6546
  %v6881 = vunpack.c.h.b16 %v6546
  %v6882 = vunpack.c.l.b16 %v6547
  %v6883 = vunpack.c.h.b16 %v6547
  %v6884 = vunpack.c.l.b16 %v6548
  %v6885 = vunpack.c.h.b16 %v6548
  %v6886 = vunpack.c.l.b16 %v6549
  %v6887 = vunpack.c.h.b16 %v6549
  %v6888 = vunpack.c.l.b16 %v6550
  %v6889 = vunpack.c.h.b16 %v6550
  %v6890 = vunpack.c.l.b16 %v6551
  %v6891 = vunpack.c.h.b16 %v6551
  %v6892 = vunpack.c.l.b16 %v6552
  %v6893 = vunpack.c.h.b16 %v6552
  %v6894 = vunpack.c.l.b16 %v6553
  %v6895 = vunpack.c.h.b16 %v6553
  %v6896 = vunpack.c.l.b16 %v6554
  %v6897 = vunpack.c.h.b16 %v6554
  %v6898 = vunpack.c.l.b16 %v6555
  %v6899 = vunpack.c.h.b16 %v6555
  %v6900 = vunpack.c.l.b16 %v6556
  %v6901 = vunpack.c.h.b16 %v6556
  %v6902 = vunpack.c.l.b16 %v6557
  %v6903 = vunpack.c.h.b16 %v6557
  %v6904 = vunpack.c.l.b16 %v6558
  %v6905 = vunpack.c.h.b16 %v6558
  %v6906 = vunpack.c.l.b16 %v6559
  %v6907 = vunpack.c.h.b16 %v6559
  %v6908 = vunpack.c.l.b16 %v6560
  %v6909 = vunpack.c.h.b16 %v6560
  %v6910 = vunpack.c.l.b16 %v6561
  %v6911 = vunpack.c.h.b16 %v6561
  %v6912 = vunpack.c.l.b16 %v6562
  %v6913 = vunpack.c.h.b16 %v6562
  %v6914 = vunpack.c.l.b16 %v6563
  %v6915 = vunpack.c.h.b16 %v6563
  %v6916 = vunpack.c.l.b16 %v6564
  %v6917 = vunpack.c.h.b16 %v6564
  %v6918 = vunpack.c.l.b16 %v6565
  %v6919 = vunpack.c.h.b16 %v6565
  %v6920 = vunpack.c.l.b16 %v6566
  %v6921 = vunpack.c.h.b16 %v6566
  %v6922 = vunpack.c.l.b16 %v6567
  %v6923 = vunpack.c.h.b16 %v6567
  %v6924 = vunpack.c.l.b16 %v6568
  %v6925 = vunpack.c.h.b16 %v6568
  %v6926 = vunpack.c.l.b16 %v6569
  %v6927 = vunpack.c.h.b16 %v6569
  %v6928 = vunpack.c.l.b16 %v6570
  %v6929 = vunpack.c.h.b16 %v6570
  %v6930 = vunpack.c.l.b16 %v6571
  %v6931 = vunpack.c.h.b16 %v6571
  %v6932 = vunpack.c.l.b16 %v6572
  %v6933 = vunpack.c.h.b16 %v6572
  %v6934 = vunpack.c.l.b16 %v6573
  %v6935 = vunpack.c.h.b16 %v6573
  %v6936 = vunpack.c.l.b16 %v6574
  %v6937 = vunpack.c.h.b16 %v6574
  %v6938 = vunpack.c.l.b16 %v6575
  %v6939 = vunpack.c.h.b16 %v6575
  %v6940 = vunpack.c.l.b16 %v6576
  %v6941 = vunpack.c.h.b16 %v6576
  %v6942 = vunpack.c.l.b16 %v6577
  %v6943 = vunpack.c.h.b16 %v6577
  %v6944 = vunpack.c.l.b16 %v6578
  %v6945 = vunpack.c.h.b16 %v6578
  %v6946 = vunpack.c.l.b16 %v6579
  %v6947 = vunpack.c.h.b16 %v6579
  %v6948 = vunpack.c.l.b16 %v6580
  %v6949 = vunpack.c.h.b16 %v6580
  %v6950 = vunpack.c.l.b16 %v6581
  %v6951 = vunpack.c.h.b16 %v6581
  %v6952 = vunpack.c.l.b16 %v6582
  %v6953 = vunpack.c.h.b16 %v6582
  %v6954 = vunpack.c.l.b16 %v6583
  %v6955 = vunpack.c.h.b16 %v6583
  %v6956 = vunpack.c.l.b16 %v6584
  %v6957 = vunpack.c.h.b16 %v6584
  %v6958 = vunpack.c.l.b16 %v6585
  %v6959 = vunpack.c.h.b16 %v6585
  %v6960 = vunpack.c.l.b16 %v6586
  %v6961 = vunpack.c.h.b16 %v6586
  %v6962 = vunpack.c.l.b16 %v6587
  %v6963 = vunpack.c.h.b16 %v6587
  %v6964 = vunpack.c.l.b16 %v6588
  %v6965 = vunpack.c.h.b16 %v6588
  %v6966 = vunpack.c.l.b16 %v6589
  %v6967 = vunpack.c.h.b16 %v6589
  %v6968 = vunpack.c.l.b16 %v6590
  %v6969 = vunpack.c.h.b16 %v6590
  %v6970 = vunpack.c.l.b16 %v6591
  %v6971 = vunpack.c.h.b16 %v6591
  %v6972 = vunpack.c.l.b16 %v6592
  %v6973 = vunpack.c.h.b16 %v6592
  %v6974 = vunpack.c.l.b16 %v6593
  %v6975 = vunpack.c.h.b16 %v6593
  %v6976 = vunpack.c.l.b16 %v6594
  %v6977 = vunpack.c.h.b16 %v6594
  %v6978 = vunpack.c.l.b16 %v6595
  %v6979 = vunpack.c.h.b16 %v6595
  %v6980 = vpack.c.b16 %v6732, %v6724
  %v6981 = vpack.c.b16 %v6733, %v6725
  %v6982 = vpack.c.b16 %v6734, %v6726
  %v6983 = vpack.c.b16 %v6735, %v6727
  %v6984 = vpack.c.b16 %v6736, %v6728
  %v6985 = vpack.c.b16 %v6737, %v6729
  %v6986 = vpack.c.b16 %v6738, %v6730
  %v6987 = vpack.c.b16 %v6739, %v6731
  %v6988 = vpack.c.b16 %v6748, %v6740
  %v6989 = vpack.c.b16 %v6749, %v6741
  %v6990 = vpack.c.b16 %v6750, %v6742
  %v6991 = vpack.c.b16 %v6751, %v6743
  %v6992 = vpack.c.b16 %v6752, %v6744
  %v6993 = vpack.c.b16 %v6753, %v6745
  %v6994 = vpack.c.b16 %v6754, %v6746
  %v6995 = vpack.c.b16 %v6755, %v6747
  %v6996 = vpack.c.b16 %v6764, %v6756
  %v6997 = vpack.c.b16 %v6765, %v6757
  %v6998 = vpack.c.b16 %v6766, %v6758
  %v6999 = vpack.c.b16 %v6767, %v6759
  %v7000 = vpack.c.b16 %v6768, %v6760
  %v7001 = vpack.c.b16 %v6769, %v6761
  %v7002 = vpack.c.b16 %v6770, %v6762
  %v7003 = vpack.c.b16 %v6771, %v6763
  %v7004 = vpack.c.b16 %v6780, %v6772
  %v7005 = vpack.c.b16 %v6781, %v6773
  %v7006 = vpack.c.b16 %v6782, %v6774
  %v7007 = vpack.c.b16 %v6783, %v6775
  %v7008 = vpack.c.b16 %v6784, %v6776
  %v7009 = vpack.c.b16 %v6785, %v6777
  %v7010 = vpack.c.b16 %v6786, %v6778
  %v7011 = vpack.c.b16 %v6787, %v6779
  %v7012 = vpack.c.b16 %v6796, %v6788
  %v7013 = vpack.c.b16 %v6797, %v6789
  %v7014 = vpack.c.b16 %v6798, %v6790
  %v7015 = vpack.c.b16 %v6799, %v6791
  %v7016 = vpack.c.b16 %v6800, %v6792
  %v7017 = vpack.c.b16 %v6801, %v6793
  %v7018 = vpack.c.b16 %v6802, %v6794
  %v7019 = vpack.c.b16 %v6803, %v6795
  %v7020 = vpack.c.b16 %v6812, %v6804
  %v7021 = vpack.c.b16 %v6813, %v6805
  %v7022 = vpack.c.b16 %v6814, %v6806
  %v7023 = vpack.c.b16 %v6815, %v6807
  %v7024 = vpack.c.b16 %v6816, %v6808
  %v7025 = vpack.c.b16 %v6817, %v6809
  %v7026 = vpack.c.b16 %v6818, %v6810
  %v7027 = vpack.c.b16 %v6819, %v6811
  %v7028 = vpack.c.b16 %v6828, %v6820
  %v7029 = vpack.c.b16 %v6829, %v6821
  %v7030 = vpack.c.b16 %v6830, %v6822
  %v7031 = vpack.c.b16 %v6831, %v6823
  %v7032 = vpack.c.b16 %v6832, %v6824
  %v7033 = vpack.c.b16 %v6833, %v6825
  %v7034 = vpack.c.b16 %v6834, %v6826
  %v7035 = vpack.c.b16 %v6835, %v6827
  %v7036 = vpack.c.b16 %v6844, %v6836
  %v7037 = vpack.c.b16 %v6845, %v6837
  %v7038 = vpack.c.b16 %v6846, %v6838
  %v7039 = vpack.c.b16 %v6847, %v6839
  %v7040 = vpack.c.b16 %v6848, %v6840
  %v7041 = vpack.c.b16 %v6849, %v6841
  %v7042 = vpack.c.b16 %v6850, %v6842
  %v7043 = vpack.c.b16 %v6851, %v6843
  %v7044 = vpack.c.b16 %v6860, %v6852
  %v7045 = vpack.c.b16 %v6861, %v6853
  %v7046 = vpack.c.b16 %v6862, %v6854
  %v7047 = vpack.c.b16 %v6863, %v6855
  %v7048 = vpack.c.b16 %v6864, %v6856
  %v7049 = vpack.c.b16 %v6865, %v6857
  %v7050 = vpack.c.b16 %v6866, %v6858
  %v7051 = vpack.c.b16 %v6867, %v6859
  %v7052 = vpack.c.b16 %v6876, %v6868
  %v7053 = vpack.c.b16 %v6877, %v6869
  %v7054 = vpack.c.b16 %v6878, %v6870
  %v7055 = vpack.c.b16 %v6879, %v6871
  %v7056 = vpack.c.b16 %v6880, %v6872
  %v7057 = vpack.c.b16 %v6881, %v6873
  %v7058 = vpack.c.b16 %v6882, %v6874
  %v7059 = vpack.c.b16 %v6883, %v6875
  %v7060 = vpack.c.b16 %v6892, %v6884
  %v7061 = vpack.c.b16 %v6893, %v6885
  %v7062 = vpack.c.b16 %v6894, %v6886
  %v7063 = vpack.c.b16 %v6895, %v6887
  %v7064 = vpack.c.b16 %v6896, %v6888
  %v7065 = vpack.c.b16 %v6897, %v6889
  %v7066 = vpack.c.b16 %v6898, %v6890
  %v7067 = vpack.c.b16 %v6899, %v6891
  %v7068 = vpack.c.b16 %v6908, %v6900
  %v7069 = vpack.c.b16 %v6909, %v6901
  %v7070 = vpack.c.b16 %v6910, %v6902
  %v7071 = vpack.c.b16 %v6911, %v6903
  %v7072 = vpack.c.b16 %v6912, %v6904
  %v7073 = vpack.c.b16 %v6913, %v6905
  %v7074 = vpack.c.b16 %v6914, %v6906
  %v7075 = vpack.c.b16 %v6915, %v6907
  %v7076 = vpack.c.b16 %v6924, %v6916
  %v7077 = vpack.c.b16 %v6925, %v6917
  %v7078 = vpack.c.b16 %v6926, %v6918
  %v7079 = vpack.c.b16 %v6927, %v6919
  %v7080 = vpack.c.b16 %v6928, %v6920
  %v7081 = vpack.c.b16 %v6929, %v6921
  %v7082 = vpack.c.b16 %v6930, %v6922
  %v7083 = vpack.c.b16 %v6931, %v6923
  %v7084 = vpack.c.b16 %v6940, %v6932
  %v7085 = vpack.c.b16 %v6941, %v6933
  %v7086 = vpack.c.b16 %v6942, %v6934
  %v7087 = vpack.c.b16 %v6943, %v6935
  %v7088 = vpack.c.b16 %v6944, %v6936
  %v7089 = vpack.c.b16 %v6945, %v6937
  %v7090 = vpack.c.b16 %v6946, %v6938
  %v7091 = vpack.c.b16 %v6947, %v6939
  %v7092 = vpack.c.b16 %v6956, %v6948
  %v7093 = vpack.c.b16 %v6957, %v6949
  %v7094 = vpack.c.b16 %v6958, %v6950
  %v7095 = vpack.c.b16 %v6959, %v6951
  %v7096 = vpack.c.b16 %v6960, %v6952
  %v7097 = vpack.c.b16 %v6961, %v6953
  %v7098 = vpack.c.b16 %v6962, %v6954
  %v7099 = vpack.c.b16 %v6963, %v6955
  %v7100 = vpack.c.b16 %v6972, %v6964
  %v7101 = vpack.c.b16 %v6973, %v6965
  %v7102 = vpack.c.b16 %v6974, %v6966
  %v7103 = vpack.c.b16 %v6975, %v6967
  %v7104 = vpack.c.b16 %v6976, %v6968
  %v7105 = vpack.c.b16 %v6977, %v6969
  %v7106 = vpack.c.b16 %v6978, %v6970
  %v7107 = vpack.c.b16 %v6979, %v6971
  %7236 = vmatprep.subr.bf16.mxu0 %v7037
  %7237 = vmatpush1.bf16.msra.mxu0 %v7036
  %7238 = vmatprep.subr.bf16.mxu0 %v7029
  %7239 = vmatpush1.bf16.msra.mxu0 %v7028
  %7240 = vmatprep.subr.bf16.mxu0 %v7021
  %7241 = vmatpush1.bf16.msra.mxu0 %v7020
  %7242 = vmatprep.subr.bf16.mxu0 %v7013
  %7243 = vmatpush1.bf16.msra.mxu0 %v7012
  %7244 = vmatprep.subr.bf16.mxu0 %v7005
  %7245 = vmatpush1.bf16.msra.mxu0 %v7004
  %7246 = vmatprep.subr.bf16.mxu0 %v6997
  %7247 = vmatpush1.bf16.msra.mxu0 %v6996
  %7248 = vmatprep.subr.bf16.mxu0 %v6989
  %7249 = vmatpush1.bf16.msra.mxu0 %v6988
  %7250 = vmatprep.subr.bf16.mxu0 %v6981
  %7251 = vmatpush1.bf16.msra.mxu0 %v6980
  %7252 = vmatprep.subr.bf16.mxu0 %v7101
  %7253 = vmatpush2.bf16.msra.mxu0 %v7100
  %7254 = vmatprep.subr.bf16.mxu0 %v7093
  %7255 = vmatpush2.bf16.msra.mxu0 %v7092
  %7256 = vmatprep.subr.bf16.mxu0 %v7085
  %7257 = vmatpush2.bf16.msra.mxu0 %v7084
  %7258 = vmatprep.subr.bf16.mxu0 %v7077
  %7259 = vmatpush2.bf16.msra.mxu0 %v7076
  %7260 = vmatprep.subr.bf16.mxu0 %v7069
  %7261 = vmatpush2.bf16.msra.mxu0 %v7068
  %7262 = vmatprep.subr.bf16.mxu0 %v7061
  %7263 = vmatpush2.bf16.msra.mxu0 %v7060
  %7264 = vmatprep.subr.bf16.mxu0 %v7053
  %7265 = vmatpush2.bf16.msra.mxu0 %v7052
  %7266 = vmatprep.subr.bf16.mxu0 %v7045
  %7267 = vmatpush2.bf16.msra.mxu0 %v7044
  %7268 = vmatprep.mubr.bf16.mxu0 %v6467
  %7269 = vmatmul.mubr.bf16.gmra.mxu0 %v6161
  %v7270 = vpop.f32.mrf.mxu0
  %v7271 = vadd.f32 0.0, %v7270
  %v7272 = vpop.f32.mrf.mxu0
  %v7273 = vadd.f32 0.0, %v7272
  %v7274 = vpop.f32.mrf.mxu0
  %v7275 = vpop.f32.mrf.mxu0
  %7276 = vdwg.mxu0
  %7277 = vmatprep.subr.bf16.mxu0 %v7039
  %7278 = vmatpush1.bf16.msra.mxu0 %v7038
  %7279 = vmatprep.subr.bf16.mxu0 %v7031
  %7280 = vmatpush1.bf16.msra.mxu0 %v7030
  %7281 = vmatprep.subr.bf16.mxu0 %v7023
  %7282 = vmatpush1.bf16.msra.mxu0 %v7022
  %7283 = vmatprep.subr.bf16.mxu0 %v7015
  %7284 = vmatpush1.bf16.msra.mxu0 %v7014
  %7285 = vmatprep.subr.bf16.mxu0 %v7007
  %7286 = vmatpush1.bf16.msra.mxu0 %v7006
  %7287 = vmatprep.subr.bf16.mxu0 %v6999
  %7288 = vmatpush1.bf16.msra.mxu0 %v6998
  %7289 = vmatprep.subr.bf16.mxu0 %v6991
  %7290 = vmatpush1.bf16.msra.mxu0 %v6990
  %7291 = vmatprep.subr.bf16.mxu0 %v6983
  %7292 = vmatpush1.bf16.msra.mxu0 %v6982
  %7293 = vmatprep.subr.bf16.mxu0 %v7103
  %7294 = vmatpush2.bf16.msra.mxu0 %v7102
  %7295 = vmatprep.subr.bf16.mxu0 %v7095
  %7296 = vmatpush2.bf16.msra.mxu0 %v7094
  %7297 = vmatprep.subr.bf16.mxu0 %v7087
  %7298 = vmatpush2.bf16.msra.mxu0 %v7086
  %7299 = vmatprep.subr.bf16.mxu0 %v7079
  %7300 = vmatpush2.bf16.msra.mxu0 %v7078
  %7301 = vmatprep.subr.bf16.mxu0 %v7071
  %7302 = vmatpush2.bf16.msra.mxu0 %v7070
  %7303 = vmatprep.subr.bf16.mxu0 %v7063
  %7304 = vmatpush2.bf16.msra.mxu0 %v7062
  %7305 = vmatprep.subr.bf16.mxu0 %v7055
  %7306 = vmatpush2.bf16.msra.mxu0 %v7054
  %7307 = vmatprep.subr.bf16.mxu0 %v7047
  %7308 = vmatpush2.bf16.msra.mxu0 %v7046
  %7309 = vmatprep.mubr.bf16.mxu0 %v6467
  %7310 = vmatmul.mubr.bf16.gmra.mxu0 %v6161
  %v7311 = vpop.f32.mrf.mxu0
  %v7312 = vadd.f32 0.0, %v7311
  %v7313 = vpop.f32.mrf.mxu0
  %v7314 = vadd.f32 0.0, %v7313
  %v7315 = vpop.f32.mrf.mxu0
  %v7316 = vpop.f32.mrf.mxu0
  %7317 = vdwg.mxu0
  %7318 = vmatprep.subr.bf16.mxu0 %v7041
  %7319 = vmatpush1.bf16.msra.mxu0 %v7040
  %7320 = vmatprep.subr.bf16.mxu0 %v7033
  %7321 = vmatpush1.bf16.msra.mxu0 %v7032
  %7322 = vmatprep.subr.bf16.mxu0 %v7025
  %7323 = vmatpush1.bf16.msra.mxu0 %v7024
  %7324 = vmatprep.subr.bf16.mxu0 %v7017
  %7325 = vmatpush1.bf16.msra.mxu0 %v7016
  %7326 = vmatprep.subr.bf16.mxu0 %v7009
  %7327 = vmatpush1.bf16.msra.mxu0 %v7008
  %7328 = vmatprep.subr.bf16.mxu0 %v7001
  %7329 = vmatpush1.bf16.msra.mxu0 %v7000
  %7330 = vmatprep.subr.bf16.mxu0 %v6993
  %7331 = vmatpush1.bf16.msra.mxu0 %v6992
  %7332 = vmatprep.subr.bf16.mxu0 %v6985
  %7333 = vmatpush1.bf16.msra.mxu0 %v6984
  %7334 = vmatprep.subr.bf16.mxu0 %v7105
  %7335 = vmatpush2.bf16.msra.mxu0 %v7104
  %7336 = vmatprep.subr.bf16.mxu0 %v7097
  %7337 = vmatpush2.bf16.msra.mxu0 %v7096
  %7338 = vmatprep.subr.bf16.mxu0 %v7089
  %7339 = vmatpush2.bf16.msra.mxu0 %v7088
  %7340 = vmatprep.subr.bf16.mxu0 %v7081
  %7341 = vmatpush2.bf16.msra.mxu0 %v7080
  %7342 = vmatprep.subr.bf16.mxu0 %v7073
  %7343 = vmatpush2.bf16.msra.mxu0 %v7072
  %7344 = vmatprep.subr.bf16.mxu0 %v7065
  %7345 = vmatpush2.bf16.msra.mxu0 %v7064
  %7346 = vmatprep.subr.bf16.mxu0 %v7057
  %7347 = vmatpush2.bf16.msra.mxu0 %v7056
  %7348 = vmatprep.subr.bf16.mxu0 %v7049
  %7349 = vmatpush2.bf16.msra.mxu0 %v7048
  %7350 = vmatprep.mubr.bf16.mxu0 %v6467
  %7351 = vmatmul.mubr.bf16.gmra.mxu0 %v6161
  %v7352 = vpop.f32.mrf.mxu0
  %v7353 = vadd.f32 0.0, %v7352
  %v7354 = vpop.f32.mrf.mxu0
  %v7355 = vadd.f32 0.0, %v7354
  %v7356 = vpop.f32.mrf.mxu0
  %v7357 = vpop.f32.mrf.mxu0
  %7358 = vdwg.mxu0
  %7359 = vmatprep.subr.bf16.mxu0 %v7043
  %7360 = vmatpush1.bf16.msra.mxu0 %v7042
  %7361 = vmatprep.subr.bf16.mxu0 %v7035
  %7362 = vmatpush1.bf16.msra.mxu0 %v7034
  %7363 = vmatprep.subr.bf16.mxu0 %v7027
  %7364 = vmatpush1.bf16.msra.mxu0 %v7026
  %7365 = vmatprep.subr.bf16.mxu0 %v7019
  %7366 = vmatpush1.bf16.msra.mxu0 %v7018
  %7367 = vmatprep.subr.bf16.mxu0 %v7011
  %7368 = vmatpush1.bf16.msra.mxu0 %v7010
  %7369 = vmatprep.subr.bf16.mxu0 %v7003
  %7370 = vmatpush1.bf16.msra.mxu0 %v7002
  %7371 = vmatprep.subr.bf16.mxu0 %v6995
  %7372 = vmatpush1.bf16.msra.mxu0 %v6994
  %7373 = vmatprep.subr.bf16.mxu0 %v6987
  %7374 = vmatpush1.bf16.msra.mxu0 %v6986
  %7375 = vmatprep.subr.bf16.mxu0 %v7107
  %7376 = vmatpush2.bf16.msra.mxu0 %v7106
  %7377 = vmatprep.subr.bf16.mxu0 %v7099
  %7378 = vmatpush2.bf16.msra.mxu0 %v7098
  %7379 = vmatprep.subr.bf16.mxu0 %v7091
  %7380 = vmatpush2.bf16.msra.mxu0 %v7090
  %7381 = vmatprep.subr.bf16.mxu0 %v7083
  %7382 = vmatpush2.bf16.msra.mxu0 %v7082
  %7383 = vmatprep.subr.bf16.mxu0 %v7075
  %7384 = vmatpush2.bf16.msra.mxu0 %v7074
  %7385 = vmatprep.subr.bf16.mxu0 %v7067
  %7386 = vmatpush2.bf16.msra.mxu0 %v7066
  %7387 = vmatprep.subr.bf16.mxu0 %v7059
  %7388 = vmatpush2.bf16.msra.mxu0 %v7058
  %7389 = vmatprep.subr.bf16.mxu0 %v7051
  %7390 = vmatpush2.bf16.msra.mxu0 %v7050
  %7391 = vmatprep.mubr.bf16.mxu0 %v6467
  %7392 = vmatmul.mubr.bf16.gmra.mxu0 %v6161
  %v7393 = vpop.f32.mrf.mxu0
  %v7394 = vadd.f32 0.0, %v7393
  %v7395 = vpop.f32.mrf.mxu0
  %v7396 = vadd.f32 0.0, %v7395
  %v7397 = vpop.f32.mrf.mxu0
  %v7398 = vpop.f32.mrf.mxu0
  %7399 = vdwg.mxu0
  %7401 = vset.pattern.permute.xlu0 0
  %7402 = vperm.xlu0 %7401, %v6466
  %v7403 = vpop.permute.xlu0 %7402
  %v7405 = vmul.f32 %v7403, %v977
  %v7406 = vmul.f32 %v7403, %v981
  %v7407 = vmul.f32 %v7403, %v985
  %v7408 = vmul.f32 %v7403, %v989
  %v7409 = vadd.f32 %v7271, %v7405
  %v7410 = vadd.f32 %v7273, %v7406
  %v7411 = vadd.f32 %v7312, %v7407
  %v7412 = vadd.f32 %v7314, %v7408
  %v7413 = vadd.f32 %v7409, %v1006
  %v7414 = vadd.f32 %v7410, %v1010
  %v7415 = vadd.f32 %v7411, %v1014
  %v7416 = vadd.f32 %v7412, %v1018
  %v7417 = vmul.f32 %v7413, 0.5
  %v7418 = vmul.f32 %v7414, 0.5
  %v7419 = vmul.f32 %v7415, 0.5
  %v7420 = vtanh.pop %v7417
  %v7421 = vtanh.pop %v7418
  %v7422 = vtanh.pop %v7419
  %v7423 = vmul.f32 %v7420, 0.5
  %v7424 = vmul.f32 %v7421, 0.5
  %v7425 = vmul.f32 %v7422, 0.5
  %v7426 = vadd.f32 %v7423, 0.5
  %v7427 = vadd.f32 %v7424, 0.5
  %v7428 = vadd.f32 %v7425, 0.5
  %v7429 = vtanh.pop %v7416
  %v7430 = vmul.f32 %v7427, %v6158
  %v7431 = vmul.f32 %v7426, %v7429
  %v7432 = vadd.f32 %v7430, %v7431
  %v7433 = vtanh.pop %v7432
  %v7434 = vmul.f32 %v7428, %v7433
  %v7435 = vpack.c.bf16 %v7434, %v7434
  %v7436 = vld [vmem:[%s4] sm:$0xff]
  %v7437 = vld [vmem:[%s4 + $0x8] sm:$0xff]
  %v7438 = vld [vmem:[%s4 + $0x10] sm:$0xff]
  %v7439 = vld [vmem:[%s4 + $0x18] sm:$0xff]
  %v7440 = vld [vmem:[%s4 + $0x20] sm:$0xff]
  %v7441 = vld [vmem:[%s4 + $0x28] sm:$0xff]
  %v7442 = vld [vmem:[%s4 + $0x30] sm:$0xff]
  %v7443 = vld [vmem:[%s4 + $0x38] sm:$0xff]
  %v7444 = vld [vmem:[%s4 + $0x40] sm:$0xff]
  %v7445 = vld [vmem:[%s4 + $0x48] sm:$0xff]
  %v7446 = vld [vmem:[%s4 + $0x50] sm:$0xff]
  %v7447 = vld [vmem:[%s4 + $0x58] sm:$0xff]
  %v7448 = vld [vmem:[%s4 + $0x60] sm:$0xff]
  %v7449 = vld [vmem:[%s4 + $0x68] sm:$0xff]
  %v7450 = vld [vmem:[%s4 + $0x70] sm:$0xff]
  %v7451 = vld [vmem:[%s4 + $0x78] sm:$0xff]
  %v7452 = vld [vmem:[%s4 + $0x80] sm:$0xff]
  %v7453 = vld [vmem:[%s4 + $0x88] sm:$0xff]
  %v7454 = vld [vmem:[%s4 + $0x90] sm:$0xff]
  %v7455 = vld [vmem:[%s4 + $0x98] sm:$0xff]
  %v7456 = vld [vmem:[%s4 + $0xa0] sm:$0xff]
  %v7457 = vld [vmem:[%s4 + $0xa8] sm:$0xff]
  %v7458 = vld [vmem:[%s4 + $0xb0] sm:$0xff]
  %v7459 = vld [vmem:[%s4 + $0xb8] sm:$0xff]
  %v7460 = vld [vmem:[%s4 + $0xc0] sm:$0xff]
  %v7461 = vld [vmem:[%s4 + $0xc8] sm:$0xff]
  %v7462 = vld [vmem:[%s4 + $0xd0] sm:$0xff]
  %v7463 = vld [vmem:[%s4 + $0xd8] sm:$0xff]
  %v7464 = vld [vmem:[%s4 + $0xe0] sm:$0xff]
  %v7465 = vld [vmem:[%s4 + $0xe8] sm:$0xff]
  %v7466 = vld [vmem:[%s4 + $0xf0] sm:$0xff]
  %v7467 = vld [vmem:[%s4 + $0xf8] sm:$0xff]
  %v7500 = vunpack.c.l.b16 %v7436
  %v7501 = vunpack.c.h.b16 %v7436
  %v7502 = vunpack.c.l.b16 %v7437
  %v7503 = vunpack.c.h.b16 %v7437
  %v7504 = vunpack.c.l.b16 %v7438
  %v7505 = vunpack.c.h.b16 %v7438
  %v7506 = vunpack.c.l.b16 %v7439
  %v7507 = vunpack.c.h.b16 %v7439
  %v7508 = vunpack.c.l.b16 %v7440
  %v7509 = vunpack.c.h.b16 %v7440
  %v7510 = vunpack.c.l.b16 %v7441
  %v7511 = vunpack.c.h.b16 %v7441
  %v7512 = vunpack.c.l.b16 %v7442
  %v7513 = vunpack.c.h.b16 %v7442
  %v7514 = vunpack.c.l.b16 %v7443
  %v7515 = vunpack.c.h.b16 %v7443
  %v7516 = vunpack.c.l.b16 %v7444
  %v7517 = vunpack.c.h.b16 %v7444
  %v7518 = vunpack.c.l.b16 %v7445
  %v7519 = vunpack.c.h.b16 %v7445
  %v7520 = vunpack.c.l.b16 %v7446
  %v7521 = vunpack.c.h.b16 %v7446
  %v7522 = vunpack.c.l.b16 %v7447
  %v7523 = vunpack.c.h.b16 %v7447
  %v7524 = vunpack.c.l.b16 %v7448
  %v7525 = vunpack.c.h.b16 %v7448
  %v7526 = vunpack.c.l.b16 %v7449
  %v7527 = vunpack.c.h.b16 %v7449
  %v7528 = vunpack.c.l.b16 %v7450
  %v7529 = vunpack.c.h.b16 %v7450
  %v7530 = vunpack.c.l.b16 %v7451
  %v7531 = vunpack.c.h.b16 %v7451
  %v7532 = vunpack.c.l.b16 %v7452
  %v7533 = vunpack.c.h.b16 %v7452
  %v7534 = vunpack.c.l.b16 %v7453
  %v7535 = vunpack.c.h.b16 %v7453
  %v7536 = vunpack.c.l.b16 %v7454
  %v7537 = vunpack.c.h.b16 %v7454
  %v7538 = vunpack.c.l.b16 %v7455
  %v7539 = vunpack.c.h.b16 %v7455
  %v7540 = vunpack.c.l.b16 %v7456
  %v7541 = vunpack.c.h.b16 %v7456
  %v7542 = vunpack.c.l.b16 %v7457
  %v7543 = vunpack.c.h.b16 %v7457
  %v7544 = vunpack.c.l.b16 %v7458
  %v7545 = vunpack.c.h.b16 %v7458
  %v7546 = vunpack.c.l.b16 %v7459
  %v7547 = vunpack.c.h.b16 %v7459
  %v7548 = vunpack.c.l.b16 %v7460
  %v7549 = vunpack.c.h.b16 %v7460
  %v7550 = vunpack.c.l.b16 %v7461
  %v7551 = vunpack.c.h.b16 %v7461
  %v7552 = vunpack.c.l.b16 %v7462
  %v7553 = vunpack.c.h.b16 %v7462
  %v7554 = vunpack.c.l.b16 %v7463
  %v7555 = vunpack.c.h.b16 %v7463
  %v7556 = vunpack.c.l.b16 %v7464
  %v7557 = vunpack.c.h.b16 %v7464
  %v7558 = vunpack.c.l.b16 %v7465
  %v7559 = vunpack.c.h.b16 %v7465
  %v7560 = vunpack.c.l.b16 %v7466
  %v7561 = vunpack.c.h.b16 %v7466
  %v7562 = vunpack.c.l.b16 %v7467
  %v7563 = vunpack.c.h.b16 %v7467
  %v7564 = vpack.c.b16 %v7504, %v7500
  %v7565 = vpack.c.b16 %v7505, %v7501
  %v7566 = vpack.c.b16 %v7506, %v7502
  %v7567 = vpack.c.b16 %v7507, %v7503
  %v7568 = vpack.c.b16 %v7512, %v7508
  %v7569 = vpack.c.b16 %v7513, %v7509
  %v7570 = vpack.c.b16 %v7514, %v7510
  %v7571 = vpack.c.b16 %v7515, %v7511
  %v7572 = vpack.c.b16 %v7520, %v7516
  %v7573 = vpack.c.b16 %v7521, %v7517
  %v7574 = vpack.c.b16 %v7522, %v7518
  %v7575 = vpack.c.b16 %v7523, %v7519
  %v7576 = vpack.c.b16 %v7528, %v7524
  %v7577 = vpack.c.b16 %v7529, %v7525
  %v7578 = vpack.c.b16 %v7530, %v7526
  %v7579 = vpack.c.b16 %v7531, %v7527
  %v7580 = vpack.c.b16 %v7536, %v7532
  %v7581 = vpack.c.b16 %v7537, %v7533
  %v7582 = vpack.c.b16 %v7538, %v7534
  %v7583 = vpack.c.b16 %v7539, %v7535
  %v7584 = vpack.c.b16 %v7544, %v7540
  %v7585 = vpack.c.b16 %v7545, %v7541
  %v7586 = vpack.c.b16 %v7546, %v7542
  %v7587 = vpack.c.b16 %v7547, %v7543
  %v7588 = vpack.c.b16 %v7552, %v7548
  %v7589 = vpack.c.b16 %v7553, %v7549
  %v7590 = vpack.c.b16 %v7554, %v7550
  %v7591 = vpack.c.b16 %v7555, %v7551
  %v7592 = vpack.c.b16 %v7560, %v7556
  %v7593 = vpack.c.b16 %v7561, %v7557
  %v7594 = vpack.c.b16 %v7562, %v7558
  %v7595 = vpack.c.b16 %v7563, %v7559
  %7628 = vmatprep.subr.bf16.mxu0 %v7593
  %7629 = vmatpush1.bf16.msra.mxu0 %v7592
  %7630 = vmatprep.subr.bf16.mxu0 %v7589
  %7631 = vmatpush1.bf16.msra.mxu0 %v7588
  %7632 = vmatprep.subr.bf16.mxu0 %v7585
  %7633 = vmatpush1.bf16.msra.mxu0 %v7584
  %7634 = vmatprep.subr.bf16.mxu0 %v7581
  %7635 = vmatpush1.bf16.msra.mxu0 %v7580
  %7636 = vmatprep.subr.bf16.mxu0 %v7577
  %7637 = vmatpush1.bf16.msra.mxu0 %v7576
  %7638 = vmatprep.subr.bf16.mxu0 %v7573
  %7639 = vmatpush1.bf16.msra.mxu0 %v7572
  %7640 = vmatprep.subr.bf16.mxu0 %v7569
  %7641 = vmatpush1.bf16.msra.mxu0 %v7568
  %7642 = vmatprep.subr.bf16.mxu0 %v7565
  %7643 = vmatpush1.bf16.msra.mxu0 %v7564
  %7644 = vmatprep.subr.bf16.mxu0 0
  %7645 = vmatpush2.bf16.msra.mxu0 0
  %7646 = vmatprep.subr.bf16.mxu0 0
  %7647 = vmatpush2.bf16.msra.mxu0 0
  %7648 = vmatprep.subr.bf16.mxu0 0
  %7649 = vmatpush2.bf16.msra.mxu0 0
  %7650 = vmatprep.subr.bf16.mxu0 0
  %7651 = vmatpush2.bf16.msra.mxu0 0
  %7652 = vmatprep.subr.bf16.mxu0 0
  %7653 = vmatpush2.bf16.msra.mxu0 0
  %7654 = vmatprep.subr.bf16.mxu0 0
  %7655 = vmatpush2.bf16.msra.mxu0 0
  %7656 = vmatprep.subr.bf16.mxu0 0
  %7657 = vmatpush2.bf16.msra.mxu0 0
  %7658 = vmatprep.subr.bf16.mxu0 0
  %7659 = vmatpush2.bf16.msra.mxu0 0
  %7660 = vmatprep.mubr.bf16.mxu0 0
  %7661 = vmatmul.mubr.bf16.gmra.mxu0 %v7435
  %v7662 = vpop.f32.mrf.mxu0
  %v7663 = vadd.f32 0.0, %v7662
  %v7664 = vpop.f32.mrf.mxu0
  %v7665 = vadd.f32 0.0, %v7664
  %v7666 = vpop.f32.mrf.mxu0
  %v7667 = vpop.f32.mrf.mxu0
  %7668 = vdwg.mxu0
  %7669 = vmatprep.subr.bf16.mxu0 %v7595
  %7670 = vmatpush1.bf16.msra.mxu0 %v7594
  %7671 = vmatprep.subr.bf16.mxu0 %v7591
  %7672 = vmatpush1.bf16.msra.mxu0 %v7590
  %7673 = vmatprep.subr.bf16.mxu0 %v7587
  %7674 = vmatpush1.bf16.msra.mxu0 %v7586
  %7675 = vmatprep.subr.bf16.mxu0 %v7583
  %7676 = vmatpush1.bf16.msra.mxu0 %v7582
  %7677 = vmatprep.subr.bf16.mxu0 %v7579
  %7678 = vmatpush1.bf16.msra.mxu0 %v7578
  %7679 = vmatprep.subr.bf16.mxu0 %v7575
  %7680 = vmatpush1.bf16.msra.mxu0 %v7574
  %7681 = vmatprep.subr.bf16.mxu0 %v7571
  %7682 = vmatpush1.bf16.msra.mxu0 %v7570
  %7683 = vmatprep.subr.bf16.mxu0 %v7567
  %7684 = vmatpush1.bf16.msra.mxu0 %v7566
  %7685 = vmatprep.subr.bf16.mxu0 0
  %7686 = vmatpush2.bf16.msra.mxu0 0
  %7687 = vmatprep.subr.bf16.mxu0 0
  %7688 = vmatpush2.bf16.msra.mxu0 0
  %7689 = vmatprep.subr.bf16.mxu0 0
  %7690 = vmatpush2.bf16.msra.mxu0 0
  %7691 = vmatprep.subr.bf16.mxu0 0
  %7692 = vmatpush2.bf16.msra.mxu0 0
  %7693 = vmatprep.subr.bf16.mxu0 0
  %7694 = vmatpush2.bf16.msra.mxu0 0
  %7695 = vmatprep.subr.bf16.mxu0 0
  %7696 = vmatpush2.bf16.msra.mxu0 0
  %7697 = vmatprep.subr.bf16.mxu0 0
  %7698 = vmatpush2.bf16.msra.mxu0 0
  %7699 = vmatprep.subr.bf16.mxu0 0
  %7700 = vmatpush2.bf16.msra.mxu0 0
  %7701 = vmatprep.mubr.bf16.mxu0 0
  %7702 = vmatmul.mubr.bf16.gmra.mxu0 %v7435
  %v7703 = vpop.f32.mrf.mxu0
  %v7704 = vadd.f32 0.0, %v7703
  %v7705 = vpop.f32.mrf.mxu0
  %v7706 = vadd.f32 0.0, %v7705
  %v7707 = vpop.f32.mrf.mxu0
  %v7708 = vpop.f32.mrf.mxu0
  %7709 = vdwg.mxu0
  %v7710 = vadd.f32 %v7353, %v7663
  %v7711 = vadd.f32 %v7355, %v7665
  %v7712 = vadd.f32 %v7394, %v7704
  %v7713 = vadd.f32 %v7396, %v7706
  %v7714 = vadd.f32 %v7710, %v1328
  %v7715 = vadd.f32 %v7711, %v1332
  %v7716 = vadd.f32 %v7712, %v1336
  %v7717 = vadd.f32 %v7713, %v1340
  %v7718 = vmul.f32 %v7714, 0.5
  %v7719 = vmul.f32 %v7715, 0.5
  %v7720 = vmul.f32 %v7716, 0.5
  %v7721 = vtanh.pop %v7718
  %v7722 = vtanh.pop %v7719
  %v7723 = vtanh.pop %v7720
  %v7724 = vmul.f32 %v7721, 0.5
  %v7725 = vmul.f32 %v7722, 0.5
  %v7726 = vmul.f32 %v7723, 0.5
  %v7727 = vadd.f32 %v7724, 0.5
  %v7728 = vadd.f32 %v7725, 0.5
  %v7729 = vadd.f32 %v7726, 0.5
  %v7730 = vtanh.pop %v7717
  %v7731 = vmul.f32 %v7728, %v6459
  %v7732 = vmul.f32 %v7727, %v7730
  %v7733 = vadd.f32 %v7731, %v7732
  %v7734 = vtanh.pop %v7733
  %v7735 = vmul.f32 %v7729, %v7734
  %v7736 = vadd.f32 %v7434, %v7735
  %s7737 = scalar_lea.vmem [#allocation2], 10
  %7738 = vst [vmem:[%s7737] sm:$0x3] %v7736
  %s7739 = scalar_lea.vmem %s0, 12
  %v7740 = vld [vmem:[%s7739] sm:$0x3]
  %v7741 = vpack.c.bf16 %v7735, %v7735
  %v7742 = vld [vmem:[%s3] sm:$0xff]
  %v7743 = vld [vmem:[%s3 + $0x8] sm:$0xff]
  %v7744 = vld [vmem:[%s3 + $0x10] sm:$0xff]
  %v7745 = vld [vmem:[%s3 + $0x18] sm:$0xff]
  %v7746 = vld [vmem:[%s3 + $0x20] sm:$0xff]
  %v7747 = vld [vmem:[%s3 + $0x28] sm:$0xff]
  %v7748 = vld [vmem:[%s3 + $0x30] sm:$0xff]
  %v7749 = vld [vmem:[%s3 + $0x38] sm:$0xff]
  %v7750 = vld [vmem:[%s3 + $0x40] sm:$0xff]
  %v7751 = vld [vmem:[%s3 + $0x48] sm:$0xff]
  %v7752 = vld [vmem:[%s3 + $0x50] sm:$0xff]
  %v7753 = vld [vmem:[%s3 + $0x58] sm:$0xff]
  %v7754 = vld [vmem:[%s3 + $0x60] sm:$0xff]
  %v7755 = vld [vmem:[%s3 + $0x68] sm:$0xff]
  %v7756 = vld [vmem:[%s3 + $0x70] sm:$0xff]
  %v7757 = vld [vmem:[%s3 + $0x78] sm:$0xff]
  %v7758 = vld [vmem:[%s3 + $0x80] sm:$0xff]
  %v7759 = vld [vmem:[%s3 + $0x88] sm:$0xff]
  %v7760 = vld [vmem:[%s3 + $0x90] sm:$0xff]
  %v7761 = vld [vmem:[%s3 + $0x98] sm:$0xff]
  %v7762 = vld [vmem:[%s3 + $0xa0] sm:$0xff]
  %v7763 = vld [vmem:[%s3 + $0xa8] sm:$0xff]
  %v7764 = vld [vmem:[%s3 + $0xb0] sm:$0xff]
  %v7765 = vld [vmem:[%s3 + $0xb8] sm:$0xff]
  %v7766 = vld [vmem:[%s3 + $0xc0] sm:$0xff]
  %v7767 = vld [vmem:[%s3 + $0xc8] sm:$0xff]
  %v7768 = vld [vmem:[%s3 + $0xd0] sm:$0xff]
  %v7769 = vld [vmem:[%s3 + $0xd8] sm:$0xff]
  %v7770 = vld [vmem:[%s3 + $0xe0] sm:$0xff]
  %v7771 = vld [vmem:[%s3 + $0xe8] sm:$0xff]
  %v7772 = vld [vmem:[%s3 + $0xf0] sm:$0xff]
  %v7773 = vld [vmem:[%s3 + $0xf8] sm:$0xff]
  %v7774 = vld [vmem:[%s3 + $0x100] sm:$0xff]
  %v7775 = vld [vmem:[%s3 + $0x108] sm:$0xff]
  %v7776 = vld [vmem:[%s3 + $0x110] sm:$0xff]
  %v7777 = vld [vmem:[%s3 + $0x118] sm:$0xff]
  %v7778 = vld [vmem:[%s3 + $0x120] sm:$0xff]
  %v7779 = vld [vmem:[%s3 + $0x128] sm:$0xff]
  %v7780 = vld [vmem:[%s3 + $0x130] sm:$0xff]
  %v7781 = vld [vmem:[%s3 + $0x138] sm:$0xff]
  %v7782 = vld [vmem:[%s3 + $0x140] sm:$0xff]
  %v7783 = vld [vmem:[%s3 + $0x148] sm:$0xff]
  %v7784 = vld [vmem:[%s3 + $0x150] sm:$0xff]
  %v7785 = vld [vmem:[%s3 + $0x158] sm:$0xff]
  %v7786 = vld [vmem:[%s3 + $0x160] sm:$0xff]
  %v7787 = vld [vmem:[%s3 + $0x168] sm:$0xff]
  %v7788 = vld [vmem:[%s3 + $0x170] sm:$0xff]
  %v7789 = vld [vmem:[%s3 + $0x178] sm:$0xff]
  %v7790 = vld [vmem:[%s3 + $0x180] sm:$0xff]
  %v7791 = vld [vmem:[%s3 + $0x188] sm:$0xff]
  %v7792 = vld [vmem:[%s3 + $0x190] sm:$0xff]
  %v7793 = vld [vmem:[%s3 + $0x198] sm:$0xff]
  %v7794 = vld [vmem:[%s3 + $0x1a0] sm:$0xff]
  %v7795 = vld [vmem:[%s3 + $0x1a8] sm:$0xff]
  %v7796 = vld [vmem:[%s3 + $0x1b0] sm:$0xff]
  %v7797 = vld [vmem:[%s3 + $0x1b8] sm:$0xff]
  %v7798 = vld [vmem:[%s3 + $0x1c0] sm:$0xff]
  %v7799 = vld [vmem:[%s3 + $0x1c8] sm:$0xff]
  %v7800 = vld [vmem:[%s3 + $0x1d0] sm:$0xff]
  %v7801 = vld [vmem:[%s3 + $0x1d8] sm:$0xff]
  %v7802 = vld [vmem:[%s3 + $0x1e0] sm:$0xff]
  %v7803 = vld [vmem:[%s3 + $0x1e8] sm:$0xff]
  %v7804 = vld [vmem:[%s3 + $0x1f0] sm:$0xff]
  %v7805 = vld [vmem:[%s3 + $0x1f8] sm:$0xff]
  %v7806 = vld [vmem:[%s3 + $0x200] sm:$0xff]
  %v7807 = vld [vmem:[%s3 + $0x208] sm:$0xff]
  %v7808 = vld [vmem:[%s3 + $0x210] sm:$0xff]
  %v7809 = vld [vmem:[%s3 + $0x218] sm:$0xff]
  %v7810 = vld [vmem:[%s3 + $0x220] sm:$0xff]
  %v7811 = vld [vmem:[%s3 + $0x228] sm:$0xff]
  %v7812 = vld [vmem:[%s3 + $0x230] sm:$0xff]
  %v7813 = vld [vmem:[%s3 + $0x238] sm:$0xff]
  %v7814 = vld [vmem:[%s3 + $0x240] sm:$0xff]
  %v7815 = vld [vmem:[%s3 + $0x248] sm:$0xff]
  %v7816 = vld [vmem:[%s3 + $0x250] sm:$0xff]
  %v7817 = vld [vmem:[%s3 + $0x258] sm:$0xff]
  %v7818 = vld [vmem:[%s3 + $0x260] sm:$0xff]
  %v7819 = vld [vmem:[%s3 + $0x268] sm:$0xff]
  %v7820 = vld [vmem:[%s3 + $0x270] sm:$0xff]
  %v7821 = vld [vmem:[%s3 + $0x278] sm:$0xff]
  %v7822 = vld [vmem:[%s3 + $0x280] sm:$0xff]
  %v7823 = vld [vmem:[%s3 + $0x288] sm:$0xff]
  %v7824 = vld [vmem:[%s3 + $0x290] sm:$0xff]
  %v7825 = vld [vmem:[%s3 + $0x298] sm:$0xff]
  %v7826 = vld [vmem:[%s3 + $0x2a0] sm:$0xff]
  %v7827 = vld [vmem:[%s3 + $0x2a8] sm:$0xff]
  %v7828 = vld [vmem:[%s3 + $0x2b0] sm:$0xff]
  %v7829 = vld [vmem:[%s3 + $0x2b8] sm:$0xff]
  %v7830 = vld [vmem:[%s3 + $0x2c0] sm:$0xff]
  %v7831 = vld [vmem:[%s3 + $0x2c8] sm:$0xff]
  %v7832 = vld [vmem:[%s3 + $0x2d0] sm:$0xff]
  %v7833 = vld [vmem:[%s3 + $0x2d8] sm:$0xff]
  %v7834 = vld [vmem:[%s3 + $0x2e0] sm:$0xff]
  %v7835 = vld [vmem:[%s3 + $0x2e8] sm:$0xff]
  %v7836 = vld [vmem:[%s3 + $0x2f0] sm:$0xff]
  %v7837 = vld [vmem:[%s3 + $0x2f8] sm:$0xff]
  %v7838 = vld [vmem:[%s3 + $0x300] sm:$0xff]
  %v7839 = vld [vmem:[%s3 + $0x308] sm:$0xff]
  %v7840 = vld [vmem:[%s3 + $0x310] sm:$0xff]
  %v7841 = vld [vmem:[%s3 + $0x318] sm:$0xff]
  %v7842 = vld [vmem:[%s3 + $0x320] sm:$0xff]
  %v7843 = vld [vmem:[%s3 + $0x328] sm:$0xff]
  %v7844 = vld [vmem:[%s3 + $0x330] sm:$0xff]
  %v7845 = vld [vmem:[%s3 + $0x338] sm:$0xff]
  %v7846 = vld [vmem:[%s3 + $0x340] sm:$0xff]
  %v7847 = vld [vmem:[%s3 + $0x348] sm:$0xff]
  %v7848 = vld [vmem:[%s3 + $0x350] sm:$0xff]
  %v7849 = vld [vmem:[%s3 + $0x358] sm:$0xff]
  %v7850 = vld [vmem:[%s3 + $0x360] sm:$0xff]
  %v7851 = vld [vmem:[%s3 + $0x368] sm:$0xff]
  %v7852 = vld [vmem:[%s3 + $0x370] sm:$0xff]
  %v7853 = vld [vmem:[%s3 + $0x378] sm:$0xff]
  %v7854 = vld [vmem:[%s3 + $0x380] sm:$0xff]
  %v7855 = vld [vmem:[%s3 + $0x388] sm:$0xff]
  %v7856 = vld [vmem:[%s3 + $0x390] sm:$0xff]
  %v7857 = vld [vmem:[%s3 + $0x398] sm:$0xff]
  %v7858 = vld [vmem:[%s3 + $0x3a0] sm:$0xff]
  %v7859 = vld [vmem:[%s3 + $0x3a8] sm:$0xff]
  %v7860 = vld [vmem:[%s3 + $0x3b0] sm:$0xff]
  %v7861 = vld [vmem:[%s3 + $0x3b8] sm:$0xff]
  %v7862 = vld [vmem:[%s3 + $0x3c0] sm:$0xff]
  %v7863 = vld [vmem:[%s3 + $0x3c8] sm:$0xff]
  %v7864 = vld [vmem:[%s3 + $0x3d0] sm:$0xff]
  %v7865 = vld [vmem:[%s3 + $0x3d8] sm:$0xff]
  %v7866 = vld [vmem:[%s3 + $0x3e0] sm:$0xff]
  %v7867 = vld [vmem:[%s3 + $0x3e8] sm:$0xff]
  %v7868 = vld [vmem:[%s3 + $0x3f0] sm:$0xff]
  %v7869 = vld [vmem:[%s3 + $0x3f8] sm:$0xff]
  %v7998 = vunpack.c.l.b16 %v7742
  %v7999 = vunpack.c.h.b16 %v7742
  %v8000 = vunpack.c.l.b16 %v7743
  %v8001 = vunpack.c.h.b16 %v7743
  %v8002 = vunpack.c.l.b16 %v7744
  %v8003 = vunpack.c.h.b16 %v7744
  %v8004 = vunpack.c.l.b16 %v7745
  %v8005 = vunpack.c.h.b16 %v7745
  %v8006 = vunpack.c.l.b16 %v7746
  %v8007 = vunpack.c.h.b16 %v7746
  %v8008 = vunpack.c.l.b16 %v7747
  %v8009 = vunpack.c.h.b16 %v7747
  %v8010 = vunpack.c.l.b16 %v7748
  %v8011 = vunpack.c.h.b16 %v7748
  %v8012 = vunpack.c.l.b16 %v7749
  %v8013 = vunpack.c.h.b16 %v7749
  %v8014 = vunpack.c.l.b16 %v7750
  %v8015 = vunpack.c.h.b16 %v7750
  %v8016 = vunpack.c.l.b16 %v7751
  %v8017 = vunpack.c.h.b16 %v7751
  %v8018 = vunpack.c.l.b16 %v7752
  %v8019 = vunpack.c.h.b16 %v7752
  %v8020 = vunpack.c.l.b16 %v7753
  %v8021 = vunpack.c.h.b16 %v7753
  %v8022 = vunpack.c.l.b16 %v7754
  %v8023 = vunpack.c.h.b16 %v7754
  %v8024 = vunpack.c.l.b16 %v7755
  %v8025 = vunpack.c.h.b16 %v7755
  %v8026 = vunpack.c.l.b16 %v7756
  %v8027 = vunpack.c.h.b16 %v7756
  %v8028 = vunpack.c.l.b16 %v7757
  %v8029 = vunpack.c.h.b16 %v7757
  %v8030 = vunpack.c.l.b16 %v7758
  %v8031 = vunpack.c.h.b16 %v7758
  %v8032 = vunpack.c.l.b16 %v7759
  %v8033 = vunpack.c.h.b16 %v7759
  %v8034 = vunpack.c.l.b16 %v7760
  %v8035 = vunpack.c.h.b16 %v7760
  %v8036 = vunpack.c.l.b16 %v7761
  %v8037 = vunpack.c.h.b16 %v7761
  %v8038 = vunpack.c.l.b16 %v7762
  %v8039 = vunpack.c.h.b16 %v7762
  %v8040 = vunpack.c.l.b16 %v7763
  %v8041 = vunpack.c.h.b16 %v7763
  %v8042 = vunpack.c.l.b16 %v7764
  %v8043 = vunpack.c.h.b16 %v7764
  %v8044 = vunpack.c.l.b16 %v7765
  %v8045 = vunpack.c.h.b16 %v7765
  %v8046 = vunpack.c.l.b16 %v7766
  %v8047 = vunpack.c.h.b16 %v7766
  %v8048 = vunpack.c.l.b16 %v7767
  %v8049 = vunpack.c.h.b16 %v7767
  %v8050 = vunpack.c.l.b16 %v7768
  %v8051 = vunpack.c.h.b16 %v7768
  %v8052 = vunpack.c.l.b16 %v7769
  %v8053 = vunpack.c.h.b16 %v7769
  %v8054 = vunpack.c.l.b16 %v7770
  %v8055 = vunpack.c.h.b16 %v7770
  %v8056 = vunpack.c.l.b16 %v7771
  %v8057 = vunpack.c.h.b16 %v7771
  %v8058 = vunpack.c.l.b16 %v7772
  %v8059 = vunpack.c.h.b16 %v7772
  %v8060 = vunpack.c.l.b16 %v7773
  %v8061 = vunpack.c.h.b16 %v7773
  %v8062 = vunpack.c.l.b16 %v7774
  %v8063 = vunpack.c.h.b16 %v7774
  %v8064 = vunpack.c.l.b16 %v7775
  %v8065 = vunpack.c.h.b16 %v7775
  %v8066 = vunpack.c.l.b16 %v7776
  %v8067 = vunpack.c.h.b16 %v7776
  %v8068 = vunpack.c.l.b16 %v7777
  %v8069 = vunpack.c.h.b16 %v7777
  %v8070 = vunpack.c.l.b16 %v7778
  %v8071 = vunpack.c.h.b16 %v7778
  %v8072 = vunpack.c.l.b16 %v7779
  %v8073 = vunpack.c.h.b16 %v7779
  %v8074 = vunpack.c.l.b16 %v7780
  %v8075 = vunpack.c.h.b16 %v7780
  %v8076 = vunpack.c.l.b16 %v7781
  %v8077 = vunpack.c.h.b16 %v7781
  %v8078 = vunpack.c.l.b16 %v7782
  %v8079 = vunpack.c.h.b16 %v7782
  %v8080 = vunpack.c.l.b16 %v7783
  %v8081 = vunpack.c.h.b16 %v7783
  %v8082 = vunpack.c.l.b16 %v7784
  %v8083 = vunpack.c.h.b16 %v7784
  %v8084 = vunpack.c.l.b16 %v7785
  %v8085 = vunpack.c.h.b16 %v7785
  %v8086 = vunpack.c.l.b16 %v7786
  %v8087 = vunpack.c.h.b16 %v7786
  %v8088 = vunpack.c.l.b16 %v7787
  %v8089 = vunpack.c.h.b16 %v7787
  %v8090 = vunpack.c.l.b16 %v7788
  %v8091 = vunpack.c.h.b16 %v7788
  %v8092 = vunpack.c.l.b16 %v7789
  %v8093 = vunpack.c.h.b16 %v7789
  %v8094 = vunpack.c.l.b16 %v7790
  %v8095 = vunpack.c.h.b16 %v7790
  %v8096 = vunpack.c.l.b16 %v7791
  %v8097 = vunpack.c.h.b16 %v7791
  %v8098 = vunpack.c.l.b16 %v7792
  %v8099 = vunpack.c.h.b16 %v7792
  %v8100 = vunpack.c.l.b16 %v7793
  %v8101 = vunpack.c.h.b16 %v7793
  %v8102 = vunpack.c.l.b16 %v7794
  %v8103 = vunpack.c.h.b16 %v7794
  %v8104 = vunpack.c.l.b16 %v7795
  %v8105 = vunpack.c.h.b16 %v7795
  %v8106 = vunpack.c.l.b16 %v7796
  %v8107 = vunpack.c.h.b16 %v7796
  %v8108 = vunpack.c.l.b16 %v7797
  %v8109 = vunpack.c.h.b16 %v7797
  %v8110 = vunpack.c.l.b16 %v7798
  %v8111 = vunpack.c.h.b16 %v7798
  %v8112 = vunpack.c.l.b16 %v7799
  %v8113 = vunpack.c.h.b16 %v7799
  %v8114 = vunpack.c.l.b16 %v7800
  %v8115 = vunpack.c.h.b16 %v7800
  %v8116 = vunpack.c.l.b16 %v7801
  %v8117 = vunpack.c.h.b16 %v7801
  %v8118 = vunpack.c.l.b16 %v7802
  %v8119 = vunpack.c.h.b16 %v7802
  %v8120 = vunpack.c.l.b16 %v7803
  %v8121 = vunpack.c.h.b16 %v7803
  %v8122 = vunpack.c.l.b16 %v7804
  %v8123 = vunpack.c.h.b16 %v7804
  %v8124 = vunpack.c.l.b16 %v7805
  %v8125 = vunpack.c.h.b16 %v7805
  %v8126 = vunpack.c.l.b16 %v7806
  %v8127 = vunpack.c.h.b16 %v7806
  %v8128 = vunpack.c.l.b16 %v7807
  %v8129 = vunpack.c.h.b16 %v7807
  %v8130 = vunpack.c.l.b16 %v7808
  %v8131 = vunpack.c.h.b16 %v7808
  %v8132 = vunpack.c.l.b16 %v7809
  %v8133 = vunpack.c.h.b16 %v7809
  %v8134 = vunpack.c.l.b16 %v7810
  %v8135 = vunpack.c.h.b16 %v7810
  %v8136 = vunpack.c.l.b16 %v7811
  %v8137 = vunpack.c.h.b16 %v7811
  %v8138 = vunpack.c.l.b16 %v7812
  %v8139 = vunpack.c.h.b16 %v7812
  %v8140 = vunpack.c.l.b16 %v7813
  %v8141 = vunpack.c.h.b16 %v7813
  %v8142 = vunpack.c.l.b16 %v7814
  %v8143 = vunpack.c.h.b16 %v7814
  %v8144 = vunpack.c.l.b16 %v7815
  %v8145 = vunpack.c.h.b16 %v7815
  %v8146 = vunpack.c.l.b16 %v7816
  %v8147 = vunpack.c.h.b16 %v7816
  %v8148 = vunpack.c.l.b16 %v7817
  %v8149 = vunpack.c.h.b16 %v7817
  %v8150 = vunpack.c.l.b16 %v7818
  %v8151 = vunpack.c.h.b16 %v7818
  %v8152 = vunpack.c.l.b16 %v7819
  %v8153 = vunpack.c.h.b16 %v7819
  %v8154 = vunpack.c.l.b16 %v7820
  %v8155 = vunpack.c.h.b16 %v7820
  %v8156 = vunpack.c.l.b16 %v7821
  %v8157 = vunpack.c.h.b16 %v7821
  %v8158 = vunpack.c.l.b16 %v7822
  %v8159 = vunpack.c.h.b16 %v7822
  %v8160 = vunpack.c.l.b16 %v7823
  %v8161 = vunpack.c.h.b16 %v7823
  %v8162 = vunpack.c.l.b16 %v7824
  %v8163 = vunpack.c.h.b16 %v7824
  %v8164 = vunpack.c.l.b16 %v7825
  %v8165 = vunpack.c.h.b16 %v7825
  %v8166 = vunpack.c.l.b16 %v7826
  %v8167 = vunpack.c.h.b16 %v7826
  %v8168 = vunpack.c.l.b16 %v7827
  %v8169 = vunpack.c.h.b16 %v7827
  %v8170 = vunpack.c.l.b16 %v7828
  %v8171 = vunpack.c.h.b16 %v7828
  %v8172 = vunpack.c.l.b16 %v7829
  %v8173 = vunpack.c.h.b16 %v7829
  %v8174 = vunpack.c.l.b16 %v7830
  %v8175 = vunpack.c.h.b16 %v7830
  %v8176 = vunpack.c.l.b16 %v7831
  %v8177 = vunpack.c.h.b16 %v7831
  %v8178 = vunpack.c.l.b16 %v7832
  %v8179 = vunpack.c.h.b16 %v7832
  %v8180 = vunpack.c.l.b16 %v7833
  %v8181 = vunpack.c.h.b16 %v7833
  %v8182 = vunpack.c.l.b16 %v7834
  %v8183 = vunpack.c.h.b16 %v7834
  %v8184 = vunpack.c.l.b16 %v7835
  %v8185 = vunpack.c.h.b16 %v7835
  %v8186 = vunpack.c.l.b16 %v7836
  %v8187 = vunpack.c.h.b16 %v7836
  %v8188 = vunpack.c.l.b16 %v7837
  %v8189 = vunpack.c.h.b16 %v7837
  %v8190 = vunpack.c.l.b16 %v7838
  %v8191 = vunpack.c.h.b16 %v7838
  %v8192 = vunpack.c.l.b16 %v7839
  %v8193 = vunpack.c.h.b16 %v7839
  %v8194 = vunpack.c.l.b16 %v7840
  %v8195 = vunpack.c.h.b16 %v7840
  %v8196 = vunpack.c.l.b16 %v7841
  %v8197 = vunpack.c.h.b16 %v7841
  %v8198 = vunpack.c.l.b16 %v7842
  %v8199 = vunpack.c.h.b16 %v7842
  %v8200 = vunpack.c.l.b16 %v7843
  %v8201 = vunpack.c.h.b16 %v7843
  %v8202 = vunpack.c.l.b16 %v7844
  %v8203 = vunpack.c.h.b16 %v7844
  %v8204 = vunpack.c.l.b16 %v7845
  %v8205 = vunpack.c.h.b16 %v7845
  %v8206 = vunpack.c.l.b16 %v7846
  %v8207 = vunpack.c.h.b16 %v7846
  %v8208 = vunpack.c.l.b16 %v7847
  %v8209 = vunpack.c.h.b16 %v7847
  %v8210 = vunpack.c.l.b16 %v7848
  %v8211 = vunpack.c.h.b16 %v7848
  %v8212 = vunpack.c.l.b16 %v7849
  %v8213 = vunpack.c.h.b16 %v7849
  %v8214 = vunpack.c.l.b16 %v7850
  %v8215 = vunpack.c.h.b16 %v7850
  %v8216 = vunpack.c.l.b16 %v7851
  %v8217 = vunpack.c.h.b16 %v7851
  %v8218 = vunpack.c.l.b16 %v7852
  %v8219 = vunpack.c.h.b16 %v7852
  %v8220 = vunpack.c.l.b16 %v7853
  %v8221 = vunpack.c.h.b16 %v7853
  %v8222 = vunpack.c.l.b16 %v7854
  %v8223 = vunpack.c.h.b16 %v7854
  %v8224 = vunpack.c.l.b16 %v7855
  %v8225 = vunpack.c.h.b16 %v7855
  %v8226 = vunpack.c.l.b16 %v7856
  %v8227 = vunpack.c.h.b16 %v7856
  %v8228 = vunpack.c.l.b16 %v7857
  %v8229 = vunpack.c.h.b16 %v7857
  %v8230 = vunpack.c.l.b16 %v7858
  %v8231 = vunpack.c.h.b16 %v7858
  %v8232 = vunpack.c.l.b16 %v7859
  %v8233 = vunpack.c.h.b16 %v7859
  %v8234 = vunpack.c.l.b16 %v7860
  %v8235 = vunpack.c.h.b16 %v7860
  %v8236 = vunpack.c.l.b16 %v7861
  %v8237 = vunpack.c.h.b16 %v7861
  %v8238 = vunpack.c.l.b16 %v7862
  %v8239 = vunpack.c.h.b16 %v7862
  %v8240 = vunpack.c.l.b16 %v7863
  %v8241 = vunpack.c.h.b16 %v7863
  %v8242 = vunpack.c.l.b16 %v7864
  %v8243 = vunpack.c.h.b16 %v7864
  %v8244 = vunpack.c.l.b16 %v7865
  %v8245 = vunpack.c.h.b16 %v7865
  %v8246 = vunpack.c.l.b16 %v7866
  %v8247 = vunpack.c.h.b16 %v7866
  %v8248 = vunpack.c.l.b16 %v7867
  %v8249 = vunpack.c.h.b16 %v7867
  %v8250 = vunpack.c.l.b16 %v7868
  %v8251 = vunpack.c.h.b16 %v7868
  %v8252 = vunpack.c.l.b16 %v7869
  %v8253 = vunpack.c.h.b16 %v7869
  %v8254 = vpack.c.b16 %v8006, %v7998
  %v8255 = vpack.c.b16 %v8007, %v7999
  %v8256 = vpack.c.b16 %v8008, %v8000
  %v8257 = vpack.c.b16 %v8009, %v8001
  %v8258 = vpack.c.b16 %v8010, %v8002
  %v8259 = vpack.c.b16 %v8011, %v8003
  %v8260 = vpack.c.b16 %v8012, %v8004
  %v8261 = vpack.c.b16 %v8013, %v8005
  %v8262 = vpack.c.b16 %v8022, %v8014
  %v8263 = vpack.c.b16 %v8023, %v8015
  %v8264 = vpack.c.b16 %v8024, %v8016
  %v8265 = vpack.c.b16 %v8025, %v8017
  %v8266 = vpack.c.b16 %v8026, %v8018
  %v8267 = vpack.c.b16 %v8027, %v8019
  %v8268 = vpack.c.b16 %v8028, %v8020
  %v8269 = vpack.c.b16 %v8029, %v8021
  %v8270 = vpack.c.b16 %v8038, %v8030
  %v8271 = vpack.c.b16 %v8039, %v8031
  %v8272 = vpack.c.b16 %v8040, %v8032
  %v8273 = vpack.c.b16 %v8041, %v8033
  %v8274 = vpack.c.b16 %v8042, %v8034
  %v8275 = vpack.c.b16 %v8043, %v8035
  %v8276 = vpack.c.b16 %v8044, %v8036
  %v8277 = vpack.c.b16 %v8045, %v8037
  %v8278 = vpack.c.b16 %v8054, %v8046
  %v8279 = vpack.c.b16 %v8055, %v8047
  %v8280 = vpack.c.b16 %v8056, %v8048
  %v8281 = vpack.c.b16 %v8057, %v8049
  %v8282 = vpack.c.b16 %v8058, %v8050
  %v8283 = vpack.c.b16 %v8059, %v8051
  %v8284 = vpack.c.b16 %v8060, %v8052
  %v8285 = vpack.c.b16 %v8061, %v8053
  %v8286 = vpack.c.b16 %v8070, %v8062
  %v8287 = vpack.c.b16 %v8071, %v8063
  %v8288 = vpack.c.b16 %v8072, %v8064
  %v8289 = vpack.c.b16 %v8073, %v8065
  %v8290 = vpack.c.b16 %v8074, %v8066
  %v8291 = vpack.c.b16 %v8075, %v8067
  %v8292 = vpack.c.b16 %v8076, %v8068
  %v8293 = vpack.c.b16 %v8077, %v8069
  %v8294 = vpack.c.b16 %v8086, %v8078
  %v8295 = vpack.c.b16 %v8087, %v8079
  %v8296 = vpack.c.b16 %v8088, %v8080
  %v8297 = vpack.c.b16 %v8089, %v8081
  %v8298 = vpack.c.b16 %v8090, %v8082
  %v8299 = vpack.c.b16 %v8091, %v8083
  %v8300 = vpack.c.b16 %v8092, %v8084
  %v8301 = vpack.c.b16 %v8093, %v8085
  %v8302 = vpack.c.b16 %v8102, %v8094
  %v8303 = vpack.c.b16 %v8103, %v8095
  %v8304 = vpack.c.b16 %v8104, %v8096
  %v8305 = vpack.c.b16 %v8105, %v8097
  %v8306 = vpack.c.b16 %v8106, %v8098
  %v8307 = vpack.c.b16 %v8107, %v8099
  %v8308 = vpack.c.b16 %v8108, %v8100
  %v8309 = vpack.c.b16 %v8109, %v8101
  %v8310 = vpack.c.b16 %v8118, %v8110
  %v8311 = vpack.c.b16 %v8119, %v8111
  %v8312 = vpack.c.b16 %v8120, %v8112
  %v8313 = vpack.c.b16 %v8121, %v8113
  %v8314 = vpack.c.b16 %v8122, %v8114
  %v8315 = vpack.c.b16 %v8123, %v8115
  %v8316 = vpack.c.b16 %v8124, %v8116
  %v8317 = vpack.c.b16 %v8125, %v8117
  %v8318 = vpack.c.b16 %v8134, %v8126
  %v8319 = vpack.c.b16 %v8135, %v8127
  %v8320 = vpack.c.b16 %v8136, %v8128
  %v8321 = vpack.c.b16 %v8137, %v8129
  %v8322 = vpack.c.b16 %v8138, %v8130
  %v8323 = vpack.c.b16 %v8139, %v8131
  %v8324 = vpack.c.b16 %v8140, %v8132
  %v8325 = vpack.c.b16 %v8141, %v8133
  %v8326 = vpack.c.b16 %v8150, %v8142
  %v8327 = vpack.c.b16 %v8151, %v8143
  %v8328 = vpack.c.b16 %v8152, %v8144
  %v8329 = vpack.c.b16 %v8153, %v8145
  %v8330 = vpack.c.b16 %v8154, %v8146
  %v8331 = vpack.c.b16 %v8155, %v8147
  %v8332 = vpack.c.b16 %v8156, %v8148
  %v8333 = vpack.c.b16 %v8157, %v8149
  %v8334 = vpack.c.b16 %v8166, %v8158
  %v8335 = vpack.c.b16 %v8167, %v8159
  %v8336 = vpack.c.b16 %v8168, %v8160
  %v8337 = vpack.c.b16 %v8169, %v8161
  %v8338 = vpack.c.b16 %v8170, %v8162
  %v8339 = vpack.c.b16 %v8171, %v8163
  %v8340 = vpack.c.b16 %v8172, %v8164
  %v8341 = vpack.c.b16 %v8173, %v8165
  %v8342 = vpack.c.b16 %v8182, %v8174
  %v8343 = vpack.c.b16 %v8183, %v8175
  %v8344 = vpack.c.b16 %v8184, %v8176
  %v8345 = vpack.c.b16 %v8185, %v8177
  %v8346 = vpack.c.b16 %v8186, %v8178
  %v8347 = vpack.c.b16 %v8187, %v8179
  %v8348 = vpack.c.b16 %v8188, %v8180
  %v8349 = vpack.c.b16 %v8189, %v8181
  %v8350 = vpack.c.b16 %v8198, %v8190
  %v8351 = vpack.c.b16 %v8199, %v8191
  %v8352 = vpack.c.b16 %v8200, %v8192
  %v8353 = vpack.c.b16 %v8201, %v8193
  %v8354 = vpack.c.b16 %v8202, %v8194
  %v8355 = vpack.c.b16 %v8203, %v8195
  %v8356 = vpack.c.b16 %v8204, %v8196
  %v8357 = vpack.c.b16 %v8205, %v8197
  %v8358 = vpack.c.b16 %v8214, %v8206
  %v8359 = vpack.c.b16 %v8215, %v8207
  %v8360 = vpack.c.b16 %v8216, %v8208
  %v8361 = vpack.c.b16 %v8217, %v8209
  %v8362 = vpack.c.b16 %v8218, %v8210
  %v8363 = vpack.c.b16 %v8219, %v8211
  %v8364 = vpack.c.b16 %v8220, %v8212
  %v8365 = vpack.c.b16 %v8221, %v8213
  %v8366 = vpack.c.b16 %v8230, %v8222
  %v8367 = vpack.c.b16 %v8231, %v8223
  %v8368 = vpack.c.b16 %v8232, %v8224
  %v8369 = vpack.c.b16 %v8233, %v8225
  %v8370 = vpack.c.b16 %v8234, %v8226
  %v8371 = vpack.c.b16 %v8235, %v8227
  %v8372 = vpack.c.b16 %v8236, %v8228
  %v8373 = vpack.c.b16 %v8237, %v8229
  %v8374 = vpack.c.b16 %v8246, %v8238
  %v8375 = vpack.c.b16 %v8247, %v8239
  %v8376 = vpack.c.b16 %v8248, %v8240
  %v8377 = vpack.c.b16 %v8249, %v8241
  %v8378 = vpack.c.b16 %v8250, %v8242
  %v8379 = vpack.c.b16 %v8251, %v8243
  %v8380 = vpack.c.b16 %v8252, %v8244
  %v8381 = vpack.c.b16 %v8253, %v8245
  %8510 = vmatprep.subr.bf16.mxu0 %v8311
  %8511 = vmatpush1.bf16.msra.mxu0 %v8310
  %8512 = vmatprep.subr.bf16.mxu0 %v8303
  %8513 = vmatpush1.bf16.msra.mxu0 %v8302
  %8514 = vmatprep.subr.bf16.mxu0 %v8295
  %8515 = vmatpush1.bf16.msra.mxu0 %v8294
  %8516 = vmatprep.subr.bf16.mxu0 %v8287
  %8517 = vmatpush1.bf16.msra.mxu0 %v8286
  %8518 = vmatprep.subr.bf16.mxu0 %v8279
  %8519 = vmatpush1.bf16.msra.mxu0 %v8278
  %8520 = vmatprep.subr.bf16.mxu0 %v8271
  %8521 = vmatpush1.bf16.msra.mxu0 %v8270
  %8522 = vmatprep.subr.bf16.mxu0 %v8263
  %8523 = vmatpush1.bf16.msra.mxu0 %v8262
  %8524 = vmatprep.subr.bf16.mxu0 %v8255
  %8525 = vmatpush1.bf16.msra.mxu0 %v8254
  %8526 = vmatprep.subr.bf16.mxu0 %v8375
  %8527 = vmatpush2.bf16.msra.mxu0 %v8374
  %8528 = vmatprep.subr.bf16.mxu0 %v8367
  %8529 = vmatpush2.bf16.msra.mxu0 %v8366
  %8530 = vmatprep.subr.bf16.mxu0 %v8359
  %8531 = vmatpush2.bf16.msra.mxu0 %v8358
  %8532 = vmatprep.subr.bf16.mxu0 %v8351
  %8533 = vmatpush2.bf16.msra.mxu0 %v8350
  %8534 = vmatprep.subr.bf16.mxu0 %v8343
  %8535 = vmatpush2.bf16.msra.mxu0 %v8342
  %8536 = vmatprep.subr.bf16.mxu0 %v8335
  %8537 = vmatpush2.bf16.msra.mxu0 %v8334
  %8538 = vmatprep.subr.bf16.mxu0 %v8327
  %8539 = vmatpush2.bf16.msra.mxu0 %v8326
  %8540 = vmatprep.subr.bf16.mxu0 %v8319
  %8541 = vmatpush2.bf16.msra.mxu0 %v8318
  %8542 = vmatprep.mubr.bf16.mxu0 %v7741
  %8543 = vmatmul.mubr.bf16.gmra.mxu0 %v7435
  %v8544 = vpop.f32.mrf.mxu0
  %v8545 = vadd.f32 0.0, %v8544
  %v8546 = vpop.f32.mrf.mxu0
  %v8547 = vadd.f32 0.0, %v8546
  %v8548 = vpop.f32.mrf.mxu0
  %v8549 = vpop.f32.mrf.mxu0
  %8550 = vdwg.mxu0
  %8551 = vmatprep.subr.bf16.mxu0 %v8313
  %8552 = vmatpush1.bf16.msra.mxu0 %v8312
  %8553 = vmatprep.subr.bf16.mxu0 %v8305
  %8554 = vmatpush1.bf16.msra.mxu0 %v8304
  %8555 = vmatprep.subr.bf16.mxu0 %v8297
  %8556 = vmatpush1.bf16.msra.mxu0 %v8296
  %8557 = vmatprep.subr.bf16.mxu0 %v8289
  %8558 = vmatpush1.bf16.msra.mxu0 %v8288
  %8559 = vmatprep.subr.bf16.mxu0 %v8281
  %8560 = vmatpush1.bf16.msra.mxu0 %v8280
  %8561 = vmatprep.subr.bf16.mxu0 %v8273
  %8562 = vmatpush1.bf16.msra.mxu0 %v8272
  %8563 = vmatprep.subr.bf16.mxu0 %v8265
  %8564 = vmatpush1.bf16.msra.mxu0 %v8264
  %8565 = vmatprep.subr.bf16.mxu0 %v8257
  %8566 = vmatpush1.bf16.msra.mxu0 %v8256
  %8567 = vmatprep.subr.bf16.mxu0 %v8377
  %8568 = vmatpush2.bf16.msra.mxu0 %v8376
  %8569 = vmatprep.subr.bf16.mxu0 %v8369
  %8570 = vmatpush2.bf16.msra.mxu0 %v8368
  %8571 = vmatprep.subr.bf16.mxu0 %v8361
  %8572 = vmatpush2.bf16.msra.mxu0 %v8360
  %8573 = vmatprep.subr.bf16.mxu0 %v8353
  %8574 = vmatpush2.bf16.msra.mxu0 %v8352
  %8575 = vmatprep.subr.bf16.mxu0 %v8345
  %8576 = vmatpush2.bf16.msra.mxu0 %v8344
  %8577 = vmatprep.subr.bf16.mxu0 %v8337
  %8578 = vmatpush2.bf16.msra.mxu0 %v8336
  %8579 = vmatprep.subr.bf16.mxu0 %v8329
  %8580 = vmatpush2.bf16.msra.mxu0 %v8328
  %8581 = vmatprep.subr.bf16.mxu0 %v8321
  %8582 = vmatpush2.bf16.msra.mxu0 %v8320
  %8583 = vmatprep.mubr.bf16.mxu0 %v7741
  %8584 = vmatmul.mubr.bf16.gmra.mxu0 %v7435
  %v8585 = vpop.f32.mrf.mxu0
  %v8586 = vadd.f32 0.0, %v8585
  %v8587 = vpop.f32.mrf.mxu0
  %v8588 = vadd.f32 0.0, %v8587
  %v8589 = vpop.f32.mrf.mxu0
  %v8590 = vpop.f32.mrf.mxu0
  %8591 = vdwg.mxu0
  %8592 = vmatprep.subr.bf16.mxu0 %v8315
  %8593 = vmatpush1.bf16.msra.mxu0 %v8314
  %8594 = vmatprep.subr.bf16.mxu0 %v8307
  %8595 = vmatpush1.bf16.msra.mxu0 %v8306
  %8596 = vmatprep.subr.bf16.mxu0 %v8299
  %8597 = vmatpush1.bf16.msra.mxu0 %v8298
  %8598 = vmatprep.subr.bf16.mxu0 %v8291
  %8599 = vmatpush1.bf16.msra.mxu0 %v8290
  %8600 = vmatprep.subr.bf16.mxu0 %v8283
  %8601 = vmatpush1.bf16.msra.mxu0 %v8282
  %8602 = vmatprep.subr.bf16.mxu0 %v8275
  %8603 = vmatpush1.bf16.msra.mxu0 %v8274
  %8604 = vmatprep.subr.bf16.mxu0 %v8267
  %8605 = vmatpush1.bf16.msra.mxu0 %v8266
  %8606 = vmatprep.subr.bf16.mxu0 %v8259
  %8607 = vmatpush1.bf16.msra.mxu0 %v8258
  %8608 = vmatprep.subr.bf16.mxu0 %v8379
  %8609 = vmatpush2.bf16.msra.mxu0 %v8378
  %8610 = vmatprep.subr.bf16.mxu0 %v8371
  %8611 = vmatpush2.bf16.msra.mxu0 %v8370
  %8612 = vmatprep.subr.bf16.mxu0 %v8363
  %8613 = vmatpush2.bf16.msra.mxu0 %v8362
  %8614 = vmatprep.subr.bf16.mxu0 %v8355
  %8615 = vmatpush2.bf16.msra.mxu0 %v8354
  %8616 = vmatprep.subr.bf16.mxu0 %v8347
  %8617 = vmatpush2.bf16.msra.mxu0 %v8346
  %8618 = vmatprep.subr.bf16.mxu0 %v8339
  %8619 = vmatpush2.bf16.msra.mxu0 %v8338
  %8620 = vmatprep.subr.bf16.mxu0 %v8331
  %8621 = vmatpush2.bf16.msra.mxu0 %v8330
  %8622 = vmatprep.subr.bf16.mxu0 %v8323
  %8623 = vmatpush2.bf16.msra.mxu0 %v8322
  %8624 = vmatprep.mubr.bf16.mxu0 %v7741
  %8625 = vmatmul.mubr.bf16.gmra.mxu0 %v7435
  %v8626 = vpop.f32.mrf.mxu0
  %v8627 = vadd.f32 0.0, %v8626
  %v8628 = vpop.f32.mrf.mxu0
  %v8629 = vadd.f32 0.0, %v8628
  %v8630 = vpop.f32.mrf.mxu0
  %v8631 = vpop.f32.mrf.mxu0
  %8632 = vdwg.mxu0
  %8633 = vmatprep.subr.bf16.mxu0 %v8317
  %8634 = vmatpush1.bf16.msra.mxu0 %v8316
  %8635 = vmatprep.subr.bf16.mxu0 %v8309
  %8636 = vmatpush1.bf16.msra.mxu0 %v8308
  %8637 = vmatprep.subr.bf16.mxu0 %v8301
  %8638 = vmatpush1.bf16.msra.mxu0 %v8300
  %8639 = vmatprep.subr.bf16.mxu0 %v8293
  %8640 = vmatpush1.bf16.msra.mxu0 %v8292
  %8641 = vmatprep.subr.bf16.mxu0 %v8285
  %8642 = vmatpush1.bf16.msra.mxu0 %v8284
  %8643 = vmatprep.subr.bf16.mxu0 %v8277
  %8644 = vmatpush1.bf16.msra.mxu0 %v8276
  %8645 = vmatprep.subr.bf16.mxu0 %v8269
  %8646 = vmatpush1.bf16.msra.mxu0 %v8268
  %8647 = vmatprep.subr.bf16.mxu0 %v8261
  %8648 = vmatpush1.bf16.msra.mxu0 %v8260
  %8649 = vmatprep.subr.bf16.mxu0 %v8381
  %8650 = vmatpush2.bf16.msra.mxu0 %v8380
  %8651 = vmatprep.subr.bf16.mxu0 %v8373
  %8652 = vmatpush2.bf16.msra.mxu0 %v8372
  %8653 = vmatprep.subr.bf16.mxu0 %v8365
  %8654 = vmatpush2.bf16.msra.mxu0 %v8364
  %8655 = vmatprep.subr.bf16.mxu0 %v8357
  %8656 = vmatpush2.bf16.msra.mxu0 %v8356
  %8657 = vmatprep.subr.bf16.mxu0 %v8349
  %8658 = vmatpush2.bf16.msra.mxu0 %v8348
  %8659 = vmatprep.subr.bf16.mxu0 %v8341
  %8660 = vmatpush2.bf16.msra.mxu0 %v8340
  %8661 = vmatprep.subr.bf16.mxu0 %v8333
  %8662 = vmatpush2.bf16.msra.mxu0 %v8332
  %8663 = vmatprep.subr.bf16.mxu0 %v8325
  %8664 = vmatpush2.bf16.msra.mxu0 %v8324
  %8665 = vmatprep.mubr.bf16.mxu0 %v7741
  %8666 = vmatmul.mubr.bf16.gmra.mxu0 %v7435
  %v8667 = vpop.f32.mrf.mxu0
  %v8668 = vadd.f32 0.0, %v8667
  %v8669 = vpop.f32.mrf.mxu0
  %v8670 = vadd.f32 0.0, %v8669
  %v8671 = vpop.f32.mrf.mxu0
  %v8672 = vpop.f32.mrf.mxu0
  %8673 = vdwg.mxu0
  %8675 = vset.pattern.permute.xlu0 0
  %8676 = vperm.xlu0 %8675, %v7740
  %v8677 = vpop.permute.xlu0 %8676
  %v8679 = vmul.f32 %v8677, %v977
  %v8680 = vmul.f32 %v8677, %v981
  %v8681 = vmul.f32 %v8677, %v985
  %v8682 = vmul.f32 %v8677, %v989
  %v8683 = vadd.f32 %v8545, %v8679
  %v8684 = vadd.f32 %v8547, %v8680
  %v8685 = vadd.f32 %v8586, %v8681
  %v8686 = vadd.f32 %v8588, %v8682
  %v8687 = vadd.f32 %v8683, %v1006
  %v8688 = vadd.f32 %v8684, %v1010
  %v8689 = vadd.f32 %v8685, %v1014
  %v8690 = vadd.f32 %v8686, %v1018
  %v8691 = vmul.f32 %v8687, 0.5
  %v8692 = vmul.f32 %v8688, 0.5
  %v8693 = vmul.f32 %v8689, 0.5
  %v8694 = vtanh.pop %v8691
  %v8695 = vtanh.pop %v8692
  %v8696 = vtanh.pop %v8693
  %v8697 = vmul.f32 %v8694, 0.5
  %v8698 = vmul.f32 %v8695, 0.5
  %v8699 = vmul.f32 %v8696, 0.5
  %v8700 = vadd.f32 %v8697, 0.5
  %v8701 = vadd.f32 %v8698, 0.5
  %v8702 = vadd.f32 %v8699, 0.5
  %v8703 = vtanh.pop %v8690
  %v8704 = vmul.f32 %v8701, %v7432
  %v8705 = vmul.f32 %v8700, %v8703
  %v8706 = vadd.f32 %v8704, %v8705
  %v8707 = vtanh.pop %v8706
  %v8708 = vmul.f32 %v8702, %v8707
  %v8709 = vpack.c.bf16 %v8708, %v8708
  %v8710 = vld [vmem:[%s4] sm:$0xff]
  %v8711 = vld [vmem:[%s4 + $0x8] sm:$0xff]
  %v8712 = vld [vmem:[%s4 + $0x10] sm:$0xff]
  %v8713 = vld [vmem:[%s4 + $0x18] sm:$0xff]
  %v8714 = vld [vmem:[%s4 + $0x20] sm:$0xff]
  %v8715 = vld [vmem:[%s4 + $0x28] sm:$0xff]
  %v8716 = vld [vmem:[%s4 + $0x30] sm:$0xff]
  %v8717 = vld [vmem:[%s4 + $0x38] sm:$0xff]
  %v8718 = vld [vmem:[%s4 + $0x40] sm:$0xff]
  %v8719 = vld [vmem:[%s4 + $0x48] sm:$0xff]
  %v8720 = vld [vmem:[%s4 + $0x50] sm:$0xff]
  %v8721 = vld [vmem:[%s4 + $0x58] sm:$0xff]
  %v8722 = vld [vmem:[%s4 + $0x60] sm:$0xff]
  %v8723 = vld [vmem:[%s4 + $0x68] sm:$0xff]
  %v8724 = vld [vmem:[%s4 + $0x70] sm:$0xff]
  %v8725 = vld [vmem:[%s4 + $0x78] sm:$0xff]
  %v8726 = vld [vmem:[%s4 + $0x80] sm:$0xff]
  %v8727 = vld [vmem:[%s4 + $0x88] sm:$0xff]
  %v8728 = vld [vmem:[%s4 + $0x90] sm:$0xff]
  %v8729 = vld [vmem:[%s4 + $0x98] sm:$0xff]
  %v8730 = vld [vmem:[%s4 + $0xa0] sm:$0xff]
  %v8731 = vld [vmem:[%s4 + $0xa8] sm:$0xff]
  %v8732 = vld [vmem:[%s4 + $0xb0] sm:$0xff]
  %v8733 = vld [vmem:[%s4 + $0xb8] sm:$0xff]
  %v8734 = vld [vmem:[%s4 + $0xc0] sm:$0xff]
  %v8735 = vld [vmem:[%s4 + $0xc8] sm:$0xff]
  %v8736 = vld [vmem:[%s4 + $0xd0] sm:$0xff]
  %v8737 = vld [vmem:[%s4 + $0xd8] sm:$0xff]
  %v8738 = vld [vmem:[%s4 + $0xe0] sm:$0xff]
  %v8739 = vld [vmem:[%s4 + $0xe8] sm:$0xff]
  %v8740 = vld [vmem:[%s4 + $0xf0] sm:$0xff]
  %v8741 = vld [vmem:[%s4 + $0xf8] sm:$0xff]
  %v8774 = vunpack.c.l.b16 %v8710
  %v8775 = vunpack.c.h.b16 %v8710
  %v8776 = vunpack.c.l.b16 %v8711
  %v8777 = vunpack.c.h.b16 %v8711
  %v8778 = vunpack.c.l.b16 %v8712
  %v8779 = vunpack.c.h.b16 %v8712
  %v8780 = vunpack.c.l.b16 %v8713
  %v8781 = vunpack.c.h.b16 %v8713
  %v8782 = vunpack.c.l.b16 %v8714
  %v8783 = vunpack.c.h.b16 %v8714
  %v8784 = vunpack.c.l.b16 %v8715
  %v8785 = vunpack.c.h.b16 %v8715
  %v8786 = vunpack.c.l.b16 %v8716
  %v8787 = vunpack.c.h.b16 %v8716
  %v8788 = vunpack.c.l.b16 %v8717
  %v8789 = vunpack.c.h.b16 %v8717
  %v8790 = vunpack.c.l.b16 %v8718
  %v8791 = vunpack.c.h.b16 %v8718
  %v8792 = vunpack.c.l.b16 %v8719
  %v8793 = vunpack.c.h.b16 %v8719
  %v8794 = vunpack.c.l.b16 %v8720
  %v8795 = vunpack.c.h.b16 %v8720
  %v8796 = vunpack.c.l.b16 %v8721
  %v8797 = vunpack.c.h.b16 %v8721
  %v8798 = vunpack.c.l.b16 %v8722
  %v8799 = vunpack.c.h.b16 %v8722
  %v8800 = vunpack.c.l.b16 %v8723
  %v8801 = vunpack.c.h.b16 %v8723
  %v8802 = vunpack.c.l.b16 %v8724
  %v8803 = vunpack.c.h.b16 %v8724
  %v8804 = vunpack.c.l.b16 %v8725
  %v8805 = vunpack.c.h.b16 %v8725
  %v8806 = vunpack.c.l.b16 %v8726
  %v8807 = vunpack.c.h.b16 %v8726
  %v8808 = vunpack.c.l.b16 %v8727
  %v8809 = vunpack.c.h.b16 %v8727
  %v8810 = vunpack.c.l.b16 %v8728
  %v8811 = vunpack.c.h.b16 %v8728
  %v8812 = vunpack.c.l.b16 %v8729
  %v8813 = vunpack.c.h.b16 %v8729
  %v8814 = vunpack.c.l.b16 %v8730
  %v8815 = vunpack.c.h.b16 %v8730
  %v8816 = vunpack.c.l.b16 %v8731
  %v8817 = vunpack.c.h.b16 %v8731
  %v8818 = vunpack.c.l.b16 %v8732
  %v8819 = vunpack.c.h.b16 %v8732
  %v8820 = vunpack.c.l.b16 %v8733
  %v8821 = vunpack.c.h.b16 %v8733
  %v8822 = vunpack.c.l.b16 %v8734
  %v8823 = vunpack.c.h.b16 %v8734
  %v8824 = vunpack.c.l.b16 %v8735
  %v8825 = vunpack.c.h.b16 %v8735
  %v8826 = vunpack.c.l.b16 %v8736
  %v8827 = vunpack.c.h.b16 %v8736
  %v8828 = vunpack.c.l.b16 %v8737
  %v8829 = vunpack.c.h.b16 %v8737
  %v8830 = vunpack.c.l.b16 %v8738
  %v8831 = vunpack.c.h.b16 %v8738
  %v8832 = vunpack.c.l.b16 %v8739
  %v8833 = vunpack.c.h.b16 %v8739
  %v8834 = vunpack.c.l.b16 %v8740
  %v8835 = vunpack.c.h.b16 %v8740
  %v8836 = vunpack.c.l.b16 %v8741
  %v8837 = vunpack.c.h.b16 %v8741
  %v8838 = vpack.c.b16 %v8778, %v8774
  %v8839 = vpack.c.b16 %v8779, %v8775
  %v8840 = vpack.c.b16 %v8780, %v8776
  %v8841 = vpack.c.b16 %v8781, %v8777
  %v8842 = vpack.c.b16 %v8786, %v8782
  %v8843 = vpack.c.b16 %v8787, %v8783
  %v8844 = vpack.c.b16 %v8788, %v8784
  %v8845 = vpack.c.b16 %v8789, %v8785
  %v8846 = vpack.c.b16 %v8794, %v8790
  %v8847 = vpack.c.b16 %v8795, %v8791
  %v8848 = vpack.c.b16 %v8796, %v8792
  %v8849 = vpack.c.b16 %v8797, %v8793
  %v8850 = vpack.c.b16 %v8802, %v8798
  %v8851 = vpack.c.b16 %v8803, %v8799
  %v8852 = vpack.c.b16 %v8804, %v8800
  %v8853 = vpack.c.b16 %v8805, %v8801
  %v8854 = vpack.c.b16 %v8810, %v8806
  %v8855 = vpack.c.b16 %v8811, %v8807
  %v8856 = vpack.c.b16 %v8812, %v8808
  %v8857 = vpack.c.b16 %v8813, %v8809
  %v8858 = vpack.c.b16 %v8818, %v8814
  %v8859 = vpack.c.b16 %v8819, %v8815
  %v8860 = vpack.c.b16 %v8820, %v8816
  %v8861 = vpack.c.b16 %v8821, %v8817
  %v8862 = vpack.c.b16 %v8826, %v8822
  %v8863 = vpack.c.b16 %v8827, %v8823
  %v8864 = vpack.c.b16 %v8828, %v8824
  %v8865 = vpack.c.b16 %v8829, %v8825
  %v8866 = vpack.c.b16 %v8834, %v8830
  %v8867 = vpack.c.b16 %v8835, %v8831
  %v8868 = vpack.c.b16 %v8836, %v8832
  %v8869 = vpack.c.b16 %v8837, %v8833
  %8902 = vmatprep.subr.bf16.mxu0 %v8867
  %8903 = vmatpush1.bf16.msra.mxu0 %v8866
  %8904 = vmatprep.subr.bf16.mxu0 %v8863
  %8905 = vmatpush1.bf16.msra.mxu0 %v8862
  %8906 = vmatprep.subr.bf16.mxu0 %v8859
  %8907 = vmatpush1.bf16.msra.mxu0 %v8858
  %8908 = vmatprep.subr.bf16.mxu0 %v8855
  %8909 = vmatpush1.bf16.msra.mxu0 %v8854
  %8910 = vmatprep.subr.bf16.mxu0 %v8851
  %8911 = vmatpush1.bf16.msra.mxu0 %v8850
  %8912 = vmatprep.subr.bf16.mxu0 %v8847
  %8913 = vmatpush1.bf16.msra.mxu0 %v8846
  %8914 = vmatprep.subr.bf16.mxu0 %v8843
  %8915 = vmatpush1.bf16.msra.mxu0 %v8842
  %8916 = vmatprep.subr.bf16.mxu0 %v8839
  %8917 = vmatpush1.bf16.msra.mxu0 %v8838
  %8918 = vmatprep.subr.bf16.mxu0 0
  %8919 = vmatpush2.bf16.msra.mxu0 0
  %8920 = vmatprep.subr.bf16.mxu0 0
  %8921 = vmatpush2.bf16.msra.mxu0 0
  %8922 = vmatprep.subr.bf16.mxu0 0
  %8923 = vmatpush2.bf16.msra.mxu0 0
  %8924 = vmatprep.subr.bf16.mxu0 0
  %8925 = vmatpush2.bf16.msra.mxu0 0
  %8926 = vmatprep.subr.bf16.mxu0 0
  %8927 = vmatpush2.bf16.msra.mxu0 0
  %8928 = vmatprep.subr.bf16.mxu0 0
  %8929 = vmatpush2.bf16.msra.mxu0 0
  %8930 = vmatprep.subr.bf16.mxu0 0
  %8931 = vmatpush2.bf16.msra.mxu0 0
  %8932 = vmatprep.subr.bf16.mxu0 0
  %8933 = vmatpush2.bf16.msra.mxu0 0
  %8934 = vmatprep.mubr.bf16.mxu0 0
  %8935 = vmatmul.mubr.bf16.gmra.mxu0 %v8709
  %v8936 = vpop.f32.mrf.mxu0
  %v8937 = vadd.f32 0.0, %v8936
  %v8938 = vpop.f32.mrf.mxu0
  %v8939 = vadd.f32 0.0, %v8938
  %v8940 = vpop.f32.mrf.mxu0
  %v8941 = vpop.f32.mrf.mxu0
  %8942 = vdwg.mxu0
  %8943 = vmatprep.subr.bf16.mxu0 %v8869
  %8944 = vmatpush1.bf16.msra.mxu0 %v8868
  %8945 = vmatprep.subr.bf16.mxu0 %v8865
  %8946 = vmatpush1.bf16.msra.mxu0 %v8864
  %8947 = vmatprep.subr.bf16.mxu0 %v8861
  %8948 = vmatpush1.bf16.msra.mxu0 %v8860
  %8949 = vmatprep.subr.bf16.mxu0 %v8857
  %8950 = vmatpush1.bf16.msra.mxu0 %v8856
  %8951 = vmatprep.subr.bf16.mxu0 %v8853
  %8952 = vmatpush1.bf16.msra.mxu0 %v8852
  %8953 = vmatprep.subr.bf16.mxu0 %v8849
  %8954 = vmatpush1.bf16.msra.mxu0 %v8848
  %8955 = vmatprep.subr.bf16.mxu0 %v8845
  %8956 = vmatpush1.bf16.msra.mxu0 %v8844
  %8957 = vmatprep.subr.bf16.mxu0 %v8841
  %8958 = vmatpush1.bf16.msra.mxu0 %v8840
  %8959 = vmatprep.subr.bf16.mxu0 0
  %8960 = vmatpush2.bf16.msra.mxu0 0
  %8961 = vmatprep.subr.bf16.mxu0 0
  %8962 = vmatpush2.bf16.msra.mxu0 0
  %8963 = vmatprep.subr.bf16.mxu0 0
  %8964 = vmatpush2.bf16.msra.mxu0 0
  %8965 = vmatprep.subr.bf16.mxu0 0
  %8966 = vmatpush2.bf16.msra.mxu0 0
  %8967 = vmatprep.subr.bf16.mxu0 0
  %8968 = vmatpush2.bf16.msra.mxu0 0
  %8969 = vmatprep.subr.bf16.mxu0 0
  %8970 = vmatpush2.bf16.msra.mxu0 0
  %8971 = vmatprep.subr.bf16.mxu0 0
  %8972 = vmatpush2.bf16.msra.mxu0 0
  %8973 = vmatprep.subr.bf16.mxu0 0
  %8974 = vmatpush2.bf16.msra.mxu0 0
  %8975 = vmatprep.mubr.bf16.mxu0 0
  %8976 = vmatmul.mubr.bf16.gmra.mxu0 %v8709
  %v8977 = vpop.f32.mrf.mxu0
  %v8978 = vadd.f32 0.0, %v8977
  %v8979 = vpop.f32.mrf.mxu0
  %v8980 = vadd.f32 0.0, %v8979
  %v8981 = vpop.f32.mrf.mxu0
  %v8982 = vpop.f32.mrf.mxu0
  %8983 = vdwg.mxu0
  %v8984 = vadd.f32 %v8627, %v8937
  %v8985 = vadd.f32 %v8629, %v8939
  %v8986 = vadd.f32 %v8668, %v8978
  %v8987 = vadd.f32 %v8670, %v8980
  %v8988 = vadd.f32 %v8984, %v1328
  %v8989 = vadd.f32 %v8985, %v1332
  %v8990 = vadd.f32 %v8986, %v1336
  %v8991 = vadd.f32 %v8987, %v1340
  %v8992 = vmul.f32 %v8988, 0.5
  %v8993 = vmul.f32 %v8989, 0.5
  %v8994 = vmul.f32 %v8990, 0.5
  %v8995 = vtanh.pop %v8992
  %v8996 = vtanh.pop %v8993
  %v8997 = vtanh.pop %v8994
  %v8998 = vmul.f32 %v8995, 0.5
  %v8999 = vmul.f32 %v8996, 0.5
  %v9000 = vmul.f32 %v8997, 0.5
  %v9001 = vadd.f32 %v8998, 0.5
  %v9002 = vadd.f32 %v8999, 0.5
  %v9003 = vadd.f32 %v9000, 0.5
  %v9004 = vtanh.pop %v8991
  %v9005 = vmul.f32 %v9002, %v7733
  %v9006 = vmul.f32 %v9001, %v9004
  %v9007 = vadd.f32 %v9005, %v9006
  %v9008 = vtanh.pop %v9007
  %v9009 = vmul.f32 %v9003, %v9008
  %v9010 = vadd.f32 %v8708, %v9009
  %s9011 = scalar_lea.vmem [#allocation2], 12
  %9012 = vst [vmem:[%s9011] sm:$0x3] %v9010
  %s9013 = scalar_lea.vmem %s0, 14
  %v9014 = vld [vmem:[%s9013] sm:$0x3]
  %v9015 = vpack.c.bf16 %v9009, %v9009
  %v9016 = vld [vmem:[%s3] sm:$0xff]
  %v9017 = vld [vmem:[%s3 + $0x8] sm:$0xff]
  %v9018 = vld [vmem:[%s3 + $0x10] sm:$0xff]
  %v9019 = vld [vmem:[%s3 + $0x18] sm:$0xff]
  %v9020 = vld [vmem:[%s3 + $0x20] sm:$0xff]
  %v9021 = vld [vmem:[%s3 + $0x28] sm:$0xff]
  %v9022 = vld [vmem:[%s3 + $0x30] sm:$0xff]
  %v9023 = vld [vmem:[%s3 + $0x38] sm:$0xff]
  %v9024 = vld [vmem:[%s3 + $0x40] sm:$0xff]
  %v9025 = vld [vmem:[%s3 + $0x48] sm:$0xff]
  %v9026 = vld [vmem:[%s3 + $0x50] sm:$0xff]
  %v9027 = vld [vmem:[%s3 + $0x58] sm:$0xff]
  %v9028 = vld [vmem:[%s3 + $0x60] sm:$0xff]
  %v9029 = vld [vmem:[%s3 + $0x68] sm:$0xff]
  %v9030 = vld [vmem:[%s3 + $0x70] sm:$0xff]
  %v9031 = vld [vmem:[%s3 + $0x78] sm:$0xff]
  %v9032 = vld [vmem:[%s3 + $0x80] sm:$0xff]
  %v9033 = vld [vmem:[%s3 + $0x88] sm:$0xff]
  %v9034 = vld [vmem:[%s3 + $0x90] sm:$0xff]
  %v9035 = vld [vmem:[%s3 + $0x98] sm:$0xff]
  %v9036 = vld [vmem:[%s3 + $0xa0] sm:$0xff]
  %v9037 = vld [vmem:[%s3 + $0xa8] sm:$0xff]
  %v9038 = vld [vmem:[%s3 + $0xb0] sm:$0xff]
  %v9039 = vld [vmem:[%s3 + $0xb8] sm:$0xff]
  %v9040 = vld [vmem:[%s3 + $0xc0] sm:$0xff]
  %v9041 = vld [vmem:[%s3 + $0xc8] sm:$0xff]
  %v9042 = vld [vmem:[%s3 + $0xd0] sm:$0xff]
  %v9043 = vld [vmem:[%s3 + $0xd8] sm:$0xff]
  %v9044 = vld [vmem:[%s3 + $0xe0] sm:$0xff]
  %v9045 = vld [vmem:[%s3 + $0xe8] sm:$0xff]
  %v9046 = vld [vmem:[%s3 + $0xf0] sm:$0xff]
  %v9047 = vld [vmem:[%s3 + $0xf8] sm:$0xff]
  %v9048 = vld [vmem:[%s3 + $0x100] sm:$0xff]
  %v9049 = vld [vmem:[%s3 + $0x108] sm:$0xff]
  %v9050 = vld [vmem:[%s3 + $0x110] sm:$0xff]
  %v9051 = vld [vmem:[%s3 + $0x118] sm:$0xff]
  %v9052 = vld [vmem:[%s3 + $0x120] sm:$0xff]
  %v9053 = vld [vmem:[%s3 + $0x128] sm:$0xff]
  %v9054 = vld [vmem:[%s3 + $0x130] sm:$0xff]
  %v9055 = vld [vmem:[%s3 + $0x138] sm:$0xff]
  %v9056 = vld [vmem:[%s3 + $0x140] sm:$0xff]
  %v9057 = vld [vmem:[%s3 + $0x148] sm:$0xff]
  %v9058 = vld [vmem:[%s3 + $0x150] sm:$0xff]
  %v9059 = vld [vmem:[%s3 + $0x158] sm:$0xff]
  %v9060 = vld [vmem:[%s3 + $0x160] sm:$0xff]
  %v9061 = vld [vmem:[%s3 + $0x168] sm:$0xff]
  %v9062 = vld [vmem:[%s3 + $0x170] sm:$0xff]
  %v9063 = vld [vmem:[%s3 + $0x178] sm:$0xff]
  %v9064 = vld [vmem:[%s3 + $0x180] sm:$0xff]
  %v9065 = vld [vmem:[%s3 + $0x188] sm:$0xff]
  %v9066 = vld [vmem:[%s3 + $0x190] sm:$0xff]
  %v9067 = vld [vmem:[%s3 + $0x198] sm:$0xff]
  %v9068 = vld [vmem:[%s3 + $0x1a0] sm:$0xff]
  %v9069 = vld [vmem:[%s3 + $0x1a8] sm:$0xff]
  %v9070 = vld [vmem:[%s3 + $0x1b0] sm:$0xff]
  %v9071 = vld [vmem:[%s3 + $0x1b8] sm:$0xff]
  %v9072 = vld [vmem:[%s3 + $0x1c0] sm:$0xff]
  %v9073 = vld [vmem:[%s3 + $0x1c8] sm:$0xff]
  %v9074 = vld [vmem:[%s3 + $0x1d0] sm:$0xff]
  %v9075 = vld [vmem:[%s3 + $0x1d8] sm:$0xff]
  %v9076 = vld [vmem:[%s3 + $0x1e0] sm:$0xff]
  %v9077 = vld [vmem:[%s3 + $0x1e8] sm:$0xff]
  %v9078 = vld [vmem:[%s3 + $0x1f0] sm:$0xff]
  %v9079 = vld [vmem:[%s3 + $0x1f8] sm:$0xff]
  %v9080 = vld [vmem:[%s3 + $0x200] sm:$0xff]
  %v9081 = vld [vmem:[%s3 + $0x208] sm:$0xff]
  %v9082 = vld [vmem:[%s3 + $0x210] sm:$0xff]
  %v9083 = vld [vmem:[%s3 + $0x218] sm:$0xff]
  %v9084 = vld [vmem:[%s3 + $0x220] sm:$0xff]
  %v9085 = vld [vmem:[%s3 + $0x228] sm:$0xff]
  %v9086 = vld [vmem:[%s3 + $0x230] sm:$0xff]
  %v9087 = vld [vmem:[%s3 + $0x238] sm:$0xff]
  %v9088 = vld [vmem:[%s3 + $0x240] sm:$0xff]
  %v9089 = vld [vmem:[%s3 + $0x248] sm:$0xff]
  %v9090 = vld [vmem:[%s3 + $0x250] sm:$0xff]
  %v9091 = vld [vmem:[%s3 + $0x258] sm:$0xff]
  %v9092 = vld [vmem:[%s3 + $0x260] sm:$0xff]
  %v9093 = vld [vmem:[%s3 + $0x268] sm:$0xff]
  %v9094 = vld [vmem:[%s3 + $0x270] sm:$0xff]
  %v9095 = vld [vmem:[%s3 + $0x278] sm:$0xff]
  %v9096 = vld [vmem:[%s3 + $0x280] sm:$0xff]
  %v9097 = vld [vmem:[%s3 + $0x288] sm:$0xff]
  %v9098 = vld [vmem:[%s3 + $0x290] sm:$0xff]
  %v9099 = vld [vmem:[%s3 + $0x298] sm:$0xff]
  %v9100 = vld [vmem:[%s3 + $0x2a0] sm:$0xff]
  %v9101 = vld [vmem:[%s3 + $0x2a8] sm:$0xff]
  %v9102 = vld [vmem:[%s3 + $0x2b0] sm:$0xff]
  %v9103 = vld [vmem:[%s3 + $0x2b8] sm:$0xff]
  %v9104 = vld [vmem:[%s3 + $0x2c0] sm:$0xff]
  %v9105 = vld [vmem:[%s3 + $0x2c8] sm:$0xff]
  %v9106 = vld [vmem:[%s3 + $0x2d0] sm:$0xff]
  %v9107 = vld [vmem:[%s3 + $0x2d8] sm:$0xff]
  %v9108 = vld [vmem:[%s3 + $0x2e0] sm:$0xff]
  %v9109 = vld [vmem:[%s3 + $0x2e8] sm:$0xff]
  %v9110 = vld [vmem:[%s3 + $0x2f0] sm:$0xff]
  %v9111 = vld [vmem:[%s3 + $0x2f8] sm:$0xff]
  %v9112 = vld [vmem:[%s3 + $0x300] sm:$0xff]
  %v9113 = vld [vmem:[%s3 + $0x308] sm:$0xff]
  %v9114 = vld [vmem:[%s3 + $0x310] sm:$0xff]
  %v9115 = vld [vmem:[%s3 + $0x318] sm:$0xff]
  %v9116 = vld [vmem:[%s3 + $0x320] sm:$0xff]
  %v9117 = vld [vmem:[%s3 + $0x328] sm:$0xff]
  %v9118 = vld [vmem:[%s3 + $0x330] sm:$0xff]
  %v9119 = vld [vmem:[%s3 + $0x338] sm:$0xff]
  %v9120 = vld [vmem:[%s3 + $0x340] sm:$0xff]
  %v9121 = vld [vmem:[%s3 + $0x348] sm:$0xff]
  %v9122 = vld [vmem:[%s3 + $0x350] sm:$0xff]
  %v9123 = vld [vmem:[%s3 + $0x358] sm:$0xff]
  %v9124 = vld [vmem:[%s3 + $0x360] sm:$0xff]
  %v9125 = vld [vmem:[%s3 + $0x368] sm:$0xff]
  %v9126 = vld [vmem:[%s3 + $0x370] sm:$0xff]
  %v9127 = vld [vmem:[%s3 + $0x378] sm:$0xff]
  %v9128 = vld [vmem:[%s3 + $0x380] sm:$0xff]
  %v9129 = vld [vmem:[%s3 + $0x388] sm:$0xff]
  %v9130 = vld [vmem:[%s3 + $0x390] sm:$0xff]
  %v9131 = vld [vmem:[%s3 + $0x398] sm:$0xff]
  %v9132 = vld [vmem:[%s3 + $0x3a0] sm:$0xff]
  %v9133 = vld [vmem:[%s3 + $0x3a8] sm:$0xff]
  %v9134 = vld [vmem:[%s3 + $0x3b0] sm:$0xff]
  %v9135 = vld [vmem:[%s3 + $0x3b8] sm:$0xff]
  %v9136 = vld [vmem:[%s3 + $0x3c0] sm:$0xff]
  %v9137 = vld [vmem:[%s3 + $0x3c8] sm:$0xff]
  %v9138 = vld [vmem:[%s3 + $0x3d0] sm:$0xff]
  %v9139 = vld [vmem:[%s3 + $0x3d8] sm:$0xff]
  %v9140 = vld [vmem:[%s3 + $0x3e0] sm:$0xff]
  %v9141 = vld [vmem:[%s3 + $0x3e8] sm:$0xff]
  %v9142 = vld [vmem:[%s3 + $0x3f0] sm:$0xff]
  %v9143 = vld [vmem:[%s3 + $0x3f8] sm:$0xff]
  %v9272 = vunpack.c.l.b16 %v9016
  %v9273 = vunpack.c.h.b16 %v9016
  %v9274 = vunpack.c.l.b16 %v9017
  %v9275 = vunpack.c.h.b16 %v9017
  %v9276 = vunpack.c.l.b16 %v9018
  %v9277 = vunpack.c.h.b16 %v9018
  %v9278 = vunpack.c.l.b16 %v9019
  %v9279 = vunpack.c.h.b16 %v9019
  %v9280 = vunpack.c.l.b16 %v9020
  %v9281 = vunpack.c.h.b16 %v9020
  %v9282 = vunpack.c.l.b16 %v9021
  %v9283 = vunpack.c.h.b16 %v9021
  %v9284 = vunpack.c.l.b16 %v9022
  %v9285 = vunpack.c.h.b16 %v9022
  %v9286 = vunpack.c.l.b16 %v9023
  %v9287 = vunpack.c.h.b16 %v9023
  %v9288 = vunpack.c.l.b16 %v9024
  %v9289 = vunpack.c.h.b16 %v9024
  %v9290 = vunpack.c.l.b16 %v9025
  %v9291 = vunpack.c.h.b16 %v9025
  %v9292 = vunpack.c.l.b16 %v9026
  %v9293 = vunpack.c.h.b16 %v9026
  %v9294 = vunpack.c.l.b16 %v9027
  %v9295 = vunpack.c.h.b16 %v9027
  %v9296 = vunpack.c.l.b16 %v9028
  %v9297 = vunpack.c.h.b16 %v9028
  %v9298 = vunpack.c.l.b16 %v9029
  %v9299 = vunpack.c.h.b16 %v9029
  %v9300 = vunpack.c.l.b16 %v9030
  %v9301 = vunpack.c.h.b16 %v9030
  %v9302 = vunpack.c.l.b16 %v9031
  %v9303 = vunpack.c.h.b16 %v9031
  %v9304 = vunpack.c.l.b16 %v9032
  %v9305 = vunpack.c.h.b16 %v9032
  %v9306 = vunpack.c.l.b16 %v9033
  %v9307 = vunpack.c.h.b16 %v9033
  %v9308 = vunpack.c.l.b16 %v9034
  %v9309 = vunpack.c.h.b16 %v9034
  %v9310 = vunpack.c.l.b16 %v9035
  %v9311 = vunpack.c.h.b16 %v9035
  %v9312 = vunpack.c.l.b16 %v9036
  %v9313 = vunpack.c.h.b16 %v9036
  %v9314 = vunpack.c.l.b16 %v9037
  %v9315 = vunpack.c.h.b16 %v9037
  %v9316 = vunpack.c.l.b16 %v9038
  %v9317 = vunpack.c.h.b16 %v9038
  %v9318 = vunpack.c.l.b16 %v9039
  %v9319 = vunpack.c.h.b16 %v9039
  %v9320 = vunpack.c.l.b16 %v9040
  %v9321 = vunpack.c.h.b16 %v9040
  %v9322 = vunpack.c.l.b16 %v9041
  %v9323 = vunpack.c.h.b16 %v9041
  %v9324 = vunpack.c.l.b16 %v9042
  %v9325 = vunpack.c.h.b16 %v9042
  %v9326 = vunpack.c.l.b16 %v9043
  %v9327 = vunpack.c.h.b16 %v9043
  %v9328 = vunpack.c.l.b16 %v9044
  %v9329 = vunpack.c.h.b16 %v9044
  %v9330 = vunpack.c.l.b16 %v9045
  %v9331 = vunpack.c.h.b16 %v9045
  %v9332 = vunpack.c.l.b16 %v9046
  %v9333 = vunpack.c.h.b16 %v9046
  %v9334 = vunpack.c.l.b16 %v9047
  %v9335 = vunpack.c.h.b16 %v9047
  %v9336 = vunpack.c.l.b16 %v9048
  %v9337 = vunpack.c.h.b16 %v9048
  %v9338 = vunpack.c.l.b16 %v9049
  %v9339 = vunpack.c.h.b16 %v9049
  %v9340 = vunpack.c.l.b16 %v9050
  %v9341 = vunpack.c.h.b16 %v9050
  %v9342 = vunpack.c.l.b16 %v9051
  %v9343 = vunpack.c.h.b16 %v9051
  %v9344 = vunpack.c.l.b16 %v9052
  %v9345 = vunpack.c.h.b16 %v9052
  %v9346 = vunpack.c.l.b16 %v9053
  %v9347 = vunpack.c.h.b16 %v9053
  %v9348 = vunpack.c.l.b16 %v9054
  %v9349 = vunpack.c.h.b16 %v9054
  %v9350 = vunpack.c.l.b16 %v9055
  %v9351 = vunpack.c.h.b16 %v9055
  %v9352 = vunpack.c.l.b16 %v9056
  %v9353 = vunpack.c.h.b16 %v9056
  %v9354 = vunpack.c.l.b16 %v9057
  %v9355 = vunpack.c.h.b16 %v9057
  %v9356 = vunpack.c.l.b16 %v9058
  %v9357 = vunpack.c.h.b16 %v9058
  %v9358 = vunpack.c.l.b16 %v9059
  %v9359 = vunpack.c.h.b16 %v9059
  %v9360 = vunpack.c.l.b16 %v9060
  %v9361 = vunpack.c.h.b16 %v9060
  %v9362 = vunpack.c.l.b16 %v9061
  %v9363 = vunpack.c.h.b16 %v9061
  %v9364 = vunpack.c.l.b16 %v9062
  %v9365 = vunpack.c.h.b16 %v9062
  %v9366 = vunpack.c.l.b16 %v9063
  %v9367 = vunpack.c.h.b16 %v9063
  %v9368 = vunpack.c.l.b16 %v9064
  %v9369 = vunpack.c.h.b16 %v9064
  %v9370 = vunpack.c.l.b16 %v9065
  %v9371 = vunpack.c.h.b16 %v9065
  %v9372 = vunpack.c.l.b16 %v9066
  %v9373 = vunpack.c.h.b16 %v9066
  %v9374 = vunpack.c.l.b16 %v9067
  %v9375 = vunpack.c.h.b16 %v9067
  %v9376 = vunpack.c.l.b16 %v9068
  %v9377 = vunpack.c.h.b16 %v9068
  %v9378 = vunpack.c.l.b16 %v9069
  %v9379 = vunpack.c.h.b16 %v9069
  %v9380 = vunpack.c.l.b16 %v9070
  %v9381 = vunpack.c.h.b16 %v9070
  %v9382 = vunpack.c.l.b16 %v9071
  %v9383 = vunpack.c.h.b16 %v9071
  %v9384 = vunpack.c.l.b16 %v9072
  %v9385 = vunpack.c.h.b16 %v9072
  %v9386 = vunpack.c.l.b16 %v9073
  %v9387 = vunpack.c.h.b16 %v9073
  %v9388 = vunpack.c.l.b16 %v9074
  %v9389 = vunpack.c.h.b16 %v9074
  %v9390 = vunpack.c.l.b16 %v9075
  %v9391 = vunpack.c.h.b16 %v9075
  %v9392 = vunpack.c.l.b16 %v9076
  %v9393 = vunpack.c.h.b16 %v9076
  %v9394 = vunpack.c.l.b16 %v9077
  %v9395 = vunpack.c.h.b16 %v9077
  %v9396 = vunpack.c.l.b16 %v9078
  %v9397 = vunpack.c.h.b16 %v9078
  %v9398 = vunpack.c.l.b16 %v9079
  %v9399 = vunpack.c.h.b16 %v9079
  %v9400 = vunpack.c.l.b16 %v9080
  %v9401 = vunpack.c.h.b16 %v9080
  %v9402 = vunpack.c.l.b16 %v9081
  %v9403 = vunpack.c.h.b16 %v9081
  %v9404 = vunpack.c.l.b16 %v9082
  %v9405 = vunpack.c.h.b16 %v9082
  %v9406 = vunpack.c.l.b16 %v9083
  %v9407 = vunpack.c.h.b16 %v9083
  %v9408 = vunpack.c.l.b16 %v9084
  %v9409 = vunpack.c.h.b16 %v9084
  %v9410 = vunpack.c.l.b16 %v9085
  %v9411 = vunpack.c.h.b16 %v9085
  %v9412 = vunpack.c.l.b16 %v9086
  %v9413 = vunpack.c.h.b16 %v9086
  %v9414 = vunpack.c.l.b16 %v9087
  %v9415 = vunpack.c.h.b16 %v9087
  %v9416 = vunpack.c.l.b16 %v9088
  %v9417 = vunpack.c.h.b16 %v9088
  %v9418 = vunpack.c.l.b16 %v9089
  %v9419 = vunpack.c.h.b16 %v9089
  %v9420 = vunpack.c.l.b16 %v9090
  %v9421 = vunpack.c.h.b16 %v9090
  %v9422 = vunpack.c.l.b16 %v9091
  %v9423 = vunpack.c.h.b16 %v9091
  %v9424 = vunpack.c.l.b16 %v9092
  %v9425 = vunpack.c.h.b16 %v9092
  %v9426 = vunpack.c.l.b16 %v9093
  %v9427 = vunpack.c.h.b16 %v9093
  %v9428 = vunpack.c.l.b16 %v9094
  %v9429 = vunpack.c.h.b16 %v9094
  %v9430 = vunpack.c.l.b16 %v9095
  %v9431 = vunpack.c.h.b16 %v9095
  %v9432 = vunpack.c.l.b16 %v9096
  %v9433 = vunpack.c.h.b16 %v9096
  %v9434 = vunpack.c.l.b16 %v9097
  %v9435 = vunpack.c.h.b16 %v9097
  %v9436 = vunpack.c.l.b16 %v9098
  %v9437 = vunpack.c.h.b16 %v9098
  %v9438 = vunpack.c.l.b16 %v9099
  %v9439 = vunpack.c.h.b16 %v9099
  %v9440 = vunpack.c.l.b16 %v9100
  %v9441 = vunpack.c.h.b16 %v9100
  %v9442 = vunpack.c.l.b16 %v9101
  %v9443 = vunpack.c.h.b16 %v9101
  %v9444 = vunpack.c.l.b16 %v9102
  %v9445 = vunpack.c.h.b16 %v9102
  %v9446 = vunpack.c.l.b16 %v9103
  %v9447 = vunpack.c.h.b16 %v9103
  %v9448 = vunpack.c.l.b16 %v9104
  %v9449 = vunpack.c.h.b16 %v9104
  %v9450 = vunpack.c.l.b16 %v9105
  %v9451 = vunpack.c.h.b16 %v9105
  %v9452 = vunpack.c.l.b16 %v9106
  %v9453 = vunpack.c.h.b16 %v9106
  %v9454 = vunpack.c.l.b16 %v9107
  %v9455 = vunpack.c.h.b16 %v9107
  %v9456 = vunpack.c.l.b16 %v9108
  %v9457 = vunpack.c.h.b16 %v9108
  %v9458 = vunpack.c.l.b16 %v9109
  %v9459 = vunpack.c.h.b16 %v9109
  %v9460 = vunpack.c.l.b16 %v9110
  %v9461 = vunpack.c.h.b16 %v9110
  %v9462 = vunpack.c.l.b16 %v9111
  %v9463 = vunpack.c.h.b16 %v9111
  %v9464 = vunpack.c.l.b16 %v9112
  %v9465 = vunpack.c.h.b16 %v9112
  %v9466 = vunpack.c.l.b16 %v9113
  %v9467 = vunpack.c.h.b16 %v9113
  %v9468 = vunpack.c.l.b16 %v9114
  %v9469 = vunpack.c.h.b16 %v9114
  %v9470 = vunpack.c.l.b16 %v9115
  %v9471 = vunpack.c.h.b16 %v9115
  %v9472 = vunpack.c.l.b16 %v9116
  %v9473 = vunpack.c.h.b16 %v9116
  %v9474 = vunpack.c.l.b16 %v9117
  %v9475 = vunpack.c.h.b16 %v9117
  %v9476 = vunpack.c.l.b16 %v9118
  %v9477 = vunpack.c.h.b16 %v9118
  %v9478 = vunpack.c.l.b16 %v9119
  %v9479 = vunpack.c.h.b16 %v9119
  %v9480 = vunpack.c.l.b16 %v9120
  %v9481 = vunpack.c.h.b16 %v9120
  %v9482 = vunpack.c.l.b16 %v9121
  %v9483 = vunpack.c.h.b16 %v9121
  %v9484 = vunpack.c.l.b16 %v9122
  %v9485 = vunpack.c.h.b16 %v9122
  %v9486 = vunpack.c.l.b16 %v9123
  %v9487 = vunpack.c.h.b16 %v9123
  %v9488 = vunpack.c.l.b16 %v9124
  %v9489 = vunpack.c.h.b16 %v9124
  %v9490 = vunpack.c.l.b16 %v9125
  %v9491 = vunpack.c.h.b16 %v9125
  %v9492 = vunpack.c.l.b16 %v9126
  %v9493 = vunpack.c.h.b16 %v9126
  %v9494 = vunpack.c.l.b16 %v9127
  %v9495 = vunpack.c.h.b16 %v9127
  %v9496 = vunpack.c.l.b16 %v9128
  %v9497 = vunpack.c.h.b16 %v9128
  %v9498 = vunpack.c.l.b16 %v9129
  %v9499 = vunpack.c.h.b16 %v9129
  %v9500 = vunpack.c.l.b16 %v9130
  %v9501 = vunpack.c.h.b16 %v9130
  %v9502 = vunpack.c.l.b16 %v9131
  %v9503 = vunpack.c.h.b16 %v9131
  %v9504 = vunpack.c.l.b16 %v9132
  %v9505 = vunpack.c.h.b16 %v9132
  %v9506 = vunpack.c.l.b16 %v9133
  %v9507 = vunpack.c.h.b16 %v9133
  %v9508 = vunpack.c.l.b16 %v9134
  %v9509 = vunpack.c.h.b16 %v9134
  %v9510 = vunpack.c.l.b16 %v9135
  %v9511 = vunpack.c.h.b16 %v9135
  %v9512 = vunpack.c.l.b16 %v9136
  %v9513 = vunpack.c.h.b16 %v9136
  %v9514 = vunpack.c.l.b16 %v9137
  %v9515 = vunpack.c.h.b16 %v9137
  %v9516 = vunpack.c.l.b16 %v9138
  %v9517 = vunpack.c.h.b16 %v9138
  %v9518 = vunpack.c.l.b16 %v9139
  %v9519 = vunpack.c.h.b16 %v9139
  %v9520 = vunpack.c.l.b16 %v9140
  %v9521 = vunpack.c.h.b16 %v9140
  %v9522 = vunpack.c.l.b16 %v9141
  %v9523 = vunpack.c.h.b16 %v9141
  %v9524 = vunpack.c.l.b16 %v9142
  %v9525 = vunpack.c.h.b16 %v9142
  %v9526 = vunpack.c.l.b16 %v9143
  %v9527 = vunpack.c.h.b16 %v9143
  %v9528 = vpack.c.b16 %v9280, %v9272
  %v9529 = vpack.c.b16 %v9281, %v9273
  %v9530 = vpack.c.b16 %v9282, %v9274
  %v9531 = vpack.c.b16 %v9283, %v9275
  %v9532 = vpack.c.b16 %v9284, %v9276
  %v9533 = vpack.c.b16 %v9285, %v9277
  %v9534 = vpack.c.b16 %v9286, %v9278
  %v9535 = vpack.c.b16 %v9287, %v9279
  %v9536 = vpack.c.b16 %v9296, %v9288
  %v9537 = vpack.c.b16 %v9297, %v9289
  %v9538 = vpack.c.b16 %v9298, %v9290
  %v9539 = vpack.c.b16 %v9299, %v9291
  %v9540 = vpack.c.b16 %v9300, %v9292
  %v9541 = vpack.c.b16 %v9301, %v9293
  %v9542 = vpack.c.b16 %v9302, %v9294
  %v9543 = vpack.c.b16 %v9303, %v9295
  %v9544 = vpack.c.b16 %v9312, %v9304
  %v9545 = vpack.c.b16 %v9313, %v9305
  %v9546 = vpack.c.b16 %v9314, %v9306
  %v9547 = vpack.c.b16 %v9315, %v9307
  %v9548 = vpack.c.b16 %v9316, %v9308
  %v9549 = vpack.c.b16 %v9317, %v9309
  %v9550 = vpack.c.b16 %v9318, %v9310
  %v9551 = vpack.c.b16 %v9319, %v9311
  %v9552 = vpack.c.b16 %v9328, %v9320
  %v9553 = vpack.c.b16 %v9329, %v9321
  %v9554 = vpack.c.b16 %v9330, %v9322
  %v9555 = vpack.c.b16 %v9331, %v9323
  %v9556 = vpack.c.b16 %v9332, %v9324
  %v9557 = vpack.c.b16 %v9333, %v9325
  %v9558 = vpack.c.b16 %v9334, %v9326
  %v9559 = vpack.c.b16 %v9335, %v9327
  %v9560 = vpack.c.b16 %v9344, %v9336
  %v9561 = vpack.c.b16 %v9345, %v9337
  %v9562 = vpack.c.b16 %v9346, %v9338
  %v9563 = vpack.c.b16 %v9347, %v9339
  %v9564 = vpack.c.b16 %v9348, %v9340
  %v9565 = vpack.c.b16 %v9349, %v9341
  %v9566 = vpack.c.b16 %v9350, %v9342
  %v9567 = vpack.c.b16 %v9351, %v9343
  %v9568 = vpack.c.b16 %v9360, %v9352
  %v9569 = vpack.c.b16 %v9361, %v9353
  %v9570 = vpack.c.b16 %v9362, %v9354
  %v9571 = vpack.c.b16 %v9363, %v9355
  %v9572 = vpack.c.b16 %v9364, %v9356
  %v9573 = vpack.c.b16 %v9365, %v9357
  %v9574 = vpack.c.b16 %v9366, %v9358
  %v9575 = vpack.c.b16 %v9367, %v9359
  %v9576 = vpack.c.b16 %v9376, %v9368
  %v9577 = vpack.c.b16 %v9377, %v9369
  %v9578 = vpack.c.b16 %v9378, %v9370
  %v9579 = vpack.c.b16 %v9379, %v9371
  %v9580 = vpack.c.b16 %v9380, %v9372
  %v9581 = vpack.c.b16 %v9381, %v9373
  %v9582 = vpack.c.b16 %v9382, %v9374
  %v9583 = vpack.c.b16 %v9383, %v9375
  %v9584 = vpack.c.b16 %v9392, %v9384
  %v9585 = vpack.c.b16 %v9393, %v9385
  %v9586 = vpack.c.b16 %v9394, %v9386
  %v9587 = vpack.c.b16 %v9395, %v9387
  %v9588 = vpack.c.b16 %v9396, %v9388
  %v9589 = vpack.c.b16 %v9397, %v9389
  %v9590 = vpack.c.b16 %v9398, %v9390
  %v9591 = vpack.c.b16 %v9399, %v9391
  %v9592 = vpack.c.b16 %v9408, %v9400
  %v9593 = vpack.c.b16 %v9409, %v9401
  %v9594 = vpack.c.b16 %v9410, %v9402
  %v9595 = vpack.c.b16 %v9411, %v9403
  %v9596 = vpack.c.b16 %v9412, %v9404
  %v9597 = vpack.c.b16 %v9413, %v9405
  %v9598 = vpack.c.b16 %v9414, %v9406
  %v9599 = vpack.c.b16 %v9415, %v9407
  %v9600 = vpack.c.b16 %v9424, %v9416
  %v9601 = vpack.c.b16 %v9425, %v9417
  %v9602 = vpack.c.b16 %v9426, %v9418
  %v9603 = vpack.c.b16 %v9427, %v9419
  %v9604 = vpack.c.b16 %v9428, %v9420
  %v9605 = vpack.c.b16 %v9429, %v9421
  %v9606 = vpack.c.b16 %v9430, %v9422
  %v9607 = vpack.c.b16 %v9431, %v9423
  %v9608 = vpack.c.b16 %v9440, %v9432
  %v9609 = vpack.c.b16 %v9441, %v9433
  %v9610 = vpack.c.b16 %v9442, %v9434
  %v9611 = vpack.c.b16 %v9443, %v9435
  %v9612 = vpack.c.b16 %v9444, %v9436
  %v9613 = vpack.c.b16 %v9445, %v9437
  %v9614 = vpack.c.b16 %v9446, %v9438
  %v9615 = vpack.c.b16 %v9447, %v9439
  %v9616 = vpack.c.b16 %v9456, %v9448
  %v9617 = vpack.c.b16 %v9457, %v9449
  %v9618 = vpack.c.b16 %v9458, %v9450
  %v9619 = vpack.c.b16 %v9459, %v9451
  %v9620 = vpack.c.b16 %v9460, %v9452
  %v9621 = vpack.c.b16 %v9461, %v9453
  %v9622 = vpack.c.b16 %v9462, %v9454
  %v9623 = vpack.c.b16 %v9463, %v9455
  %v9624 = vpack.c.b16 %v9472, %v9464
  %v9625 = vpack.c.b16 %v9473, %v9465
  %v9626 = vpack.c.b16 %v9474, %v9466
  %v9627 = vpack.c.b16 %v9475, %v9467
  %v9628 = vpack.c.b16 %v9476, %v9468
  %v9629 = vpack.c.b16 %v9477, %v9469
  %v9630 = vpack.c.b16 %v9478, %v9470
  %v9631 = vpack.c.b16 %v9479, %v9471
  %v9632 = vpack.c.b16 %v9488, %v9480
  %v9633 = vpack.c.b16 %v9489, %v9481
  %v9634 = vpack.c.b16 %v9490, %v9482
  %v9635 = vpack.c.b16 %v9491, %v9483
  %v9636 = vpack.c.b16 %v9492, %v9484
  %v9637 = vpack.c.b16 %v9493, %v9485
  %v9638 = vpack.c.b16 %v9494, %v9486
  %v9639 = vpack.c.b16 %v9495, %v9487
  %v9640 = vpack.c.b16 %v9504, %v9496
  %v9641 = vpack.c.b16 %v9505, %v9497
  %v9642 = vpack.c.b16 %v9506, %v9498
  %v9643 = vpack.c.b16 %v9507, %v9499
  %v9644 = vpack.c.b16 %v9508, %v9500
  %v9645 = vpack.c.b16 %v9509, %v9501
  %v9646 = vpack.c.b16 %v9510, %v9502
  %v9647 = vpack.c.b16 %v9511, %v9503
  %v9648 = vpack.c.b16 %v9520, %v9512
  %v9649 = vpack.c.b16 %v9521, %v9513
  %v9650 = vpack.c.b16 %v9522, %v9514
  %v9651 = vpack.c.b16 %v9523, %v9515
  %v9652 = vpack.c.b16 %v9524, %v9516
  %v9653 = vpack.c.b16 %v9525, %v9517
  %v9654 = vpack.c.b16 %v9526, %v9518
  %v9655 = vpack.c.b16 %v9527, %v9519
  %9784 = vmatprep.subr.bf16.mxu0 %v9585
  %9785 = vmatpush1.bf16.msra.mxu0 %v9584
  %9786 = vmatprep.subr.bf16.mxu0 %v9577
  %9787 = vmatpush1.bf16.msra.mxu0 %v9576
  %9788 = vmatprep.subr.bf16.mxu0 %v9569
  %9789 = vmatpush1.bf16.msra.mxu0 %v9568
  %9790 = vmatprep.subr.bf16.mxu0 %v9561
  %9791 = vmatpush1.bf16.msra.mxu0 %v9560
  %9792 = vmatprep.subr.bf16.mxu0 %v9553
  %9793 = vmatpush1.bf16.msra.mxu0 %v9552
  %9794 = vmatprep.subr.bf16.mxu0 %v9545
  %9795 = vmatpush1.bf16.msra.mxu0 %v9544
  %9796 = vmatprep.subr.bf16.mxu0 %v9537
  %9797 = vmatpush1.bf16.msra.mxu0 %v9536
  %9798 = vmatprep.subr.bf16.mxu0 %v9529
  %9799 = vmatpush1.bf16.msra.mxu0 %v9528
  %9800 = vmatprep.subr.bf16.mxu0 %v9649
  %9801 = vmatpush2.bf16.msra.mxu0 %v9648
  %9802 = vmatprep.subr.bf16.mxu0 %v9641
  %9803 = vmatpush2.bf16.msra.mxu0 %v9640
  %9804 = vmatprep.subr.bf16.mxu0 %v9633
  %9805 = vmatpush2.bf16.msra.mxu0 %v9632
  %9806 = vmatprep.subr.bf16.mxu0 %v9625
  %9807 = vmatpush2.bf16.msra.mxu0 %v9624
  %9808 = vmatprep.subr.bf16.mxu0 %v9617
  %9809 = vmatpush2.bf16.msra.mxu0 %v9616
  %9810 = vmatprep.subr.bf16.mxu0 %v9609
  %9811 = vmatpush2.bf16.msra.mxu0 %v9608
  %9812 = vmatprep.subr.bf16.mxu0 %v9601
  %9813 = vmatpush2.bf16.msra.mxu0 %v9600
  %9814 = vmatprep.subr.bf16.mxu0 %v9593
  %9815 = vmatpush2.bf16.msra.mxu0 %v9592
  %9816 = vmatprep.mubr.bf16.mxu0 %v9015
  %9817 = vmatmul.mubr.bf16.gmra.mxu0 %v8709
  %v9818 = vpop.f32.mrf.mxu0
  %v9819 = vadd.f32 0.0, %v9818
  %v9820 = vpop.f32.mrf.mxu0
  %v9821 = vadd.f32 0.0, %v9820
  %v9822 = vpop.f32.mrf.mxu0
  %v9823 = vpop.f32.mrf.mxu0
  %9824 = vdwg.mxu0
  %9825 = vmatprep.subr.bf16.mxu0 %v9587
  %9826 = vmatpush1.bf16.msra.mxu0 %v9586
  %9827 = vmatprep.subr.bf16.mxu0 %v9579
  %9828 = vmatpush1.bf16.msra.mxu0 %v9578
  %9829 = vmatprep.subr.bf16.mxu0 %v9571
  %9830 = vmatpush1.bf16.msra.mxu0 %v9570
  %9831 = vmatprep.subr.bf16.mxu0 %v9563
  %9832 = vmatpush1.bf16.msra.mxu0 %v9562
  %9833 = vmatprep.subr.bf16.mxu0 %v9555
  %9834 = vmatpush1.bf16.msra.mxu0 %v9554
  %9835 = vmatprep.subr.bf16.mxu0 %v9547
  %9836 = vmatpush1.bf16.msra.mxu0 %v9546
  %9837 = vmatprep.subr.bf16.mxu0 %v9539
  %9838 = vmatpush1.bf16.msra.mxu0 %v9538
  %9839 = vmatprep.subr.bf16.mxu0 %v9531
  %9840 = vmatpush1.bf16.msra.mxu0 %v9530
  %9841 = vmatprep.subr.bf16.mxu0 %v9651
  %9842 = vmatpush2.bf16.msra.mxu0 %v9650
  %9843 = vmatprep.subr.bf16.mxu0 %v9643
  %9844 = vmatpush2.bf16.msra.mxu0 %v9642
  %9845 = vmatprep.subr.bf16.mxu0 %v9635
  %9846 = vmatpush2.bf16.msra.mxu0 %v9634
  %9847 = vmatprep.subr.bf16.mxu0 %v9627
  %9848 = vmatpush2.bf16.msra.mxu0 %v9626
  %9849 = vmatprep.subr.bf16.mxu0 %v9619
  %9850 = vmatpush2.bf16.msra.mxu0 %v9618
  %9851 = vmatprep.subr.bf16.mxu0 %v9611
  %9852 = vmatpush2.bf16.msra.mxu0 %v9610
  %9853 = vmatprep.subr.bf16.mxu0 %v9603
  %9854 = vmatpush2.bf16.msra.mxu0 %v9602
  %9855 = vmatprep.subr.bf16.mxu0 %v9595
  %9856 = vmatpush2.bf16.msra.mxu0 %v9594
  %9857 = vmatprep.mubr.bf16.mxu0 %v9015
  %9858 = vmatmul.mubr.bf16.gmra.mxu0 %v8709
  %v9859 = vpop.f32.mrf.mxu0
  %v9860 = vadd.f32 0.0, %v9859
  %v9861 = vpop.f32.mrf.mxu0
  %v9862 = vadd.f32 0.0, %v9861
  %v9863 = vpop.f32.mrf.mxu0
  %v9864 = vpop.f32.mrf.mxu0
  %9865 = vdwg.mxu0
  %9866 = vmatprep.subr.bf16.mxu0 %v9589
  %9867 = vmatpush1.bf16.msra.mxu0 %v9588
  %9868 = vmatprep.subr.bf16.mxu0 %v9581
  %9869 = vmatpush1.bf16.msra.mxu0 %v9580
  %9870 = vmatprep.subr.bf16.mxu0 %v9573
  %9871 = vmatpush1.bf16.msra.mxu0 %v9572
  %9872 = vmatprep.subr.bf16.mxu0 %v9565
  %9873 = vmatpush1.bf16.msra.mxu0 %v9564
  %9874 = vmatprep.subr.bf16.mxu0 %v9557
  %9875 = vmatpush1.bf16.msra.mxu0 %v9556
  %9876 = vmatprep.subr.bf16.mxu0 %v9549
  %9877 = vmatpush1.bf16.msra.mxu0 %v9548
  %9878 = vmatprep.subr.bf16.mxu0 %v9541
  %9879 = vmatpush1.bf16.msra.mxu0 %v9540
  %9880 = vmatprep.subr.bf16.mxu0 %v9533
  %9881 = vmatpush1.bf16.msra.mxu0 %v9532
  %9882 = vmatprep.subr.bf16.mxu0 %v9653
  %9883 = vmatpush2.bf16.msra.mxu0 %v9652
  %9884 = vmatprep.subr.bf16.mxu0 %v9645
  %9885 = vmatpush2.bf16.msra.mxu0 %v9644
  %9886 = vmatprep.subr.bf16.mxu0 %v9637
  %9887 = vmatpush2.bf16.msra.mxu0 %v9636
  %9888 = vmatprep.subr.bf16.mxu0 %v9629
  %9889 = vmatpush2.bf16.msra.mxu0 %v9628
  %9890 = vmatprep.subr.bf16.mxu0 %v9621
  %9891 = vmatpush2.bf16.msra.mxu0 %v9620
  %9892 = vmatprep.subr.bf16.mxu0 %v9613
  %9893 = vmatpush2.bf16.msra.mxu0 %v9612
  %9894 = vmatprep.subr.bf16.mxu0 %v9605
  %9895 = vmatpush2.bf16.msra.mxu0 %v9604
  %9896 = vmatprep.subr.bf16.mxu0 %v9597
  %9897 = vmatpush2.bf16.msra.mxu0 %v9596
  %9898 = vmatprep.mubr.bf16.mxu0 %v9015
  %9899 = vmatmul.mubr.bf16.gmra.mxu0 %v8709
  %v9900 = vpop.f32.mrf.mxu0
  %v9901 = vadd.f32 0.0, %v9900
  %v9902 = vpop.f32.mrf.mxu0
  %v9903 = vadd.f32 0.0, %v9902
  %v9904 = vpop.f32.mrf.mxu0
  %v9905 = vpop.f32.mrf.mxu0
  %9906 = vdwg.mxu0
  %9907 = vmatprep.subr.bf16.mxu0 %v9591
  %9908 = vmatpush1.bf16.msra.mxu0 %v9590
  %9909 = vmatprep.subr.bf16.mxu0 %v9583
  %9910 = vmatpush1.bf16.msra.mxu0 %v9582
  %9911 = vmatprep.subr.bf16.mxu0 %v9575
  %9912 = vmatpush1.bf16.msra.mxu0 %v9574
  %9913 = vmatprep.subr.bf16.mxu0 %v9567
  %9914 = vmatpush1.bf16.msra.mxu0 %v9566
  %9915 = vmatprep.subr.bf16.mxu0 %v9559
  %9916 = vmatpush1.bf16.msra.mxu0 %v9558
  %9917 = vmatprep.subr.bf16.mxu0 %v9551
  %9918 = vmatpush1.bf16.msra.mxu0 %v9550
  %9919 = vmatprep.subr.bf16.mxu0 %v9543
  %9920 = vmatpush1.bf16.msra.mxu0 %v9542
  %9921 = vmatprep.subr.bf16.mxu0 %v9535
  %9922 = vmatpush1.bf16.msra.mxu0 %v9534
  %9923 = vmatprep.subr.bf16.mxu0 %v9655
  %9924 = vmatpush2.bf16.msra.mxu0 %v9654
  %9925 = vmatprep.subr.bf16.mxu0 %v9647
  %9926 = vmatpush2.bf16.msra.mxu0 %v9646
  %9927 = vmatprep.subr.bf16.mxu0 %v9639
  %9928 = vmatpush2.bf16.msra.mxu0 %v9638
  %9929 = vmatprep.subr.bf16.mxu0 %v9631
  %9930 = vmatpush2.bf16.msra.mxu0 %v9630
  %9931 = vmatprep.subr.bf16.mxu0 %v9623
  %9932 = vmatpush2.bf16.msra.mxu0 %v9622
  %9933 = vmatprep.subr.bf16.mxu0 %v9615
  %9934 = vmatpush2.bf16.msra.mxu0 %v9614
  %9935 = vmatprep.subr.bf16.mxu0 %v9607
  %9936 = vmatpush2.bf16.msra.mxu0 %v9606
  %9937 = vmatprep.subr.bf16.mxu0 %v9599
  %9938 = vmatpush2.bf16.msra.mxu0 %v9598
  %9939 = vmatprep.mubr.bf16.mxu0 %v9015
  %9940 = vmatmul.mubr.bf16.gmra.mxu0 %v8709
  %v9941 = vpop.f32.mrf.mxu0
  %v9942 = vadd.f32 0.0, %v9941
  %v9943 = vpop.f32.mrf.mxu0
  %v9944 = vadd.f32 0.0, %v9943
  %v9945 = vpop.f32.mrf.mxu0
  %v9946 = vpop.f32.mrf.mxu0
  %9947 = vdwg.mxu0
  %9949 = vset.pattern.permute.xlu0 0
  %9950 = vperm.xlu0 %9949, %v9014
  %v9951 = vpop.permute.xlu0 %9950
  %v9953 = vmul.f32 %v9951, %v977
  %v9954 = vmul.f32 %v9951, %v981
  %v9955 = vmul.f32 %v9951, %v985
  %v9956 = vmul.f32 %v9951, %v989
  %v9957 = vadd.f32 %v9819, %v9953
  %v9958 = vadd.f32 %v9821, %v9954
  %v9959 = vadd.f32 %v9860, %v9955
  %v9960 = vadd.f32 %v9862, %v9956
  %v9961 = vadd.f32 %v9957, %v1006
  %v9962 = vadd.f32 %v9958, %v1010
  %v9963 = vadd.f32 %v9959, %v1014
  %v9964 = vadd.f32 %v9960, %v1018
  %v9965 = vmul.f32 %v9961, 0.5
  %v9966 = vmul.f32 %v9962, 0.5
  %v9967 = vmul.f32 %v9963, 0.5
  %v9968 = vtanh.pop %v9965
  %v9969 = vtanh.pop %v9966
  %v9970 = vtanh.pop %v9967
  %v9971 = vmul.f32 %v9968, 0.5
  %v9972 = vmul.f32 %v9969, 0.5
  %v9973 = vmul.f32 %v9970, 0.5
  %v9974 = vadd.f32 %v9971, 0.5
  %v9975 = vadd.f32 %v9972, 0.5
  %v9976 = vadd.f32 %v9973, 0.5
  %v9977 = vtanh.pop %v9964
  %v9978 = vmul.f32 %v9975, %v8706
  %v9979 = vmul.f32 %v9974, %v9977
  %v9980 = vadd.f32 %v9978, %v9979
  %v9981 = vtanh.pop %v9980
  %v9982 = vmul.f32 %v9976, %v9981
  %v9983 = vpack.c.bf16 %v9982, %v9982
  %v9984 = vld [vmem:[%s4] sm:$0xff]
  %v9985 = vld [vmem:[%s4 + $0x8] sm:$0xff]
  %v9986 = vld [vmem:[%s4 + $0x10] sm:$0xff]
  %v9987 = vld [vmem:[%s4 + $0x18] sm:$0xff]
  %v9988 = vld [vmem:[%s4 + $0x20] sm:$0xff]
  %v9989 = vld [vmem:[%s4 + $0x28] sm:$0xff]
  %v9990 = vld [vmem:[%s4 + $0x30] sm:$0xff]
  %v9991 = vld [vmem:[%s4 + $0x38] sm:$0xff]
  %v9992 = vld [vmem:[%s4 + $0x40] sm:$0xff]
  %v9993 = vld [vmem:[%s4 + $0x48] sm:$0xff]
  %v9994 = vld [vmem:[%s4 + $0x50] sm:$0xff]
  %v9995 = vld [vmem:[%s4 + $0x58] sm:$0xff]
  %v9996 = vld [vmem:[%s4 + $0x60] sm:$0xff]
  %v9997 = vld [vmem:[%s4 + $0x68] sm:$0xff]
  %v9998 = vld [vmem:[%s4 + $0x70] sm:$0xff]
  %v9999 = vld [vmem:[%s4 + $0x78] sm:$0xff]
  %v10000 = vld [vmem:[%s4 + $0x80] sm:$0xff]
  %v10001 = vld [vmem:[%s4 + $0x88] sm:$0xff]
  %v10002 = vld [vmem:[%s4 + $0x90] sm:$0xff]
  %v10003 = vld [vmem:[%s4 + $0x98] sm:$0xff]
  %v10004 = vld [vmem:[%s4 + $0xa0] sm:$0xff]
  %v10005 = vld [vmem:[%s4 + $0xa8] sm:$0xff]
  %v10006 = vld [vmem:[%s4 + $0xb0] sm:$0xff]
  %v10007 = vld [vmem:[%s4 + $0xb8] sm:$0xff]
  %v10008 = vld [vmem:[%s4 + $0xc0] sm:$0xff]
  %v10009 = vld [vmem:[%s4 + $0xc8] sm:$0xff]
  %v10010 = vld [vmem:[%s4 + $0xd0] sm:$0xff]
  %v10011 = vld [vmem:[%s4 + $0xd8] sm:$0xff]
  %v10012 = vld [vmem:[%s4 + $0xe0] sm:$0xff]
  %v10013 = vld [vmem:[%s4 + $0xe8] sm:$0xff]
  %v10014 = vld [vmem:[%s4 + $0xf0] sm:$0xff]
  %v10015 = vld [vmem:[%s4 + $0xf8] sm:$0xff]
  %v10048 = vunpack.c.l.b16 %v9984
  %v10049 = vunpack.c.h.b16 %v9984
  %v10050 = vunpack.c.l.b16 %v9985
  %v10051 = vunpack.c.h.b16 %v9985
  %v10052 = vunpack.c.l.b16 %v9986
  %v10053 = vunpack.c.h.b16 %v9986
  %v10054 = vunpack.c.l.b16 %v9987
  %v10055 = vunpack.c.h.b16 %v9987
  %v10056 = vunpack.c.l.b16 %v9988
  %v10057 = vunpack.c.h.b16 %v9988
  %v10058 = vunpack.c.l.b16 %v9989
  %v10059 = vunpack.c.h.b16 %v9989
  %v10060 = vunpack.c.l.b16 %v9990
  %v10061 = vunpack.c.h.b16 %v9990
  %v10062 = vunpack.c.l.b16 %v9991
  %v10063 = vunpack.c.h.b16 %v9991
  %v10064 = vunpack.c.l.b16 %v9992
  %v10065 = vunpack.c.h.b16 %v9992
  %v10066 = vunpack.c.l.b16 %v9993
  %v10067 = vunpack.c.h.b16 %v9993
  %v10068 = vunpack.c.l.b16 %v9994
  %v10069 = vunpack.c.h.b16 %v9994
  %v10070 = vunpack.c.l.b16 %v9995
  %v10071 = vunpack.c.h.b16 %v9995
  %v10072 = vunpack.c.l.b16 %v9996
  %v10073 = vunpack.c.h.b16 %v9996
  %v10074 = vunpack.c.l.b16 %v9997
  %v10075 = vunpack.c.h.b16 %v9997
  %v10076 = vunpack.c.l.b16 %v9998
  %v10077 = vunpack.c.h.b16 %v9998
  %v10078 = vunpack.c.l.b16 %v9999
  %v10079 = vunpack.c.h.b16 %v9999
  %v10080 = vunpack.c.l.b16 %v10000
  %v10081 = vunpack.c.h.b16 %v10000
  %v10082 = vunpack.c.l.b16 %v10001
  %v10083 = vunpack.c.h.b16 %v10001
  %v10084 = vunpack.c.l.b16 %v10002
  %v10085 = vunpack.c.h.b16 %v10002
  %v10086 = vunpack.c.l.b16 %v10003
  %v10087 = vunpack.c.h.b16 %v10003
  %v10088 = vunpack.c.l.b16 %v10004
  %v10089 = vunpack.c.h.b16 %v10004
  %v10090 = vunpack.c.l.b16 %v10005
  %v10091 = vunpack.c.h.b16 %v10005
  %v10092 = vunpack.c.l.b16 %v10006
  %v10093 = vunpack.c.h.b16 %v10006
  %v10094 = vunpack.c.l.b16 %v10007
  %v10095 = vunpack.c.h.b16 %v10007
  %v10096 = vunpack.c.l.b16 %v10008
  %v10097 = vunpack.c.h.b16 %v10008
  %v10098 = vunpack.c.l.b16 %v10009
  %v10099 = vunpack.c.h.b16 %v10009
  %v10100 = vunpack.c.l.b16 %v10010
  %v10101 = vunpack.c.h.b16 %v10010
  %v10102 = vunpack.c.l.b16 %v10011
  %v10103 = vunpack.c.h.b16 %v10011
  %v10104 = vunpack.c.l.b16 %v10012
  %v10105 = vunpack.c.h.b16 %v10012
  %v10106 = vunpack.c.l.b16 %v10013
  %v10107 = vunpack.c.h.b16 %v10013
  %v10108 = vunpack.c.l.b16 %v10014
  %v10109 = vunpack.c.h.b16 %v10014
  %v10110 = vunpack.c.l.b16 %v10015
  %v10111 = vunpack.c.h.b16 %v10015
  %v10112 = vpack.c.b16 %v10052, %v10048
  %v10113 = vpack.c.b16 %v10053, %v10049
  %v10114 = vpack.c.b16 %v10054, %v10050
  %v10115 = vpack.c.b16 %v10055, %v10051
  %v10116 = vpack.c.b16 %v10060, %v10056
  %v10117 = vpack.c.b16 %v10061, %v10057
  %v10118 = vpack.c.b16 %v10062, %v10058
  %v10119 = vpack.c.b16 %v10063, %v10059
  %v10120 = vpack.c.b16 %v10068, %v10064
  %v10121 = vpack.c.b16 %v10069, %v10065
  %v10122 = vpack.c.b16 %v10070, %v10066
  %v10123 = vpack.c.b16 %v10071, %v10067
  %v10124 = vpack.c.b16 %v10076, %v10072
  %v10125 = vpack.c.b16 %v10077, %v10073
  %v10126 = vpack.c.b16 %v10078, %v10074
  %v10127 = vpack.c.b16 %v10079, %v10075
  %v10128 = vpack.c.b16 %v10084, %v10080
  %v10129 = vpack.c.b16 %v10085, %v10081
  %v10130 = vpack.c.b16 %v10086, %v10082
  %v10131 = vpack.c.b16 %v10087, %v10083
  %v10132 = vpack.c.b16 %v10092, %v10088
  %v10133 = vpack.c.b16 %v10093, %v10089
  %v10134 = vpack.c.b16 %v10094, %v10090
  %v10135 = vpack.c.b16 %v10095, %v10091
  %v10136 = vpack.c.b16 %v10100, %v10096
  %v10137 = vpack.c.b16 %v10101, %v10097
  %v10138 = vpack.c.b16 %v10102, %v10098
  %v10139 = vpack.c.b16 %v10103, %v10099
  %v10140 = vpack.c.b16 %v10108, %v10104
  %v10141 = vpack.c.b16 %v10109, %v10105
  %v10142 = vpack.c.b16 %v10110, %v10106
  %v10143 = vpack.c.b16 %v10111, %v10107
  %10176 = vmatprep.subr.bf16.mxu0 %v10141
  %10177 = vmatpush1.bf16.msra.mxu0 %v10140
  %10178 = vmatprep.subr.bf16.mxu0 %v10137
  %10179 = vmatpush1.bf16.msra.mxu0 %v10136
  %10180 = vmatprep.subr.bf16.mxu0 %v10133
  %10181 = vmatpush1.bf16.msra.mxu0 %v10132
  %10182 = vmatprep.subr.bf16.mxu0 %v10129
  %10183 = vmatpush1.bf16.msra.mxu0 %v10128
  %10184 = vmatprep.subr.bf16.mxu0 %v10125
  %10185 = vmatpush1.bf16.msra.mxu0 %v10124
  %10186 = vmatprep.subr.bf16.mxu0 %v10121
  %10187 = vmatpush1.bf16.msra.mxu0 %v10120
  %10188 = vmatprep.subr.bf16.mxu0 %v10117
  %10189 = vmatpush1.bf16.msra.mxu0 %v10116
  %10190 = vmatprep.subr.bf16.mxu0 %v10113
  %10191 = vmatpush1.bf16.msra.mxu0 %v10112
  %10192 = vmatprep.subr.bf16.mxu0 0
  %10193 = vmatpush2.bf16.msra.mxu0 0
  %10194 = vmatprep.subr.bf16.mxu0 0
  %10195 = vmatpush2.bf16.msra.mxu0 0
  %10196 = vmatprep.subr.bf16.mxu0 0
  %10197 = vmatpush2.bf16.msra.mxu0 0
  %10198 = vmatprep.subr.bf16.mxu0 0
  %10199 = vmatpush2.bf16.msra.mxu0 0
  %10200 = vmatprep.subr.bf16.mxu0 0
  %10201 = vmatpush2.bf16.msra.mxu0 0
  %10202 = vmatprep.subr.bf16.mxu0 0
  %10203 = vmatpush2.bf16.msra.mxu0 0
  %10204 = vmatprep.subr.bf16.mxu0 0
  %10205 = vmatpush2.bf16.msra.mxu0 0
  %10206 = vmatprep.subr.bf16.mxu0 0
  %10207 = vmatpush2.bf16.msra.mxu0 0
  %10208 = vmatprep.mubr.bf16.mxu0 0
  %10209 = vmatmul.mubr.bf16.gmra.mxu0 %v9983
  %v10210 = vpop.f32.mrf.mxu0
  %v10211 = vadd.f32 0.0, %v10210
  %v10212 = vpop.f32.mrf.mxu0
  %v10213 = vadd.f32 0.0, %v10212
  %v10214 = vpop.f32.mrf.mxu0
  %v10215 = vpop.f32.mrf.mxu0
  %10216 = vdwg.mxu0
  %10217 = vmatprep.subr.bf16.mxu0 %v10143
  %10218 = vmatpush1.bf16.msra.mxu0 %v10142
  %10219 = vmatprep.subr.bf16.mxu0 %v10139
  %10220 = vmatpush1.bf16.msra.mxu0 %v10138
  %10221 = vmatprep.subr.bf16.mxu0 %v10135
  %10222 = vmatpush1.bf16.msra.mxu0 %v10134
  %10223 = vmatprep.subr.bf16.mxu0 %v10131
  %10224 = vmatpush1.bf16.msra.mxu0 %v10130
  %10225 = vmatprep.subr.bf16.mxu0 %v10127
  %10226 = vmatpush1.bf16.msra.mxu0 %v10126
  %10227 = vmatprep.subr.bf16.mxu0 %v10123
  %10228 = vmatpush1.bf16.msra.mxu0 %v10122
  %10229 = vmatprep.subr.bf16.mxu0 %v10119
  %10230 = vmatpush1.bf16.msra.mxu0 %v10118
  %10231 = vmatprep.subr.bf16.mxu0 %v10115
  %10232 = vmatpush1.bf16.msra.mxu0 %v10114
  %10233 = vmatprep.subr.bf16.mxu0 0
  %10234 = vmatpush2.bf16.msra.mxu0 0
  %10235 = vmatprep.subr.bf16.mxu0 0
  %10236 = vmatpush2.bf16.msra.mxu0 0
  %10237 = vmatprep.subr.bf16.mxu0 0
  %10238 = vmatpush2.bf16.msra.mxu0 0
  %10239 = vmatprep.subr.bf16.mxu0 0
  %10240 = vmatpush2.bf16.msra.mxu0 0
  %10241 = vmatprep.subr.bf16.mxu0 0
  %10242 = vmatpush2.bf16.msra.mxu0 0
  %10243 = vmatprep.subr.bf16.mxu0 0
  %10244 = vmatpush2.bf16.msra.mxu0 0
  %10245 = vmatprep.subr.bf16.mxu0 0
  %10246 = vmatpush2.bf16.msra.mxu0 0
  %10247 = vmatprep.subr.bf16.mxu0 0
  %10248 = vmatpush2.bf16.msra.mxu0 0
  %10249 = vmatprep.mubr.bf16.mxu0 0
  %10250 = vmatmul.mubr.bf16.gmra.mxu0 %v9983
  %v10251 = vpop.f32.mrf.mxu0
  %v10252 = vadd.f32 0.0, %v10251
  %v10253 = vpop.f32.mrf.mxu0
  %v10254 = vadd.f32 0.0, %v10253
  %v10255 = vpop.f32.mrf.mxu0
  %v10256 = vpop.f32.mrf.mxu0
  %10257 = vdwg.mxu0
  %v10258 = vadd.f32 %v9901, %v10211
  %v10259 = vadd.f32 %v9903, %v10213
  %v10260 = vadd.f32 %v9942, %v10252
  %v10261 = vadd.f32 %v9944, %v10254
  %v10262 = vadd.f32 %v10258, %v1328
  %v10263 = vadd.f32 %v10259, %v1332
  %v10264 = vadd.f32 %v10260, %v1336
  %v10265 = vadd.f32 %v10261, %v1340
  %v10266 = vmul.f32 %v10262, 0.5
  %v10267 = vmul.f32 %v10263, 0.5
  %v10268 = vmul.f32 %v10264, 0.5
  %v10269 = vtanh.pop %v10266
  %v10270 = vtanh.pop %v10267
  %v10271 = vtanh.pop %v10268
  %v10272 = vmul.f32 %v10269, 0.5
  %v10273 = vmul.f32 %v10270, 0.5
  %v10274 = vmul.f32 %v10271, 0.5
  %v10275 = vadd.f32 %v10272, 0.5
  %v10276 = vadd.f32 %v10273, 0.5
  %v10277 = vadd.f32 %v10274, 0.5
  %v10278 = vtanh.pop %v10265
  %v10279 = vmul.f32 %v10276, %v9007
  %v10280 = vmul.f32 %v10275, %v10278
  %v10281 = vadd.f32 %v10279, %v10280
  %v10282 = vtanh.pop %v10281
  %v10283 = vmul.f32 %v10277, %v10282
  %v10284 = vadd.f32 %v9982, %v10283
  %s10285 = scalar_lea.vmem [#allocation2], 14
  %10286 = vst [vmem:[%s10285] sm:$0x3] %v10284
  %v10287 = vld [vmem:[#allocation2] sm:$0x3]
  %v10288 = vld [vmem:[#allocation2 + $0x2] sm:$0x3]
  %v10289 = vld [vmem:[#allocation2 + $0x4] sm:$0x3]
  %v10290 = vld [vmem:[#allocation2 + $0x6] sm:$0x3]
  %v10291 = vld [vmem:[#allocation2 + $0x8] sm:$0x3]
  %v10292 = vld [vmem:[#allocation2 + $0xa] sm:$0x3]
  %v10293 = vld [vmem:[#allocation2 + $0xc] sm:$0x3]
  %v10294 = vld [vmem:[#allocation2 + $0xe] sm:$0x3]
  %v10295 = vld [vmem:[%s6] sm:$0x1]
  %v10297 = vlaneseq
  %v10298 = vshrl.u32 %v10297, 7
  %v10299 = vsub.s32 0, %v10298
  %v10300 = vrot.slane %v10295, %v10299
  %v10302 = vmul.f32 %v10287, %v10300
  %v10303 = vmul.f32 %v10288, %v10300
  %v10304 = vmul.f32 %v10289, %v10300
  %v10305 = vmul.f32 %v10290, %v10300
  %v10306 = vmul.f32 %v10291, %v10300
  %v10307 = vmul.f32 %v10292, %v10300
  %v10308 = vmul.f32 %v10293, %v10300
  %v10309 = vmul.f32 %v10294, %v10300
  %vm10310 = vcmask 1041408
  %v10311 = vsel %vm10310, %v10302, 0.0
  %10312 = vadd.xlane.f32.xlu0 %v10311
  %v10313 = vpop.xlane.xlu0 %10312
  %v10314 = vsel %vm10310, %v10303, 0.0
  %10315 = vadd.xlane.f32.xlu0 %v10314
  %v10316 = vpop.xlane.xlu0 %10315
  %v10317 = vsel %vm10310, %v10304, 0.0
  %10318 = vadd.xlane.f32.xlu0 %v10317
  %v10319 = vpop.xlane.xlu0 %10318
  %v10320 = vsel %vm10310, %v10305, 0.0
  %10321 = vadd.xlane.f32.xlu0 %v10320
  %v10322 = vpop.xlane.xlu0 %10321
  %v10323 = vsel %vm10310, %v10306, 0.0
  %10324 = vadd.xlane.f32.xlu0 %v10323
  %v10325 = vpop.xlane.xlu0 %10324
  %v10326 = vsel %vm10310, %v10307, 0.0
  %10327 = vadd.xlane.f32.xlu0 %v10326
  %v10328 = vpop.xlane.xlu0 %10327
  %v10329 = vsel %vm10310, %v10308, 0.0
  %10330 = vadd.xlane.f32.xlu0 %v10329
  %v10331 = vpop.xlane.xlu0 %10330
  %v10332 = vsel %vm10310, %v10309, 0.0
  %10333 = vadd.xlane.f32.xlu0 %v10332
  %v10334 = vpop.xlane.xlu0 %10333
  %v10335 = vld [vmem:[#allocation3] sm:$0x1]
  %v10337 = vlaneseq
  %v10338 = vshrl.u32 %v10337, 7
  %v10339 = vsub.s32 0, %v10338
  %v10340 = vrot.slane %v10335, %v10339
  %10341 = vset.pattern.permute.xlu0 0
  %10342 = vperm.xlu0 %10341, %v10340
  %v10343 = vpop.permute.xlu0 %10342
  %v10345 = vadd.f32 %v10313, %v10343
  %v10346 = vadd.f32 %v10316, %v10343
  %v10347 = vadd.f32 %v10319, %v10343
  %v10348 = vadd.f32 %v10322, %v10343
  %v10349 = vadd.f32 %v10325, %v10343
  %v10350 = vadd.f32 %v10328, %v10343
  %v10351 = vadd.f32 %v10331, %v10343
  %v10352 = vadd.f32 %v10334, %v10343
  %v10361 = vlaneseq
  %v10362 = vand.u32 %v10361, 127
  %v10363 = vlaneseq
  %v10364 = vshrl.u32 %v10363, 7
  %v10365 = vsub.s32 %v10362, %v10364
  %v10366 = vrot.slane %v10345, %v10365
  %v10367 = vlaneseq
  %v10368 = vshrl.u32 %v10367, 7
  %v10369 = vsub.s32 %v10362, %v10368
  %v10370 = vrot.slane %v10346, %v10369
  %v10371 = vlaneseq
  %v10372 = vshrl.u32 %v10371, 7
  %v10373 = vsub.s32 %v10362, %v10372
  %v10374 = vrot.slane %v10347, %v10373
  %v10375 = vlaneseq
  %v10376 = vshrl.u32 %v10375, 7
  %v10377 = vsub.s32 %v10362, %v10376
  %v10378 = vrot.slane %v10348, %v10377
  %v10379 = vlaneseq
  %v10380 = vshrl.u32 %v10379, 7
  %v10381 = vsub.s32 %v10362, %v10380
  %v10382 = vrot.slane %v10349, %v10381
  %v10383 = vlaneseq
  %v10384 = vshrl.u32 %v10383, 7
  %v10385 = vsub.s32 %v10362, %v10384
  %v10386 = vrot.slane %v10350, %v10385
  %v10387 = vlaneseq
  %v10388 = vshrl.u32 %v10387, 7
  %v10389 = vsub.s32 %v10362, %v10388
  %v10390 = vrot.slane %v10351, %v10389
  %v10391 = vlaneseq
  %v10392 = vshrl.u32 %v10391, 7
  %v10393 = vsub.s32 %v10362, %v10392
  %v10394 = vrot.slane %v10352, %v10393
  %vm10395 = vcmask 1041409
  %v10396 = vsel %vm10395, %v10370, %v10366
  %vm10397 = vcmask 1042434
  %v10398 = vsel %vm10397, %v10374, %v10396
  %vm10399 = vcmask 1043459
  %v10400 = vsel %vm10399, %v10378, %v10398
  %vm10401 = vcmask 1044484
  %v10402 = vsel %vm10401, %v10382, %v10400
  %vm10403 = vcmask 1045509
  %v10404 = vsel %vm10403, %v10386, %v10402
  %vm10405 = vcmask 1046534
  %v10406 = vsel %vm10405, %v10390, %v10404
  %vm10407 = vcmask 1047559
  %v10408 = vsel %vm10407, %v10394, %v10406
  %vm10410 = vcmask 15360
  %10411 = vst.msk [vmem:[%s8] sm:$0xff] %vm10410, %v10408
  // Predicated region
  $region34: #{res_lstms_forward.1} parent=0 // pred_check
    _
  $region35: #{res_lstms_forward.1} parent=0 // pred_check_branch
    %10413 = sbr.rel (0) target = $region37
  $region36: #{res_lstms_forward.1} parent=0 // pred_region
    _
  $region37: #{res_lstms_forward.1} parent=0 // pred_fallthru
    _
  // Predicated region
  $region38: #{res_lstms_forward.1} parent=0 // pred_check
    _
  $region39: #{res_lstms_forward.1} parent=0 // pred_check_branch
    %10415 = sbr.rel (0) target = $region41
  $region40: #{res_lstms_forward.1} parent=0 // pred_region
    _
  $region41: #{res_lstms_forward.1} parent=0 // pred_fallthru
    _

</llo_original>
